<compile_context>
chip_gen: v7x
topology: tpu7x:2x2x1
jax: 0.10.0
libtpu: 0.0.40
codegen_flags: <defaults>
</compile_context>

<pallas_src>
import functools
import math

import jax
import jax.numpy as jnp
import numpy as np
from jax import lax
from jax.experimental import pallas as pl
from jax.experimental.pallas import tpu as pltpu


def _local_residual_kernel(xa_ref, xv_ref,
                           ws1_ref, w2p_ref, w3t_ref,
                           wv1_ref, waoutt_ref, wvoutt_ref,
                           pa_pool_ref, pa_scat_ref, pv_pool_ref, pv_scat_ref,
                           bias_ref,
                           out_a_ref, out_v_ref, *, eps):
    f32 = jnp.float32
    leaky = lambda t: jnp.maximum(t, 0.2 * t)              # LeakyReLU(0.2)

    def dot_w(a, w_ref):                                    # MXU matmul, f32 accum
        w = w_ref[...]
        return jnp.dot(a.astype(w.dtype), w, preferred_element_type=f32)

    def dot_f32(a, w_ref):                                  # GN stats stay f32
        return jnp.dot(a, w_ref[...], preferred_element_type=f32)

    T, A = xa_ref.shape
    _, _, V = xv_ref.shape
    R = ws1_ref.shape[1] - A
    AP = out_a_ref.shape[1]

    xa = xa_ref[...]                                        # (T, A)
    # (3,T,V) block is contiguous and T is 8-aligned -> layout-preserving merge
    xv_flat = xv_ref[...].reshape(3 * T, V)                 # (3T, V)
    xv0 = xv_flat[0:T]
    xv1 = xv_flat[T:2 * T]
    xv2 = xv_flat[2 * T:3 * T]

    # packed bias rows
    bs1 = bias_ref[0:1, 0:A + R]                            # [b1 | prod_a_in_b]
    b2 = bias_ref[1:2, 0:A]
    b_ha = bias_ref[2:3, 0:A]                               # b3 + prod_a_out_b
    gab = bias_ref[3:4, 0:A]

    # --- fused scalar matmul: xa @ [W1^T | Wain^T] ---------------------------
    t1 = dot_w(xa, ws1_ref) + bs1                           # (T, A+R)
    a_r = t1[:, A:A + R]                                    # (T, R), pre-activation
    h1 = leaky(t1)                                          # extra R lanes killed by zero rows of w2p
    h2 = leaky(dot_w(h1, w2p_ref) + b2)                     # (T, A)

    # --- fused vector matmul: xv_flat @ [Wv^T | Wvin^T] ----------------------
    tv = dot_w(xv_flat, wv1_ref)                            # (3T, V+R)
    yv_flat = tv[:, 0:V]                                    # lin_v output
    vr_flat = tv[:, V:V + R]                                # prod_v_in output
    vr0 = vr_flat[0:T]
    vr1 = vr_flat[T:2 * T]
    vr2 = vr_flat[2 * T:3 * T]

    # --- ScalVecProducts ------------------------------------------------------
    vv = vr0 * vr0 + vr1 * vr1 + vr2 * vr2                  # (T, R) invariant
    a_r3 = jnp.concatenate([a_r, a_r, a_r], axis=0)         # (3T, R)
    pv_flat = dot_w(a_r3 * vr_flat, wvoutt_ref)             # (3T, V)

    # ha = layers_a(x_a) + p_a  (biases folded into b_ha)
    ha = dot_w(h2, w3t_ref) + dot_w(vv, waoutt_ref) + b_ha  # (T, A)

    # --- ScalGroupNorm (affine folded into scatter matrix) -------------------
    ha2 = jnp.concatenate([ha, ha * ha], axis=0)            # (2T, A)
    stats = dot_f32(ha2, pa_pool_ref)                       # (2T, GA)
    mu_g = stats[0:T]
    m2_g = stats[T:2 * T]
    var_g = jnp.maximum(m2_g - mu_g * mu_g, 0.0)
    inv_g = lax.rsqrt(var_g + eps)
    scale = dot_f32(inv_g, pa_scat_ref)                     # per-channel inv * gaw
    shift = gab - dot_f32(mu_g * inv_g, pa_scat_ref)        # gab - mu*inv*gaw
    res_a = xa + ha * scale + shift                         # residual

    # --- VecGroupNorm (gvw folded into scatter matrix) ------------------------
    hv_flat = yv_flat + pv_flat                             # (3T, V)
    hv0 = hv_flat[0:T]
    hv1 = hv_flat[T:2 * T]
    hv2 = hv_flat[2 * T:3 * T]
    n2 = hv0 * hv0 + hv1 * hv1 + hv2 * hv2                  # (T, V) squared norms
    msn_g = dot_f32(n2, pv_pool_ref)                        # (T, GV)
    vscale = dot_f32(lax.rsqrt(msn_g + eps), pv_scat_ref)   # (T, V) rms_inv * gvw

    # --- stores ----------------------------------------------------------------
    if AP > A:                                              # lane-dense scalar store
        res_a = jnp.concatenate([res_a, jnp.zeros((T, AP - A), f32)], axis=1)
    out_a_ref[...] = res_a
    out_v_ref[0] = xv0 + hv0 * vscale
    out_v_ref[1] = xv1 + hv1 * vscale
    out_v_ref[2] = xv2 + hv2 * vscale


def _round_up(x, m):
    return ((x + m - 1) // m) * m


def _group_matrices(channels, groups):
    gsz = channels // groups
    gid = np.arange(channels) // gsz
    scat = (gid[None, :] == np.arange(groups)[:, None]).astype(np.float32)  # (G, C)
    pool = scat.T / float(gsz)                                              # (C, G)
    return pool, scat


def local_residual_forward(x_a, x_v, params, *, agroups, vgroups,
                           tile_m=1024, eps=1e-5, matmul_dtype=jnp.float32):
    B, N, A = x_a.shape
    V = x_v.shape[-2]
    R = params["prod_a_in_w"].shape[0]
    assert A % agroups == 0 and V % vgroups == 0
    M = B * N
    f32 = jnp.float32

    # Boundary layout conversion (rows = B*N, vectors component-major).
    # TODO(synk): when stacking LocalResidual layers, keep the flattened /
    # component-major layout between layers and hoist these transposes out.
    xa2d = x_a.reshape(M, A).astype(f32)
    xv3d = jnp.transpose(x_v, (3, 0, 1, 2)).reshape(3, M, V).astype(f32)

    # Large 8-aligned row tile, and >= 2 grid steps when possible (v7x megacore).
    Mr = _round_up(M, 8)
    T = max(8, min(_round_up(tile_m, 8), Mr))
    if T >= Mr and Mr >= 16:
        T = _round_up(Mr // 2, 8)
    M_pad = _round_up(M, T)
    if M_pad != M:
        xa2d = jnp.pad(xa2d, ((0, M_pad - M), (0, 0)))
        xv3d = jnp.pad(xv3d, ((0, 0), (0, M_pad - M), (0, 0)))

    mdt = matmul_dtype
    # Fused, pre-transposed weights (x @ W^T form).
    ws1 = jnp.concatenate([params["w1"].T, params["prod_a_in_w"].T], axis=1).astype(mdt)   # (A, A+R)
    w2p = jnp.concatenate([params["w2"].T, jnp.zeros((R, A), f32)], axis=0).astype(mdt)    # (A+R, A)
    w3t = params["w3"].T.astype(mdt)                                                       # (A, A)
    wv1 = jnp.concatenate([params["lin_v_w"].T, params["prod_v_in_w"].T], axis=1).astype(mdt)  # (V, V+R)
    waoutt = params["prod_a_out_w"].T.astype(mdt)                                          # (R, A)
    wvoutt = params["prod_v_out_w"].T.astype(mdt)                                          # (R, V)

    # GroupNorm pooling / scatter matrices (affine scale folded into scatter).
    pa_pool_np, pa_scat_np = _group_matrices(A, agroups)
    pv_pool_np, pv_scat_np = _group_matrices(V, vgroups)
    pa_pool = jnp.asarray(pa_pool_np, f32)
    pv_pool = jnp.asarray(pv_pool_np, f32)
    pa_scat = jnp.asarray(pa_scat_np, f32) * params["gnorm_a_w"].astype(f32)[None, :]
    pv_scat = jnp.asarray(pv_scat_np, f32) * params["gnorm_v_w"].astype(f32)[None, :]

    # All tiny bias/affine rows packed into one (8, 128) constant.
    assert A + R <= 128 and A <= 128
    bias = jnp.zeros((8, 128), f32)
    bias = bias.at[0, :A + R].set(
        jnp.concatenate([params["b1"], params["prod_a_in_b"]]).astype(f32))
    bias = bias.at[1, :A].set(params["b2"].astype(f32))
    bias = bias.at[2, :A].set((params["b3"] + params["prod_a_out_b"]).astype(f32))
    bias = bias.at[3, :A].set(params["gnorm_a_b"].astype(f32))

    AP = _round_up(A, 128)                                   # lane-dense scalar output width
    row = lambda c: pl.BlockSpec((T, c), lambda i: (i, 0))
    vecspec = pl.BlockSpec((3, T, V), lambda i: (0, i, 0))
    const = lambda arr: pl.BlockSpec(arr.shape, lambda i: (0,) * arr.ndim)

    kernel = functools.partial(_local_residual_kernel, eps=float(eps))

    out_a_pad, out_v3 = pl.pallas_call(
        kernel,
        out_shape=(jax.ShapeDtypeStruct((M_pad, AP), f32),
                   jax.ShapeDtypeStruct((3, M_pad, V), f32)),
        grid=(M_pad // T,),
        in_specs=[
            row(A),                                          # x_a      (M_pad, A)
            vecspec,                                         # x_v      (3, M_pad, V)
            const(ws1), const(w2p), const(w3t),
            const(wv1), const(waoutt), const(wvoutt),
            const(pa_pool), const(pa_scat), const(pv_pool), const(pv_scat),
            const(bias),
        ],
        out_specs=(row(AP), vecspec),
        compiler_params=pltpu.CompilerParams(
            dimension_semantics=("parallel",),
            vmem_limit_bytes=32 * 1024 * 1024),
    )(xa2d, xv3d, ws1, w2p, w3t, wv1, waoutt, wvoutt,
      pa_pool, pa_scat, pv_pool, pv_scat, bias)

    out_a = out_a_pad[:M, :A].reshape(B, N, A)
    out_v = jnp.transpose(out_v3[:, :M, :], (1, 2, 0)).reshape(B, N, V, 3)
    return out_a, out_v


# --- pure-JAX reference (same math, PyTorch-style shapes) ----------------------
def local_residual_ref(x_a, x_v, params, agroups, vgroups, eps=1e-5):
    lrelu = lambda t: jnp.where(t >= 0, t, 0.2 * t)
    h = lrelu(x_a @ params["w1"].T + params["b1"])
    h = lrelu(h @ params["w2"].T + params["b2"])
    y_a = h @ params["w3"].T + params["b3"]

    y_v = jnp.einsum("bnic,oi->bnoc", x_v, params["lin_v_w"])

    a_r = x_a @ params["prod_a_in_w"].T + params["prod_a_in_b"]
    v_r = jnp.einsum("bnic,oi->bnoc", x_v, params["prod_v_in_w"])
    p_a = (v_r ** 2).sum(-1) @ params["prod_a_out_w"].T + params["prod_a_out_b"]
    p_v = jnp.einsum("bnic,oi->bnoc", a_r[..., None] * v_r, params["prod_v_out_w"])

    # ScalGroupNorm
    ha = y_a + p_a
    B, N, A = ha.shape
    hg = ha.reshape(B, N, agroups, A // agroups)
    mu = hg.mean(-1, keepdims=True)
    var = hg.var(-1, keepdims=True)
    z_a = ((hg - mu) / jnp.sqrt(var + eps)).reshape(B, N, A)
    z_a = z_a * params["gnorm_a_w"] + params["gnorm_a_b"]

    # VecGroupNorm
    hv = y_v + p_v
    V = hv.shape[-2]
    hvg = hv.reshape(B, N, vgroups, V // vgroups, 3)
    msn = (hvg ** 2).sum(-1).mean(-1)                         # (B, N, GV)
    z_v = hvg / jnp.sqrt(msn + eps)[..., None, None]
    z_v = z_v.reshape(B, N, V, 3) * params["gnorm_v_w"][:, None]

    return x_a + z_a, x_v + z_v


if __name__ == "__main__":
    B, N = 2, 256
    adim, vdim, rank = 32, 16, 8
    agroups, vgroups = 4, 4

    key = jax.random.PRNGKey(0)
    keys = jax.random.split(key, 18)

    def lin_init(kw, kb, out_d, in_d):
        lim = 1.0 / math.sqrt(in_d)
        w = jax.random.uniform(kw, (out_d, in_d), jnp.float32, -lim, lim)
        b = jax.random.uniform(kb, (out_d,), jnp.float32, -lim, lim)
        return w, b

    x_a = jax.random.normal(keys[0], (B, N, adim), jnp.float32)
    x_v = jax.random.normal(keys[1], (B, N, vdim, 3), jnp.float32)

    w1, b1 = lin_init(keys[2], keys[3], adim, adim)
    w2, b2 = lin_init(keys[4], keys[5], adim, adim)
    w3, b3 = lin_init(keys[6], keys[7], adim, adim)
    pa_in_w, pa_in_b = lin_init(keys[8], keys[9], rank, adim)
    pa_out_w, pa_out_b = lin_init(keys[10], keys[11], adim, rank)

    lv = 1.0 / math.sqrt(vdim)
    lr = 1.0 / math.sqrt(rank)
    params = {
        "w1": w1, "b1": b1, "w2": w2, "b2": b2, "w3": w3, "b3": b3,
        "lin_v_w": jax.random.uniform(keys[12], (vdim, vdim), jnp.float32, -lv, lv),
        "prod_a_in_w": pa_in_w, "prod_a_in_b": pa_in_b,
        "prod_v_in_w": jax.random.uniform(keys[13], (rank, vdim), jnp.float32, -lv, lv),
        "prod_a_out_w": pa_out_w, "prod_a_out_b": pa_out_b,
        "prod_v_out_w": jax.random.uniform(keys[14], (vdim, rank), jnp.float32, -lr, lr),
        "gnorm_a_w": 1.0 + 0.1 * jax.random.normal(keys[15], (adim,), jnp.float32),
        "gnorm_a_b": 0.1 * jax.random.normal(keys[16], (adim,), jnp.float32),
        "gnorm_v_w": 1.0 + 0.1 * jax.random.normal(keys[17], (vdim,), jnp.float32),
    }

    ref_a, ref_v = local_residual_ref(x_a, x_v, params, agroups, vgroups)

    # f32 matmul path (default): tight tolerance.
    out_a, out_v = local_residual_forward(
        x_a, x_v, params, agroups=agroups, vgroups=vgroups)
    jax.block_until_ready((out_a, out_v))
    np.testing.assert_allclose(np.asarray(out_a), np.asarray(ref_a), rtol=2e-3, atol=2e-3)
    np.testing.assert_allclose(np.asarray(out_v), np.asarray(ref_v), rtol=2e-3, atol=2e-3)

    # bf16 MXU path (v6e/v7x oriented; elementwise + GN stats stay f32): loose tolerance.
    out_a_bf, out_v_bf = local_residual_forward(
        x_a, x_v, params, agroups=agroups, vgroups=vgroups, matmul_dtype=jnp.bfloat16)
    jax.block_until_ready((out_a_bf, out_v_bf))
    np.testing.assert_allclose(np.asarray(out_a_bf), np.asarray(ref_a), rtol=1e-1, atol=1e-1)
    np.testing.assert_allclose(np.asarray(out_v_bf), np.asarray(ref_v), rtol=1e-1, atol=1e-1)

    print("KERNEL_OK")
</pallas_src>

<mosaic_0001>
module attributes {stable_mosaic.version = 11 : i64} {
  func.func @_local_residual_kernel(%arg0: i32, %arg1: memref<256x32xf32, #tpu.memory_space<vmem>>, %arg2: memref<3x256x16xf32, #tpu.memory_space<vmem>>, %arg3: memref<32x40xf32, #tpu.memory_space<vmem>>, %arg4: memref<40x32xf32, #tpu.memory_space<vmem>>, %arg5: memref<32x32xf32, #tpu.memory_space<vmem>>, %arg6: memref<16x24xf32, #tpu.memory_space<vmem>>, %arg7: memref<8x32xf32, #tpu.memory_space<vmem>>, %arg8: memref<8x16xf32, #tpu.memory_space<vmem>>, %arg9: memref<32x4xf32, #tpu.memory_space<vmem>>, %arg10: memref<4x32xf32, #tpu.memory_space<vmem>>, %arg11: memref<16x4xf32, #tpu.memory_space<vmem>>, %arg12: memref<4x16xf32, #tpu.memory_space<vmem>>, %arg13: memref<8x128xf32, #tpu.memory_space<vmem>>, %arg14: memref<256x128xf32, #tpu.memory_space<vmem>>, %arg15: memref<3x256x16xf32, #tpu.memory_space<vmem>>) attributes {dimension_semantics = [#tpu.dimension_semantics<parallel>], iteration_bounds = array<i64: 2>, scalar_prefetch = 0 : i64, scratch_operands = 0 : i64, tpu.core_type = #tpu.core_type<tc>, window_params = [{transform_indices = @transform_0, window_bounds = array<i64: 256, 32>}, {transform_indices = @transform_1, window_bounds = array<i64: 3, 256, 16>}, {pipeline_mode = #tpu.pipeline_mode<synchronous>, transform_indices = @transform_2, window_bounds = array<i64: 32, 40>}, {pipeline_mode = #tpu.pipeline_mode<synchronous>, transform_indices = @transform_3, window_bounds = array<i64: 40, 32>}, {pipeline_mode = #tpu.pipeline_mode<synchronous>, transform_indices = @transform_4, window_bounds = array<i64: 32, 32>}, {pipeline_mode = #tpu.pipeline_mode<synchronous>, transform_indices = @transform_5, window_bounds = array<i64: 16, 24>}, {pipeline_mode = #tpu.pipeline_mode<synchronous>, transform_indices = @transform_6, window_bounds = array<i64: 8, 32>}, {pipeline_mode = #tpu.pipeline_mode<synchronous>, transform_indices = @transform_7, window_bounds = array<i64: 8, 16>}, {pipeline_mode = #tpu.pipeline_mode<synchronous>, transform_indices = @transform_8, window_bounds = array<i64: 32, 4>}, {pipeline_mode = #tpu.pipeline_mode<synchronous>, transform_indices = @transform_9, window_bounds = array<i64: 4, 32>}, {pipeline_mode = #tpu.pipeline_mode<synchronous>, transform_indices = @transform_10, window_bounds = array<i64: 16, 4>}, {pipeline_mode = #tpu.pipeline_mode<synchronous>, transform_indices = @transform_11, window_bounds = array<i64: 4, 16>}, {pipeline_mode = #tpu.pipeline_mode<synchronous>, transform_indices = @transform_12, window_bounds = array<i64: 8, 128>}, {transform_indices = @transform_13, window_bounds = array<i64: 256, 128>}, {transform_indices = @transform_14, window_bounds = array<i64: 3, 256, 16>}]} {
    %c0 = arith.constant 0 : index
    %c0_0 = arith.constant 0 : index
    %0 = vector.load %arg1[%c0, %c0_0] : memref<256x32xf32, #tpu.memory_space<vmem>>, vector<256x32xf32>
    %c0_1 = arith.constant 0 : index
    %c0_2 = arith.constant 0 : index
    %c0_3 = arith.constant 0 : index
    %1 = vector.load %arg2[%c0_1, %c0_2, %c0_3] : memref<3x256x16xf32, #tpu.memory_space<vmem>>, vector<3x256x16xf32>
    %2 = vector.shape_cast %1 : vector<3x256x16xf32> to vector<768x16xf32>
    %3 = vector.extract_strided_slice %2 {offsets = [0, 0], sizes = [256, 16], strides = [1, 1]} : vector<768x16xf32> to vector<256x16xf32>
    %4 = vector.extract_strided_slice %2 {offsets = [256, 0], sizes = [256, 16], strides = [1, 1]} : vector<768x16xf32> to vector<256x16xf32>
    %5 = vector.extract_strided_slice %2 {offsets = [512, 0], sizes = [256, 16], strides = [1, 1]} : vector<768x16xf32> to vector<256x16xf32>
    %c0_4 = arith.constant 0 : index
    %c0_5 = arith.constant 0 : index
    %6 = vector.load %arg13[%c0_4, %c0_5] : memref<8x128xf32, #tpu.memory_space<vmem>>, vector<1x40xf32>
    %c1 = arith.constant 1 : index
    %c0_6 = arith.constant 0 : index
    %7 = vector.load %arg13[%c1, %c0_6] : memref<8x128xf32, #tpu.memory_space<vmem>>, vector<1x32xf32>
    %c2 = arith.constant 2 : index
    %c0_7 = arith.constant 0 : index
    %8 = vector.load %arg13[%c2, %c0_7] : memref<8x128xf32, #tpu.memory_space<vmem>>, vector<1x32xf32>
    %c3 = arith.constant 3 : index
    %c0_8 = arith.constant 0 : index
    %9 = vector.load %arg13[%c3, %c0_8] : memref<8x128xf32, #tpu.memory_space<vmem>>, vector<1x32xf32>
    %c0_9 = arith.constant 0 : index
    %c0_10 = arith.constant 0 : index
    %10 = vector.load %arg3[%c0_9, %c0_10] : memref<32x40xf32, #tpu.memory_space<vmem>>, vector<32x40xf32>
    %cst = arith.constant dense<0.000000e+00> : vector<256x40xf32>
    %11 = tpu.matmul %0, %10, %cst {dimension_numbers = #tpu.dot_dimension_numbers<[1], [0], [0], [1], [0, 0, 1, 1], [], []>} : vector<256x32xf32>, vector<32x40xf32>, vector<256x40xf32> -> vector<256x40xf32>
    %12 = vector.broadcast %6 : vector<1x40xf32> to vector<256x40xf32>
    %13 = arith.addf %11, %12 : vector<256x40xf32>
    %14 = vector.extract_strided_slice %13 {offsets = [0, 32], sizes = [256, 8], strides = [1, 1]} : vector<256x40xf32> to vector<256x8xf32>
    %cst_11 = arith.constant 2.000000e-01 : f32
    %15 = vector.broadcast %cst_11 : f32 to vector<256x40xf32>
    %16 = arith.mulf %15, %13 : vector<256x40xf32>
    %17 = arith.maximumf %13, %16 : vector<256x40xf32>
    %c0_12 = arith.constant 0 : index
    %c0_13 = arith.constant 0 : index
    %18 = vector.load %arg4[%c0_12, %c0_13] : memref<40x32xf32, #tpu.memory_space<vmem>>, vector<40x32xf32>
    %cst_14 = arith.constant dense<0.000000e+00> : vector<256x32xf32>
    %19 = tpu.matmul %17, %18, %cst_14 {dimension_numbers = #tpu.dot_dimension_numbers<[1], [0], [0], [1], [0, 0, 1, 1], [], []>} : vector<256x40xf32>, vector<40x32xf32>, vector<256x32xf32> -> vector<256x32xf32>
    %20 = vector.broadcast %7 : vector<1x32xf32> to vector<256x32xf32>
    %21 = arith.addf %19, %20 : vector<256x32xf32>
    %cst_15 = arith.constant 2.000000e-01 : f32
    %22 = vector.broadcast %cst_15 : f32 to vector<256x32xf32>
    %23 = arith.mulf %22, %21 : vector<256x32xf32>
    %24 = arith.maximumf %21, %23 : vector<256x32xf32>
    %c0_16 = arith.constant 0 : index
    %c0_17 = arith.constant 0 : index
    %25 = vector.load %arg6[%c0_16, %c0_17] : memref<16x24xf32, #tpu.memory_space<vmem>>, vector<16x24xf32>
    %cst_18 = arith.constant dense<0.000000e+00> : vector<768x24xf32>
    %26 = tpu.matmul %2, %25, %cst_18 {dimension_numbers = #tpu.dot_dimension_numbers<[1], [0], [0], [1], [0, 0, 1, 1], [], []>} : vector<768x16xf32>, vector<16x24xf32>, vector<768x24xf32> -> vector<768x24xf32>
    %27 = vector.extract_strided_slice %26 {offsets = [0, 0], sizes = [768, 16], strides = [1, 1]} : vector<768x24xf32> to vector<768x16xf32>
    %28 = vector.extract_strided_slice %26 {offsets = [0, 16], sizes = [768, 8], strides = [1, 1]} : vector<768x24xf32> to vector<768x8xf32>
    %29 = vector.extract_strided_slice %28 {offsets = [0, 0], sizes = [256, 8], strides = [1, 1]} : vector<768x8xf32> to vector<256x8xf32>
    %30 = vector.extract_strided_slice %28 {offsets = [256, 0], sizes = [256, 8], strides = [1, 1]} : vector<768x8xf32> to vector<256x8xf32>
    %31 = vector.extract_strided_slice %28 {offsets = [512, 0], sizes = [256, 8], strides = [1, 1]} : vector<768x8xf32> to vector<256x8xf32>
    %32 = arith.mulf %29, %29 : vector<256x8xf32>
    %33 = arith.mulf %30, %30 : vector<256x8xf32>
    %34 = arith.addf %32, %33 : vector<256x8xf32>
    %35 = arith.mulf %31, %31 : vector<256x8xf32>
    %36 = arith.addf %34, %35 : vector<256x8xf32>
    %37 = tpu.concatenate %14, %14, %14 in 0 : vector<256x8xf32>, vector<256x8xf32>, vector<256x8xf32> -> vector<768x8xf32>
    %38 = arith.mulf %37, %28 : vector<768x8xf32>
    %c0_19 = arith.constant 0 : index
    %c0_20 = arith.constant 0 : index
    %39 = vector.load %arg8[%c0_19, %c0_20] : memref<8x16xf32, #tpu.memory_space<vmem>>, vector<8x16xf32>
    %cst_21 = arith.constant dense<0.000000e+00> : vector<768x16xf32>
    %40 = tpu.matmul %38, %39, %cst_21 {dimension_numbers = #tpu.dot_dimension_numbers<[1], [0], [0], [1], [0, 0, 1, 1], [], []>} : vector<768x8xf32>, vector<8x16xf32>, vector<768x16xf32> -> vector<768x16xf32>
    %c0_22 = arith.constant 0 : index
    %c0_23 = arith.constant 0 : index
    %41 = vector.load %arg5[%c0_22, %c0_23] : memref<32x32xf32, #tpu.memory_space<vmem>>, vector<32x32xf32>
    %cst_24 = arith.constant dense<0.000000e+00> : vector<256x32xf32>
    %42 = tpu.matmul %24, %41, %cst_24 {dimension_numbers = #tpu.dot_dimension_numbers<[1], [0], [0], [1], [0, 0, 1, 1], [], []>} : vector<256x32xf32>, vector<32x32xf32>, vector<256x32xf32> -> vector<256x32xf32>
    %c0_25 = arith.constant 0 : index
    %c0_26 = arith.constant 0 : index
    %43 = vector.load %arg7[%c0_25, %c0_26] : memref<8x32xf32, #tpu.memory_space<vmem>>, vector<8x32xf32>
    %cst_27 = arith.constant dense<0.000000e+00> : vector<256x32xf32>
    %44 = tpu.matmul %36, %43, %cst_27 {dimension_numbers = #tpu.dot_dimension_numbers<[1], [0], [0], [1], [0, 0, 1, 1], [], []>} : vector<256x8xf32>, vector<8x32xf32>, vector<256x32xf32> -> vector<256x32xf32>
    %45 = arith.addf %42, %44 : vector<256x32xf32>
    %46 = vector.broadcast %8 : vector<1x32xf32> to vector<256x32xf32>
    %47 = arith.addf %45, %46 : vector<256x32xf32>
    %48 = arith.mulf %47, %47 : vector<256x32xf32>
    %49 = tpu.concatenate %47, %48 in 0 : vector<256x32xf32>, vector<256x32xf32> -> vector<512x32xf32>
    %c0_28 = arith.constant 0 : index
    %c0_29 = arith.constant 0 : index
    %50 = vector.load %arg9[%c0_28, %c0_29] : memref<32x4xf32, #tpu.memory_space<vmem>>, vector<32x4xf32>
    %cst_30 = arith.constant dense<0.000000e+00> : vector<512x4xf32>
    %51 = tpu.matmul %49, %50, %cst_30 {dimension_numbers = #tpu.dot_dimension_numbers<[1], [0], [0], [1], [0, 0, 1, 1], [], []>} : vector<512x32xf32>, vector<32x4xf32>, vector<512x4xf32> -> vector<512x4xf32>
    %52 = vector.extract_strided_slice %51 {offsets = [0, 0], sizes = [256, 4], strides = [1, 1]} : vector<512x4xf32> to vector<256x4xf32>
    %53 = vector.extract_strided_slice %51 {offsets = [256, 0], sizes = [256, 4], strides = [1, 1]} : vector<512x4xf32> to vector<256x4xf32>
    %54 = arith.mulf %52, %52 : vector<256x4xf32>
    %55 = arith.subf %53, %54 : vector<256x4xf32>
    %cst_31 = arith.constant 0.000000e+00 : f32
    %56 = vector.broadcast %cst_31 : f32 to vector<256x4xf32>
    %57 = arith.maximumf %55, %56 : vector<256x4xf32>
    %cst_32 = arith.constant 9.99999974E-6 : f32
    %58 = vector.broadcast %cst_32 : f32 to vector<256x4xf32>
    %59 = arith.addf %57, %58 : vector<256x4xf32>
    %60 = math.rsqrt %59 : vector<256x4xf32>
    %c0_33 = arith.constant 0 : index
    %c0_34 = arith.constant 0 : index
    %61 = vector.load %arg10[%c0_33, %c0_34] : memref<4x32xf32, #tpu.memory_space<vmem>>, vector<4x32xf32>
    %cst_35 = arith.constant dense<0.000000e+00> : vector<256x32xf32>
    %62 = tpu.matmul %60, %61, %cst_35 {dimension_numbers = #tpu.dot_dimension_numbers<[1], [0], [0], [1], [0, 0, 1, 1], [], []>} : vector<256x4xf32>, vector<4x32xf32>, vector<256x32xf32> -> vector<256x32xf32>
    %63 = arith.mulf %52, %60 : vector<256x4xf32>
    %c0_36 = arith.constant 0 : index
    %c0_37 = arith.constant 0 : index
    %64 = vector.load %arg10[%c0_36, %c0_37] : memref<4x32xf32, #tpu.memory_space<vmem>>, vector<4x32xf32>
    %cst_38 = arith.constant dense<0.000000e+00> : vector<256x32xf32>
    %65 = tpu.matmul %63, %64, %cst_38 {dimension_numbers = #tpu.dot_dimension_numbers<[1], [0], [0], [1], [0, 0, 1, 1], [], []>} : vector<256x4xf32>, vector<4x32xf32>, vector<256x32xf32> -> vector<256x32xf32>
    %66 = vector.broadcast %9 : vector<1x32xf32> to vector<256x32xf32>
    %67 = arith.subf %66, %65 : vector<256x32xf32>
    %68 = arith.mulf %47, %62 : vector<256x32xf32>
    %69 = arith.addf %0, %68 : vector<256x32xf32>
    %70 = arith.addf %69, %67 : vector<256x32xf32>
    %71 = arith.addf %27, %40 : vector<768x16xf32>
    %72 = vector.extract_strided_slice %71 {offsets = [0, 0], sizes = [256, 16], strides = [1, 1]} : vector<768x16xf32> to vector<256x16xf32>
    %73 = vector.extract_strided_slice %71 {offsets = [256, 0], sizes = [256, 16], strides = [1, 1]} : vector<768x16xf32> to vector<256x16xf32>
    %74 = vector.extract_strided_slice %71 {offsets = [512, 0], sizes = [256, 16], strides = [1, 1]} : vector<768x16xf32> to vector<256x16xf32>
    %75 = arith.mulf %72, %72 : vector<256x16xf32>
    %76 = arith.mulf %73, %73 : vector<256x16xf32>
    %77 = arith.addf %75, %76 : vector<256x16xf32>
    %78 = arith.mulf %74, %74 : vector<256x16xf32>
    %79 = arith.addf %77, %78 : vector<256x16xf32>
    %c0_39 = arith.constant 0 : index
    %c0_40 = arith.constant 0 : index
    %80 = vector.load %arg11[%c0_39, %c0_40] : memref<16x4xf32, #tpu.memory_space<vmem>>, vector<16x4xf32>
    %cst_41 = arith.constant dense<0.000000e+00> : vector<256x4xf32>
    %81 = tpu.matmul %79, %80, %cst_41 {dimension_numbers = #tpu.dot_dimension_numbers<[1], [0], [0], [1], [0, 0, 1, 1], [], []>} : vector<256x16xf32>, vector<16x4xf32>, vector<256x4xf32> -> vector<256x4xf32>
    %cst_42 = arith.constant 9.99999974E-6 : f32
    %82 = vector.broadcast %cst_42 : f32 to vector<256x4xf32>
    %83 = arith.addf %81, %82 : vector<256x4xf32>
    %84 = math.rsqrt %83 : vector<256x4xf32>
    %c0_43 = arith.constant 0 : index
    %c0_44 = arith.constant 0 : index
    %85 = vector.load %arg12[%c0_43, %c0_44] : memref<4x16xf32, #tpu.memory_space<vmem>>, vector<4x16xf32>
    %cst_45 = arith.constant dense<0.000000e+00> : vector<256x16xf32>
    %86 = tpu.matmul %84, %85, %cst_45 {dimension_numbers = #tpu.dot_dimension_numbers<[1], [0], [0], [1], [0, 0, 1, 1], [], []>} : vector<256x4xf32>, vector<4x16xf32>, vector<256x16xf32> -> vector<256x16xf32>
    %cst_46 = arith.constant 0.000000e+00 : f32
    %87 = vector.broadcast %cst_46 : f32 to vector<256x96xf32>
    %88 = tpu.concatenate %70, %87 in 1 : vector<256x32xf32>, vector<256x96xf32> -> vector<256x128xf32>
    %c0_47 = arith.constant 0 : index
    %c0_48 = arith.constant 0 : index
    %89 = vector.load %arg14[%c0_47, %c0_48] : memref<256x128xf32, #tpu.memory_space<vmem>>, vector<256x128xf32>
    tpu.vector_store %arg14[%c0_47, %c0_48], %88 {strides = array<i32>} : memref<256x128xf32, #tpu.memory_space<vmem>>, vector<256x128xf32>,
    %90 = arith.mulf %72, %86 : vector<256x16xf32>
    %91 = arith.addf %3, %90 : vector<256x16xf32>
    %c0_49 = arith.constant 0 : index
    %c0_50 = arith.constant 0 : index
    %c0_51 = arith.constant 0 : index
    %92 = vector.load %arg15[%c0_49, %c0_50, %c0_51] : memref<3x256x16xf32, #tpu.memory_space<vmem>>, vector<1x256x16xf32>
    %93 = vector.shape_cast %92 : vector<1x256x16xf32> to vector<256x16xf32>
    %94 = vector.shape_cast %91 : vector<256x16xf32> to vector<1x256x16xf32>
    tpu.vector_store %arg15[%c0_49, %c0_50, %c0_51], %94 {strides = array<i32>} : memref<3x256x16xf32, #tpu.memory_space<vmem>>, vector<1x256x16xf32>,
    %95 = arith.mulf %73, %86 : vector<256x16xf32>
    %96 = arith.addf %4, %95 : vector<256x16xf32>
    %c1_52 = arith.constant 1 : index
    %c0_53 = arith.constant 0 : index
    %c0_54 = arith.constant 0 : index
    %97 = vector.load %arg15[%c1_52, %c0_53, %c0_54] : memref<3x256x16xf32, #tpu.memory_space<vmem>>, vector<1x256x16xf32>
    %98 = vector.shape_cast %97 : vector<1x256x16xf32> to vector<256x16xf32>
    %99 = vector.shape_cast %96 : vector<256x16xf32> to vector<1x256x16xf32>
    tpu.vector_store %arg15[%c1_52, %c0_53, %c0_54], %99 {strides = array<i32>} : memref<3x256x16xf32, #tpu.memory_space<vmem>>, vector<1x256x16xf32>,
    %100 = arith.mulf %74, %86 : vector<256x16xf32>
    %101 = arith.addf %5, %100 : vector<256x16xf32>
    %c2_55 = arith.constant 2 : index
    %c0_56 = arith.constant 0 : index
    %c0_57 = arith.constant 0 : index
    %102 = vector.load %arg15[%c2_55, %c0_56, %c0_57] : memref<3x256x16xf32, #tpu.memory_space<vmem>>, vector<1x256x16xf32>
    %103 = vector.shape_cast %102 : vector<1x256x16xf32> to vector<256x16xf32>
    %104 = vector.shape_cast %101 : vector<256x16xf32> to vector<1x256x16xf32>
    tpu.vector_store %arg15[%c2_55, %c0_56, %c0_57], %104 {strides = array<i32>} : memref<3x256x16xf32, #tpu.memory_space<vmem>>, vector<1x256x16xf32>,
    return
  }
  func.func @transform_0(%arg0: i32) -> (i32, i32) {
    %c0_i32 = arith.constant 0 : i32
    %c0_i32_0 = arith.constant 0 : i32
    return %arg0, %c0_i32 : i32, i32
  }
  func.func @transform_1(%arg0: i32) -> (i32, i32, i32) {
    %c0_i32 = arith.constant 0 : i32
    %c0_i32_0 = arith.constant 0 : i32
    %c0_i32_1 = arith.constant 0 : i32
    return %c0_i32, %arg0, %c0_i32_0 : i32, i32, i32
  }
  func.func @transform_2(%arg0: i32) -> (i32, i32) {
    %c0_i32 = arith.constant 0 : i32
    %c0_i32_0 = arith.constant 0 : i32
    %c0_i32_1 = arith.constant 0 : i32
    return %c0_i32, %c0_i32_0 : i32, i32
  }
  func.func @transform_3(%arg0: i32) -> (i32, i32) {
    %c0_i32 = arith.constant 0 : i32
    %c0_i32_0 = arith.constant 0 : i32
    %c0_i32_1 = arith.constant 0 : i32
    return %c0_i32, %c0_i32_0 : i32, i32
  }
  func.func @transform_4(%arg0: i32) -> (i32, i32) {
    %c0_i32 = arith.constant 0 : i32
    %c0_i32_0 = arith.constant 0 : i32
    %c0_i32_1 = arith.constant 0 : i32
    return %c0_i32, %c0_i32_0 : i32, i32
  }
  func.func @transform_5(%arg0: i32) -> (i32, i32) {
    %c0_i32 = arith.constant 0 : i32
    %c0_i32_0 = arith.constant 0 : i32
    %c0_i32_1 = arith.constant 0 : i32
    return %c0_i32, %c0_i32_0 : i32, i32
  }
  func.func @transform_6(%arg0: i32) -> (i32, i32) {
    %c0_i32 = arith.constant 0 : i32
    %c0_i32_0 = arith.constant 0 : i32
    %c0_i32_1 = arith.constant 0 : i32
    return %c0_i32, %c0_i32_0 : i32, i32
  }
  func.func @transform_7(%arg0: i32) -> (i32, i32) {
    %c0_i32 = arith.constant 0 : i32
    %c0_i32_0 = arith.constant 0 : i32
    %c0_i32_1 = arith.constant 0 : i32
    return %c0_i32, %c0_i32_0 : i32, i32
  }
  func.func @transform_8(%arg0: i32) -> (i32, i32) {
    %c0_i32 = arith.constant 0 : i32
    %c0_i32_0 = arith.constant 0 : i32
    %c0_i32_1 = arith.constant 0 : i32
    return %c0_i32, %c0_i32_0 : i32, i32
  }
  func.func @transform_9(%arg0: i32) -> (i32, i32) {
    %c0_i32 = arith.constant 0 : i32
    %c0_i32_0 = arith.constant 0 : i32
    %c0_i32_1 = arith.constant 0 : i32
    return %c0_i32, %c0_i32_0 : i32, i32
  }
  func.func @transform_10(%arg0: i32) -> (i32, i32) {
    %c0_i32 = arith.constant 0 : i32
    %c0_i32_0 = arith.constant 0 : i32
    %c0_i32_1 = arith.constant 0 : i32
    return %c0_i32, %c0_i32_0 : i32, i32
  }
  func.func @transform_11(%arg0: i32) -> (i32, i32) {
    %c0_i32 = arith.constant 0 : i32
    %c0_i32_0 = arith.constant 0 : i32
    %c0_i32_1 = arith.constant 0 : i32
    return %c0_i32, %c0_i32_0 : i32, i32
  }
  func.func @transform_12(%arg0: i32) -> (i32, i32) {
    %c0_i32 = arith.constant 0 : i32
    %c0_i32_0 = arith.constant 0 : i32
    %c0_i32_1 = arith.constant 0 : i32
    return %c0_i32, %c0_i32_0 : i32, i32
  }
  func.func @transform_13(%arg0: i32) -> (i32, i32) {
    %c0_i32 = arith.constant 0 : i32
    %c0_i32_0 = arith.constant 0 : i32
    return %arg0, %c0_i32 : i32, i32
  }
  func.func @transform_14(%arg0: i32) -> (i32, i32, i32) {
    %c0_i32 = arith.constant 0 : i32
    %c0_i32_0 = arith.constant 0 : i32
    %c0_i32_1 = arith.constant 0 : i32
    return %c0_i32, %arg0, %c0_i32_0 : i32, i32, i32
  }
}

</mosaic_0001>

<llo_original>
// kernel: tpu_custom_call.1
$region0: #{tpu_custom_call.1}
  #allocation0 [shape = 'u32[]', space=smem, size = 0x4, offset = 0x4, fixed_abs, tag = 'smem constant byte address 0x4 - core index']
  #allocation1 [shape = 'u32[144,128]{1,0:T(1,128)}', space=vmem, size = 0x12000, scoped, tag = 'internal scratch']
  %s0 = inlined_call_operand.vmem [shape: f32[512,32], index: 0, kind: input, shape index: {}]
  %s1 = inlined_call_operand.vmem [shape: f32[3,512,16], index: 1, kind: input, shape index: {}]
  %s2 = inlined_call_operand.vmem [shape: f32[32,40], index: 2, kind: input, shape index: {}]
  %s3 = inlined_call_operand.vmem [shape: f32[40,32], index: 3, kind: input, shape index: {}]
  %s4 = inlined_call_operand.vmem [shape: f32[32,32], index: 4, kind: input, shape index: {}]
  %s5 = inlined_call_operand.vmem [shape: f32[16,24], index: 5, kind: input, shape index: {}]
  %s6 = inlined_call_operand.vmem [shape: f32[8,32], index: 6, kind: input, shape index: {}]
  %s7 = inlined_call_operand.vmem [shape: f32[8,16], index: 7, kind: input, shape index: {}]
  %s8 = inlined_call_operand.vmem [shape: f32[32,4], index: 8, kind: input, shape index: {}]
  %s9 = inlined_call_operand.vmem [shape: f32[4,32], index: 9, kind: input, shape index: {}]
  %s10 = inlined_call_operand.vmem [shape: f32[16,4], index: 10, kind: input, shape index: {}]
  %s11 = inlined_call_operand.vmem [shape: f32[4,16], index: 11, kind: input, shape index: {}]
  %s12 = inlined_call_operand.vmem [shape: f32[8,128], index: 12, kind: input, shape index: {}]
  %s13 = inlined_call_operand.hbm [shape: f32[512,128], index: 13, kind: output, shape index: {0}]
  %s14 = inlined_call_operand.vmem [shape: f32[3,512,16], index: 14, kind: output, shape index: {1}]
  %15 = xla_tuple %s13, %s14
  %s16 = sld [smem:[#allocation0]]
  $region165: #{tpu_custom_call.1} parent=0
    _
  %s18 = ssub.s32 1, %s16
  %s19 = scalar_select 0, %s18, %s16
  $region1: #{tpu_custom_call.1} parent=0
    #allocation2 [shape = 'u8[786432]{0}', space=vmem, size = 0xc0000, scoped, tag = 'input window, operand 1']
    #allocation3 [shape = 'u8[262144]{0}', space=vmem, size = 0x40000, scoped, tag = 'output window, operand 0']
    #allocation4 [shape = 's32[2]{0}', space=sflag, size = 0x8, scoped, tag = 'scoped memory for tpu_custom_call.1']
    #allocation5 [shape = 'u8[786432]{0}', space=vmem, size = 0xc0000, scoped, tag = 'output window, operand 1']
    %20 = vsyncpa [#allocation4], 0
    %s21 = scalar_lea.sflag [#allocation4], 1
    %22 = vsyncpa %s21, 0
    loop: start=0, step=1, limit=4
    $region2: #{tpu_custom_call.1} parent=1 // loop_pre_header
      _
    $region3: #{tpu_custom_call.1} parent=1 // loop_header
      %s24 = sphi 0, %s28
      %p25 = scmp.ge.s32.totalorder %s24, 4
      %s34 = sphi 0, %s36
      %s37 = sphi 0, %s34
      %s38 = sphi 0, %s37
      %s54 = sphi 0, %s38
      %s60 = sphi 0, %s62
      %s63 = sphi 0, %s60
      %s64 = sphi 0, %s63
      %s80 = sphi 0, %s64
      %s84 = sphi 0, %s84
      %s86 = sphi 0, %s84
      %s87 = sphi 0, %s86
      %s101 = sphi 0, %s87
      %s105 = sphi 0, %s105
      %s107 = sphi 0, %s105
      %s108 = sphi 0, %s107
      %s122 = sphi 0, %s108
      %s126 = sphi 0, %s126
      %s128 = sphi 0, %s126
      %s129 = sphi 0, %s128
      %s143 = sphi 0, %s129
      %s147 = sphi 0, %s147
      %s149 = sphi 0, %s147
      %s150 = sphi 0, %s149
      %s164 = sphi 0, %s150
      %s168 = sphi 0, %s168
      %s170 = sphi 0, %s168
      %s171 = sphi 0, %s170
      %s185 = sphi 0, %s171
      %s189 = sphi 0, %s189
      %s191 = sphi 0, %s189
      %s192 = sphi 0, %s191
      %s206 = sphi 0, %s192
      %s210 = sphi 0, %s210
      %s212 = sphi 0, %s210
      %s213 = sphi 0, %s212
      %s227 = sphi 0, %s213
      %s231 = sphi 0, %s231
      %s233 = sphi 0, %s231
      %s234 = sphi 0, %s233
      %s248 = sphi 0, %s234
      %s252 = sphi 0, %s252
      %s254 = sphi 0, %s252
      %s255 = sphi 0, %s254
      %s269 = sphi 0, %s255
      %s273 = sphi 0, %s273
      %s275 = sphi 0, %s273
      %s276 = sphi 0, %s275
      %s290 = sphi 0, %s276
      %s294 = sphi 0, %s294
      %s296 = sphi 0, %s294
      %s297 = sphi 0, %s296
      %s311 = sphi 0, %s297
      %s317 = sphi 0, %s319
      %s320 = sphi 0, %s317
      %s321 = sphi 0, %s320
      %s337 = sphi 0, %s321
      %s343 = sphi 0, %s345
      %s346 = sphi 0, %s343
      %s347 = sphi 0, %s346
      %s363 = sphi 0, %s347
    $region4: #{tpu_custom_call.1} parent=1 // loop_header_branch
      %27 = sbr.rel (%p25) target = $region8
    $region5: #{tpu_custom_call.1} parent=1 // loop_body
      %s29 = ssub.s32 %s24, 1
      %s30 = ssub.s32 %s24, 2
      %s31 = sadd.s32 %s24, 1
      %s32 = ssub.s32 %s24, %s31
      %p33 = scmp.eq.s32.totalorder %s32, 0
      %s35 = sadd.s32 %s34, 1
      %s36 = scalar_select %p33, %s34, %s35
      %p39 = pneg %p33
      %p40 = scmp.eq.s32.totalorder %s24, 1
      %p41 = por %p39, %p40
      %p42 = scmp.ne.s32.totalorder %s34, %s37
      %p43 = scmp.eq.s32.totalorder %s24, 0
      %p44 = por %p42, %p43
      %p45 = scmp.ne.s32.totalorder %s34, %s37
      %p46 = scmp.eq.s32.totalorder %s29, 1
      %p47 = por %p45, %p46
      %p48 = scmp.ne.s32.totalorder %s37, %s38
      %p49 = scmp.eq.s32.totalorder %s29, 0
      %p50 = por %p48, %p49
      %p51 = scmp.ne.s32.totalorder %s37, %s38
      %p52 = scmp.eq.s32.totalorder %s30, 1
      %p53 = por %p51, %p52
      %p55 = scmp.ne.s32.totalorder %s38, %s54
      %p56 = scmp.eq.s32.totalorder %s30, 0
      %p57 = por %p55, %p56
      %s58 = ssub.s32 %s24, %s31
      %p59 = scmp.eq.s32.totalorder %s58, 0
      %s61 = sadd.s32 %s60, 1
      %s62 = scalar_select %p59, %s60, %s61
      %p65 = pneg %p59
      %p66 = scmp.eq.s32.totalorder %s24, 1
      %p67 = por %p65, %p66
      %p68 = scmp.ne.s32.totalorder %s60, %s63
      %p69 = scmp.eq.s32.totalorder %s24, 0
      %p70 = por %p68, %p69
      %p71 = scmp.ne.s32.totalorder %s60, %s63
      %p72 = scmp.eq.s32.totalorder %s29, 1
      %p73 = por %p71, %p72
      %p74 = scmp.ne.s32.totalorder %s63, %s64
      %p75 = scmp.eq.s32.totalorder %s29, 0
      %p76 = por %p74, %p75
      %p77 = scmp.ne.s32.totalorder %s63, %s64
      %p78 = scmp.eq.s32.totalorder %s30, 1
      %p79 = por %p77, %p78
      %p81 = scmp.ne.s32.totalorder %s64, %s80
      %p82 = scmp.eq.s32.totalorder %s30, 0
      %p83 = por %p81, %p82
      %s85 = sadd.s32 %s84, 1
      %p88 = scmp.eq.s32.totalorder %s24, 1
      %p89 = scmp.ne.s32.totalorder %s84, %s86
      %p90 = scmp.eq.s32.totalorder %s24, 0
      %p91 = por %p89, %p90
      %p92 = scmp.ne.s32.totalorder %s84, %s86
      %p93 = scmp.eq.s32.totalorder %s29, 1
      %p94 = por %p92, %p93
      %p95 = scmp.ne.s32.totalorder %s86, %s87
      %p96 = scmp.eq.s32.totalorder %s29, 0
      %p97 = por %p95, %p96
      %p98 = scmp.ne.s32.totalorder %s86, %s87
      %p99 = scmp.eq.s32.totalorder %s30, 1
      %p100 = por %p98, %p99
      %p102 = scmp.ne.s32.totalorder %s87, %s101
      %p103 = scmp.eq.s32.totalorder %s30, 0
      %p104 = por %p102, %p103
      %s106 = sadd.s32 %s105, 1
      %p109 = scmp.eq.s32.totalorder %s24, 1
      %p110 = scmp.ne.s32.totalorder %s105, %s107
      %p111 = scmp.eq.s32.totalorder %s24, 0
      %p112 = por %p110, %p111
      %p113 = scmp.ne.s32.totalorder %s105, %s107
      %p114 = scmp.eq.s32.totalorder %s29, 1
      %p115 = por %p113, %p114
      %p116 = scmp.ne.s32.totalorder %s107, %s108
      %p117 = scmp.eq.s32.totalorder %s29, 0
      %p118 = por %p116, %p117
      %p119 = scmp.ne.s32.totalorder %s107, %s108
      %p120 = scmp.eq.s32.totalorder %s30, 1
      %p121 = por %p119, %p120
      %p123 = scmp.ne.s32.totalorder %s108, %s122
      %p124 = scmp.eq.s32.totalorder %s30, 0
      %p125 = por %p123, %p124
      %s127 = sadd.s32 %s126, 1
      %p130 = scmp.eq.s32.totalorder %s24, 1
      %p131 = scmp.ne.s32.totalorder %s126, %s128
      %p132 = scmp.eq.s32.totalorder %s24, 0
      %p133 = por %p131, %p132
      %p134 = scmp.ne.s32.totalorder %s126, %s128
      %p135 = scmp.eq.s32.totalorder %s29, 1
      %p136 = por %p134, %p135
      %p137 = scmp.ne.s32.totalorder %s128, %s129
      %p138 = scmp.eq.s32.totalorder %s29, 0
      %p139 = por %p137, %p138
      %p140 = scmp.ne.s32.totalorder %s128, %s129
      %p141 = scmp.eq.s32.totalorder %s30, 1
      %p142 = por %p140, %p141
      %p144 = scmp.ne.s32.totalorder %s129, %s143
      %p145 = scmp.eq.s32.totalorder %s30, 0
      %p146 = por %p144, %p145
      %s148 = sadd.s32 %s147, 1
      %p151 = scmp.eq.s32.totalorder %s24, 1
      %p152 = scmp.ne.s32.totalorder %s147, %s149
      %p153 = scmp.eq.s32.totalorder %s24, 0
      %p154 = por %p152, %p153
      %p155 = scmp.ne.s32.totalorder %s147, %s149
      %p156 = scmp.eq.s32.totalorder %s29, 1
      %p157 = por %p155, %p156
      %p158 = scmp.ne.s32.totalorder %s149, %s150
      %p159 = scmp.eq.s32.totalorder %s29, 0
      %p160 = por %p158, %p159
      %p161 = scmp.ne.s32.totalorder %s149, %s150
      %p162 = scmp.eq.s32.totalorder %s30, 1
      %p163 = por %p161, %p162
      %p165 = scmp.ne.s32.totalorder %s150, %s164
      %p166 = scmp.eq.s32.totalorder %s30, 0
      %p167 = por %p165, %p166
      %s169 = sadd.s32 %s168, 1
      %p172 = scmp.eq.s32.totalorder %s24, 1
      %p173 = scmp.ne.s32.totalorder %s168, %s170
      %p174 = scmp.eq.s32.totalorder %s24, 0
      %p175 = por %p173, %p174
      %p176 = scmp.ne.s32.totalorder %s168, %s170
      %p177 = scmp.eq.s32.totalorder %s29, 1
      %p178 = por %p176, %p177
      %p179 = scmp.ne.s32.totalorder %s170, %s171
      %p180 = scmp.eq.s32.totalorder %s29, 0
      %p181 = por %p179, %p180
      %p182 = scmp.ne.s32.totalorder %s170, %s171
      %p183 = scmp.eq.s32.totalorder %s30, 1
      %p184 = por %p182, %p183
      %p186 = scmp.ne.s32.totalorder %s171, %s185
      %p187 = scmp.eq.s32.totalorder %s30, 0
      %p188 = por %p186, %p187
      %s190 = sadd.s32 %s189, 1
      %p193 = scmp.eq.s32.totalorder %s24, 1
      %p194 = scmp.ne.s32.totalorder %s189, %s191
      %p195 = scmp.eq.s32.totalorder %s24, 0
      %p196 = por %p194, %p195
      %p197 = scmp.ne.s32.totalorder %s189, %s191
      %p198 = scmp.eq.s32.totalorder %s29, 1
      %p199 = por %p197, %p198
      %p200 = scmp.ne.s32.totalorder %s191, %s192
      %p201 = scmp.eq.s32.totalorder %s29, 0
      %p202 = por %p200, %p201
      %p203 = scmp.ne.s32.totalorder %s191, %s192
      %p204 = scmp.eq.s32.totalorder %s30, 1
      %p205 = por %p203, %p204
      %p207 = scmp.ne.s32.totalorder %s192, %s206
      %p208 = scmp.eq.s32.totalorder %s30, 0
      %p209 = por %p207, %p208
      %s211 = sadd.s32 %s210, 1
      %p214 = scmp.eq.s32.totalorder %s24, 1
      %p215 = scmp.ne.s32.totalorder %s210, %s212
      %p216 = scmp.eq.s32.totalorder %s24, 0
      %p217 = por %p215, %p216
      %p218 = scmp.ne.s32.totalorder %s210, %s212
      %p219 = scmp.eq.s32.totalorder %s29, 1
      %p220 = por %p218, %p219
      %p221 = scmp.ne.s32.totalorder %s212, %s213
      %p222 = scmp.eq.s32.totalorder %s29, 0
      %p223 = por %p221, %p222
      %p224 = scmp.ne.s32.totalorder %s212, %s213
      %p225 = scmp.eq.s32.totalorder %s30, 1
      %p226 = por %p224, %p225
      %p228 = scmp.ne.s32.totalorder %s213, %s227
      %p229 = scmp.eq.s32.totalorder %s30, 0
      %p230 = por %p228, %p229
      %s232 = sadd.s32 %s231, 1
      %p235 = scmp.eq.s32.totalorder %s24, 1
      %p236 = scmp.ne.s32.totalorder %s231, %s233
      %p237 = scmp.eq.s32.totalorder %s24, 0
      %p238 = por %p236, %p237
      %p239 = scmp.ne.s32.totalorder %s231, %s233
      %p240 = scmp.eq.s32.totalorder %s29, 1
      %p241 = por %p239, %p240
      %p242 = scmp.ne.s32.totalorder %s233, %s234
      %p243 = scmp.eq.s32.totalorder %s29, 0
      %p244 = por %p242, %p243
      %p245 = scmp.ne.s32.totalorder %s233, %s234
      %p246 = scmp.eq.s32.totalorder %s30, 1
      %p247 = por %p245, %p246
      %p249 = scmp.ne.s32.totalorder %s234, %s248
      %p250 = scmp.eq.s32.totalorder %s30, 0
      %p251 = por %p249, %p250
      %s253 = sadd.s32 %s252, 1
      %p256 = scmp.eq.s32.totalorder %s24, 1
      %p257 = scmp.ne.s32.totalorder %s252, %s254
      %p258 = scmp.eq.s32.totalorder %s24, 0
      %p259 = por %p257, %p258
      %p260 = scmp.ne.s32.totalorder %s252, %s254
      %p261 = scmp.eq.s32.totalorder %s29, 1
      %p262 = por %p260, %p261
      %p263 = scmp.ne.s32.totalorder %s254, %s255
      %p264 = scmp.eq.s32.totalorder %s29, 0
      %p265 = por %p263, %p264
      %p266 = scmp.ne.s32.totalorder %s254, %s255
      %p267 = scmp.eq.s32.totalorder %s30, 1
      %p268 = por %p266, %p267
      %p270 = scmp.ne.s32.totalorder %s255, %s269
      %p271 = scmp.eq.s32.totalorder %s30, 0
      %p272 = por %p270, %p271
      %s274 = sadd.s32 %s273, 1
      %p277 = scmp.eq.s32.totalorder %s24, 1
      %p278 = scmp.ne.s32.totalorder %s273, %s275
      %p279 = scmp.eq.s32.totalorder %s24, 0
      %p280 = por %p278, %p279
      %p281 = scmp.ne.s32.totalorder %s273, %s275
      %p282 = scmp.eq.s32.totalorder %s29, 1
      %p283 = por %p281, %p282
      %p284 = scmp.ne.s32.totalorder %s275, %s276
      %p285 = scmp.eq.s32.totalorder %s29, 0
      %p286 = por %p284, %p285
      %p287 = scmp.ne.s32.totalorder %s275, %s276
      %p288 = scmp.eq.s32.totalorder %s30, 1
      %p289 = por %p287, %p288
      %p291 = scmp.ne.s32.totalorder %s276, %s290
      %p292 = scmp.eq.s32.totalorder %s30, 0
      %p293 = por %p291, %p292
      %s295 = sadd.s32 %s294, 1
      %p298 = scmp.eq.s32.totalorder %s24, 1
      %p299 = scmp.ne.s32.totalorder %s294, %s296
      %p300 = scmp.eq.s32.totalorder %s24, 0
      %p301 = por %p299, %p300
      %p302 = scmp.ne.s32.totalorder %s294, %s296
      %p303 = scmp.eq.s32.totalorder %s29, 1
      %p304 = por %p302, %p303
      %p305 = scmp.ne.s32.totalorder %s296, %s297
      %p306 = scmp.eq.s32.totalorder %s29, 0
      %p307 = por %p305, %p306
      %p308 = scmp.ne.s32.totalorder %s296, %s297
      %p309 = scmp.eq.s32.totalorder %s30, 1
      %p310 = por %p308, %p309
      %p312 = scmp.ne.s32.totalorder %s297, %s311
      %p313 = scmp.eq.s32.totalorder %s30, 0
      %p314 = por %p312, %p313
      %s315 = ssub.s32 %s24, %s31
      %p316 = scmp.eq.s32.totalorder %s315, 0
      %s318 = sadd.s32 %s317, 1
      %s319 = scalar_select %p316, %s317, %s318
      %p322 = pneg %p316
      %p323 = scmp.eq.s32.totalorder %s24, 1
      %p324 = por %p322, %p323
      %p325 = scmp.ne.s32.totalorder %s317, %s320
      %p326 = scmp.eq.s32.totalorder %s24, 0
      %p327 = por %p325, %p326
      %p328 = scmp.ne.s32.totalorder %s317, %s320
      %p329 = scmp.eq.s32.totalorder %s29, 1
      %p330 = por %p328, %p329
      %p331 = scmp.ne.s32.totalorder %s320, %s321
      %p332 = scmp.eq.s32.totalorder %s29, 0
      %p333 = por %p331, %p332
      %p334 = scmp.ne.s32.totalorder %s320, %s321
      %p335 = scmp.eq.s32.totalorder %s30, 1
      %p336 = por %p334, %p335
      %p338 = scmp.ne.s32.totalorder %s321, %s337
      %p339 = scmp.eq.s32.totalorder %s30, 0
      %p340 = por %p338, %p339
      %s341 = ssub.s32 %s24, %s31
      %p342 = scmp.eq.s32.totalorder %s341, 0
      %s344 = sadd.s32 %s343, 1
      %s345 = scalar_select %p342, %s343, %s344
      %p348 = pneg %p342
      %p349 = scmp.eq.s32.totalorder %s24, 1
      %p350 = por %p348, %p349
      %p351 = scmp.ne.s32.totalorder %s343, %s346
      %p352 = scmp.eq.s32.totalorder %s24, 0
      %p353 = por %p351, %p352
      %p354 = scmp.ne.s32.totalorder %s343, %s346
      %p355 = scmp.eq.s32.totalorder %s29, 1
      %p356 = por %p354, %p355
      %p357 = scmp.ne.s32.totalorder %s346, %s347
      %p358 = scmp.eq.s32.totalorder %s29, 0
      %p359 = por %p357, %p358
      %p360 = scmp.ne.s32.totalorder %s346, %s347
      %p361 = scmp.eq.s32.totalorder %s30, 1
      %p362 = por %p360, %p361
      %p364 = scmp.ne.s32.totalorder %s347, %s363
      %p365 = scmp.eq.s32.totalorder %s30, 0
      %p366 = por %p364, %p365
      %p367 = scmp.le.s32.totalorder 1, %s24
      %p368 = scmp.lt.s32.totalorder %s24, 3
      %p369 = pnand %p367, %p368
      %p370 = pneg %p369
      // Predicated region
      $region9: #{tpu_custom_call.1} parent=5 // pred_check
        _
      $region10: #{tpu_custom_call.1} parent=5 // pred_check_branch
        %372 = sbr.rel (%p369) target = $region12
      $region11: #{tpu_custom_call.1} parent=5 // pred_region
        %s373 = ssub.s32 %s24, 1
        // Predicated region
        $region13: #{tpu_custom_call.1} parent=11 // pred_check
          %p374 = pneg %p97
        $region14: #{tpu_custom_call.1} parent=11 // pred_check_branch
          %376 = sbr.rel (%p374) target = $region16
        $region15: #{tpu_custom_call.1} parent=11 // pred_region
          _
        $region16: #{tpu_custom_call.1} parent=11 // pred_fallthru
          _
        // Predicated region
        $region17: #{tpu_custom_call.1} parent=11 // pred_check
          %p377 = pneg %p118
        $region18: #{tpu_custom_call.1} parent=11 // pred_check_branch
          %379 = sbr.rel (%p377) target = $region20
        $region19: #{tpu_custom_call.1} parent=11 // pred_region
          _
        $region20: #{tpu_custom_call.1} parent=11 // pred_fallthru
          _
        // Predicated region
        $region21: #{tpu_custom_call.1} parent=11 // pred_check
          %p380 = pneg %p139
        $region22: #{tpu_custom_call.1} parent=11 // pred_check_branch
          %382 = sbr.rel (%p380) target = $region24
        $region23: #{tpu_custom_call.1} parent=11 // pred_region
          _
        $region24: #{tpu_custom_call.1} parent=11 // pred_fallthru
          _
        // Predicated region
        $region25: #{tpu_custom_call.1} parent=11 // pred_check
          %p383 = pneg %p160
        $region26: #{tpu_custom_call.1} parent=11 // pred_check_branch
          %385 = sbr.rel (%p383) target = $region28
        $region27: #{tpu_custom_call.1} parent=11 // pred_region
          _
        $region28: #{tpu_custom_call.1} parent=11 // pred_fallthru
          _
        // Predicated region
        $region29: #{tpu_custom_call.1} parent=11 // pred_check
          %p386 = pneg %p181
        $region30: #{tpu_custom_call.1} parent=11 // pred_check_branch
          %388 = sbr.rel (%p386) target = $region32
        $region31: #{tpu_custom_call.1} parent=11 // pred_region
          _
        $region32: #{tpu_custom_call.1} parent=11 // pred_fallthru
          _
        // Predicated region
        $region33: #{tpu_custom_call.1} parent=11 // pred_check
          %p389 = pneg %p202
        $region34: #{tpu_custom_call.1} parent=11 // pred_check_branch
          %391 = sbr.rel (%p389) target = $region36
        $region35: #{tpu_custom_call.1} parent=11 // pred_region
          _
        $region36: #{tpu_custom_call.1} parent=11 // pred_fallthru
          _
        // Predicated region
        $region37: #{tpu_custom_call.1} parent=11 // pred_check
          %p392 = pneg %p223
        $region38: #{tpu_custom_call.1} parent=11 // pred_check_branch
          %394 = sbr.rel (%p392) target = $region40
        $region39: #{tpu_custom_call.1} parent=11 // pred_region
          _
        $region40: #{tpu_custom_call.1} parent=11 // pred_fallthru
          _
        // Predicated region
        $region41: #{tpu_custom_call.1} parent=11 // pred_check
          %p395 = pneg %p244
        $region42: #{tpu_custom_call.1} parent=11 // pred_check_branch
          %397 = sbr.rel (%p395) target = $region44
        $region43: #{tpu_custom_call.1} parent=11 // pred_region
          _
        $region44: #{tpu_custom_call.1} parent=11 // pred_fallthru
          _
        // Predicated region
        $region45: #{tpu_custom_call.1} parent=11 // pred_check
          %p398 = pneg %p265
        $region46: #{tpu_custom_call.1} parent=11 // pred_check_branch
          %400 = sbr.rel (%p398) target = $region48
        $region47: #{tpu_custom_call.1} parent=11 // pred_region
          _
        $region48: #{tpu_custom_call.1} parent=11 // pred_fallthru
          _
        // Predicated region
        $region49: #{tpu_custom_call.1} parent=11 // pred_check
          %p401 = pneg %p286
        $region50: #{tpu_custom_call.1} parent=11 // pred_check_branch
          %403 = sbr.rel (%p401) target = $region52
        $region51: #{tpu_custom_call.1} parent=11 // pred_region
          _
        $region52: #{tpu_custom_call.1} parent=11 // pred_fallthru
          _
        // Predicated region
        $region53: #{tpu_custom_call.1} parent=11 // pred_check
          %p404 = pneg %p307
        $region54: #{tpu_custom_call.1} parent=11 // pred_check_branch
          %406 = sbr.rel (%p404) target = $region56
        $region55: #{tpu_custom_call.1} parent=11 // pred_region
          _
        $region56: #{tpu_custom_call.1} parent=11 // pred_fallthru
          _
      $region12: #{tpu_custom_call.1} parent=5 // pred_fallthru
        _
      %p407 = scmp.lt.s32.totalorder %s24, 2
      // Predicated region
      $region57: #{tpu_custom_call.1} parent=5 // pred_check
        %p408 = pneg %p407
      $region58: #{tpu_custom_call.1} parent=5 // pred_check_branch
        %410 = sbr.rel (%p408) target = $region60
      $region59: #{tpu_custom_call.1} parent=5 // pred_region
        // Predicated region
        $region61: #{tpu_custom_call.1} parent=59 // pred_check
          %p411 = pneg %p44
        $region62: #{tpu_custom_call.1} parent=59 // pred_check_branch
          %413 = sbr.rel (%p411) target = $region64
        $region63: #{tpu_custom_call.1} parent=59 // pred_region
          %s414 = smul.u32 32, %s24
          %p415 = scmp.lt.s32.totalorder %s414, 63
          %s416 = scalar_select %p415, %s414, 63
          %s417 = smul.addr %s416, 8
          %s418 = scalar_lea.vmem %s0, %s417
          %s419 = smul.u32 32, %s24
        $region64: #{tpu_custom_call.1} parent=59 // pred_fallthru
          _
        // Predicated region
        $region65: #{tpu_custom_call.1} parent=59 // pred_check
          %p420 = pneg %p70
        $region66: #{tpu_custom_call.1} parent=59 // pred_check_branch
          %422 = sbr.rel (%p420) target = $region68
        $region67: #{tpu_custom_call.1} parent=59 // pred_region
          %s423 = sand.u32 %s60, 1
          %s424 = sand.u32 %s60, 1
          %s425 = smul.addr %s424, 768
          %s426 = scalar_lea.vmem [#allocation2], %s425
          %s427 = smul.u32 32, %s24
          %s428 = smul.addr %s427, 8
          %s429 = scalar_lea.vmem %s1, %s428
          // Predicated region
          $region69: #{tpu_custom_call.1} parent=67 // pred_check
            _
          $region70: #{tpu_custom_call.1} parent=67 // pred_check_branch
            %431 = sbr.rel (0) target = $region72
          $region71: #{tpu_custom_call.1} parent=67 // pred_region
            // Predicated region
            $region73: #{tpu_custom_call.1} parent=71 // pred_check
              _
            $region74: #{tpu_custom_call.1} parent=71 // pred_check_branch
              %433 = sbr.rel (0) target = $region76
            $region75: #{tpu_custom_call.1} parent=71 // pred_region
              // Predicated region
              $region88: #{tpu_custom_call.1} parent=75 // pred_check
                _
              $region89: #{tpu_custom_call.1} parent=75 // pred_check_branch
                %638 = sbr.rel (0) target = $region91
              $region90: #{tpu_custom_call.1} parent=75 // pred_region
                loop: start=0, step=1, limit=1
                $region92: #{tpu_custom_call.1} parent=90 // loop_pre_header
                  _
                $region93: #{tpu_custom_call.1} parent=90 // loop_header
                  %s640 = sphi 0, %s644
                  %p641 = scmp.ge.s32.totalorder %s640, 1
                  %s645 = sphi %s429, %s429
                  %s646 = sphi %s426, %s426
                $region94: #{tpu_custom_call.1} parent=90 // loop_header_branch
                  %643 = sbr.rel (%p641) target = $region98
                $region95: #{tpu_custom_call.1} parent=90 // loop_body
                  %v647 = vld [vmem:[%s645] sm:$0xff]
                  %648 = vst [vmem:[%s646] sm:$0xff] %v647
                  %v649 = vld [vmem:[%s645 + $0x8] sm:$0xff]
                  %650 = vst [vmem:[%s646 + $0x8] sm:$0xff] %v649
                  %v651 = vld [vmem:[%s645 + $0x10] sm:$0xff]
                  %652 = vst [vmem:[%s646 + $0x10] sm:$0xff] %v651
                  %v653 = vld [vmem:[%s645 + $0x18] sm:$0xff]
                  %654 = vst [vmem:[%s646 + $0x18] sm:$0xff] %v653
                  %v655 = vld [vmem:[%s645 + $0x20] sm:$0xff]
                  %656 = vst [vmem:[%s646 + $0x20] sm:$0xff] %v655
                  %v657 = vld [vmem:[%s645 + $0x28] sm:$0xff]
                  %658 = vst [vmem:[%s646 + $0x28] sm:$0xff] %v657
                  %v659 = vld [vmem:[%s645 + $0x30] sm:$0xff]
                  %660 = vst [vmem:[%s646 + $0x30] sm:$0xff] %v659
                  %v661 = vld [vmem:[%s645 + $0x38] sm:$0xff]
                  %662 = vst [vmem:[%s646 + $0x38] sm:$0xff] %v661
                  %v663 = vld [vmem:[%s645 + $0x40] sm:$0xff]
                  %664 = vst [vmem:[%s646 + $0x40] sm:$0xff] %v663
                  %v665 = vld [vmem:[%s645 + $0x48] sm:$0xff]
                  %666 = vst [vmem:[%s646 + $0x48] sm:$0xff] %v665
                  %v667 = vld [vmem:[%s645 + $0x50] sm:$0xff]
                  %668 = vst [vmem:[%s646 + $0x50] sm:$0xff] %v667
                  %v669 = vld [vmem:[%s645 + $0x58] sm:$0xff]
                  %670 = vst [vmem:[%s646 + $0x58] sm:$0xff] %v669
                  %v671 = vld [vmem:[%s645 + $0x60] sm:$0xff]
                  %672 = vst [vmem:[%s646 + $0x60] sm:$0xff] %v671
                  %v673 = vld [vmem:[%s645 + $0x68] sm:$0xff]
                  %674 = vst [vmem:[%s646 + $0x68] sm:$0xff] %v673
                  %v675 = vld [vmem:[%s645 + $0x70] sm:$0xff]
                  %676 = vst [vmem:[%s646 + $0x70] sm:$0xff] %v675
                  %v677 = vld [vmem:[%s645 + $0x78] sm:$0xff]
                  %678 = vst [vmem:[%s646 + $0x78] sm:$0xff] %v677
                  %v679 = vld [vmem:[%s645 + $0x80] sm:$0xff]
                  %680 = vst [vmem:[%s646 + $0x80] sm:$0xff] %v679
                  %v681 = vld [vmem:[%s645 + $0x88] sm:$0xff]
                  %682 = vst [vmem:[%s646 + $0x88] sm:$0xff] %v681
                  %v683 = vld [vmem:[%s645 + $0x90] sm:$0xff]
                  %684 = vst [vmem:[%s646 + $0x90] sm:$0xff] %v683
                  %v685 = vld [vmem:[%s645 + $0x98] sm:$0xff]
                  %686 = vst [vmem:[%s646 + $0x98] sm:$0xff] %v685
                  %v687 = vld [vmem:[%s645 + $0xa0] sm:$0xff]
                  %688 = vst [vmem:[%s646 + $0xa0] sm:$0xff] %v687
                  %v689 = vld [vmem:[%s645 + $0xa8] sm:$0xff]
                  %690 = vst [vmem:[%s646 + $0xa8] sm:$0xff] %v689
                  %v691 = vld [vmem:[%s645 + $0xb0] sm:$0xff]
                  %692 = vst [vmem:[%s646 + $0xb0] sm:$0xff] %v691
                  %v693 = vld [vmem:[%s645 + $0xb8] sm:$0xff]
                  %694 = vst [vmem:[%s646 + $0xb8] sm:$0xff] %v693
                  %v695 = vld [vmem:[%s645 + $0xc0] sm:$0xff]
                  %696 = vst [vmem:[%s646 + $0xc0] sm:$0xff] %v695
                  %v697 = vld [vmem:[%s645 + $0xc8] sm:$0xff]
                  %698 = vst [vmem:[%s646 + $0xc8] sm:$0xff] %v697
                  %v699 = vld [vmem:[%s645 + $0xd0] sm:$0xff]
                  %700 = vst [vmem:[%s646 + $0xd0] sm:$0xff] %v699
                  %v701 = vld [vmem:[%s645 + $0xd8] sm:$0xff]
                  %702 = vst [vmem:[%s646 + $0xd8] sm:$0xff] %v701
                  %v703 = vld [vmem:[%s645 + $0xe0] sm:$0xff]
                  %704 = vst [vmem:[%s646 + $0xe0] sm:$0xff] %v703
                  %v705 = vld [vmem:[%s645 + $0xe8] sm:$0xff]
                  %706 = vst [vmem:[%s646 + $0xe8] sm:$0xff] %v705
                  %v707 = vld [vmem:[%s645 + $0xf0] sm:$0xff]
                  %708 = vst [vmem:[%s646 + $0xf0] sm:$0xff] %v707
                  %v709 = vld [vmem:[%s645 + $0xf8] sm:$0xff]
                  %710 = vst [vmem:[%s646 + $0xf8] sm:$0xff] %v709
                  %v711 = vld [vmem:[%s645 + $0x200] sm:$0xff]
                  %712 = vst [vmem:[%s646 + $0x100] sm:$0xff] %v711
                  %v713 = vld [vmem:[%s645 + $0x208] sm:$0xff]
                  %714 = vst [vmem:[%s646 + $0x108] sm:$0xff] %v713
                  %v715 = vld [vmem:[%s645 + $0x210] sm:$0xff]
                  %716 = vst [vmem:[%s646 + $0x110] sm:$0xff] %v715
                  %v717 = vld [vmem:[%s645 + $0x218] sm:$0xff]
                  %718 = vst [vmem:[%s646 + $0x118] sm:$0xff] %v717
                  %v719 = vld [vmem:[%s645 + $0x220] sm:$0xff]
                  %720 = vst [vmem:[%s646 + $0x120] sm:$0xff] %v719
                  %v721 = vld [vmem:[%s645 + $0x228] sm:$0xff]
                  %722 = vst [vmem:[%s646 + $0x128] sm:$0xff] %v721
                  %v723 = vld [vmem:[%s645 + $0x230] sm:$0xff]
                  %724 = vst [vmem:[%s646 + $0x130] sm:$0xff] %v723
                  %v725 = vld [vmem:[%s645 + $0x238] sm:$0xff]
                  %726 = vst [vmem:[%s646 + $0x138] sm:$0xff] %v725
                  %v727 = vld [vmem:[%s645 + $0x240] sm:$0xff]
                  %728 = vst [vmem:[%s646 + $0x140] sm:$0xff] %v727
                  %v729 = vld [vmem:[%s645 + $0x248] sm:$0xff]
                  %730 = vst [vmem:[%s646 + $0x148] sm:$0xff] %v729
                  %v731 = vld [vmem:[%s645 + $0x250] sm:$0xff]
                  %732 = vst [vmem:[%s646 + $0x150] sm:$0xff] %v731
                  %v733 = vld [vmem:[%s645 + $0x258] sm:$0xff]
                  %734 = vst [vmem:[%s646 + $0x158] sm:$0xff] %v733
                  %v735 = vld [vmem:[%s645 + $0x260] sm:$0xff]
                  %736 = vst [vmem:[%s646 + $0x160] sm:$0xff] %v735
                  %v737 = vld [vmem:[%s645 + $0x268] sm:$0xff]
                  %738 = vst [vmem:[%s646 + $0x168] sm:$0xff] %v737
                  %v739 = vld [vmem:[%s645 + $0x270] sm:$0xff]
                  %740 = vst [vmem:[%s646 + $0x170] sm:$0xff] %v739
                  %v741 = vld [vmem:[%s645 + $0x278] sm:$0xff]
                  %742 = vst [vmem:[%s646 + $0x178] sm:$0xff] %v741
                  %v743 = vld [vmem:[%s645 + $0x280] sm:$0xff]
                  %744 = vst [vmem:[%s646 + $0x180] sm:$0xff] %v743
                  %v745 = vld [vmem:[%s645 + $0x288] sm:$0xff]
                  %746 = vst [vmem:[%s646 + $0x188] sm:$0xff] %v745
                  %v747 = vld [vmem:[%s645 + $0x290] sm:$0xff]
                  %748 = vst [vmem:[%s646 + $0x190] sm:$0xff] %v747
                  %v749 = vld [vmem:[%s645 + $0x298] sm:$0xff]
                  %750 = vst [vmem:[%s646 + $0x198] sm:$0xff] %v749
                  %v751 = vld [vmem:[%s645 + $0x2a0] sm:$0xff]
                  %752 = vst [vmem:[%s646 + $0x1a0] sm:$0xff] %v751
                  %v753 = vld [vmem:[%s645 + $0x2a8] sm:$0xff]
                  %754 = vst [vmem:[%s646 + $0x1a8] sm:$0xff] %v753
                  %v755 = vld [vmem:[%s645 + $0x2b0] sm:$0xff]
                  %756 = vst [vmem:[%s646 + $0x1b0] sm:$0xff] %v755
                  %v757 = vld [vmem:[%s645 + $0x2b8] sm:$0xff]
                  %758 = vst [vmem:[%s646 + $0x1b8] sm:$0xff] %v757
                  %v759 = vld [vmem:[%s645 + $0x2c0] sm:$0xff]
                  %760 = vst [vmem:[%s646 + $0x1c0] sm:$0xff] %v759
                  %v761 = vld [vmem:[%s645 + $0x2c8] sm:$0xff]
                  %762 = vst [vmem:[%s646 + $0x1c8] sm:$0xff] %v761
                  %v763 = vld [vmem:[%s645 + $0x2d0] sm:$0xff]
                  %764 = vst [vmem:[%s646 + $0x1d0] sm:$0xff] %v763
                  %v765 = vld [vmem:[%s645 + $0x2d8] sm:$0xff]
                  %766 = vst [vmem:[%s646 + $0x1d8] sm:$0xff] %v765
                  %v767 = vld [vmem:[%s645 + $0x2e0] sm:$0xff]
                  %768 = vst [vmem:[%s646 + $0x1e0] sm:$0xff] %v767
                  %v769 = vld [vmem:[%s645 + $0x2e8] sm:$0xff]
                  %770 = vst [vmem:[%s646 + $0x1e8] sm:$0xff] %v769
                  %v771 = vld [vmem:[%s645 + $0x2f0] sm:$0xff]
                  %772 = vst [vmem:[%s646 + $0x1f0] sm:$0xff] %v771
                  %v773 = vld [vmem:[%s645 + $0x2f8] sm:$0xff]
                  %774 = vst [vmem:[%s646 + $0x1f8] sm:$0xff] %v773
                  %v775 = vld [vmem:[%s645 + $0x400] sm:$0xff]
                  %776 = vst [vmem:[%s646 + $0x200] sm:$0xff] %v775
                  %v777 = vld [vmem:[%s645 + $0x408] sm:$0xff]
                  %778 = vst [vmem:[%s646 + $0x208] sm:$0xff] %v777
                  %v779 = vld [vmem:[%s645 + $0x410] sm:$0xff]
                  %780 = vst [vmem:[%s646 + $0x210] sm:$0xff] %v779
                  %v781 = vld [vmem:[%s645 + $0x418] sm:$0xff]
                  %782 = vst [vmem:[%s646 + $0x218] sm:$0xff] %v781
                  %v783 = vld [vmem:[%s645 + $0x420] sm:$0xff]
                  %784 = vst [vmem:[%s646 + $0x220] sm:$0xff] %v783
                  %v785 = vld [vmem:[%s645 + $0x428] sm:$0xff]
                  %786 = vst [vmem:[%s646 + $0x228] sm:$0xff] %v785
                  %v787 = vld [vmem:[%s645 + $0x430] sm:$0xff]
                  %788 = vst [vmem:[%s646 + $0x230] sm:$0xff] %v787
                  %v789 = vld [vmem:[%s645 + $0x438] sm:$0xff]
                  %790 = vst [vmem:[%s646 + $0x238] sm:$0xff] %v789
                  %v791 = vld [vmem:[%s645 + $0x440] sm:$0xff]
                  %792 = vst [vmem:[%s646 + $0x240] sm:$0xff] %v791
                  %v793 = vld [vmem:[%s645 + $0x448] sm:$0xff]
                  %794 = vst [vmem:[%s646 + $0x248] sm:$0xff] %v793
                  %v795 = vld [vmem:[%s645 + $0x450] sm:$0xff]
                  %796 = vst [vmem:[%s646 + $0x250] sm:$0xff] %v795
                  %v797 = vld [vmem:[%s645 + $0x458] sm:$0xff]
                  %798 = vst [vmem:[%s646 + $0x258] sm:$0xff] %v797
                  %v799 = vld [vmem:[%s645 + $0x460] sm:$0xff]
                  %800 = vst [vmem:[%s646 + $0x260] sm:$0xff] %v799
                  %v801 = vld [vmem:[%s645 + $0x468] sm:$0xff]
                  %802 = vst [vmem:[%s646 + $0x268] sm:$0xff] %v801
                  %v803 = vld [vmem:[%s645 + $0x470] sm:$0xff]
                  %804 = vst [vmem:[%s646 + $0x270] sm:$0xff] %v803
                  %v805 = vld [vmem:[%s645 + $0x478] sm:$0xff]
                  %806 = vst [vmem:[%s646 + $0x278] sm:$0xff] %v805
                  %v807 = vld [vmem:[%s645 + $0x480] sm:$0xff]
                  %808 = vst [vmem:[%s646 + $0x280] sm:$0xff] %v807
                  %v809 = vld [vmem:[%s645 + $0x488] sm:$0xff]
                  %810 = vst [vmem:[%s646 + $0x288] sm:$0xff] %v809
                  %v811 = vld [vmem:[%s645 + $0x490] sm:$0xff]
                  %812 = vst [vmem:[%s646 + $0x290] sm:$0xff] %v811
                  %v813 = vld [vmem:[%s645 + $0x498] sm:$0xff]
                  %814 = vst [vmem:[%s646 + $0x298] sm:$0xff] %v813
                  %v815 = vld [vmem:[%s645 + $0x4a0] sm:$0xff]
                  %816 = vst [vmem:[%s646 + $0x2a0] sm:$0xff] %v815
                  %v817 = vld [vmem:[%s645 + $0x4a8] sm:$0xff]
                  %818 = vst [vmem:[%s646 + $0x2a8] sm:$0xff] %v817
                  %v819 = vld [vmem:[%s645 + $0x4b0] sm:$0xff]
                  %820 = vst [vmem:[%s646 + $0x2b0] sm:$0xff] %v819
                  %v821 = vld [vmem:[%s645 + $0x4b8] sm:$0xff]
                  %822 = vst [vmem:[%s646 + $0x2b8] sm:$0xff] %v821
                  %v823 = vld [vmem:[%s645 + $0x4c0] sm:$0xff]
                  %824 = vst [vmem:[%s646 + $0x2c0] sm:$0xff] %v823
                  %v825 = vld [vmem:[%s645 + $0x4c8] sm:$0xff]
                  %826 = vst [vmem:[%s646 + $0x2c8] sm:$0xff] %v825
                  %v827 = vld [vmem:[%s645 + $0x4d0] sm:$0xff]
                  %828 = vst [vmem:[%s646 + $0x2d0] sm:$0xff] %v827
                  %v829 = vld [vmem:[%s645 + $0x4d8] sm:$0xff]
                  %830 = vst [vmem:[%s646 + $0x2d8] sm:$0xff] %v829
                  %v831 = vld [vmem:[%s645 + $0x4e0] sm:$0xff]
                  %832 = vst [vmem:[%s646 + $0x2e0] sm:$0xff] %v831
                  %v833 = vld [vmem:[%s645 + $0x4e8] sm:$0xff]
                  %834 = vst [vmem:[%s646 + $0x2e8] sm:$0xff] %v833
                  %v835 = vld [vmem:[%s645 + $0x4f0] sm:$0xff]
                  %836 = vst [vmem:[%s646 + $0x2f0] sm:$0xff] %v835
                  %v837 = vld [vmem:[%s645 + $0x4f8] sm:$0xff]
                  %838 = vst [vmem:[%s646 + $0x2f8] sm:$0xff] %v837
                $region96: #{tpu_custom_call.1} parent=90 // loop_footer
                  %s644 = sadd.s32 1, %s640
                $region97: #{tpu_custom_call.1} parent=90 // loop_footer_branch
                  %639 = sbr.rel target = $region93
                $region98: #{tpu_custom_call.1} parent=90 // loop_exit
                  _
              $region91: #{tpu_custom_call.1} parent=75 // pred_fallthru
                _
              // Predicated region
              $region99: #{tpu_custom_call.1} parent=75 // pred_check
                _
              $region100: #{tpu_custom_call.1} parent=75 // pred_check_branch
                %840 = sbr.rel target = $region102
              $region101: #{tpu_custom_call.1} parent=75 // pred_region
                _
              $region102: #{tpu_custom_call.1} parent=75 // pred_fallthru
                _
            $region76: #{tpu_custom_call.1} parent=71 // pred_fallthru
              _
            // Predicated region
            $region77: #{tpu_custom_call.1} parent=71 // pred_check
              _
            $region78: #{tpu_custom_call.1} parent=71 // pred_check_branch
              %435 = sbr.rel target = $region80
            $region79: #{tpu_custom_call.1} parent=71 // pred_region
              loop: start=0, step=1, limit=1
              $region81: #{tpu_custom_call.1} parent=79 // loop_pre_header
                _
              $region82: #{tpu_custom_call.1} parent=79 // loop_header
                %s438 = sphi 0, %s442
                %p439 = scmp.ge.s32.totalorder %s438, 1
                %s443 = sphi %s429, %s429
                %s444 = sphi %s426, %s426
              $region83: #{tpu_custom_call.1} parent=79 // loop_header_branch
                %441 = sbr.rel (%p439) target = $region87
              $region84: #{tpu_custom_call.1} parent=79 // loop_body
                %v445 = vld [vmem:[%s443] sm:$0xff]
                %446 = vst [vmem:[%s444] sm:$0xff] %v445
                %v447 = vld [vmem:[%s443 + $0x8] sm:$0xff]
                %448 = vst [vmem:[%s444 + $0x8] sm:$0xff] %v447
                %v449 = vld [vmem:[%s443 + $0x10] sm:$0xff]
                %450 = vst [vmem:[%s444 + $0x10] sm:$0xff] %v449
                %v451 = vld [vmem:[%s443 + $0x18] sm:$0xff]
                %452 = vst [vmem:[%s444 + $0x18] sm:$0xff] %v451
                %v453 = vld [vmem:[%s443 + $0x20] sm:$0xff]
                %454 = vst [vmem:[%s444 + $0x20] sm:$0xff] %v453
                %v455 = vld [vmem:[%s443 + $0x28] sm:$0xff]
                %456 = vst [vmem:[%s444 + $0x28] sm:$0xff] %v455
                %v457 = vld [vmem:[%s443 + $0x30] sm:$0xff]
                %458 = vst [vmem:[%s444 + $0x30] sm:$0xff] %v457
                %v459 = vld [vmem:[%s443 + $0x38] sm:$0xff]
                %460 = vst [vmem:[%s444 + $0x38] sm:$0xff] %v459
                %v461 = vld [vmem:[%s443 + $0x40] sm:$0xff]
                %462 = vst [vmem:[%s444 + $0x40] sm:$0xff] %v461
                %v463 = vld [vmem:[%s443 + $0x48] sm:$0xff]
                %464 = vst [vmem:[%s444 + $0x48] sm:$0xff] %v463
                %v465 = vld [vmem:[%s443 + $0x50] sm:$0xff]
                %466 = vst [vmem:[%s444 + $0x50] sm:$0xff] %v465
                %v467 = vld [vmem:[%s443 + $0x58] sm:$0xff]
                %468 = vst [vmem:[%s444 + $0x58] sm:$0xff] %v467
                %v469 = vld [vmem:[%s443 + $0x60] sm:$0xff]
                %470 = vst [vmem:[%s444 + $0x60] sm:$0xff] %v469
                %v471 = vld [vmem:[%s443 + $0x68] sm:$0xff]
                %472 = vst [vmem:[%s444 + $0x68] sm:$0xff] %v471
                %v473 = vld [vmem:[%s443 + $0x70] sm:$0xff]
                %474 = vst [vmem:[%s444 + $0x70] sm:$0xff] %v473
                %v475 = vld [vmem:[%s443 + $0x78] sm:$0xff]
                %476 = vst [vmem:[%s444 + $0x78] sm:$0xff] %v475
                %v477 = vld [vmem:[%s443 + $0x80] sm:$0xff]
                %478 = vst [vmem:[%s444 + $0x80] sm:$0xff] %v477
                %v479 = vld [vmem:[%s443 + $0x88] sm:$0xff]
                %480 = vst [vmem:[%s444 + $0x88] sm:$0xff] %v479
                %v481 = vld [vmem:[%s443 + $0x90] sm:$0xff]
                %482 = vst [vmem:[%s444 + $0x90] sm:$0xff] %v481
                %v483 = vld [vmem:[%s443 + $0x98] sm:$0xff]
                %484 = vst [vmem:[%s444 + $0x98] sm:$0xff] %v483
                %v485 = vld [vmem:[%s443 + $0xa0] sm:$0xff]
                %486 = vst [vmem:[%s444 + $0xa0] sm:$0xff] %v485
                %v487 = vld [vmem:[%s443 + $0xa8] sm:$0xff]
                %488 = vst [vmem:[%s444 + $0xa8] sm:$0xff] %v487
                %v489 = vld [vmem:[%s443 + $0xb0] sm:$0xff]
                %490 = vst [vmem:[%s444 + $0xb0] sm:$0xff] %v489
                %v491 = vld [vmem:[%s443 + $0xb8] sm:$0xff]
                %492 = vst [vmem:[%s444 + $0xb8] sm:$0xff] %v491
                %v493 = vld [vmem:[%s443 + $0xc0] sm:$0xff]
                %494 = vst [vmem:[%s444 + $0xc0] sm:$0xff] %v493
                %v495 = vld [vmem:[%s443 + $0xc8] sm:$0xff]
                %496 = vst [vmem:[%s444 + $0xc8] sm:$0xff] %v495
                %v497 = vld [vmem:[%s443 + $0xd0] sm:$0xff]
                %498 = vst [vmem:[%s444 + $0xd0] sm:$0xff] %v497
                %v499 = vld [vmem:[%s443 + $0xd8] sm:$0xff]
                %500 = vst [vmem:[%s444 + $0xd8] sm:$0xff] %v499
                %v501 = vld [vmem:[%s443 + $0xe0] sm:$0xff]
                %502 = vst [vmem:[%s444 + $0xe0] sm:$0xff] %v501
                %v503 = vld [vmem:[%s443 + $0xe8] sm:$0xff]
                %504 = vst [vmem:[%s444 + $0xe8] sm:$0xff] %v503
                %v505 = vld [vmem:[%s443 + $0xf0] sm:$0xff]
                %506 = vst [vmem:[%s444 + $0xf0] sm:$0xff] %v505
                %v507 = vld [vmem:[%s443 + $0xf8] sm:$0xff]
                %508 = vst [vmem:[%s444 + $0xf8] sm:$0xff] %v507
                %v509 = vld [vmem:[%s443 + $0x200] sm:$0xff]
                %510 = vst [vmem:[%s444 + $0x100] sm:$0xff] %v509
                %v511 = vld [vmem:[%s443 + $0x208] sm:$0xff]
                %512 = vst [vmem:[%s444 + $0x108] sm:$0xff] %v511
                %v513 = vld [vmem:[%s443 + $0x210] sm:$0xff]
                %514 = vst [vmem:[%s444 + $0x110] sm:$0xff] %v513
                %v515 = vld [vmem:[%s443 + $0x218] sm:$0xff]
                %516 = vst [vmem:[%s444 + $0x118] sm:$0xff] %v515
                %v517 = vld [vmem:[%s443 + $0x220] sm:$0xff]
                %518 = vst [vmem:[%s444 + $0x120] sm:$0xff] %v517
                %v519 = vld [vmem:[%s443 + $0x228] sm:$0xff]
                %520 = vst [vmem:[%s444 + $0x128] sm:$0xff] %v519
                %v521 = vld [vmem:[%s443 + $0x230] sm:$0xff]
                %522 = vst [vmem:[%s444 + $0x130] sm:$0xff] %v521
                %v523 = vld [vmem:[%s443 + $0x238] sm:$0xff]
                %524 = vst [vmem:[%s444 + $0x138] sm:$0xff] %v523
                %v525 = vld [vmem:[%s443 + $0x240] sm:$0xff]
                %526 = vst [vmem:[%s444 + $0x140] sm:$0xff] %v525
                %v527 = vld [vmem:[%s443 + $0x248] sm:$0xff]
                %528 = vst [vmem:[%s444 + $0x148] sm:$0xff] %v527
                %v529 = vld [vmem:[%s443 + $0x250] sm:$0xff]
                %530 = vst [vmem:[%s444 + $0x150] sm:$0xff] %v529
                %v531 = vld [vmem:[%s443 + $0x258] sm:$0xff]
                %532 = vst [vmem:[%s444 + $0x158] sm:$0xff] %v531
                %v533 = vld [vmem:[%s443 + $0x260] sm:$0xff]
                %534 = vst [vmem:[%s444 + $0x160] sm:$0xff] %v533
                %v535 = vld [vmem:[%s443 + $0x268] sm:$0xff]
                %536 = vst [vmem:[%s444 + $0x168] sm:$0xff] %v535
                %v537 = vld [vmem:[%s443 + $0x270] sm:$0xff]
                %538 = vst [vmem:[%s444 + $0x170] sm:$0xff] %v537
                %v539 = vld [vmem:[%s443 + $0x278] sm:$0xff]
                %540 = vst [vmem:[%s444 + $0x178] sm:$0xff] %v539
                %v541 = vld [vmem:[%s443 + $0x280] sm:$0xff]
                %542 = vst [vmem:[%s444 + $0x180] sm:$0xff] %v541
                %v543 = vld [vmem:[%s443 + $0x288] sm:$0xff]
                %544 = vst [vmem:[%s444 + $0x188] sm:$0xff] %v543
                %v545 = vld [vmem:[%s443 + $0x290] sm:$0xff]
                %546 = vst [vmem:[%s444 + $0x190] sm:$0xff] %v545
                %v547 = vld [vmem:[%s443 + $0x298] sm:$0xff]
                %548 = vst [vmem:[%s444 + $0x198] sm:$0xff] %v547
                %v549 = vld [vmem:[%s443 + $0x2a0] sm:$0xff]
                %550 = vst [vmem:[%s444 + $0x1a0] sm:$0xff] %v549
                %v551 = vld [vmem:[%s443 + $0x2a8] sm:$0xff]
                %552 = vst [vmem:[%s444 + $0x1a8] sm:$0xff] %v551
                %v553 = vld [vmem:[%s443 + $0x2b0] sm:$0xff]
                %554 = vst [vmem:[%s444 + $0x1b0] sm:$0xff] %v553
                %v555 = vld [vmem:[%s443 + $0x2b8] sm:$0xff]
                %556 = vst [vmem:[%s444 + $0x1b8] sm:$0xff] %v555
                %v557 = vld [vmem:[%s443 + $0x2c0] sm:$0xff]
                %558 = vst [vmem:[%s444 + $0x1c0] sm:$0xff] %v557
                %v559 = vld [vmem:[%s443 + $0x2c8] sm:$0xff]
                %560 = vst [vmem:[%s444 + $0x1c8] sm:$0xff] %v559
                %v561 = vld [vmem:[%s443 + $0x2d0] sm:$0xff]
                %562 = vst [vmem:[%s444 + $0x1d0] sm:$0xff] %v561
                %v563 = vld [vmem:[%s443 + $0x2d8] sm:$0xff]
                %564 = vst [vmem:[%s444 + $0x1d8] sm:$0xff] %v563
                %v565 = vld [vmem:[%s443 + $0x2e0] sm:$0xff]
                %566 = vst [vmem:[%s444 + $0x1e0] sm:$0xff] %v565
                %v567 = vld [vmem:[%s443 + $0x2e8] sm:$0xff]
                %568 = vst [vmem:[%s444 + $0x1e8] sm:$0xff] %v567
                %v569 = vld [vmem:[%s443 + $0x2f0] sm:$0xff]
                %570 = vst [vmem:[%s444 + $0x1f0] sm:$0xff] %v569
                %v571 = vld [vmem:[%s443 + $0x2f8] sm:$0xff]
                %572 = vst [vmem:[%s444 + $0x1f8] sm:$0xff] %v571
                %v573 = vld [vmem:[%s443 + $0x400] sm:$0xff]
                %574 = vst [vmem:[%s444 + $0x200] sm:$0xff] %v573
                %v575 = vld [vmem:[%s443 + $0x408] sm:$0xff]
                %576 = vst [vmem:[%s444 + $0x208] sm:$0xff] %v575
                %v577 = vld [vmem:[%s443 + $0x410] sm:$0xff]
                %578 = vst [vmem:[%s444 + $0x210] sm:$0xff] %v577
                %v579 = vld [vmem:[%s443 + $0x418] sm:$0xff]
                %580 = vst [vmem:[%s444 + $0x218] sm:$0xff] %v579
                %v581 = vld [vmem:[%s443 + $0x420] sm:$0xff]
                %582 = vst [vmem:[%s444 + $0x220] sm:$0xff] %v581
                %v583 = vld [vmem:[%s443 + $0x428] sm:$0xff]
                %584 = vst [vmem:[%s444 + $0x228] sm:$0xff] %v583
                %v585 = vld [vmem:[%s443 + $0x430] sm:$0xff]
                %586 = vst [vmem:[%s444 + $0x230] sm:$0xff] %v585
                %v587 = vld [vmem:[%s443 + $0x438] sm:$0xff]
                %588 = vst [vmem:[%s444 + $0x238] sm:$0xff] %v587
                %v589 = vld [vmem:[%s443 + $0x440] sm:$0xff]
                %590 = vst [vmem:[%s444 + $0x240] sm:$0xff] %v589
                %v591 = vld [vmem:[%s443 + $0x448] sm:$0xff]
                %592 = vst [vmem:[%s444 + $0x248] sm:$0xff] %v591
                %v593 = vld [vmem:[%s443 + $0x450] sm:$0xff]
                %594 = vst [vmem:[%s444 + $0x250] sm:$0xff] %v593
                %v595 = vld [vmem:[%s443 + $0x458] sm:$0xff]
                %596 = vst [vmem:[%s444 + $0x258] sm:$0xff] %v595
                %v597 = vld [vmem:[%s443 + $0x460] sm:$0xff]
                %598 = vst [vmem:[%s444 + $0x260] sm:$0xff] %v597
                %v599 = vld [vmem:[%s443 + $0x468] sm:$0xff]
                %600 = vst [vmem:[%s444 + $0x268] sm:$0xff] %v599
                %v601 = vld [vmem:[%s443 + $0x470] sm:$0xff]
                %602 = vst [vmem:[%s444 + $0x270] sm:$0xff] %v601
                %v603 = vld [vmem:[%s443 + $0x478] sm:$0xff]
                %604 = vst [vmem:[%s444 + $0x278] sm:$0xff] %v603
                %v605 = vld [vmem:[%s443 + $0x480] sm:$0xff]
                %606 = vst [vmem:[%s444 + $0x280] sm:$0xff] %v605
                %v607 = vld [vmem:[%s443 + $0x488] sm:$0xff]
                %608 = vst [vmem:[%s444 + $0x288] sm:$0xff] %v607
                %v609 = vld [vmem:[%s443 + $0x490] sm:$0xff]
                %610 = vst [vmem:[%s444 + $0x290] sm:$0xff] %v609
                %v611 = vld [vmem:[%s443 + $0x498] sm:$0xff]
                %612 = vst [vmem:[%s444 + $0x298] sm:$0xff] %v611
                %v613 = vld [vmem:[%s443 + $0x4a0] sm:$0xff]
                %614 = vst [vmem:[%s444 + $0x2a0] sm:$0xff] %v613
                %v615 = vld [vmem:[%s443 + $0x4a8] sm:$0xff]
                %616 = vst [vmem:[%s444 + $0x2a8] sm:$0xff] %v615
                %v617 = vld [vmem:[%s443 + $0x4b0] sm:$0xff]
                %618 = vst [vmem:[%s444 + $0x2b0] sm:$0xff] %v617
                %v619 = vld [vmem:[%s443 + $0x4b8] sm:$0xff]
                %620 = vst [vmem:[%s444 + $0x2b8] sm:$0xff] %v619
                %v621 = vld [vmem:[%s443 + $0x4c0] sm:$0xff]
                %622 = vst [vmem:[%s444 + $0x2c0] sm:$0xff] %v621
                %v623 = vld [vmem:[%s443 + $0x4c8] sm:$0xff]
                %624 = vst [vmem:[%s444 + $0x2c8] sm:$0xff] %v623
                %v625 = vld [vmem:[%s443 + $0x4d0] sm:$0xff]
                %626 = vst [vmem:[%s444 + $0x2d0] sm:$0xff] %v625
                %v627 = vld [vmem:[%s443 + $0x4d8] sm:$0xff]
                %628 = vst [vmem:[%s444 + $0x2d8] sm:$0xff] %v627
                %v629 = vld [vmem:[%s443 + $0x4e0] sm:$0xff]
                %630 = vst [vmem:[%s444 + $0x2e0] sm:$0xff] %v629
                %v631 = vld [vmem:[%s443 + $0x4e8] sm:$0xff]
                %632 = vst [vmem:[%s444 + $0x2e8] sm:$0xff] %v631
                %v633 = vld [vmem:[%s443 + $0x4f0] sm:$0xff]
                %634 = vst [vmem:[%s444 + $0x2f0] sm:$0xff] %v633
                %v635 = vld [vmem:[%s443 + $0x4f8] sm:$0xff]
                %636 = vst [vmem:[%s444 + $0x2f8] sm:$0xff] %v635
              $region85: #{tpu_custom_call.1} parent=79 // loop_footer
                %s442 = sadd.s32 1, %s438
              $region86: #{tpu_custom_call.1} parent=79 // loop_footer_branch
                %437 = sbr.rel target = $region82
              $region87: #{tpu_custom_call.1} parent=79 // loop_exit
                _
            $region80: #{tpu_custom_call.1} parent=71 // pred_fallthru
              _
          $region72: #{tpu_custom_call.1} parent=67 // pred_fallthru
            _
          %841 = vnop
        $region68: #{tpu_custom_call.1} parent=59 // pred_fallthru
          _
      $region60: #{tpu_custom_call.1} parent=5 // pred_fallthru
        _
      %p842 = scmp.le.s32.totalorder 1, %s24
      %p843 = scmp.lt.s32.totalorder %s24, 3
      %p844 = pnand %p842, %p843
      %p845 = pneg %p844
      // Predicated region
      $region103: #{tpu_custom_call.1} parent=5 // pred_check
        _
      $region104: #{tpu_custom_call.1} parent=5 // pred_check_branch
        %847 = sbr.rel (%p844) target = $region106
      $region105: #{tpu_custom_call.1} parent=5 // pred_region
        %s848 = ssub.s32 %s24, 1
        %s849 = sand.u32 %s63, 1
        %s850 = sand.u32 %s63, 1
        %s851 = smul.addr %s850, 768
        %s852 = scalar_lea.vmem [#allocation2], %s851
        // Predicated region
        $region107: #{tpu_custom_call.1} parent=105 // pred_check
          %p853 = pneg %p76
        $region108: #{tpu_custom_call.1} parent=105 // pred_check_branch
          %855 = sbr.rel (%p853) target = $region110
        $region109: #{tpu_custom_call.1} parent=105 // pred_region
          _
        $region110: #{tpu_custom_call.1} parent=105 // pred_fallthru
          _
        %s856 = smul.u32 32, %s29
        %p857 = scmp.lt.s32.totalorder %s856, 63
        %s858 = scalar_select %p857, %s856, 63
        %s859 = smul.addr %s858, 8
        %s860 = scalar_lea.vmem %s0, %s859
        %p861 = pneg %p50
        %p862 = pneg %p47
        %s863 = sand.u32 %s63, 1
        %s864 = sand.u32 %s63, 1
        %s865 = smul.addr %s864, 768
        %s866 = scalar_lea.vmem [#allocation2], %s865
        %p867 = pneg %p76
        %p868 = pneg %p73
        %p869 = pneg %p97
        %p870 = pneg %p94
        %p871 = pneg %p118
        %p872 = pneg %p115
        %p873 = pneg %p139
        %p874 = pneg %p136
        %p875 = pneg %p160
        %p876 = pneg %p157
        %p877 = pneg %p181
        %p878 = pneg %p178
        %p879 = pneg %p202
        %p880 = pneg %p199
        %p881 = pneg %p223
        %p882 = pneg %p220
        %p883 = pneg %p244
        %p884 = pneg %p241
        %p885 = pneg %p265
        %p886 = pneg %p262
        %p887 = pneg %p286
        %p888 = pneg %p283
        %p889 = pneg %p307
        %p890 = pneg %p304
        %p891 = pneg %p333
        %p892 = pneg %p330
        %s893 = sand.u32 %s320, 1
        %s894 = scalar_lea.sflag [#allocation4], %s893
        %s895 = sand.u32 %s320, 1
        %s896 = smul.addr %s895, 256
        %s897 = scalar_lea.vmem [#allocation3], %s896
        %p898 = pneg %p359
        %p899 = pneg %p356
        %s900 = sand.u32 %s346, 1
        %s901 = sand.u32 %s346, 1
        %s902 = smul.addr %s901, 768
        %s903 = scalar_lea.vmem [#allocation5], %s902
        %s904 = smul.u32 32, %s29
        %p905 = scmp.lt.s32.totalorder %s904, 63
        %s906 = scalar_select %p905, %s904, 63
        %s907 = smul.addr %s906, 8
        %s908 = scalar_lea.vmem %s0, %s907
        %s909 = smul.u32 32, %s29
        %s910 = smul.u32 32, %s29
        %s911 = smul.u32 32, %s29
        %s912 = smul.u32 32, %s29
        %v913 = vld [vmem:[%s908] sm:$0xff]
        %v914 = vld [vmem:[%s908 + $0x8] sm:$0xff]
        %v915 = vld [vmem:[%s908 + $0x10] sm:$0xff]
        %v916 = vld [vmem:[%s908 + $0x18] sm:$0xff]
        %v917 = vld [vmem:[%s908 + $0x20] sm:$0xff]
        %v918 = vld [vmem:[%s908 + $0x28] sm:$0xff]
        %v919 = vld [vmem:[%s908 + $0x30] sm:$0xff]
        %v920 = vld [vmem:[%s908 + $0x38] sm:$0xff]
        %v921 = vld [vmem:[%s908 + $0x40] sm:$0xff]
        %v922 = vld [vmem:[%s908 + $0x48] sm:$0xff]
        %v923 = vld [vmem:[%s908 + $0x50] sm:$0xff]
        %v924 = vld [vmem:[%s908 + $0x58] sm:$0xff]
        %v925 = vld [vmem:[%s908 + $0x60] sm:$0xff]
        %v926 = vld [vmem:[%s908 + $0x68] sm:$0xff]
        %v927 = vld [vmem:[%s908 + $0x70] sm:$0xff]
        %v928 = vld [vmem:[%s908 + $0x78] sm:$0xff]
        %v929 = vld [vmem:[%s908 + $0x80] sm:$0xff]
        %v930 = vld [vmem:[%s908 + $0x88] sm:$0xff]
        %v931 = vld [vmem:[%s908 + $0x90] sm:$0xff]
        %v932 = vld [vmem:[%s908 + $0x98] sm:$0xff]
        %v933 = vld [vmem:[%s908 + $0xa0] sm:$0xff]
        %v934 = vld [vmem:[%s908 + $0xa8] sm:$0xff]
        %v935 = vld [vmem:[%s908 + $0xb0] sm:$0xff]
        %v936 = vld [vmem:[%s908 + $0xb8] sm:$0xff]
        %v937 = vld [vmem:[%s908 + $0xc0] sm:$0xff]
        %v938 = vld [vmem:[%s908 + $0xc8] sm:$0xff]
        %v939 = vld [vmem:[%s908 + $0xd0] sm:$0xff]
        %v940 = vld [vmem:[%s908 + $0xd8] sm:$0xff]
        %v941 = vld [vmem:[%s908 + $0xe0] sm:$0xff]
        %v942 = vld [vmem:[%s908 + $0xe8] sm:$0xff]
        %v943 = vld [vmem:[%s908 + $0xf0] sm:$0xff]
        %v944 = vld [vmem:[%s908 + $0xf8] sm:$0xff]
        %v945 = vld [vmem:[%s852] sm:$0xff]
        %v946 = vld [vmem:[%s852 + $0x8] sm:$0xff]
        %v947 = vld [vmem:[%s852 + $0x10] sm:$0xff]
        %v948 = vld [vmem:[%s852 + $0x18] sm:$0xff]
        %v949 = vld [vmem:[%s852 + $0x20] sm:$0xff]
        %v950 = vld [vmem:[%s852 + $0x28] sm:$0xff]
        %v951 = vld [vmem:[%s852 + $0x30] sm:$0xff]
        %v952 = vld [vmem:[%s852 + $0x38] sm:$0xff]
        %v953 = vld [vmem:[%s852 + $0x40] sm:$0xff]
        %v954 = vld [vmem:[%s852 + $0x48] sm:$0xff]
        %v955 = vld [vmem:[%s852 + $0x50] sm:$0xff]
        %v956 = vld [vmem:[%s852 + $0x58] sm:$0xff]
        %v957 = vld [vmem:[%s852 + $0x60] sm:$0xff]
        %v958 = vld [vmem:[%s852 + $0x68] sm:$0xff]
        %v959 = vld [vmem:[%s852 + $0x70] sm:$0xff]
        %v960 = vld [vmem:[%s852 + $0x78] sm:$0xff]
        %v961 = vld [vmem:[%s852 + $0x80] sm:$0xff]
        %v962 = vld [vmem:[%s852 + $0x88] sm:$0xff]
        %v963 = vld [vmem:[%s852 + $0x90] sm:$0xff]
        %v964 = vld [vmem:[%s852 + $0x98] sm:$0xff]
        %v965 = vld [vmem:[%s852 + $0xa0] sm:$0xff]
        %v966 = vld [vmem:[%s852 + $0xa8] sm:$0xff]
        %v967 = vld [vmem:[%s852 + $0xb0] sm:$0xff]
        %v968 = vld [vmem:[%s852 + $0xb8] sm:$0xff]
        %v969 = vld [vmem:[%s852 + $0xc0] sm:$0xff]
        %v970 = vld [vmem:[%s852 + $0xc8] sm:$0xff]
        %v971 = vld [vmem:[%s852 + $0xd0] sm:$0xff]
        %v972 = vld [vmem:[%s852 + $0xd8] sm:$0xff]
        %v973 = vld [vmem:[%s852 + $0xe0] sm:$0xff]
        %v974 = vld [vmem:[%s852 + $0xe8] sm:$0xff]
        %v975 = vld [vmem:[%s852 + $0xf0] sm:$0xff]
        %v976 = vld [vmem:[%s852 + $0xf8] sm:$0xff]
        %v977 = vld [vmem:[%s852 + $0x100] sm:$0xff]
        %v978 = vld [vmem:[%s852 + $0x108] sm:$0xff]
        %v979 = vld [vmem:[%s852 + $0x110] sm:$0xff]
        %v980 = vld [vmem:[%s852 + $0x118] sm:$0xff]
        %v981 = vld [vmem:[%s852 + $0x120] sm:$0xff]
        %v982 = vld [vmem:[%s852 + $0x128] sm:$0xff]
        %v983 = vld [vmem:[%s852 + $0x130] sm:$0xff]
        %v984 = vld [vmem:[%s852 + $0x138] sm:$0xff]
        %v985 = vld [vmem:[%s852 + $0x140] sm:$0xff]
        %v986 = vld [vmem:[%s852 + $0x148] sm:$0xff]
        %v987 = vld [vmem:[%s852 + $0x150] sm:$0xff]
        %v988 = vld [vmem:[%s852 + $0x158] sm:$0xff]
        %v989 = vld [vmem:[%s852 + $0x160] sm:$0xff]
        %v990 = vld [vmem:[%s852 + $0x168] sm:$0xff]
        %v991 = vld [vmem:[%s852 + $0x170] sm:$0xff]
        %v992 = vld [vmem:[%s852 + $0x178] sm:$0xff]
        %v993 = vld [vmem:[%s852 + $0x180] sm:$0xff]
        %v994 = vld [vmem:[%s852 + $0x188] sm:$0xff]
        %v995 = vld [vmem:[%s852 + $0x190] sm:$0xff]
        %v996 = vld [vmem:[%s852 + $0x198] sm:$0xff]
        %v997 = vld [vmem:[%s852 + $0x1a0] sm:$0xff]
        %v998 = vld [vmem:[%s852 + $0x1a8] sm:$0xff]
        %v999 = vld [vmem:[%s852 + $0x1b0] sm:$0xff]
        %v1000 = vld [vmem:[%s852 + $0x1b8] sm:$0xff]
        %v1001 = vld [vmem:[%s852 + $0x1c0] sm:$0xff]
        %v1002 = vld [vmem:[%s852 + $0x1c8] sm:$0xff]
        %v1003 = vld [vmem:[%s852 + $0x1d0] sm:$0xff]
        %v1004 = vld [vmem:[%s852 + $0x1d8] sm:$0xff]
        %v1005 = vld [vmem:[%s852 + $0x1e0] sm:$0xff]
        %v1006 = vld [vmem:[%s852 + $0x1e8] sm:$0xff]
        %v1007 = vld [vmem:[%s852 + $0x1f0] sm:$0xff]
        %v1008 = vld [vmem:[%s852 + $0x1f8] sm:$0xff]
        %v1009 = vld [vmem:[%s852 + $0x200] sm:$0xff]
        %v1010 = vld [vmem:[%s852 + $0x208] sm:$0xff]
        %v1011 = vld [vmem:[%s852 + $0x210] sm:$0xff]
        %v1012 = vld [vmem:[%s852 + $0x218] sm:$0xff]
        %v1013 = vld [vmem:[%s852 + $0x220] sm:$0xff]
        %v1014 = vld [vmem:[%s852 + $0x228] sm:$0xff]
        %v1015 = vld [vmem:[%s852 + $0x230] sm:$0xff]
        %v1016 = vld [vmem:[%s852 + $0x238] sm:$0xff]
        %v1017 = vld [vmem:[%s852 + $0x240] sm:$0xff]
        %v1018 = vld [vmem:[%s852 + $0x248] sm:$0xff]
        %v1019 = vld [vmem:[%s852 + $0x250] sm:$0xff]
        %v1020 = vld [vmem:[%s852 + $0x258] sm:$0xff]
        %v1021 = vld [vmem:[%s852 + $0x260] sm:$0xff]
        %v1022 = vld [vmem:[%s852 + $0x268] sm:$0xff]
        %v1023 = vld [vmem:[%s852 + $0x270] sm:$0xff]
        %v1024 = vld [vmem:[%s852 + $0x278] sm:$0xff]
        %v1025 = vld [vmem:[%s852 + $0x280] sm:$0xff]
        %v1026 = vld [vmem:[%s852 + $0x288] sm:$0xff]
        %v1027 = vld [vmem:[%s852 + $0x290] sm:$0xff]
        %v1028 = vld [vmem:[%s852 + $0x298] sm:$0xff]
        %v1029 = vld [vmem:[%s852 + $0x2a0] sm:$0xff]
        %v1030 = vld [vmem:[%s852 + $0x2a8] sm:$0xff]
        %v1031 = vld [vmem:[%s852 + $0x2b0] sm:$0xff]
        %v1032 = vld [vmem:[%s852 + $0x2b8] sm:$0xff]
        %v1033 = vld [vmem:[%s852 + $0x2c0] sm:$0xff]
        %v1034 = vld [vmem:[%s852 + $0x2c8] sm:$0xff]
        %v1035 = vld [vmem:[%s852 + $0x2d0] sm:$0xff]
        %v1036 = vld [vmem:[%s852 + $0x2d8] sm:$0xff]
        %v1037 = vld [vmem:[%s852 + $0x2e0] sm:$0xff]
        %v1038 = vld [vmem:[%s852 + $0x2e8] sm:$0xff]
        %v1039 = vld [vmem:[%s852 + $0x2f0] sm:$0xff]
        %v1040 = vld [vmem:[%s852 + $0x2f8] sm:$0xff]
        %v1041 = vld [vmem:[%s12] sm:$0x1]
        %v1042 = vld [vmem:[%s12 + $0x1] sm:$0x1]
        %v1043 = vld [vmem:[%s12 + $0x2] sm:$0x1]
        %v1044 = vld [vmem:[%s12 + $0x3] sm:$0x1]
        %v1045 = vld [vmem:[%s2] sm:$0xff]
        %v1046 = vld [vmem:[%s2 + $0x8] sm:$0xff]
        %v1047 = vld [vmem:[%s2 + $0x10] sm:$0xff]
        %v1048 = vld [vmem:[%s2 + $0x18] sm:$0xff]
        %v1049 = vlaneseq
        %v1050 = vshrl.u32 %v1049, 7
        %v1051 = vsub.s32 0, %v1050
        %v1052 = vrot.slane %v1041, %v1051
        %vm1053 = vcmask 261120
        %v1055 = vsel %vm1053, %v913, 0
        %v1058 = vsel %vm1053, %v914, 0
        %v1061 = vsel %vm1053, %v915, 0
        %v1064 = vsel %vm1053, %v916, 0
        %v1067 = vsel %vm1053, %v917, 0
        %v1070 = vsel %vm1053, %v918, 0
        %v1073 = vsel %vm1053, %v919, 0
        %v1076 = vsel %vm1053, %v920, 0
        %v1079 = vsel %vm1053, %v921, 0
        %v1082 = vsel %vm1053, %v922, 0
        %v1085 = vsel %vm1053, %v923, 0
        %v1088 = vsel %vm1053, %v924, 0
        %v1091 = vsel %vm1053, %v925, 0
        %v1094 = vsel %vm1053, %v926, 0
        %v1097 = vsel %vm1053, %v927, 0
        %v1100 = vsel %vm1053, %v928, 0
        %v1103 = vsel %vm1053, %v929, 0
        %v1106 = vsel %vm1053, %v930, 0
        %v1109 = vsel %vm1053, %v931, 0
        %v1112 = vsel %vm1053, %v932, 0
        %v1115 = vsel %vm1053, %v933, 0
        %v1118 = vsel %vm1053, %v934, 0
        %v1121 = vsel %vm1053, %v935, 0
        %v1124 = vsel %vm1053, %v936, 0
        %v1127 = vsel %vm1053, %v937, 0
        %v1130 = vsel %vm1053, %v938, 0
        %v1133 = vsel %vm1053, %v939, 0
        %v1136 = vsel %vm1053, %v940, 0
        %v1139 = vsel %vm1053, %v941, 0
        %v1142 = vsel %vm1053, %v942, 0
        %v1145 = vsel %vm1053, %v943, 0
        %v1148 = vsel %vm1053, %v944, 0
        %1150 = vmatprep.subr.mxu0 0.0
        %1151 = vmatpush1.msra.mxu0 %v1045
        %1152 = vmatprep.subr.mxu0 0.0
        %1153 = vmatpush1.msra.mxu0 %v1046
        %1154 = vmatprep.subr.mxu0 0.0
        %1155 = vmatpush1.msra.mxu0 %v1047
        %1156 = vmatprep.subr.mxu0 0.0
        %1157 = vmatpush1.msra.mxu0 %v1048
        %1158 = vmatprep.subr.mxu0 0.0
        %1159 = vmatpush1.msra.mxu0 0.0
        %1160 = vmatprep.subr.mxu0 0.0
        %1161 = vmatpush1.msra.mxu0 0.0
        %1162 = vmatprep.subr.mxu0 0.0
        %1163 = vmatpush1.msra.mxu0 0.0
        %1164 = vmatprep.subr.mxu0 0.0
        %1165 = vmatpush1.msra.mxu0 0.0
        %1166 = vmatprep.subr.mxu0 0.0
        %1167 = vmatpush1.msra.mxu0 0.0
        %1168 = vmatprep.subr.mxu0 0.0
        %1169 = vmatpush1.msra.mxu0 0.0
        %1170 = vmatprep.subr.mxu0 0.0
        %1171 = vmatpush1.msra.mxu0 0.0
        %1172 = vmatprep.subr.mxu0 0.0
        %1173 = vmatpush1.msra.mxu0 0.0
        %1174 = vmatprep.subr.mxu0 0.0
        %1175 = vmatpush1.msra.mxu0 0.0
        %1176 = vmatprep.subr.mxu0 0.0
        %1177 = vmatpush1.msra.mxu0 0.0
        %1178 = vmatprep.subr.mxu0 0.0
        %1179 = vmatpush1.msra.mxu0 0.0
        %1180 = vmatprep.subr.mxu0 0.0
        %1181 = vmatpush1.msra.mxu0 0.0
        %1182 = vmatprep.subr.mxu0 0.0
        %1183 = vmatpush1.msra.mxu0 0.0
        %1184 = vmatprep.subr.mxu0 0.0
        %1185 = vmatpush1.msra.mxu0 0.0
        %1186 = vmatprep.subr.mxu0 0.0
        %1187 = vmatpush1.msra.mxu0 0.0
        %1188 = vmatprep.subr.mxu0 0.0
        %1189 = vmatpush1.msra.mxu0 0.0
        %1190 = vmatprep.subr.mxu0 0.0
        %1191 = vmatpush1.msra.mxu0 0.0
        %1192 = vmatprep.subr.mxu0 0.0
        %1193 = vmatpush1.msra.mxu0 0.0
        %1194 = vmatprep.subr.mxu0 0.0
        %1195 = vmatpush1.msra.mxu0 0.0
        %1196 = vmatprep.subr.mxu0 0.0
        %1197 = vmatpush1.msra.mxu0 0.0
        %1198 = vmatprep.subr.mxu0 0.0
        %1199 = vmatpush1.msra.mxu0 0.0
        %1200 = vmatprep.subr.mxu0 0.0
        %1201 = vmatpush1.msra.mxu0 0.0
        %1202 = vmatprep.subr.mxu0 0.0
        %1203 = vmatpush1.msra.mxu0 0.0
        %1204 = vmatprep.subr.mxu0 0.0
        %1205 = vmatpush1.msra.mxu0 0.0
        %1206 = vmatprep.subr.mxu0 0.0
        %1207 = vmatpush1.msra.mxu0 0.0
        %1208 = vmatprep.subr.mxu0 0.0
        %1209 = vmatpush1.msra.mxu0 0.0
        %1210 = vmatprep.subr.mxu0 0.0
        %1211 = vmatpush1.msra.mxu0 0.0
        %1212 = vmatprep.subr.mxu0 0.0
        %1213 = vmatpush1.msra.mxu0 0.0
        %1214 = vmatprep.mubr.f32.mxu0 0.0
        %1215 = vmatmul.mubr.f32.gmra.mrb[0].mxu0 %v1055
        %v1216 = vpop.f32.mrb[0].mxu0
        %v1217 = vadd.f32 %v1052, %v1216
        %v1218 = vpop.f32.mrb[0].mxu0
        %1219 = vmatprep.mubr.f32.mxu0 0.0
        %1220 = vmatmul.mubr.f32.gmra.mrb[0].mxu0 %v1058
        %v1221 = vpop.f32.mrb[0].mxu0
        %v1222 = vadd.f32 %v1052, %v1221
        %v1223 = vpop.f32.mrb[0].mxu0
        %1224 = vmatprep.mubr.f32.mxu0 0.0
        %1225 = vmatmul.mubr.f32.gmra.mrb[0].mxu0 %v1061
        %v1226 = vpop.f32.mrb[0].mxu0
        %v1227 = vadd.f32 %v1052, %v1226
        %v1228 = vpop.f32.mrb[0].mxu0
        %1229 = vmatprep.mubr.f32.mxu0 0.0
        %1230 = vmatmul.mubr.f32.gmra.mrb[0].mxu0 %v1064
        %v1231 = vpop.f32.mrb[0].mxu0
        %v1232 = vadd.f32 %v1052, %v1231
        %v1233 = vpop.f32.mrb[0].mxu0
        %1234 = vmatprep.mubr.f32.mxu0 0.0
        %1235 = vmatmul.mubr.f32.gmra.mrb[0].mxu0 %v1067
        %v1236 = vpop.f32.mrb[0].mxu0
        %v1237 = vadd.f32 %v1052, %v1236
        %v1238 = vpop.f32.mrb[0].mxu0
        %1239 = vmatprep.mubr.f32.mxu0 0.0
        %1240 = vmatmul.mubr.f32.gmra.mrb[0].mxu0 %v1070
        %v1241 = vpop.f32.mrb[0].mxu0
        %v1242 = vadd.f32 %v1052, %v1241
        %v1243 = vpop.f32.mrb[0].mxu0
        %1244 = vmatprep.mubr.f32.mxu0 0.0
        %1245 = vmatmul.mubr.f32.gmra.mrb[0].mxu0 %v1073
        %v1246 = vpop.f32.mrb[0].mxu0
        %v1247 = vadd.f32 %v1052, %v1246
        %v1248 = vpop.f32.mrb[0].mxu0
        %1249 = vmatprep.mubr.f32.mxu0 0.0
        %1250 = vmatmul.mubr.f32.gmra.mrb[0].mxu0 %v1076
        %v1251 = vpop.f32.mrb[0].mxu0
        %v1252 = vadd.f32 %v1052, %v1251
        %v1253 = vpop.f32.mrb[0].mxu0
        %1254 = vmatprep.mubr.f32.mxu0 0.0
        %1255 = vmatmul.mubr.f32.gmra.mrb[0].mxu0 %v1079
        %v1256 = vpop.f32.mrb[0].mxu0
        %v1257 = vadd.f32 %v1052, %v1256
        %v1258 = vpop.f32.mrb[0].mxu0
        %1259 = vmatprep.mubr.f32.mxu0 0.0
        %1260 = vmatmul.mubr.f32.gmra.mrb[0].mxu0 %v1082
        %v1261 = vpop.f32.mrb[0].mxu0
        %v1262 = vadd.f32 %v1052, %v1261
        %v1263 = vpop.f32.mrb[0].mxu0
        %1264 = vmatprep.mubr.f32.mxu0 0.0
        %1265 = vmatmul.mubr.f32.gmra.mrb[0].mxu0 %v1085
        %v1266 = vpop.f32.mrb[0].mxu0
        %v1267 = vadd.f32 %v1052, %v1266
        %v1268 = vpop.f32.mrb[0].mxu0
        %1269 = vmatprep.mubr.f32.mxu0 0.0
        %1270 = vmatmul.mubr.f32.gmra.mrb[0].mxu0 %v1088
        %v1271 = vpop.f32.mrb[0].mxu0
        %v1272 = vadd.f32 %v1052, %v1271
        %v1273 = vpop.f32.mrb[0].mxu0
        %1274 = vmatprep.mubr.f32.mxu0 0.0
        %1275 = vmatmul.mubr.f32.gmra.mrb[0].mxu0 %v1091
        %v1276 = vpop.f32.mrb[0].mxu0
        %v1277 = vadd.f32 %v1052, %v1276
        %v1278 = vpop.f32.mrb[0].mxu0
        %1279 = vmatprep.mubr.f32.mxu0 0.0
        %1280 = vmatmul.mubr.f32.gmra.mrb[0].mxu0 %v1094
        %v1281 = vpop.f32.mrb[0].mxu0
        %v1282 = vadd.f32 %v1052, %v1281
        %v1283 = vpop.f32.mrb[0].mxu0
        %1284 = vmatprep.mubr.f32.mxu0 0.0
        %1285 = vmatmul.mubr.f32.gmra.mrb[0].mxu0 %v1097
        %v1286 = vpop.f32.mrb[0].mxu0
        %v1287 = vadd.f32 %v1052, %v1286
        %v1288 = vpop.f32.mrb[0].mxu0
        %1289 = vmatprep.mubr.f32.mxu0 0.0
        %1290 = vmatmul.mubr.f32.gmra.mrb[0].mxu0 %v1100
        %v1291 = vpop.f32.mrb[0].mxu0
        %v1292 = vadd.f32 %v1052, %v1291
        %v1293 = vpop.f32.mrb[0].mxu0
        %1294 = vmatprep.mubr.f32.mxu0 0.0
        %1295 = vmatmul.mubr.f32.gmra.mrb[0].mxu0 %v1103
        %v1296 = vpop.f32.mrb[0].mxu0
        %v1297 = vadd.f32 %v1052, %v1296
        %v1298 = vpop.f32.mrb[0].mxu0
        %1299 = vmatprep.mubr.f32.mxu0 0.0
        %1300 = vmatmul.mubr.f32.gmra.mrb[0].mxu0 %v1106
        %v1301 = vpop.f32.mrb[0].mxu0
        %v1302 = vadd.f32 %v1052, %v1301
        %v1303 = vpop.f32.mrb[0].mxu0
        %1304 = vmatprep.mubr.f32.mxu0 0.0
        %1305 = vmatmul.mubr.f32.gmra.mrb[0].mxu0 %v1109
        %v1306 = vpop.f32.mrb[0].mxu0
        %v1307 = vadd.f32 %v1052, %v1306
        %v1308 = vpop.f32.mrb[0].mxu0
        %1309 = vmatprep.mubr.f32.mxu0 0.0
        %1310 = vmatmul.mubr.f32.gmra.mrb[0].mxu0 %v1112
        %v1311 = vpop.f32.mrb[0].mxu0
        %v1312 = vadd.f32 %v1052, %v1311
        %v1313 = vpop.f32.mrb[0].mxu0
        %1314 = vmatprep.mubr.f32.mxu0 0.0
        %1315 = vmatmul.mubr.f32.gmra.mrb[0].mxu0 %v1115
        %v1316 = vpop.f32.mrb[0].mxu0
        %v1317 = vadd.f32 %v1052, %v1316
        %v1318 = vpop.f32.mrb[0].mxu0
        %1319 = vmatprep.mubr.f32.mxu0 0.0
        %1320 = vmatmul.mubr.f32.gmra.mrb[0].mxu0 %v1118
        %v1321 = vpop.f32.mrb[0].mxu0
        %v1322 = vadd.f32 %v1052, %v1321
        %v1323 = vpop.f32.mrb[0].mxu0
        %1324 = vmatprep.mubr.f32.mxu0 0.0
        %1325 = vmatmul.mubr.f32.gmra.mrb[0].mxu0 %v1121
        %v1326 = vpop.f32.mrb[0].mxu0
        %v1327 = vadd.f32 %v1052, %v1326
        %v1328 = vpop.f32.mrb[0].mxu0
        %1329 = vmatprep.mubr.f32.mxu0 0.0
        %1330 = vmatmul.mubr.f32.gmra.mrb[0].mxu0 %v1124
        %v1331 = vpop.f32.mrb[0].mxu0
        %v1332 = vadd.f32 %v1052, %v1331
        %v1333 = vpop.f32.mrb[0].mxu0
        %1334 = vmatprep.mubr.f32.mxu0 0.0
        %1335 = vmatmul.mubr.f32.gmra.mrb[0].mxu0 %v1127
        %v1336 = vpop.f32.mrb[0].mxu0
        %v1337 = vadd.f32 %v1052, %v1336
        %v1338 = vpop.f32.mrb[0].mxu0
        %1339 = vmatprep.mubr.f32.mxu0 0.0
        %1340 = vmatmul.mubr.f32.gmra.mrb[0].mxu0 %v1130
        %v1341 = vpop.f32.mrb[0].mxu0
        %v1342 = vadd.f32 %v1052, %v1341
        %v1343 = vpop.f32.mrb[0].mxu0
        %1344 = vmatprep.mubr.f32.mxu0 0.0
        %1345 = vmatmul.mubr.f32.gmra.mrb[0].mxu0 %v1133
        %v1346 = vpop.f32.mrb[0].mxu0
        %v1347 = vadd.f32 %v1052, %v1346
        %v1348 = vpop.f32.mrb[0].mxu0
        %1349 = vmatprep.mubr.f32.mxu0 0.0
        %1350 = vmatmul.mubr.f32.gmra.mrb[0].mxu0 %v1136
        %v1351 = vpop.f32.mrb[0].mxu0
        %v1352 = vadd.f32 %v1052, %v1351
        %v1353 = vpop.f32.mrb[0].mxu0
        %1354 = vmatprep.mubr.f32.mxu0 0.0
        %1355 = vmatmul.mubr.f32.gmra.mrb[0].mxu0 %v1139
        %v1356 = vpop.f32.mrb[0].mxu0
        %v1357 = vadd.f32 %v1052, %v1356
        %v1358 = vpop.f32.mrb[0].mxu0
        %1359 = vmatprep.mubr.f32.mxu0 0.0
        %1360 = vmatmul.mubr.f32.gmra.mrb[0].mxu0 %v1142
        %v1361 = vpop.f32.mrb[0].mxu0
        %v1362 = vadd.f32 %v1052, %v1361
        %v1363 = vpop.f32.mrb[0].mxu0
        %1364 = vmatprep.mubr.f32.mxu0 0.0
        %1365 = vmatmul.mubr.f32.gmra.mrb[0].mxu0 %v1145
        %v1366 = vpop.f32.mrb[0].mxu0
        %v1367 = vadd.f32 %v1052, %v1366
        %v1368 = vpop.f32.mrb[0].mxu0
        %1369 = vmatprep.mubr.f32.mxu0 0.0
        %1370 = vmatmul.mubr.f32.gmra.mrb[0].mxu0 %v1148
        %v1371 = vpop.f32.mrb[0].mxu0
        %v1372 = vadd.f32 %v1052, %v1371
        %v1373 = vpop.f32.mrb[0].mxu0
        %1374 = vdwg.mxu0
        %v1375 = vmul.f32 %v1217, 0.2
        %v1376 = vmul.f32 %v1222, 0.2
        %v1377 = vmul.f32 %v1227, 0.2
        %v1378 = vmul.f32 %v1232, 0.2
        %v1379 = vmul.f32 %v1237, 0.2
        %v1380 = vmul.f32 %v1242, 0.2
        %v1381 = vmul.f32 %v1247, 0.2
        %v1382 = vmul.f32 %v1252, 0.2
        %v1383 = vmul.f32 %v1257, 0.2
        %v1384 = vmul.f32 %v1262, 0.2
        %v1385 = vmul.f32 %v1267, 0.2
        %v1386 = vmul.f32 %v1272, 0.2
        %v1387 = vmul.f32 %v1277, 0.2
        %v1388 = vmul.f32 %v1282, 0.2
        %v1389 = vmul.f32 %v1287, 0.2
        %v1390 = vmul.f32 %v1292, 0.2
        %v1391 = vmul.f32 %v1297, 0.2
        %v1392 = vmul.f32 %v1302, 0.2
        %v1393 = vmul.f32 %v1307, 0.2
        %v1394 = vmul.f32 %v1312, 0.2
        %v1395 = vmul.f32 %v1317, 0.2
        %v1396 = vmul.f32 %v1322, 0.2
        %v1397 = vmul.f32 %v1327, 0.2
        %v1398 = vmul.f32 %v1332, 0.2
        %v1399 = vmul.f32 %v1337, 0.2
        %v1400 = vmul.f32 %v1342, 0.2
        %v1401 = vmul.f32 %v1347, 0.2
        %v1402 = vmul.f32 %v1352, 0.2
        %v1403 = vmul.f32 %v1357, 0.2
        %v1404 = vmul.f32 %v1362, 0.2
        %v1405 = vmul.f32 %v1367, 0.2
        %v1406 = vmul.f32 %v1372, 0.2
        %v1407 = vmax.f32 %v1217, %v1375
        %v1408 = vmax.f32 %v1222, %v1376
        %v1409 = vmax.f32 %v1227, %v1377
        %v1410 = vmax.f32 %v1232, %v1378
        %v1411 = vmax.f32 %v1237, %v1379
        %v1412 = vmax.f32 %v1242, %v1380
        %v1413 = vmax.f32 %v1247, %v1381
        %v1414 = vmax.f32 %v1252, %v1382
        %v1415 = vmax.f32 %v1257, %v1383
        %v1416 = vmax.f32 %v1262, %v1384
        %v1417 = vmax.f32 %v1267, %v1385
        %v1418 = vmax.f32 %v1272, %v1386
        %v1419 = vmax.f32 %v1277, %v1387
        %v1420 = vmax.f32 %v1282, %v1388
        %v1421 = vmax.f32 %v1287, %v1389
        %v1422 = vmax.f32 %v1292, %v1390
        %v1423 = vmax.f32 %v1297, %v1391
        %v1424 = vmax.f32 %v1302, %v1392
        %v1425 = vmax.f32 %v1307, %v1393
        %v1426 = vmax.f32 %v1312, %v1394
        %v1427 = vmax.f32 %v1317, %v1395
        %v1428 = vmax.f32 %v1322, %v1396
        %v1429 = vmax.f32 %v1327, %v1397
        %v1430 = vmax.f32 %v1332, %v1398
        %v1431 = vmax.f32 %v1337, %v1399
        %v1432 = vmax.f32 %v1342, %v1400
        %v1433 = vmax.f32 %v1347, %v1401
        %v1434 = vmax.f32 %v1352, %v1402
        %v1435 = vmax.f32 %v1357, %v1403
        %v1436 = vmax.f32 %v1362, %v1404
        %v1437 = vmax.f32 %v1367, %v1405
        %v1438 = vmax.f32 %v1372, %v1406
        %v1439 = vld [vmem:[%s3] sm:$0xff]
        %v1440 = vld [vmem:[%s3 + $0x8] sm:$0xff]
        %v1441 = vld [vmem:[%s3 + $0x10] sm:$0xff]
        %v1442 = vld [vmem:[%s3 + $0x18] sm:$0xff]
        %v1443 = vld [vmem:[%s3 + $0x20] sm:$0xff]
        %v1444 = vlaneseq
        %v1445 = vshrl.u32 %v1444, 7
        %v1446 = vsub.s32 0, %v1445
        %v1447 = vrot.slane %v1042, %v1446
        %vm1448 = vcmask 326656
        %v1450 = vsel %vm1448, %v1407, 0
        %v1453 = vsel %vm1448, %v1408, 0
        %v1456 = vsel %vm1448, %v1409, 0
        %v1459 = vsel %vm1448, %v1410, 0
        %v1462 = vsel %vm1448, %v1411, 0
        %v1465 = vsel %vm1448, %v1412, 0
        %v1468 = vsel %vm1448, %v1413, 0
        %v1471 = vsel %vm1448, %v1414, 0
        %v1474 = vsel %vm1448, %v1415, 0
        %v1477 = vsel %vm1448, %v1416, 0
        %v1480 = vsel %vm1448, %v1417, 0
        %v1483 = vsel %vm1448, %v1418, 0
        %v1486 = vsel %vm1448, %v1419, 0
        %v1489 = vsel %vm1448, %v1420, 0
        %v1492 = vsel %vm1448, %v1421, 0
        %v1495 = vsel %vm1448, %v1422, 0
        %v1498 = vsel %vm1448, %v1423, 0
        %v1501 = vsel %vm1448, %v1424, 0
        %v1504 = vsel %vm1448, %v1425, 0
        %v1507 = vsel %vm1448, %v1426, 0
        %v1510 = vsel %vm1448, %v1427, 0
        %v1513 = vsel %vm1448, %v1428, 0
        %v1516 = vsel %vm1448, %v1429, 0
        %v1519 = vsel %vm1448, %v1430, 0
        %v1522 = vsel %vm1448, %v1431, 0
        %v1525 = vsel %vm1448, %v1432, 0
        %v1528 = vsel %vm1448, %v1433, 0
        %v1531 = vsel %vm1448, %v1434, 0
        %v1534 = vsel %vm1448, %v1435, 0
        %v1537 = vsel %vm1448, %v1436, 0
        %v1540 = vsel %vm1448, %v1437, 0
        %v1543 = vsel %vm1448, %v1438, 0
        %1545 = vmatprep.subr.mxu0 0.0
        %1546 = vmatpush1.msra.mxu0 %v1439
        %1547 = vmatprep.subr.mxu0 0.0
        %1548 = vmatpush1.msra.mxu0 %v1440
        %1549 = vmatprep.subr.mxu0 0.0
        %1550 = vmatpush1.msra.mxu0 %v1441
        %1551 = vmatprep.subr.mxu0 0.0
        %1552 = vmatpush1.msra.mxu0 %v1442
        %1553 = vmatprep.subr.mxu0 0.0
        %1554 = vmatpush1.msra.mxu0 %v1443
        %1555 = vmatprep.subr.mxu0 0.0
        %1556 = vmatpush1.msra.mxu0 0.0
        %1557 = vmatprep.subr.mxu0 0.0
        %1558 = vmatpush1.msra.mxu0 0.0
        %1559 = vmatprep.subr.mxu0 0.0
        %1560 = vmatpush1.msra.mxu0 0.0
        %1561 = vmatprep.subr.mxu0 0.0
        %1562 = vmatpush1.msra.mxu0 0.0
        %1563 = vmatprep.subr.mxu0 0.0
        %1564 = vmatpush1.msra.mxu0 0.0
        %1565 = vmatprep.subr.mxu0 0.0
        %1566 = vmatpush1.msra.mxu0 0.0
        %1567 = vmatprep.subr.mxu0 0.0
        %1568 = vmatpush1.msra.mxu0 0.0
        %1569 = vmatprep.subr.mxu0 0.0
        %1570 = vmatpush1.msra.mxu0 0.0
        %1571 = vmatprep.subr.mxu0 0.0
        %1572 = vmatpush1.msra.mxu0 0.0
        %1573 = vmatprep.subr.mxu0 0.0
        %1574 = vmatpush1.msra.mxu0 0.0
        %1575 = vmatprep.subr.mxu0 0.0
        %1576 = vmatpush1.msra.mxu0 0.0
        %1577 = vmatprep.subr.mxu0 0.0
        %1578 = vmatpush1.msra.mxu0 0.0
        %1579 = vmatprep.subr.mxu0 0.0
        %1580 = vmatpush1.msra.mxu0 0.0
        %1581 = vmatprep.subr.mxu0 0.0
        %1582 = vmatpush1.msra.mxu0 0.0
        %1583 = vmatprep.subr.mxu0 0.0
        %1584 = vmatpush1.msra.mxu0 0.0
        %1585 = vmatprep.subr.mxu0 0.0
        %1586 = vmatpush1.msra.mxu0 0.0
        %1587 = vmatprep.subr.mxu0 0.0
        %1588 = vmatpush1.msra.mxu0 0.0
        %1589 = vmatprep.subr.mxu0 0.0
        %1590 = vmatpush1.msra.mxu0 0.0
        %1591 = vmatprep.subr.mxu0 0.0
        %1592 = vmatpush1.msra.mxu0 0.0
        %1593 = vmatprep.subr.mxu0 0.0
        %1594 = vmatpush1.msra.mxu0 0.0
        %1595 = vmatprep.subr.mxu0 0.0
        %1596 = vmatpush1.msra.mxu0 0.0
        %1597 = vmatprep.subr.mxu0 0.0
        %1598 = vmatpush1.msra.mxu0 0.0
        %1599 = vmatprep.subr.mxu0 0.0
        %1600 = vmatpush1.msra.mxu0 0.0
        %1601 = vmatprep.subr.mxu0 0.0
        %1602 = vmatpush1.msra.mxu0 0.0
        %1603 = vmatprep.subr.mxu0 0.0
        %1604 = vmatpush1.msra.mxu0 0.0
        %1605 = vmatprep.subr.mxu0 0.0
        %1606 = vmatpush1.msra.mxu0 0.0
        %1607 = vmatprep.subr.mxu0 0.0
        %1608 = vmatpush1.msra.mxu0 0.0
        %1609 = vmatprep.mubr.f32.mxu0 0.0
        %1610 = vmatmul.mubr.f32.gmra.mrb[0].mxu0 %v1450
        %v1611 = vpop.f32.mrb[0].mxu0
        %v1612 = vadd.f32 %v1447, %v1611
        %v1613 = vpop.f32.mrb[0].mxu0
        %1614 = vmatprep.mubr.f32.mxu0 0.0
        %1615 = vmatmul.mubr.f32.gmra.mrb[0].mxu0 %v1453
        %v1616 = vpop.f32.mrb[0].mxu0
        %v1617 = vadd.f32 %v1447, %v1616
        %v1618 = vpop.f32.mrb[0].mxu0
        %1619 = vmatprep.mubr.f32.mxu0 0.0
        %1620 = vmatmul.mubr.f32.gmra.mrb[0].mxu0 %v1456
        %v1621 = vpop.f32.mrb[0].mxu0
        %v1622 = vadd.f32 %v1447, %v1621
        %v1623 = vpop.f32.mrb[0].mxu0
        %1624 = vmatprep.mubr.f32.mxu0 0.0
        %1625 = vmatmul.mubr.f32.gmra.mrb[0].mxu0 %v1459
        %v1626 = vpop.f32.mrb[0].mxu0
        %v1627 = vadd.f32 %v1447, %v1626
        %v1628 = vpop.f32.mrb[0].mxu0
        %1629 = vmatprep.mubr.f32.mxu0 0.0
        %1630 = vmatmul.mubr.f32.gmra.mrb[0].mxu0 %v1462
        %v1631 = vpop.f32.mrb[0].mxu0
        %v1632 = vadd.f32 %v1447, %v1631
        %v1633 = vpop.f32.mrb[0].mxu0
        %1634 = vmatprep.mubr.f32.mxu0 0.0
        %1635 = vmatmul.mubr.f32.gmra.mrb[0].mxu0 %v1465
        %v1636 = vpop.f32.mrb[0].mxu0
        %v1637 = vadd.f32 %v1447, %v1636
        %v1638 = vpop.f32.mrb[0].mxu0
        %1639 = vmatprep.mubr.f32.mxu0 0.0
        %1640 = vmatmul.mubr.f32.gmra.mrb[0].mxu0 %v1468
        %v1641 = vpop.f32.mrb[0].mxu0
        %v1642 = vadd.f32 %v1447, %v1641
        %v1643 = vpop.f32.mrb[0].mxu0
        %1644 = vmatprep.mubr.f32.mxu0 0.0
        %1645 = vmatmul.mubr.f32.gmra.mrb[0].mxu0 %v1471
        %v1646 = vpop.f32.mrb[0].mxu0
        %v1647 = vadd.f32 %v1447, %v1646
        %v1648 = vpop.f32.mrb[0].mxu0
        %1649 = vmatprep.mubr.f32.mxu0 0.0
        %1650 = vmatmul.mubr.f32.gmra.mrb[0].mxu0 %v1474
        %v1651 = vpop.f32.mrb[0].mxu0
        %v1652 = vadd.f32 %v1447, %v1651
        %v1653 = vpop.f32.mrb[0].mxu0
        %1654 = vmatprep.mubr.f32.mxu0 0.0
        %1655 = vmatmul.mubr.f32.gmra.mrb[0].mxu0 %v1477
        %v1656 = vpop.f32.mrb[0].mxu0
        %v1657 = vadd.f32 %v1447, %v1656
        %v1658 = vpop.f32.mrb[0].mxu0
        %1659 = vmatprep.mubr.f32.mxu0 0.0
        %1660 = vmatmul.mubr.f32.gmra.mrb[0].mxu0 %v1480
        %v1661 = vpop.f32.mrb[0].mxu0
        %v1662 = vadd.f32 %v1447, %v1661
        %v1663 = vpop.f32.mrb[0].mxu0
        %1664 = vmatprep.mubr.f32.mxu0 0.0
        %1665 = vmatmul.mubr.f32.gmra.mrb[0].mxu0 %v1483
        %v1666 = vpop.f32.mrb[0].mxu0
        %v1667 = vadd.f32 %v1447, %v1666
        %v1668 = vpop.f32.mrb[0].mxu0
        %1669 = vmatprep.mubr.f32.mxu0 0.0
        %1670 = vmatmul.mubr.f32.gmra.mrb[0].mxu0 %v1486
        %v1671 = vpop.f32.mrb[0].mxu0
        %v1672 = vadd.f32 %v1447, %v1671
        %v1673 = vpop.f32.mrb[0].mxu0
        %1674 = vmatprep.mubr.f32.mxu0 0.0
        %1675 = vmatmul.mubr.f32.gmra.mrb[0].mxu0 %v1489
        %v1676 = vpop.f32.mrb[0].mxu0
        %v1677 = vadd.f32 %v1447, %v1676
        %v1678 = vpop.f32.mrb[0].mxu0
        %1679 = vmatprep.mubr.f32.mxu0 0.0
        %1680 = vmatmul.mubr.f32.gmra.mrb[0].mxu0 %v1492
        %v1681 = vpop.f32.mrb[0].mxu0
        %v1682 = vadd.f32 %v1447, %v1681
        %v1683 = vpop.f32.mrb[0].mxu0
        %1684 = vmatprep.mubr.f32.mxu0 0.0
        %1685 = vmatmul.mubr.f32.gmra.mrb[0].mxu0 %v1495
        %v1686 = vpop.f32.mrb[0].mxu0
        %v1687 = vadd.f32 %v1447, %v1686
        %v1688 = vpop.f32.mrb[0].mxu0
        %1689 = vmatprep.mubr.f32.mxu0 0.0
        %1690 = vmatmul.mubr.f32.gmra.mrb[0].mxu0 %v1498
        %v1691 = vpop.f32.mrb[0].mxu0
        %v1692 = vadd.f32 %v1447, %v1691
        %v1693 = vpop.f32.mrb[0].mxu0
        %1694 = vmatprep.mubr.f32.mxu0 0.0
        %1695 = vmatmul.mubr.f32.gmra.mrb[0].mxu0 %v1501
        %v1696 = vpop.f32.mrb[0].mxu0
        %v1697 = vadd.f32 %v1447, %v1696
        %v1698 = vpop.f32.mrb[0].mxu0
        %1699 = vmatprep.mubr.f32.mxu0 0.0
        %1700 = vmatmul.mubr.f32.gmra.mrb[0].mxu0 %v1504
        %v1701 = vpop.f32.mrb[0].mxu0
        %v1702 = vadd.f32 %v1447, %v1701
        %v1703 = vpop.f32.mrb[0].mxu0
        %1704 = vmatprep.mubr.f32.mxu0 0.0
        %1705 = vmatmul.mubr.f32.gmra.mrb[0].mxu0 %v1507
        %v1706 = vpop.f32.mrb[0].mxu0
        %v1707 = vadd.f32 %v1447, %v1706
        %v1708 = vpop.f32.mrb[0].mxu0
        %1709 = vmatprep.mubr.f32.mxu0 0.0
        %1710 = vmatmul.mubr.f32.gmra.mrb[0].mxu0 %v1510
        %v1711 = vpop.f32.mrb[0].mxu0
        %v1712 = vadd.f32 %v1447, %v1711
        %v1713 = vpop.f32.mrb[0].mxu0
        %1714 = vmatprep.mubr.f32.mxu0 0.0
        %1715 = vmatmul.mubr.f32.gmra.mrb[0].mxu0 %v1513
        %v1716 = vpop.f32.mrb[0].mxu0
        %v1717 = vadd.f32 %v1447, %v1716
        %v1718 = vpop.f32.mrb[0].mxu0
        %1719 = vmatprep.mubr.f32.mxu0 0.0
        %1720 = vmatmul.mubr.f32.gmra.mrb[0].mxu0 %v1516
        %v1721 = vpop.f32.mrb[0].mxu0
        %v1722 = vadd.f32 %v1447, %v1721
        %v1723 = vpop.f32.mrb[0].mxu0
        %1724 = vmatprep.mubr.f32.mxu0 0.0
        %1725 = vmatmul.mubr.f32.gmra.mrb[0].mxu0 %v1519
        %v1726 = vpop.f32.mrb[0].mxu0
        %v1727 = vadd.f32 %v1447, %v1726
        %v1728 = vpop.f32.mrb[0].mxu0
        %1729 = vmatprep.mubr.f32.mxu0 0.0
        %1730 = vmatmul.mubr.f32.gmra.mrb[0].mxu0 %v1522
        %v1731 = vpop.f32.mrb[0].mxu0
        %v1732 = vadd.f32 %v1447, %v1731
        %v1733 = vpop.f32.mrb[0].mxu0
        %1734 = vmatprep.mubr.f32.mxu0 0.0
        %1735 = vmatmul.mubr.f32.gmra.mrb[0].mxu0 %v1525
        %v1736 = vpop.f32.mrb[0].mxu0
        %v1737 = vadd.f32 %v1447, %v1736
        %v1738 = vpop.f32.mrb[0].mxu0
        %1739 = vmatprep.mubr.f32.mxu0 0.0
        %1740 = vmatmul.mubr.f32.gmra.mrb[0].mxu0 %v1528
        %v1741 = vpop.f32.mrb[0].mxu0
        %v1742 = vadd.f32 %v1447, %v1741
        %v1743 = vpop.f32.mrb[0].mxu0
        %1744 = vmatprep.mubr.f32.mxu0 0.0
        %1745 = vmatmul.mubr.f32.gmra.mrb[0].mxu0 %v1531
        %v1746 = vpop.f32.mrb[0].mxu0
        %v1747 = vadd.f32 %v1447, %v1746
        %v1748 = vpop.f32.mrb[0].mxu0
        %1749 = vmatprep.mubr.f32.mxu0 0.0
        %1750 = vmatmul.mubr.f32.gmra.mrb[0].mxu0 %v1534
        %v1751 = vpop.f32.mrb[0].mxu0
        %v1752 = vadd.f32 %v1447, %v1751
        %v1753 = vpop.f32.mrb[0].mxu0
        %1754 = vmatprep.mubr.f32.mxu0 0.0
        %1755 = vmatmul.mubr.f32.gmra.mrb[0].mxu0 %v1537
        %v1756 = vpop.f32.mrb[0].mxu0
        %v1757 = vadd.f32 %v1447, %v1756
        %v1758 = vpop.f32.mrb[0].mxu0
        %1759 = vmatprep.mubr.f32.mxu0 0.0
        %1760 = vmatmul.mubr.f32.gmra.mrb[0].mxu0 %v1540
        %v1761 = vpop.f32.mrb[0].mxu0
        %v1762 = vadd.f32 %v1447, %v1761
        %v1763 = vpop.f32.mrb[0].mxu0
        %1764 = vmatprep.mubr.f32.mxu0 0.0
        %1765 = vmatmul.mubr.f32.gmra.mrb[0].mxu0 %v1543
        %v1766 = vpop.f32.mrb[0].mxu0
        %v1767 = vadd.f32 %v1447, %v1766
        %v1768 = vpop.f32.mrb[0].mxu0
        %1769 = vdwg.mxu0
        %v1770 = vmul.f32 %v1612, 0.2
        %v1771 = vmul.f32 %v1617, 0.2
        %v1772 = vmul.f32 %v1622, 0.2
        %v1773 = vmul.f32 %v1627, 0.2
        %v1774 = vmul.f32 %v1632, 0.2
        %v1775 = vmul.f32 %v1637, 0.2
        %v1776 = vmul.f32 %v1642, 0.2
        %v1777 = vmul.f32 %v1647, 0.2
        %v1778 = vmul.f32 %v1652, 0.2
        %v1779 = vmul.f32 %v1657, 0.2
        %v1780 = vmul.f32 %v1662, 0.2
        %v1781 = vmul.f32 %v1667, 0.2
        %v1782 = vmul.f32 %v1672, 0.2
        %v1783 = vmul.f32 %v1677, 0.2
        %v1784 = vmul.f32 %v1682, 0.2
        %v1785 = vmul.f32 %v1687, 0.2
        %v1786 = vmul.f32 %v1692, 0.2
        %v1787 = vmul.f32 %v1697, 0.2
        %v1788 = vmul.f32 %v1702, 0.2
        %v1789 = vmul.f32 %v1707, 0.2
        %v1790 = vmul.f32 %v1712, 0.2
        %v1791 = vmul.f32 %v1717, 0.2
        %v1792 = vmul.f32 %v1722, 0.2
        %v1793 = vmul.f32 %v1727, 0.2
        %v1794 = vmul.f32 %v1732, 0.2
        %v1795 = vmul.f32 %v1737, 0.2
        %v1796 = vmul.f32 %v1742, 0.2
        %v1797 = vmul.f32 %v1747, 0.2
        %v1798 = vmul.f32 %v1752, 0.2
        %v1799 = vmul.f32 %v1757, 0.2
        %v1800 = vmul.f32 %v1762, 0.2
        %v1801 = vmul.f32 %v1767, 0.2
        %v1802 = vmax.f32 %v1612, %v1770
        %v1803 = vmax.f32 %v1617, %v1771
        %v1804 = vmax.f32 %v1622, %v1772
        %v1805 = vmax.f32 %v1627, %v1773
        %v1806 = vmax.f32 %v1632, %v1774
        %v1807 = vmax.f32 %v1637, %v1775
        %v1808 = vmax.f32 %v1642, %v1776
        %v1809 = vmax.f32 %v1647, %v1777
        %v1810 = vmax.f32 %v1652, %v1778
        %v1811 = vmax.f32 %v1657, %v1779
        %v1812 = vmax.f32 %v1662, %v1780
        %v1813 = vmax.f32 %v1667, %v1781
        %v1814 = vmax.f32 %v1672, %v1782
        %v1815 = vmax.f32 %v1677, %v1783
        %v1816 = vmax.f32 %v1682, %v1784
        %v1817 = vmax.f32 %v1687, %v1785
        %v1818 = vmax.f32 %v1692, %v1786
        %v1819 = vmax.f32 %v1697, %v1787
        %v1820 = vmax.f32 %v1702, %v1788
        %v1821 = vmax.f32 %v1707, %v1789
        %v1822 = vmax.f32 %v1712, %v1790
        %v1823 = vmax.f32 %v1717, %v1791
        %v1824 = vmax.f32 %v1722, %v1792
        %v1825 = vmax.f32 %v1727, %v1793
        %v1826 = vmax.f32 %v1732, %v1794
        %v1827 = vmax.f32 %v1737, %v1795
        %v1828 = vmax.f32 %v1742, %v1796
        %v1829 = vmax.f32 %v1747, %v1797
        %v1830 = vmax.f32 %v1752, %v1798
        %v1831 = vmax.f32 %v1757, %v1799
        %v1832 = vmax.f32 %v1762, %v1800
        %v1833 = vmax.f32 %v1767, %v1801
        %v1834 = vld [vmem:[%s5] sm:$0xff]
        %v1835 = vld [vmem:[%s5 + $0x8] sm:$0xff]
        %vm1836 = vcmask 130048
        %v1838 = vsel %vm1836, %v945, 0
        %v1841 = vsel %vm1836, %v946, 0
        %v1844 = vsel %vm1836, %v947, 0
        %v1847 = vsel %vm1836, %v948, 0
        %v1850 = vsel %vm1836, %v949, 0
        %v1853 = vsel %vm1836, %v950, 0
        %v1856 = vsel %vm1836, %v951, 0
        %v1859 = vsel %vm1836, %v952, 0
        %v1862 = vsel %vm1836, %v953, 0
        %v1865 = vsel %vm1836, %v954, 0
        %v1868 = vsel %vm1836, %v955, 0
        %v1871 = vsel %vm1836, %v956, 0
        %v1874 = vsel %vm1836, %v957, 0
        %v1877 = vsel %vm1836, %v958, 0
        %v1880 = vsel %vm1836, %v959, 0
        %v1883 = vsel %vm1836, %v960, 0
        %v1886 = vsel %vm1836, %v961, 0
        %v1889 = vsel %vm1836, %v962, 0
        %v1892 = vsel %vm1836, %v963, 0
        %v1895 = vsel %vm1836, %v964, 0
        %v1898 = vsel %vm1836, %v965, 0
        %v1901 = vsel %vm1836, %v966, 0
        %v1904 = vsel %vm1836, %v967, 0
        %v1907 = vsel %vm1836, %v968, 0
        %v1910 = vsel %vm1836, %v969, 0
        %v1913 = vsel %vm1836, %v970, 0
        %v1916 = vsel %vm1836, %v971, 0
        %v1919 = vsel %vm1836, %v972, 0
        %v1922 = vsel %vm1836, %v973, 0
        %v1925 = vsel %vm1836, %v974, 0
        %v1928 = vsel %vm1836, %v975, 0
        %v1931 = vsel %vm1836, %v976, 0
        %v1934 = vsel %vm1836, %v977, 0
        %v1937 = vsel %vm1836, %v978, 0
        %v1940 = vsel %vm1836, %v979, 0
        %v1943 = vsel %vm1836, %v980, 0
        %v1946 = vsel %vm1836, %v981, 0
        %v1949 = vsel %vm1836, %v982, 0
        %v1952 = vsel %vm1836, %v983, 0
        %v1955 = vsel %vm1836, %v984, 0
        %v1958 = vsel %vm1836, %v985, 0
        %v1961 = vsel %vm1836, %v986, 0
        %v1964 = vsel %vm1836, %v987, 0
        %v1967 = vsel %vm1836, %v988, 0
        %v1970 = vsel %vm1836, %v989, 0
        %v1973 = vsel %vm1836, %v990, 0
        %v1976 = vsel %vm1836, %v991, 0
        %v1979 = vsel %vm1836, %v992, 0
        %v1982 = vsel %vm1836, %v993, 0
        %v1985 = vsel %vm1836, %v994, 0
        %v1988 = vsel %vm1836, %v995, 0
        %v1991 = vsel %vm1836, %v996, 0
        %v1994 = vsel %vm1836, %v997, 0
        %v1997 = vsel %vm1836, %v998, 0
        %v2000 = vsel %vm1836, %v999, 0
        %v2003 = vsel %vm1836, %v1000, 0
        %v2006 = vsel %vm1836, %v1001, 0
        %v2009 = vsel %vm1836, %v1002, 0
        %v2012 = vsel %vm1836, %v1003, 0
        %v2015 = vsel %vm1836, %v1004, 0
        %v2018 = vsel %vm1836, %v1005, 0
        %v2021 = vsel %vm1836, %v1006, 0
        %v2024 = vsel %vm1836, %v1007, 0
        %v2027 = vsel %vm1836, %v1008, 0
        %v2030 = vsel %vm1836, %v1009, 0
        %v2033 = vsel %vm1836, %v1010, 0
        %v2036 = vsel %vm1836, %v1011, 0
        %v2039 = vsel %vm1836, %v1012, 0
        %v2042 = vsel %vm1836, %v1013, 0
        %v2045 = vsel %vm1836, %v1014, 0
        %v2048 = vsel %vm1836, %v1015, 0
        %v2051 = vsel %vm1836, %v1016, 0
        %v2054 = vsel %vm1836, %v1017, 0
        %v2057 = vsel %vm1836, %v1018, 0
        %v2060 = vsel %vm1836, %v1019, 0
        %v2063 = vsel %vm1836, %v1020, 0
        %v2066 = vsel %vm1836, %v1021, 0
        %v2069 = vsel %vm1836, %v1022, 0
        %v2072 = vsel %vm1836, %v1023, 0
        %v2075 = vsel %vm1836, %v1024, 0
        %v2078 = vsel %vm1836, %v1025, 0
        %v2081 = vsel %vm1836, %v1026, 0
        %v2084 = vsel %vm1836, %v1027, 0
        %v2087 = vsel %vm1836, %v1028, 0
        %v2090 = vsel %vm1836, %v1029, 0
        %v2093 = vsel %vm1836, %v1030, 0
        %v2096 = vsel %vm1836, %v1031, 0
        %v2099 = vsel %vm1836, %v1032, 0
        %v2102 = vsel %vm1836, %v1033, 0
        %v2105 = vsel %vm1836, %v1034, 0
        %v2108 = vsel %vm1836, %v1035, 0
        %v2111 = vsel %vm1836, %v1036, 0
        %v2114 = vsel %vm1836, %v1037, 0
        %v2117 = vsel %vm1836, %v1038, 0
        %v2120 = vsel %vm1836, %v1039, 0
        %v2123 = vsel %vm1836, %v1040, 0
        %2125 = vmatprep.subr.mxu0 0.0
        %2126 = vmatpush1.msra.mxu0 %v1834
        %2127 = vmatprep.subr.mxu0 0.0
        %2128 = vmatpush1.msra.mxu0 %v1835
        %2129 = vmatprep.subr.mxu0 0.0
        %2130 = vmatpush1.msra.mxu0 0.0
        %2131 = vmatprep.subr.mxu0 0.0
        %2132 = vmatpush1.msra.mxu0 0.0
        %2133 = vmatprep.subr.mxu0 0.0
        %2134 = vmatpush1.msra.mxu0 0.0
        %2135 = vmatprep.subr.mxu0 0.0
        %2136 = vmatpush1.msra.mxu0 0.0
        %2137 = vmatprep.subr.mxu0 0.0
        %2138 = vmatpush1.msra.mxu0 0.0
        %2139 = vmatprep.subr.mxu0 0.0
        %2140 = vmatpush1.msra.mxu0 0.0
        %2141 = vmatprep.subr.mxu0 0.0
        %2142 = vmatpush1.msra.mxu0 0.0
        %2143 = vmatprep.subr.mxu0 0.0
        %2144 = vmatpush1.msra.mxu0 0.0
        %2145 = vmatprep.subr.mxu0 0.0
        %2146 = vmatpush1.msra.mxu0 0.0
        %2147 = vmatprep.subr.mxu0 0.0
        %2148 = vmatpush1.msra.mxu0 0.0
        %2149 = vmatprep.subr.mxu0 0.0
        %2150 = vmatpush1.msra.mxu0 0.0
        %2151 = vmatprep.subr.mxu0 0.0
        %2152 = vmatpush1.msra.mxu0 0.0
        %2153 = vmatprep.subr.mxu0 0.0
        %2154 = vmatpush1.msra.mxu0 0.0
        %2155 = vmatprep.subr.mxu0 0.0
        %2156 = vmatpush1.msra.mxu0 0.0
        %2157 = vmatprep.subr.mxu0 0.0
        %2158 = vmatpush1.msra.mxu0 0.0
        %2159 = vmatprep.subr.mxu0 0.0
        %2160 = vmatpush1.msra.mxu0 0.0
        %2161 = vmatprep.subr.mxu0 0.0
        %2162 = vmatpush1.msra.mxu0 0.0
        %2163 = vmatprep.subr.mxu0 0.0
        %2164 = vmatpush1.msra.mxu0 0.0
        %2165 = vmatprep.subr.mxu0 0.0
        %2166 = vmatpush1.msra.mxu0 0.0
        %2167 = vmatprep.subr.mxu0 0.0
        %2168 = vmatpush1.msra.mxu0 0.0
        %2169 = vmatprep.subr.mxu0 0.0
        %2170 = vmatpush1.msra.mxu0 0.0
        %2171 = vmatprep.subr.mxu0 0.0
        %2172 = vmatpush1.msra.mxu0 0.0
        %2173 = vmatprep.subr.mxu0 0.0
        %2174 = vmatpush1.msra.mxu0 0.0
        %2175 = vmatprep.subr.mxu0 0.0
        %2176 = vmatpush1.msra.mxu0 0.0
        %2177 = vmatprep.subr.mxu0 0.0
        %2178 = vmatpush1.msra.mxu0 0.0
        %2179 = vmatprep.subr.mxu0 0.0
        %2180 = vmatpush1.msra.mxu0 0.0
        %2181 = vmatprep.subr.mxu0 0.0
        %2182 = vmatpush1.msra.mxu0 0.0
        %2183 = vmatprep.subr.mxu0 0.0
        %2184 = vmatpush1.msra.mxu0 0.0
        %2185 = vmatprep.subr.mxu0 0.0
        %2186 = vmatpush1.msra.mxu0 0.0
        %2187 = vmatprep.subr.mxu0 0.0
        %2188 = vmatpush1.msra.mxu0 0.0
        %2189 = vmatprep.mubr.f32.mxu0 0.0
        %2190 = vmatmul.mubr.f32.gmra.mrb[0].mxu0 %v1838
        %v2191 = vpop.f32.mrb[0].mxu0
        %v2192 = vadd.f32 0.0, %v2191
        %v2193 = vpop.f32.mrb[0].mxu0
        %2194 = vmatprep.mubr.f32.mxu0 0.0
        %2195 = vmatmul.mubr.f32.gmra.mrb[0].mxu0 %v1841
        %v2196 = vpop.f32.mrb[0].mxu0
        %v2197 = vadd.f32 0.0, %v2196
        %v2198 = vpop.f32.mrb[0].mxu0
        %2199 = vmatprep.mubr.f32.mxu0 0.0
        %2200 = vmatmul.mubr.f32.gmra.mrb[0].mxu0 %v1844
        %v2201 = vpop.f32.mrb[0].mxu0
        %v2202 = vadd.f32 0.0, %v2201
        %v2203 = vpop.f32.mrb[0].mxu0
        %2204 = vmatprep.mubr.f32.mxu0 0.0
        %2205 = vmatmul.mubr.f32.gmra.mrb[0].mxu0 %v1847
        %v2206 = vpop.f32.mrb[0].mxu0
        %v2207 = vadd.f32 0.0, %v2206
        %v2208 = vpop.f32.mrb[0].mxu0
        %2209 = vmatprep.mubr.f32.mxu0 0.0
        %2210 = vmatmul.mubr.f32.gmra.mrb[0].mxu0 %v1850
        %v2211 = vpop.f32.mrb[0].mxu0
        %v2212 = vadd.f32 0.0, %v2211
        %v2213 = vpop.f32.mrb[0].mxu0
        %2214 = vmatprep.mubr.f32.mxu0 0.0
        %2215 = vmatmul.mubr.f32.gmra.mrb[0].mxu0 %v1853
        %v2216 = vpop.f32.mrb[0].mxu0
        %v2217 = vadd.f32 0.0, %v2216
        %v2218 = vpop.f32.mrb[0].mxu0
        %2219 = vmatprep.mubr.f32.mxu0 0.0
        %2220 = vmatmul.mubr.f32.gmra.mrb[0].mxu0 %v1856
        %v2221 = vpop.f32.mrb[0].mxu0
        %v2222 = vadd.f32 0.0, %v2221
        %v2223 = vpop.f32.mrb[0].mxu0
        %2224 = vmatprep.mubr.f32.mxu0 0.0
        %2225 = vmatmul.mubr.f32.gmra.mrb[0].mxu0 %v1859
        %v2226 = vpop.f32.mrb[0].mxu0
        %v2227 = vadd.f32 0.0, %v2226
        %v2228 = vpop.f32.mrb[0].mxu0
        %2229 = vmatprep.mubr.f32.mxu0 0.0
        %2230 = vmatmul.mubr.f32.gmra.mrb[0].mxu0 %v1862
        %v2231 = vpop.f32.mrb[0].mxu0
        %v2232 = vadd.f32 0.0, %v2231
        %v2233 = vpop.f32.mrb[0].mxu0
        %2234 = vmatprep.mubr.f32.mxu0 0.0
        %2235 = vmatmul.mubr.f32.gmra.mrb[0].mxu0 %v1865
        %v2236 = vpop.f32.mrb[0].mxu0
        %v2237 = vadd.f32 0.0, %v2236
        %v2238 = vpop.f32.mrb[0].mxu0
        %2239 = vmatprep.mubr.f32.mxu0 0.0
        %2240 = vmatmul.mubr.f32.gmra.mrb[0].mxu0 %v1868
        %v2241 = vpop.f32.mrb[0].mxu0
        %v2242 = vadd.f32 0.0, %v2241
        %v2243 = vpop.f32.mrb[0].mxu0
        %2244 = vmatprep.mubr.f32.mxu0 0.0
        %2245 = vmatmul.mubr.f32.gmra.mrb[0].mxu0 %v1871
        %v2246 = vpop.f32.mrb[0].mxu0
        %v2247 = vadd.f32 0.0, %v2246
        %v2248 = vpop.f32.mrb[0].mxu0
        %2249 = vmatprep.mubr.f32.mxu0 0.0
        %2250 = vmatmul.mubr.f32.gmra.mrb[0].mxu0 %v1874
        %v2251 = vpop.f32.mrb[0].mxu0
        %v2252 = vadd.f32 0.0, %v2251
        %v2253 = vpop.f32.mrb[0].mxu0
        %2254 = vmatprep.mubr.f32.mxu0 0.0
        %2255 = vmatmul.mubr.f32.gmra.mrb[0].mxu0 %v1877
        %v2256 = vpop.f32.mrb[0].mxu0
        %v2257 = vadd.f32 0.0, %v2256
        %v2258 = vpop.f32.mrb[0].mxu0
        %2259 = vmatprep.mubr.f32.mxu0 0.0
        %2260 = vmatmul.mubr.f32.gmra.mrb[0].mxu0 %v1880
        %v2261 = vpop.f32.mrb[0].mxu0
        %v2262 = vadd.f32 0.0, %v2261
        %v2263 = vpop.f32.mrb[0].mxu0
        %2264 = vmatprep.mubr.f32.mxu0 0.0
        %2265 = vmatmul.mubr.f32.gmra.mrb[0].mxu0 %v1883
        %v2266 = vpop.f32.mrb[0].mxu0
        %v2267 = vadd.f32 0.0, %v2266
        %v2268 = vpop.f32.mrb[0].mxu0
        %2269 = vmatprep.mubr.f32.mxu0 0.0
        %2270 = vmatmul.mubr.f32.gmra.mrb[0].mxu0 %v1886
        %v2271 = vpop.f32.mrb[0].mxu0
        %v2272 = vadd.f32 0.0, %v2271
        %v2273 = vpop.f32.mrb[0].mxu0
        %2274 = vmatprep.mubr.f32.mxu0 0.0
        %2275 = vmatmul.mubr.f32.gmra.mrb[0].mxu0 %v1889
        %v2276 = vpop.f32.mrb[0].mxu0
        %v2277 = vadd.f32 0.0, %v2276
        %v2278 = vpop.f32.mrb[0].mxu0
        %2279 = vmatprep.mubr.f32.mxu0 0.0
        %2280 = vmatmul.mubr.f32.gmra.mrb[0].mxu0 %v1892
        %v2281 = vpop.f32.mrb[0].mxu0
        %v2282 = vadd.f32 0.0, %v2281
        %v2283 = vpop.f32.mrb[0].mxu0
        %2284 = vmatprep.mubr.f32.mxu0 0.0
        %2285 = vmatmul.mubr.f32.gmra.mrb[0].mxu0 %v1895
        %v2286 = vpop.f32.mrb[0].mxu0
        %v2287 = vadd.f32 0.0, %v2286
        %v2288 = vpop.f32.mrb[0].mxu0
        %2289 = vmatprep.mubr.f32.mxu0 0.0
        %2290 = vmatmul.mubr.f32.gmra.mrb[0].mxu0 %v1898
        %v2291 = vpop.f32.mrb[0].mxu0
        %v2292 = vadd.f32 0.0, %v2291
        %v2293 = vpop.f32.mrb[0].mxu0
        %2294 = vmatprep.mubr.f32.mxu0 0.0
        %2295 = vmatmul.mubr.f32.gmra.mrb[0].mxu0 %v1901
        %v2296 = vpop.f32.mrb[0].mxu0
        %v2297 = vadd.f32 0.0, %v2296
        %v2298 = vpop.f32.mrb[0].mxu0
        %2299 = vmatprep.mubr.f32.mxu0 0.0
        %2300 = vmatmul.mubr.f32.gmra.mrb[0].mxu0 %v1904
        %v2301 = vpop.f32.mrb[0].mxu0
        %v2302 = vadd.f32 0.0, %v2301
        %v2303 = vpop.f32.mrb[0].mxu0
        %2304 = vmatprep.mubr.f32.mxu0 0.0
        %2305 = vmatmul.mubr.f32.gmra.mrb[0].mxu0 %v1907
        %v2306 = vpop.f32.mrb[0].mxu0
        %v2307 = vadd.f32 0.0, %v2306
        %v2308 = vpop.f32.mrb[0].mxu0
        %2309 = vmatprep.mubr.f32.mxu0 0.0
        %2310 = vmatmul.mubr.f32.gmra.mrb[0].mxu0 %v1910
        %v2311 = vpop.f32.mrb[0].mxu0
        %v2312 = vadd.f32 0.0, %v2311
        %v2313 = vpop.f32.mrb[0].mxu0
        %2314 = vmatprep.mubr.f32.mxu0 0.0
        %2315 = vmatmul.mubr.f32.gmra.mrb[0].mxu0 %v1913
        %v2316 = vpop.f32.mrb[0].mxu0
        %v2317 = vadd.f32 0.0, %v2316
        %v2318 = vpop.f32.mrb[0].mxu0
        %2319 = vmatprep.mubr.f32.mxu0 0.0
        %2320 = vmatmul.mubr.f32.gmra.mrb[0].mxu0 %v1916
        %v2321 = vpop.f32.mrb[0].mxu0
        %v2322 = vadd.f32 0.0, %v2321
        %v2323 = vpop.f32.mrb[0].mxu0
        %2324 = vmatprep.mubr.f32.mxu0 0.0
        %2325 = vmatmul.mubr.f32.gmra.mrb[0].mxu0 %v1919
        %v2326 = vpop.f32.mrb[0].mxu0
        %v2327 = vadd.f32 0.0, %v2326
        %v2328 = vpop.f32.mrb[0].mxu0
        %2329 = vmatprep.mubr.f32.mxu0 0.0
        %2330 = vmatmul.mubr.f32.gmra.mrb[0].mxu0 %v1922
        %v2331 = vpop.f32.mrb[0].mxu0
        %v2332 = vadd.f32 0.0, %v2331
        %v2333 = vpop.f32.mrb[0].mxu0
        %2334 = vmatprep.mubr.f32.mxu0 0.0
        %2335 = vmatmul.mubr.f32.gmra.mrb[0].mxu0 %v1925
        %v2336 = vpop.f32.mrb[0].mxu0
        %v2337 = vadd.f32 0.0, %v2336
        %v2338 = vpop.f32.mrb[0].mxu0
        %2339 = vmatprep.mubr.f32.mxu0 0.0
        %2340 = vmatmul.mubr.f32.gmra.mrb[0].mxu0 %v1928
        %v2341 = vpop.f32.mrb[0].mxu0
        %v2342 = vadd.f32 0.0, %v2341
        %v2343 = vpop.f32.mrb[0].mxu0
        %2344 = vmatprep.mubr.f32.mxu0 0.0
        %2345 = vmatmul.mubr.f32.gmra.mrb[0].mxu0 %v1931
        %v2346 = vpop.f32.mrb[0].mxu0
        %v2347 = vadd.f32 0.0, %v2346
        %v2348 = vpop.f32.mrb[0].mxu0
        %2349 = vmatprep.mubr.f32.mxu0 0.0
        %2350 = vmatmul.mubr.f32.gmra.mrb[0].mxu0 %v1934
        %v2351 = vpop.f32.mrb[0].mxu0
        %v2352 = vadd.f32 0.0, %v2351
        %v2353 = vpop.f32.mrb[0].mxu0
        %2354 = vmatprep.mubr.f32.mxu0 0.0
        %2355 = vmatmul.mubr.f32.gmra.mrb[0].mxu0 %v1937
        %v2356 = vpop.f32.mrb[0].mxu0
        %v2357 = vadd.f32 0.0, %v2356
        %v2358 = vpop.f32.mrb[0].mxu0
        %2359 = vmatprep.mubr.f32.mxu0 0.0
        %2360 = vmatmul.mubr.f32.gmra.mrb[0].mxu0 %v1940
        %v2361 = vpop.f32.mrb[0].mxu0
        %v2362 = vadd.f32 0.0, %v2361
        %v2363 = vpop.f32.mrb[0].mxu0
        %2364 = vmatprep.mubr.f32.mxu0 0.0
        %2365 = vmatmul.mubr.f32.gmra.mrb[0].mxu0 %v1943
        %v2366 = vpop.f32.mrb[0].mxu0
        %v2367 = vadd.f32 0.0, %v2366
        %v2368 = vpop.f32.mrb[0].mxu0
        %2369 = vmatprep.mubr.f32.mxu0 0.0
        %2370 = vmatmul.mubr.f32.gmra.mrb[0].mxu0 %v1946
        %v2371 = vpop.f32.mrb[0].mxu0
        %v2372 = vadd.f32 0.0, %v2371
        %v2373 = vpop.f32.mrb[0].mxu0
        %2374 = vmatprep.mubr.f32.mxu0 0.0
        %2375 = vmatmul.mubr.f32.gmra.mrb[0].mxu0 %v1949
        %v2376 = vpop.f32.mrb[0].mxu0
        %v2377 = vadd.f32 0.0, %v2376
        %v2378 = vpop.f32.mrb[0].mxu0
        %2379 = vmatprep.mubr.f32.mxu0 0.0
        %2380 = vmatmul.mubr.f32.gmra.mrb[0].mxu0 %v1952
        %v2381 = vpop.f32.mrb[0].mxu0
        %v2382 = vadd.f32 0.0, %v2381
        %v2383 = vpop.f32.mrb[0].mxu0
        %2384 = vmatprep.mubr.f32.mxu0 0.0
        %2385 = vmatmul.mubr.f32.gmra.mrb[0].mxu0 %v1955
        %v2386 = vpop.f32.mrb[0].mxu0
        %v2387 = vadd.f32 0.0, %v2386
        %v2388 = vpop.f32.mrb[0].mxu0
        %2389 = vmatprep.mubr.f32.mxu0 0.0
        %2390 = vmatmul.mubr.f32.gmra.mrb[0].mxu0 %v1958
        %v2391 = vpop.f32.mrb[0].mxu0
        %v2392 = vadd.f32 0.0, %v2391
        %v2393 = vpop.f32.mrb[0].mxu0
        %2394 = vmatprep.mubr.f32.mxu0 0.0
        %2395 = vmatmul.mubr.f32.gmra.mrb[0].mxu0 %v1961
        %v2396 = vpop.f32.mrb[0].mxu0
        %v2397 = vadd.f32 0.0, %v2396
        %v2398 = vpop.f32.mrb[0].mxu0
        %2399 = vmatprep.mubr.f32.mxu0 0.0
        %2400 = vmatmul.mubr.f32.gmra.mrb[0].mxu0 %v1964
        %v2401 = vpop.f32.mrb[0].mxu0
        %v2402 = vadd.f32 0.0, %v2401
        %v2403 = vpop.f32.mrb[0].mxu0
        %2404 = vmatprep.mubr.f32.mxu0 0.0
        %2405 = vmatmul.mubr.f32.gmra.mrb[0].mxu0 %v1967
        %v2406 = vpop.f32.mrb[0].mxu0
        %v2407 = vadd.f32 0.0, %v2406
        %v2408 = vpop.f32.mrb[0].mxu0
        %2409 = vmatprep.mubr.f32.mxu0 0.0
        %2410 = vmatmul.mubr.f32.gmra.mrb[0].mxu0 %v1970
        %v2411 = vpop.f32.mrb[0].mxu0
        %v2412 = vadd.f32 0.0, %v2411
        %v2413 = vpop.f32.mrb[0].mxu0
        %2414 = vmatprep.mubr.f32.mxu0 0.0
        %2415 = vmatmul.mubr.f32.gmra.mrb[0].mxu0 %v1973
        %v2416 = vpop.f32.mrb[0].mxu0
        %v2417 = vadd.f32 0.0, %v2416
        %v2418 = vpop.f32.mrb[0].mxu0
        %2419 = vmatprep.mubr.f32.mxu0 0.0
        %2420 = vmatmul.mubr.f32.gmra.mrb[0].mxu0 %v1976
        %v2421 = vpop.f32.mrb[0].mxu0
        %v2422 = vadd.f32 0.0, %v2421
        %v2423 = vpop.f32.mrb[0].mxu0
        %2424 = vmatprep.mubr.f32.mxu0 0.0
        %2425 = vmatmul.mubr.f32.gmra.mrb[0].mxu0 %v1979
        %v2426 = vpop.f32.mrb[0].mxu0
        %v2427 = vadd.f32 0.0, %v2426
        %v2428 = vpop.f32.mrb[0].mxu0
        %2429 = vmatprep.mubr.f32.mxu0 0.0
        %2430 = vmatmul.mubr.f32.gmra.mrb[0].mxu0 %v1982
        %v2431 = vpop.f32.mrb[0].mxu0
        %v2432 = vadd.f32 0.0, %v2431
        %v2433 = vpop.f32.mrb[0].mxu0
        %2434 = vmatprep.mubr.f32.mxu0 0.0
        %2435 = vmatmul.mubr.f32.gmra.mrb[0].mxu0 %v1985
        %v2436 = vpop.f32.mrb[0].mxu0
        %v2437 = vadd.f32 0.0, %v2436
        %v2438 = vpop.f32.mrb[0].mxu0
        %2439 = vmatprep.mubr.f32.mxu0 0.0
        %2440 = vmatmul.mubr.f32.gmra.mrb[0].mxu0 %v1988
        %v2441 = vpop.f32.mrb[0].mxu0
        %v2442 = vadd.f32 0.0, %v2441
        %v2443 = vpop.f32.mrb[0].mxu0
        %2444 = vmatprep.mubr.f32.mxu0 0.0
        %2445 = vmatmul.mubr.f32.gmra.mrb[0].mxu0 %v1991
        %v2446 = vpop.f32.mrb[0].mxu0
        %v2447 = vadd.f32 0.0, %v2446
        %v2448 = vpop.f32.mrb[0].mxu0
        %2449 = vmatprep.mubr.f32.mxu0 0.0
        %2450 = vmatmul.mubr.f32.gmra.mrb[0].mxu0 %v1994
        %v2451 = vpop.f32.mrb[0].mxu0
        %v2452 = vadd.f32 0.0, %v2451
        %v2453 = vpop.f32.mrb[0].mxu0
        %2454 = vmatprep.mubr.f32.mxu0 0.0
        %2455 = vmatmul.mubr.f32.gmra.mrb[0].mxu0 %v1997
        %v2456 = vpop.f32.mrb[0].mxu0
        %v2457 = vadd.f32 0.0, %v2456
        %v2458 = vpop.f32.mrb[0].mxu0
        %2459 = vmatprep.mubr.f32.mxu0 0.0
        %2460 = vmatmul.mubr.f32.gmra.mrb[0].mxu0 %v2000
        %v2461 = vpop.f32.mrb[0].mxu0
        %v2462 = vadd.f32 0.0, %v2461
        %v2463 = vpop.f32.mrb[0].mxu0
        %2464 = vmatprep.mubr.f32.mxu0 0.0
        %2465 = vmatmul.mubr.f32.gmra.mrb[0].mxu0 %v2003
        %v2466 = vpop.f32.mrb[0].mxu0
        %v2467 = vadd.f32 0.0, %v2466
        %v2468 = vpop.f32.mrb[0].mxu0
        %2469 = vmatprep.mubr.f32.mxu0 0.0
        %2470 = vmatmul.mubr.f32.gmra.mrb[0].mxu0 %v2006
        %v2471 = vpop.f32.mrb[0].mxu0
        %v2472 = vadd.f32 0.0, %v2471
        %v2473 = vpop.f32.mrb[0].mxu0
        %2474 = vmatprep.mubr.f32.mxu0 0.0
        %2475 = vmatmul.mubr.f32.gmra.mrb[0].mxu0 %v2009
        %v2476 = vpop.f32.mrb[0].mxu0
        %v2477 = vadd.f32 0.0, %v2476
        %v2478 = vpop.f32.mrb[0].mxu0
        %2479 = vmatprep.mubr.f32.mxu0 0.0
        %2480 = vmatmul.mubr.f32.gmra.mrb[0].mxu0 %v2012
        %v2481 = vpop.f32.mrb[0].mxu0
        %v2482 = vadd.f32 0.0, %v2481
        %v2483 = vpop.f32.mrb[0].mxu0
        %2484 = vmatprep.mubr.f32.mxu0 0.0
        %2485 = vmatmul.mubr.f32.gmra.mrb[0].mxu0 %v2015
        %v2486 = vpop.f32.mrb[0].mxu0
        %v2487 = vadd.f32 0.0, %v2486
        %v2488 = vpop.f32.mrb[0].mxu0
        %2489 = vmatprep.mubr.f32.mxu0 0.0
        %2490 = vmatmul.mubr.f32.gmra.mrb[0].mxu0 %v2018
        %v2491 = vpop.f32.mrb[0].mxu0
        %v2492 = vadd.f32 0.0, %v2491
        %v2493 = vpop.f32.mrb[0].mxu0
        %2494 = vmatprep.mubr.f32.mxu0 0.0
        %2495 = vmatmul.mubr.f32.gmra.mrb[0].mxu0 %v2021
        %v2496 = vpop.f32.mrb[0].mxu0
        %v2497 = vadd.f32 0.0, %v2496
        %v2498 = vpop.f32.mrb[0].mxu0
        %2499 = vmatprep.mubr.f32.mxu0 0.0
        %2500 = vmatmul.mubr.f32.gmra.mrb[0].mxu0 %v2024
        %v2501 = vpop.f32.mrb[0].mxu0
        %v2502 = vadd.f32 0.0, %v2501
        %v2503 = vpop.f32.mrb[0].mxu0
        %2504 = vmatprep.mubr.f32.mxu0 0.0
        %2505 = vmatmul.mubr.f32.gmra.mrb[0].mxu0 %v2027
        %v2506 = vpop.f32.mrb[0].mxu0
        %v2507 = vadd.f32 0.0, %v2506
        %v2508 = vpop.f32.mrb[0].mxu0
        %2509 = vmatprep.mubr.f32.mxu0 0.0
        %2510 = vmatmul.mubr.f32.gmra.mrb[0].mxu0 %v2030
        %v2511 = vpop.f32.mrb[0].mxu0
        %v2512 = vadd.f32 0.0, %v2511
        %v2513 = vpop.f32.mrb[0].mxu0
        %2514 = vmatprep.mubr.f32.mxu0 0.0
        %2515 = vmatmul.mubr.f32.gmra.mrb[0].mxu0 %v2033
        %v2516 = vpop.f32.mrb[0].mxu0
        %v2517 = vadd.f32 0.0, %v2516
        %v2518 = vpop.f32.mrb[0].mxu0
        %2519 = vmatprep.mubr.f32.mxu0 0.0
        %2520 = vmatmul.mubr.f32.gmra.mrb[0].mxu0 %v2036
        %v2521 = vpop.f32.mrb[0].mxu0
        %v2522 = vadd.f32 0.0, %v2521
        %v2523 = vpop.f32.mrb[0].mxu0
        %2524 = vmatprep.mubr.f32.mxu0 0.0
        %2525 = vmatmul.mubr.f32.gmra.mrb[0].mxu0 %v2039
        %v2526 = vpop.f32.mrb[0].mxu0
        %v2527 = vadd.f32 0.0, %v2526
        %v2528 = vpop.f32.mrb[0].mxu0
        %2529 = vmatprep.mubr.f32.mxu0 0.0
        %2530 = vmatmul.mubr.f32.gmra.mrb[0].mxu0 %v2042
        %v2531 = vpop.f32.mrb[0].mxu0
        %v2532 = vadd.f32 0.0, %v2531
        %v2533 = vpop.f32.mrb[0].mxu0
        %2534 = vmatprep.mubr.f32.mxu0 0.0
        %2535 = vmatmul.mubr.f32.gmra.mrb[0].mxu0 %v2045
        %v2536 = vpop.f32.mrb[0].mxu0
        %v2537 = vadd.f32 0.0, %v2536
        %v2538 = vpop.f32.mrb[0].mxu0
        %2539 = vmatprep.mubr.f32.mxu0 0.0
        %2540 = vmatmul.mubr.f32.gmra.mrb[0].mxu0 %v2048
        %v2541 = vpop.f32.mrb[0].mxu0
        %v2542 = vadd.f32 0.0, %v2541
        %v2543 = vpop.f32.mrb[0].mxu0
        %2544 = vmatprep.mubr.f32.mxu0 0.0
        %2545 = vmatmul.mubr.f32.gmra.mrb[0].mxu0 %v2051
        %v2546 = vpop.f32.mrb[0].mxu0
        %v2547 = vadd.f32 0.0, %v2546
        %v2548 = vpop.f32.mrb[0].mxu0
        %2549 = vmatprep.mubr.f32.mxu0 0.0
        %2550 = vmatmul.mubr.f32.gmra.mrb[0].mxu0 %v2054
        %v2551 = vpop.f32.mrb[0].mxu0
        %v2552 = vadd.f32 0.0, %v2551
        %v2553 = vpop.f32.mrb[0].mxu0
        %2554 = vmatprep.mubr.f32.mxu0 0.0
        %2555 = vmatmul.mubr.f32.gmra.mrb[0].mxu0 %v2057
        %v2556 = vpop.f32.mrb[0].mxu0
        %v2557 = vadd.f32 0.0, %v2556
        %v2558 = vpop.f32.mrb[0].mxu0
        %2559 = vmatprep.mubr.f32.mxu0 0.0
        %2560 = vmatmul.mubr.f32.gmra.mrb[0].mxu0 %v2060
        %v2561 = vpop.f32.mrb[0].mxu0
        %v2562 = vadd.f32 0.0, %v2561
        %v2563 = vpop.f32.mrb[0].mxu0
        %2564 = vmatprep.mubr.f32.mxu0 0.0
        %2565 = vmatmul.mubr.f32.gmra.mrb[0].mxu0 %v2063
        %v2566 = vpop.f32.mrb[0].mxu0
        %v2567 = vadd.f32 0.0, %v2566
        %v2568 = vpop.f32.mrb[0].mxu0
        %2569 = vmatprep.mubr.f32.mxu0 0.0
        %2570 = vmatmul.mubr.f32.gmra.mrb[0].mxu0 %v2066
        %v2571 = vpop.f32.mrb[0].mxu0
        %v2572 = vadd.f32 0.0, %v2571
        %v2573 = vpop.f32.mrb[0].mxu0
        %2574 = vmatprep.mubr.f32.mxu0 0.0
        %2575 = vmatmul.mubr.f32.gmra.mrb[0].mxu0 %v2069
        %v2576 = vpop.f32.mrb[0].mxu0
        %v2577 = vadd.f32 0.0, %v2576
        %v2578 = vpop.f32.mrb[0].mxu0
        %2579 = vmatprep.mubr.f32.mxu0 0.0
        %2580 = vmatmul.mubr.f32.gmra.mrb[0].mxu0 %v2072
        %v2581 = vpop.f32.mrb[0].mxu0
        %v2582 = vadd.f32 0.0, %v2581
        %v2583 = vpop.f32.mrb[0].mxu0
        %2584 = vmatprep.mubr.f32.mxu0 0.0
        %2585 = vmatmul.mubr.f32.gmra.mrb[0].mxu0 %v2075
        %v2586 = vpop.f32.mrb[0].mxu0
        %v2587 = vadd.f32 0.0, %v2586
        %v2588 = vpop.f32.mrb[0].mxu0
        %2589 = vmatprep.mubr.f32.mxu0 0.0
        %2590 = vmatmul.mubr.f32.gmra.mrb[0].mxu0 %v2078
        %v2591 = vpop.f32.mrb[0].mxu0
        %v2592 = vadd.f32 0.0, %v2591
        %v2593 = vpop.f32.mrb[0].mxu0
        %2594 = vmatprep.mubr.f32.mxu0 0.0
        %2595 = vmatmul.mubr.f32.gmra.mrb[0].mxu0 %v2081
        %v2596 = vpop.f32.mrb[0].mxu0
        %v2597 = vadd.f32 0.0, %v2596
        %v2598 = vpop.f32.mrb[0].mxu0
        %2599 = vmatprep.mubr.f32.mxu0 0.0
        %2600 = vmatmul.mubr.f32.gmra.mrb[0].mxu0 %v2084
        %v2601 = vpop.f32.mrb[0].mxu0
        %v2602 = vadd.f32 0.0, %v2601
        %v2603 = vpop.f32.mrb[0].mxu0
        %2604 = vmatprep.mubr.f32.mxu0 0.0
        %2605 = vmatmul.mubr.f32.gmra.mrb[0].mxu0 %v2087
        %v2606 = vpop.f32.mrb[0].mxu0
        %v2607 = vadd.f32 0.0, %v2606
        %v2608 = vpop.f32.mrb[0].mxu0
        %2609 = vmatprep.mubr.f32.mxu0 0.0
        %2610 = vmatmul.mubr.f32.gmra.mrb[0].mxu0 %v2090
        %v2611 = vpop.f32.mrb[0].mxu0
        %v2612 = vadd.f32 0.0, %v2611
        %v2613 = vpop.f32.mrb[0].mxu0
        %2614 = vmatprep.mubr.f32.mxu0 0.0
        %2615 = vmatmul.mubr.f32.gmra.mrb[0].mxu0 %v2093
        %v2616 = vpop.f32.mrb[0].mxu0
        %v2617 = vadd.f32 0.0, %v2616
        %v2618 = vpop.f32.mrb[0].mxu0
        %2619 = vmatprep.mubr.f32.mxu0 0.0
        %2620 = vmatmul.mubr.f32.gmra.mrb[0].mxu0 %v2096
        %v2621 = vpop.f32.mrb[0].mxu0
        %v2622 = vadd.f32 0.0, %v2621
        %v2623 = vpop.f32.mrb[0].mxu0
        %2624 = vmatprep.mubr.f32.mxu0 0.0
        %2625 = vmatmul.mubr.f32.gmra.mrb[0].mxu0 %v2099
        %v2626 = vpop.f32.mrb[0].mxu0
        %v2627 = vadd.f32 0.0, %v2626
        %v2628 = vpop.f32.mrb[0].mxu0
        %2629 = vmatprep.mubr.f32.mxu0 0.0
        %2630 = vmatmul.mubr.f32.gmra.mrb[0].mxu0 %v2102
        %v2631 = vpop.f32.mrb[0].mxu0
        %v2632 = vadd.f32 0.0, %v2631
        %v2633 = vpop.f32.mrb[0].mxu0
        %2634 = vmatprep.mubr.f32.mxu0 0.0
        %2635 = vmatmul.mubr.f32.gmra.mrb[0].mxu0 %v2105
        %v2636 = vpop.f32.mrb[0].mxu0
        %v2637 = vadd.f32 0.0, %v2636
        %v2638 = vpop.f32.mrb[0].mxu0
        %2639 = vmatprep.mubr.f32.mxu0 0.0
        %2640 = vmatmul.mubr.f32.gmra.mrb[0].mxu0 %v2108
        %v2641 = vpop.f32.mrb[0].mxu0
        %v2642 = vadd.f32 0.0, %v2641
        %v2643 = vpop.f32.mrb[0].mxu0
        %2644 = vmatprep.mubr.f32.mxu0 0.0
        %2645 = vmatmul.mubr.f32.gmra.mrb[0].mxu0 %v2111
        %v2646 = vpop.f32.mrb[0].mxu0
        %v2647 = vadd.f32 0.0, %v2646
        %v2648 = vpop.f32.mrb[0].mxu0
        %2649 = vmatprep.mubr.f32.mxu0 0.0
        %2650 = vmatmul.mubr.f32.gmra.mrb[0].mxu0 %v2114
        %v2651 = vpop.f32.mrb[0].mxu0
        %v2652 = vadd.f32 0.0, %v2651
        %v2653 = vpop.f32.mrb[0].mxu0
        %2654 = vmatprep.mubr.f32.mxu0 0.0
        %2655 = vmatmul.mubr.f32.gmra.mrb[0].mxu0 %v2117
        %v2656 = vpop.f32.mrb[0].mxu0
        %v2657 = vadd.f32 0.0, %v2656
        %v2658 = vpop.f32.mrb[0].mxu0
        %2659 = vmatprep.mubr.f32.mxu0 0.0
        %2660 = vmatmul.mubr.f32.gmra.mrb[0].mxu0 %v2120
        %v2661 = vpop.f32.mrb[0].mxu0
        %v2662 = vadd.f32 0.0, %v2661
        %v2663 = vpop.f32.mrb[0].mxu0
        %2664 = vmatprep.mubr.f32.mxu0 0.0
        %2665 = vmatmul.mubr.f32.gmra.mrb[0].mxu0 %v2123
        %v2666 = vpop.f32.mrb[0].mxu0
        %v2667 = vadd.f32 0.0, %v2666
        %v2668 = vpop.f32.mrb[0].mxu0
        %2669 = vdwg.mxu0
        %v2670 = vmul.f32 %v2192, %v2192
        %v2671 = vmul.f32 %v2197, %v2197
        %v2672 = vmul.f32 %v2202, %v2202
        %v2673 = vmul.f32 %v2207, %v2207
        %v2674 = vmul.f32 %v2212, %v2212
        %v2675 = vmul.f32 %v2217, %v2217
        %v2676 = vmul.f32 %v2222, %v2222
        %v2677 = vmul.f32 %v2227, %v2227
        %v2678 = vmul.f32 %v2232, %v2232
        %v2679 = vmul.f32 %v2237, %v2237
        %v2680 = vmul.f32 %v2242, %v2242
        %v2681 = vmul.f32 %v2247, %v2247
        %v2682 = vmul.f32 %v2252, %v2252
        %v2683 = vmul.f32 %v2257, %v2257
        %v2684 = vmul.f32 %v2262, %v2262
        %v2685 = vmul.f32 %v2267, %v2267
        %v2686 = vmul.f32 %v2272, %v2272
        %v2687 = vmul.f32 %v2277, %v2277
        %v2688 = vmul.f32 %v2282, %v2282
        %v2689 = vmul.f32 %v2287, %v2287
        %v2690 = vmul.f32 %v2292, %v2292
        %v2691 = vmul.f32 %v2297, %v2297
        %v2692 = vmul.f32 %v2302, %v2302
        %v2693 = vmul.f32 %v2307, %v2307
        %v2694 = vmul.f32 %v2312, %v2312
        %v2695 = vmul.f32 %v2317, %v2317
        %v2696 = vmul.f32 %v2322, %v2322
        %v2697 = vmul.f32 %v2327, %v2327
        %v2698 = vmul.f32 %v2332, %v2332
        %v2699 = vmul.f32 %v2337, %v2337
        %v2700 = vmul.f32 %v2342, %v2342
        %v2701 = vmul.f32 %v2347, %v2347
        %v2702 = vmul.f32 %v2352, %v2352
        %v2703 = vmul.f32 %v2357, %v2357
        %v2704 = vmul.f32 %v2362, %v2362
        %v2705 = vmul.f32 %v2367, %v2367
        %v2706 = vmul.f32 %v2372, %v2372
        %v2707 = vmul.f32 %v2377, %v2377
        %v2708 = vmul.f32 %v2382, %v2382
        %v2709 = vmul.f32 %v2387, %v2387
        %v2710 = vmul.f32 %v2392, %v2392
        %v2711 = vmul.f32 %v2397, %v2397
        %v2712 = vmul.f32 %v2402, %v2402
        %v2713 = vmul.f32 %v2407, %v2407
        %v2714 = vmul.f32 %v2412, %v2412
        %v2715 = vmul.f32 %v2417, %v2417
        %v2716 = vmul.f32 %v2422, %v2422
        %v2717 = vmul.f32 %v2427, %v2427
        %v2718 = vmul.f32 %v2432, %v2432
        %v2719 = vmul.f32 %v2437, %v2437
        %v2720 = vmul.f32 %v2442, %v2442
        %v2721 = vmul.f32 %v2447, %v2447
        %v2722 = vmul.f32 %v2452, %v2452
        %v2723 = vmul.f32 %v2457, %v2457
        %v2724 = vmul.f32 %v2462, %v2462
        %v2725 = vmul.f32 %v2467, %v2467
        %v2726 = vmul.f32 %v2472, %v2472
        %v2727 = vmul.f32 %v2477, %v2477
        %v2728 = vmul.f32 %v2482, %v2482
        %v2729 = vmul.f32 %v2487, %v2487
        %v2730 = vmul.f32 %v2492, %v2492
        %v2731 = vmul.f32 %v2497, %v2497
        %v2732 = vmul.f32 %v2502, %v2502
        %v2733 = vmul.f32 %v2507, %v2507
        %v2734 = vadd.f32 %v2670, %v2702
        %v2735 = vadd.f32 %v2671, %v2703
        %v2736 = vadd.f32 %v2672, %v2704
        %v2737 = vadd.f32 %v2673, %v2705
        %v2738 = vadd.f32 %v2674, %v2706
        %v2739 = vadd.f32 %v2675, %v2707
        %v2740 = vadd.f32 %v2676, %v2708
        %v2741 = vadd.f32 %v2677, %v2709
        %v2742 = vadd.f32 %v2678, %v2710
        %v2743 = vadd.f32 %v2679, %v2711
        %v2744 = vadd.f32 %v2680, %v2712
        %v2745 = vadd.f32 %v2681, %v2713
        %v2746 = vadd.f32 %v2682, %v2714
        %v2747 = vadd.f32 %v2683, %v2715
        %v2748 = vadd.f32 %v2684, %v2716
        %v2749 = vadd.f32 %v2685, %v2717
        %v2750 = vadd.f32 %v2686, %v2718
        %v2751 = vadd.f32 %v2687, %v2719
        %v2752 = vadd.f32 %v2688, %v2720
        %v2753 = vadd.f32 %v2689, %v2721
        %v2754 = vadd.f32 %v2690, %v2722
        %v2755 = vadd.f32 %v2691, %v2723
        %v2756 = vadd.f32 %v2692, %v2724
        %v2757 = vadd.f32 %v2693, %v2725
        %v2758 = vadd.f32 %v2694, %v2726
        %v2759 = vadd.f32 %v2695, %v2727
        %v2760 = vadd.f32 %v2696, %v2728
        %v2761 = vadd.f32 %v2697, %v2729
        %v2762 = vadd.f32 %v2698, %v2730
        %v2763 = vadd.f32 %v2699, %v2731
        %v2764 = vadd.f32 %v2700, %v2732
        %v2765 = vadd.f32 %v2701, %v2733
        %v2766 = vmul.f32 %v2512, %v2512
        %v2767 = vmul.f32 %v2517, %v2517
        %v2768 = vmul.f32 %v2522, %v2522
        %v2769 = vmul.f32 %v2527, %v2527
        %v2770 = vmul.f32 %v2532, %v2532
        %v2771 = vmul.f32 %v2537, %v2537
        %v2772 = vmul.f32 %v2542, %v2542
        %v2773 = vmul.f32 %v2547, %v2547
        %v2774 = vmul.f32 %v2552, %v2552
        %v2775 = vmul.f32 %v2557, %v2557
        %v2776 = vmul.f32 %v2562, %v2562
        %v2777 = vmul.f32 %v2567, %v2567
        %v2778 = vmul.f32 %v2572, %v2572
        %v2779 = vmul.f32 %v2577, %v2577
        %v2780 = vmul.f32 %v2582, %v2582
        %v2781 = vmul.f32 %v2587, %v2587
        %v2782 = vmul.f32 %v2592, %v2592
        %v2783 = vmul.f32 %v2597, %v2597
        %v2784 = vmul.f32 %v2602, %v2602
        %v2785 = vmul.f32 %v2607, %v2607
        %v2786 = vmul.f32 %v2612, %v2612
        %v2787 = vmul.f32 %v2617, %v2617
        %v2788 = vmul.f32 %v2622, %v2622
        %v2789 = vmul.f32 %v2627, %v2627
        %v2790 = vmul.f32 %v2632, %v2632
        %v2791 = vmul.f32 %v2637, %v2637
        %v2792 = vmul.f32 %v2642, %v2642
        %v2793 = vmul.f32 %v2647, %v2647
        %v2794 = vmul.f32 %v2652, %v2652
        %v2795 = vmul.f32 %v2657, %v2657
        %v2796 = vmul.f32 %v2662, %v2662
        %v2797 = vmul.f32 %v2667, %v2667
        %v2798 = vadd.f32 %v2734, %v2766
        %v2799 = vadd.f32 %v2735, %v2767
        %v2800 = vadd.f32 %v2736, %v2768
        %v2801 = vadd.f32 %v2737, %v2769
        %v2802 = vadd.f32 %v2738, %v2770
        %v2803 = vadd.f32 %v2739, %v2771
        %v2804 = vadd.f32 %v2740, %v2772
        %v2805 = vadd.f32 %v2741, %v2773
        %v2806 = vadd.f32 %v2742, %v2774
        %v2807 = vadd.f32 %v2743, %v2775
        %v2808 = vadd.f32 %v2744, %v2776
        %v2809 = vadd.f32 %v2745, %v2777
        %v2810 = vadd.f32 %v2746, %v2778
        %v2811 = vadd.f32 %v2747, %v2779
        %v2812 = vadd.f32 %v2748, %v2780
        %v2813 = vadd.f32 %v2749, %v2781
        %v2814 = vadd.f32 %v2750, %v2782
        %v2815 = vadd.f32 %v2751, %v2783
        %v2816 = vadd.f32 %v2752, %v2784
        %v2817 = vadd.f32 %v2753, %v2785
        %v2818 = vadd.f32 %v2754, %v2786
        %v2819 = vadd.f32 %v2755, %v2787
        %v2820 = vadd.f32 %v2756, %v2788
        %v2821 = vadd.f32 %v2757, %v2789
        %v2822 = vadd.f32 %v2758, %v2790
        %v2823 = vadd.f32 %v2759, %v2791
        %v2824 = vadd.f32 %v2760, %v2792
        %v2825 = vadd.f32 %v2761, %v2793
        %v2826 = vadd.f32 %v2762, %v2794
        %v2827 = vadd.f32 %v2763, %v2795
        %v2828 = vadd.f32 %v2764, %v2796
        %v2829 = vadd.f32 %v2765, %v2797
        %2926 = vrot.lane.b32.xlu0 %v2192, 16
        %v2927 = vpop.permute.xlu0 %2926
        %2928 = vrot.lane.b32.xlu0 %v2197, 16
        %v2929 = vpop.permute.xlu0 %2928
        %2930 = vrot.lane.b32.xlu0 %v2202, 16
        %v2931 = vpop.permute.xlu0 %2930
        %2932 = vrot.lane.b32.xlu0 %v2207, 16
        %v2933 = vpop.permute.xlu0 %2932
        %2934 = vrot.lane.b32.xlu0 %v2212, 16
        %v2935 = vpop.permute.xlu0 %2934
        %2936 = vrot.lane.b32.xlu0 %v2217, 16
        %v2937 = vpop.permute.xlu0 %2936
        %2938 = vrot.lane.b32.xlu0 %v2222, 16
        %v2939 = vpop.permute.xlu0 %2938
        %2940 = vrot.lane.b32.xlu0 %v2227, 16
        %v2941 = vpop.permute.xlu0 %2940
        %2942 = vrot.lane.b32.xlu0 %v2232, 16
        %v2943 = vpop.permute.xlu0 %2942
        %2944 = vrot.lane.b32.xlu0 %v2237, 16
        %v2945 = vpop.permute.xlu0 %2944
        %2946 = vrot.lane.b32.xlu0 %v2242, 16
        %v2947 = vpop.permute.xlu0 %2946
        %2948 = vrot.lane.b32.xlu0 %v2247, 16
        %v2949 = vpop.permute.xlu0 %2948
        %2950 = vrot.lane.b32.xlu0 %v2252, 16
        %v2951 = vpop.permute.xlu0 %2950
        %2952 = vrot.lane.b32.xlu0 %v2257, 16
        %v2953 = vpop.permute.xlu0 %2952
        %2954 = vrot.lane.b32.xlu0 %v2262, 16
        %v2955 = vpop.permute.xlu0 %2954
        %2956 = vrot.lane.b32.xlu0 %v2267, 16
        %v2957 = vpop.permute.xlu0 %2956
        %2958 = vrot.lane.b32.xlu0 %v2272, 16
        %v2959 = vpop.permute.xlu0 %2958
        %2960 = vrot.lane.b32.xlu0 %v2277, 16
        %v2961 = vpop.permute.xlu0 %2960
        %2962 = vrot.lane.b32.xlu0 %v2282, 16
        %v2963 = vpop.permute.xlu0 %2962
        %2964 = vrot.lane.b32.xlu0 %v2287, 16
        %v2965 = vpop.permute.xlu0 %2964
        %2966 = vrot.lane.b32.xlu0 %v2292, 16
        %v2967 = vpop.permute.xlu0 %2966
        %2968 = vrot.lane.b32.xlu0 %v2297, 16
        %v2969 = vpop.permute.xlu0 %2968
        %2970 = vrot.lane.b32.xlu0 %v2302, 16
        %v2971 = vpop.permute.xlu0 %2970
        %2972 = vrot.lane.b32.xlu0 %v2307, 16
        %v2973 = vpop.permute.xlu0 %2972
        %2974 = vrot.lane.b32.xlu0 %v2312, 16
        %v2975 = vpop.permute.xlu0 %2974
        %2976 = vrot.lane.b32.xlu0 %v2317, 16
        %v2977 = vpop.permute.xlu0 %2976
        %2978 = vrot.lane.b32.xlu0 %v2322, 16
        %v2979 = vpop.permute.xlu0 %2978
        %2980 = vrot.lane.b32.xlu0 %v2327, 16
        %v2981 = vpop.permute.xlu0 %2980
        %2982 = vrot.lane.b32.xlu0 %v2332, 16
        %v2983 = vpop.permute.xlu0 %2982
        %2984 = vrot.lane.b32.xlu0 %v2337, 16
        %v2985 = vpop.permute.xlu0 %2984
        %2986 = vrot.lane.b32.xlu0 %v2342, 16
        %v2987 = vpop.permute.xlu0 %2986
        %2988 = vrot.lane.b32.xlu0 %v2347, 16
        %v2989 = vpop.permute.xlu0 %2988
        %2990 = vrot.lane.b32.xlu0 %v2352, 16
        %v2991 = vpop.permute.xlu0 %2990
        %2992 = vrot.lane.b32.xlu0 %v2357, 16
        %v2993 = vpop.permute.xlu0 %2992
        %2994 = vrot.lane.b32.xlu0 %v2362, 16
        %v2995 = vpop.permute.xlu0 %2994
        %2996 = vrot.lane.b32.xlu0 %v2367, 16
        %v2997 = vpop.permute.xlu0 %2996
        %2998 = vrot.lane.b32.xlu0 %v2372, 16
        %v2999 = vpop.permute.xlu0 %2998
        %3000 = vrot.lane.b32.xlu0 %v2377, 16
        %v3001 = vpop.permute.xlu0 %3000
        %3002 = vrot.lane.b32.xlu0 %v2382, 16
        %v3003 = vpop.permute.xlu0 %3002
        %3004 = vrot.lane.b32.xlu0 %v2387, 16
        %v3005 = vpop.permute.xlu0 %3004
        %3006 = vrot.lane.b32.xlu0 %v2392, 16
        %v3007 = vpop.permute.xlu0 %3006
        %3008 = vrot.lane.b32.xlu0 %v2397, 16
        %v3009 = vpop.permute.xlu0 %3008
        %3010 = vrot.lane.b32.xlu0 %v2402, 16
        %v3011 = vpop.permute.xlu0 %3010
        %3012 = vrot.lane.b32.xlu0 %v2407, 16
        %v3013 = vpop.permute.xlu0 %3012
        %3014 = vrot.lane.b32.xlu0 %v2412, 16
        %v3015 = vpop.permute.xlu0 %3014
        %3016 = vrot.lane.b32.xlu0 %v2417, 16
        %v3017 = vpop.permute.xlu0 %3016
        %3018 = vrot.lane.b32.xlu0 %v2422, 16
        %v3019 = vpop.permute.xlu0 %3018
        %3020 = vrot.lane.b32.xlu0 %v2427, 16
        %v3021 = vpop.permute.xlu0 %3020
        %3022 = vrot.lane.b32.xlu0 %v2432, 16
        %v3023 = vpop.permute.xlu0 %3022
        %3024 = vrot.lane.b32.xlu0 %v2437, 16
        %v3025 = vpop.permute.xlu0 %3024
        %3026 = vrot.lane.b32.xlu0 %v2442, 16
        %v3027 = vpop.permute.xlu0 %3026
        %3028 = vrot.lane.b32.xlu0 %v2447, 16
        %v3029 = vpop.permute.xlu0 %3028
        %3030 = vrot.lane.b32.xlu0 %v2452, 16
        %v3031 = vpop.permute.xlu0 %3030
        %3032 = vrot.lane.b32.xlu0 %v2457, 16
        %v3033 = vpop.permute.xlu0 %3032
        %3034 = vrot.lane.b32.xlu0 %v2462, 16
        %v3035 = vpop.permute.xlu0 %3034
        %3036 = vrot.lane.b32.xlu0 %v2467, 16
        %v3037 = vpop.permute.xlu0 %3036
        %3038 = vrot.lane.b32.xlu0 %v2472, 16
        %v3039 = vpop.permute.xlu0 %3038
        %3040 = vrot.lane.b32.xlu0 %v2477, 16
        %v3041 = vpop.permute.xlu0 %3040
        %3042 = vrot.lane.b32.xlu0 %v2482, 16
        %v3043 = vpop.permute.xlu0 %3042
        %3044 = vrot.lane.b32.xlu0 %v2487, 16
        %v3045 = vpop.permute.xlu0 %3044
        %3046 = vrot.lane.b32.xlu0 %v2492, 16
        %v3047 = vpop.permute.xlu0 %3046
        %3048 = vrot.lane.b32.xlu0 %v2497, 16
        %v3049 = vpop.permute.xlu0 %3048
        %3050 = vrot.lane.b32.xlu0 %v2502, 16
        %v3051 = vpop.permute.xlu0 %3050
        %3052 = vrot.lane.b32.xlu0 %v2507, 16
        %v3053 = vpop.permute.xlu0 %3052
        %3054 = vrot.lane.b32.xlu0 %v2512, 16
        %v3055 = vpop.permute.xlu0 %3054
        %3056 = vrot.lane.b32.xlu0 %v2517, 16
        %v3057 = vpop.permute.xlu0 %3056
        %3058 = vrot.lane.b32.xlu0 %v2522, 16
        %v3059 = vpop.permute.xlu0 %3058
        %3060 = vrot.lane.b32.xlu0 %v2527, 16
        %v3061 = vpop.permute.xlu0 %3060
        %3062 = vrot.lane.b32.xlu0 %v2532, 16
        %v3063 = vpop.permute.xlu0 %3062
        %3064 = vrot.lane.b32.xlu0 %v2537, 16
        %v3065 = vpop.permute.xlu0 %3064
        %3066 = vrot.lane.b32.xlu0 %v2542, 16
        %v3067 = vpop.permute.xlu0 %3066
        %3068 = vrot.lane.b32.xlu0 %v2547, 16
        %v3069 = vpop.permute.xlu0 %3068
        %3070 = vrot.lane.b32.xlu0 %v2552, 16
        %v3071 = vpop.permute.xlu0 %3070
        %3072 = vrot.lane.b32.xlu0 %v2557, 16
        %v3073 = vpop.permute.xlu0 %3072
        %3074 = vrot.lane.b32.xlu0 %v2562, 16
        %v3075 = vpop.permute.xlu0 %3074
        %3076 = vrot.lane.b32.xlu0 %v2567, 16
        %v3077 = vpop.permute.xlu0 %3076
        %3078 = vrot.lane.b32.xlu0 %v2572, 16
        %v3079 = vpop.permute.xlu0 %3078
        %3080 = vrot.lane.b32.xlu0 %v2577, 16
        %v3081 = vpop.permute.xlu0 %3080
        %3082 = vrot.lane.b32.xlu0 %v2582, 16
        %v3083 = vpop.permute.xlu0 %3082
        %3084 = vrot.lane.b32.xlu0 %v2587, 16
        %v3085 = vpop.permute.xlu0 %3084
        %3086 = vrot.lane.b32.xlu0 %v2592, 16
        %v3087 = vpop.permute.xlu0 %3086
        %3088 = vrot.lane.b32.xlu0 %v2597, 16
        %v3089 = vpop.permute.xlu0 %3088
        %3090 = vrot.lane.b32.xlu0 %v2602, 16
        %v3091 = vpop.permute.xlu0 %3090
        %3092 = vrot.lane.b32.xlu0 %v2607, 16
        %v3093 = vpop.permute.xlu0 %3092
        %3094 = vrot.lane.b32.xlu0 %v2612, 16
        %v3095 = vpop.permute.xlu0 %3094
        %3096 = vrot.lane.b32.xlu0 %v2617, 16
        %v3097 = vpop.permute.xlu0 %3096
        %3098 = vrot.lane.b32.xlu0 %v2622, 16
        %v3099 = vpop.permute.xlu0 %3098
        %3100 = vrot.lane.b32.xlu0 %v2627, 16
        %v3101 = vpop.permute.xlu0 %3100
        %3102 = vrot.lane.b32.xlu0 %v2632, 16
        %v3103 = vpop.permute.xlu0 %3102
        %3104 = vrot.lane.b32.xlu0 %v2637, 16
        %v3105 = vpop.permute.xlu0 %3104
        %3106 = vrot.lane.b32.xlu0 %v2642, 16
        %v3107 = vpop.permute.xlu0 %3106
        %3108 = vrot.lane.b32.xlu0 %v2647, 16
        %v3109 = vpop.permute.xlu0 %3108
        %3110 = vrot.lane.b32.xlu0 %v2652, 16
        %v3111 = vpop.permute.xlu0 %3110
        %3112 = vrot.lane.b32.xlu0 %v2657, 16
        %v3113 = vpop.permute.xlu0 %3112
        %3114 = vrot.lane.b32.xlu0 %v2662, 16
        %v3115 = vpop.permute.xlu0 %3114
        %3116 = vrot.lane.b32.xlu0 %v2667, 16
        %v3117 = vpop.permute.xlu0 %3116
        %v3214 = vmul.f32 %v1217, %v2927
        %v3215 = vmul.f32 %v1222, %v2929
        %v3216 = vmul.f32 %v1227, %v2931
        %v3217 = vmul.f32 %v1232, %v2933
        %v3218 = vmul.f32 %v1237, %v2935
        %v3219 = vmul.f32 %v1242, %v2937
        %v3220 = vmul.f32 %v1247, %v2939
        %v3221 = vmul.f32 %v1252, %v2941
        %v3222 = vmul.f32 %v1257, %v2943
        %v3223 = vmul.f32 %v1262, %v2945
        %v3224 = vmul.f32 %v1267, %v2947
        %v3225 = vmul.f32 %v1272, %v2949
        %v3226 = vmul.f32 %v1277, %v2951
        %v3227 = vmul.f32 %v1282, %v2953
        %v3228 = vmul.f32 %v1287, %v2955
        %v3229 = vmul.f32 %v1292, %v2957
        %v3230 = vmul.f32 %v1297, %v2959
        %v3231 = vmul.f32 %v1302, %v2961
        %v3232 = vmul.f32 %v1307, %v2963
        %v3233 = vmul.f32 %v1312, %v2965
        %v3234 = vmul.f32 %v1317, %v2967
        %v3235 = vmul.f32 %v1322, %v2969
        %v3236 = vmul.f32 %v1327, %v2971
        %v3237 = vmul.f32 %v1332, %v2973
        %v3238 = vmul.f32 %v1337, %v2975
        %v3239 = vmul.f32 %v1342, %v2977
        %v3240 = vmul.f32 %v1347, %v2979
        %v3241 = vmul.f32 %v1352, %v2981
        %v3242 = vmul.f32 %v1357, %v2983
        %v3243 = vmul.f32 %v1362, %v2985
        %v3244 = vmul.f32 %v1367, %v2987
        %v3245 = vmul.f32 %v1372, %v2989
        %v3246 = vmul.f32 %v1217, %v2991
        %v3247 = vmul.f32 %v1222, %v2993
        %v3248 = vmul.f32 %v1227, %v2995
        %v3249 = vmul.f32 %v1232, %v2997
        %v3250 = vmul.f32 %v1237, %v2999
        %v3251 = vmul.f32 %v1242, %v3001
        %v3252 = vmul.f32 %v1247, %v3003
        %v3253 = vmul.f32 %v1252, %v3005
        %v3254 = vmul.f32 %v1257, %v3007
        %v3255 = vmul.f32 %v1262, %v3009
        %v3256 = vmul.f32 %v1267, %v3011
        %v3257 = vmul.f32 %v1272, %v3013
        %v3258 = vmul.f32 %v1277, %v3015
        %v3259 = vmul.f32 %v1282, %v3017
        %v3260 = vmul.f32 %v1287, %v3019
        %v3261 = vmul.f32 %v1292, %v3021
        %v3262 = vmul.f32 %v1297, %v3023
        %v3263 = vmul.f32 %v1302, %v3025
        %v3264 = vmul.f32 %v1307, %v3027
        %v3265 = vmul.f32 %v1312, %v3029
        %v3266 = vmul.f32 %v1317, %v3031
        %v3267 = vmul.f32 %v1322, %v3033
        %v3268 = vmul.f32 %v1327, %v3035
        %v3269 = vmul.f32 %v1332, %v3037
        %v3270 = vmul.f32 %v1337, %v3039
        %v3271 = vmul.f32 %v1342, %v3041
        %v3272 = vmul.f32 %v1347, %v3043
        %v3273 = vmul.f32 %v1352, %v3045
        %v3274 = vmul.f32 %v1357, %v3047
        %v3275 = vmul.f32 %v1362, %v3049
        %v3276 = vmul.f32 %v1367, %v3051
        %v3277 = vmul.f32 %v1372, %v3053
        %v3278 = vmul.f32 %v1217, %v3055
        %v3279 = vmul.f32 %v1222, %v3057
        %v3280 = vmul.f32 %v1227, %v3059
        %v3281 = vmul.f32 %v1232, %v3061
        %v3282 = vmul.f32 %v1237, %v3063
        %v3283 = vmul.f32 %v1242, %v3065
        %v3284 = vmul.f32 %v1247, %v3067
        %v3285 = vmul.f32 %v1252, %v3069
        %v3286 = vmul.f32 %v1257, %v3071
        %v3287 = vmul.f32 %v1262, %v3073
        %v3288 = vmul.f32 %v1267, %v3075
        %v3289 = vmul.f32 %v1272, %v3077
        %v3290 = vmul.f32 %v1277, %v3079
        %v3291 = vmul.f32 %v1282, %v3081
        %v3292 = vmul.f32 %v1287, %v3083
        %v3293 = vmul.f32 %v1292, %v3085
        %v3294 = vmul.f32 %v1297, %v3087
        %v3295 = vmul.f32 %v1302, %v3089
        %v3296 = vmul.f32 %v1307, %v3091
        %v3297 = vmul.f32 %v1312, %v3093
        %v3298 = vmul.f32 %v1317, %v3095
        %v3299 = vmul.f32 %v1322, %v3097
        %v3300 = vmul.f32 %v1327, %v3099
        %v3301 = vmul.f32 %v1332, %v3101
        %v3302 = vmul.f32 %v1337, %v3103
        %v3303 = vmul.f32 %v1342, %v3105
        %v3304 = vmul.f32 %v1347, %v3107
        %v3305 = vmul.f32 %v1352, %v3109
        %v3306 = vmul.f32 %v1357, %v3111
        %v3307 = vmul.f32 %v1362, %v3113
        %v3308 = vmul.f32 %v1367, %v3115
        %v3309 = vmul.f32 %v1372, %v3117
        %v3310 = vld [vmem:[%s7] sm:$0xff]
        %3407 = vrot.lane.b32.xlu0 %v3214, 96
        %v3408 = vpop.permute.xlu0 %3407
        %3409 = vrot.lane.b32.xlu0 %v3215, 96
        %v3410 = vpop.permute.xlu0 %3409
        %3411 = vrot.lane.b32.xlu0 %v3216, 96
        %v3412 = vpop.permute.xlu0 %3411
        %3413 = vrot.lane.b32.xlu0 %v3217, 96
        %v3414 = vpop.permute.xlu0 %3413
        %3415 = vrot.lane.b32.xlu0 %v3218, 96
        %v3416 = vpop.permute.xlu0 %3415
        %3417 = vrot.lane.b32.xlu0 %v3219, 96
        %v3418 = vpop.permute.xlu0 %3417
        %3419 = vrot.lane.b32.xlu0 %v3220, 96
        %v3420 = vpop.permute.xlu0 %3419
        %3421 = vrot.lane.b32.xlu0 %v3221, 96
        %v3422 = vpop.permute.xlu0 %3421
        %3423 = vrot.lane.b32.xlu0 %v3222, 96
        %v3424 = vpop.permute.xlu0 %3423
        %3425 = vrot.lane.b32.xlu0 %v3223, 96
        %v3426 = vpop.permute.xlu0 %3425
        %3427 = vrot.lane.b32.xlu0 %v3224, 96
        %v3428 = vpop.permute.xlu0 %3427
        %3429 = vrot.lane.b32.xlu0 %v3225, 96
        %v3430 = vpop.permute.xlu0 %3429
        %3431 = vrot.lane.b32.xlu0 %v3226, 96
        %v3432 = vpop.permute.xlu0 %3431
        %3433 = vrot.lane.b32.xlu0 %v3227, 96
        %v3434 = vpop.permute.xlu0 %3433
        %3435 = vrot.lane.b32.xlu0 %v3228, 96
        %v3436 = vpop.permute.xlu0 %3435
        %3437 = vrot.lane.b32.xlu0 %v3229, 96
        %v3438 = vpop.permute.xlu0 %3437
        %3439 = vrot.lane.b32.xlu0 %v3230, 96
        %v3440 = vpop.permute.xlu0 %3439
        %3441 = vrot.lane.b32.xlu0 %v3231, 96
        %v3442 = vpop.permute.xlu0 %3441
        %3443 = vrot.lane.b32.xlu0 %v3232, 96
        %v3444 = vpop.permute.xlu0 %3443
        %3445 = vrot.lane.b32.xlu0 %v3233, 96
        %v3446 = vpop.permute.xlu0 %3445
        %3447 = vrot.lane.b32.xlu0 %v3234, 96
        %v3448 = vpop.permute.xlu0 %3447
        %3449 = vrot.lane.b32.xlu0 %v3235, 96
        %v3450 = vpop.permute.xlu0 %3449
        %3451 = vrot.lane.b32.xlu0 %v3236, 96
        %v3452 = vpop.permute.xlu0 %3451
        %3453 = vrot.lane.b32.xlu0 %v3237, 96
        %v3454 = vpop.permute.xlu0 %3453
        %3455 = vrot.lane.b32.xlu0 %v3238, 96
        %v3456 = vpop.permute.xlu0 %3455
        %3457 = vrot.lane.b32.xlu0 %v3239, 96
        %v3458 = vpop.permute.xlu0 %3457
        %3459 = vrot.lane.b32.xlu0 %v3240, 96
        %v3460 = vpop.permute.xlu0 %3459
        %3461 = vrot.lane.b32.xlu0 %v3241, 96
        %v3462 = vpop.permute.xlu0 %3461
        %3463 = vrot.lane.b32.xlu0 %v3242, 96
        %v3464 = vpop.permute.xlu0 %3463
        %3465 = vrot.lane.b32.xlu0 %v3243, 96
        %v3466 = vpop.permute.xlu0 %3465
        %3467 = vrot.lane.b32.xlu0 %v3244, 96
        %v3468 = vpop.permute.xlu0 %3467
        %3469 = vrot.lane.b32.xlu0 %v3245, 96
        %v3470 = vpop.permute.xlu0 %3469
        %3471 = vrot.lane.b32.xlu0 %v3246, 96
        %v3472 = vpop.permute.xlu0 %3471
        %3473 = vrot.lane.b32.xlu0 %v3247, 96
        %v3474 = vpop.permute.xlu0 %3473
        %3475 = vrot.lane.b32.xlu0 %v3248, 96
        %v3476 = vpop.permute.xlu0 %3475
        %3477 = vrot.lane.b32.xlu0 %v3249, 96
        %v3478 = vpop.permute.xlu0 %3477
        %3479 = vrot.lane.b32.xlu0 %v3250, 96
        %v3480 = vpop.permute.xlu0 %3479
        %3481 = vrot.lane.b32.xlu0 %v3251, 96
        %v3482 = vpop.permute.xlu0 %3481
        %3483 = vrot.lane.b32.xlu0 %v3252, 96
        %v3484 = vpop.permute.xlu0 %3483
        %3485 = vrot.lane.b32.xlu0 %v3253, 96
        %v3486 = vpop.permute.xlu0 %3485
        %3487 = vrot.lane.b32.xlu0 %v3254, 96
        %v3488 = vpop.permute.xlu0 %3487
        %3489 = vrot.lane.b32.xlu0 %v3255, 96
        %v3490 = vpop.permute.xlu0 %3489
        %3491 = vrot.lane.b32.xlu0 %v3256, 96
        %v3492 = vpop.permute.xlu0 %3491
        %3493 = vrot.lane.b32.xlu0 %v3257, 96
        %v3494 = vpop.permute.xlu0 %3493
        %3495 = vrot.lane.b32.xlu0 %v3258, 96
        %v3496 = vpop.permute.xlu0 %3495
        %3497 = vrot.lane.b32.xlu0 %v3259, 96
        %v3498 = vpop.permute.xlu0 %3497
        %3499 = vrot.lane.b32.xlu0 %v3260, 96
        %v3500 = vpop.permute.xlu0 %3499
        %3501 = vrot.lane.b32.xlu0 %v3261, 96
        %v3502 = vpop.permute.xlu0 %3501
        %3503 = vrot.lane.b32.xlu0 %v3262, 96
        %v3504 = vpop.permute.xlu0 %3503
        %3505 = vrot.lane.b32.xlu0 %v3263, 96
        %v3506 = vpop.permute.xlu0 %3505
        %3507 = vrot.lane.b32.xlu0 %v3264, 96
        %v3508 = vpop.permute.xlu0 %3507
        %3509 = vrot.lane.b32.xlu0 %v3265, 96
        %v3510 = vpop.permute.xlu0 %3509
        %3511 = vrot.lane.b32.xlu0 %v3266, 96
        %v3512 = vpop.permute.xlu0 %3511
        %3513 = vrot.lane.b32.xlu0 %v3267, 96
        %v3514 = vpop.permute.xlu0 %3513
        %3515 = vrot.lane.b32.xlu0 %v3268, 96
        %v3516 = vpop.permute.xlu0 %3515
        %3517 = vrot.lane.b32.xlu0 %v3269, 96
        %v3518 = vpop.permute.xlu0 %3517
        %3519 = vrot.lane.b32.xlu0 %v3270, 96
        %v3520 = vpop.permute.xlu0 %3519
        %3521 = vrot.lane.b32.xlu0 %v3271, 96
        %v3522 = vpop.permute.xlu0 %3521
        %3523 = vrot.lane.b32.xlu0 %v3272, 96
        %v3524 = vpop.permute.xlu0 %3523
        %3525 = vrot.lane.b32.xlu0 %v3273, 96
        %v3526 = vpop.permute.xlu0 %3525
        %3527 = vrot.lane.b32.xlu0 %v3274, 96
        %v3528 = vpop.permute.xlu0 %3527
        %3529 = vrot.lane.b32.xlu0 %v3275, 96
        %v3530 = vpop.permute.xlu0 %3529
        %3531 = vrot.lane.b32.xlu0 %v3276, 96
        %v3532 = vpop.permute.xlu0 %3531
        %3533 = vrot.lane.b32.xlu0 %v3277, 96
        %v3534 = vpop.permute.xlu0 %3533
        %3535 = vrot.lane.b32.xlu0 %v3278, 96
        %v3536 = vpop.permute.xlu0 %3535
        %3537 = vrot.lane.b32.xlu0 %v3279, 96
        %v3538 = vpop.permute.xlu0 %3537
        %3539 = vrot.lane.b32.xlu0 %v3280, 96
        %v3540 = vpop.permute.xlu0 %3539
        %3541 = vrot.lane.b32.xlu0 %v3281, 96
        %v3542 = vpop.permute.xlu0 %3541
        %3543 = vrot.lane.b32.xlu0 %v3282, 96
        %v3544 = vpop.permute.xlu0 %3543
        %3545 = vrot.lane.b32.xlu0 %v3283, 96
        %v3546 = vpop.permute.xlu0 %3545
        %3547 = vrot.lane.b32.xlu0 %v3284, 96
        %v3548 = vpop.permute.xlu0 %3547
        %3549 = vrot.lane.b32.xlu0 %v3285, 96
        %v3550 = vpop.permute.xlu0 %3549
        %3551 = vrot.lane.b32.xlu0 %v3286, 96
        %v3552 = vpop.permute.xlu0 %3551
        %3553 = vrot.lane.b32.xlu0 %v3287, 96
        %v3554 = vpop.permute.xlu0 %3553
        %3555 = vrot.lane.b32.xlu0 %v3288, 96
        %v3556 = vpop.permute.xlu0 %3555
        %3557 = vrot.lane.b32.xlu0 %v3289, 96
        %v3558 = vpop.permute.xlu0 %3557
        %3559 = vrot.lane.b32.xlu0 %v3290, 96
        %v3560 = vpop.permute.xlu0 %3559
        %3561 = vrot.lane.b32.xlu0 %v3291, 96
        %v3562 = vpop.permute.xlu0 %3561
        %3563 = vrot.lane.b32.xlu0 %v3292, 96
        %v3564 = vpop.permute.xlu0 %3563
        %3565 = vrot.lane.b32.xlu0 %v3293, 96
        %v3566 = vpop.permute.xlu0 %3565
        %3567 = vrot.lane.b32.xlu0 %v3294, 96
        %v3568 = vpop.permute.xlu0 %3567
        %3569 = vrot.lane.b32.xlu0 %v3295, 96
        %v3570 = vpop.permute.xlu0 %3569
        %3571 = vrot.lane.b32.xlu0 %v3296, 96
        %v3572 = vpop.permute.xlu0 %3571
        %3573 = vrot.lane.b32.xlu0 %v3297, 96
        %v3574 = vpop.permute.xlu0 %3573
        %3575 = vrot.lane.b32.xlu0 %v3298, 96
        %v3576 = vpop.permute.xlu0 %3575
        %3577 = vrot.lane.b32.xlu0 %v3299, 96
        %v3578 = vpop.permute.xlu0 %3577
        %3579 = vrot.lane.b32.xlu0 %v3300, 96
        %v3580 = vpop.permute.xlu0 %3579
        %3581 = vrot.lane.b32.xlu0 %v3301, 96
        %v3582 = vpop.permute.xlu0 %3581
        %3583 = vrot.lane.b32.xlu0 %v3302, 96
        %v3584 = vpop.permute.xlu0 %3583
        %3585 = vrot.lane.b32.xlu0 %v3303, 96
        %v3586 = vpop.permute.xlu0 %3585
        %3587 = vrot.lane.b32.xlu0 %v3304, 96
        %v3588 = vpop.permute.xlu0 %3587
        %3589 = vrot.lane.b32.xlu0 %v3305, 96
        %v3590 = vpop.permute.xlu0 %3589
        %3591 = vrot.lane.b32.xlu0 %v3306, 96
        %v3592 = vpop.permute.xlu0 %3591
        %3593 = vrot.lane.b32.xlu0 %v3307, 96
        %v3594 = vpop.permute.xlu0 %3593
        %3595 = vrot.lane.b32.xlu0 %v3308, 96
        %v3596 = vpop.permute.xlu0 %3595
        %3597 = vrot.lane.b32.xlu0 %v3309, 96
        %v3598 = vpop.permute.xlu0 %3597
        %vm3599 = vcmask 64512
        %v3600 = vsel %vm3599, %v3408, 0
        %v3602 = vsel %vm3599, %v3410, 0
        %v3604 = vsel %vm3599, %v3412, 0
        %v3606 = vsel %vm3599, %v3414, 0
        %v3608 = vsel %vm3599, %v3416, 0
        %v3610 = vsel %vm3599, %v3418, 0
        %v3612 = vsel %vm3599, %v3420, 0
        %v3614 = vsel %vm3599, %v3422, 0
        %v3616 = vsel %vm3599, %v3424, 0
        %v3618 = vsel %vm3599, %v3426, 0
        %v3620 = vsel %vm3599, %v3428, 0
        %v3622 = vsel %vm3599, %v3430, 0
        %v3624 = vsel %vm3599, %v3432, 0
        %v3626 = vsel %vm3599, %v3434, 0
        %v3628 = vsel %vm3599, %v3436, 0
        %v3630 = vsel %vm3599, %v3438, 0
        %v3632 = vsel %vm3599, %v3440, 0
        %v3634 = vsel %vm3599, %v3442, 0
        %v3636 = vsel %vm3599, %v3444, 0
        %v3638 = vsel %vm3599, %v3446, 0
        %v3640 = vsel %vm3599, %v3448, 0
        %v3642 = vsel %vm3599, %v3450, 0
        %v3644 = vsel %vm3599, %v3452, 0
        %v3646 = vsel %vm3599, %v3454, 0
        %v3648 = vsel %vm3599, %v3456, 0
        %v3650 = vsel %vm3599, %v3458, 0
        %v3652 = vsel %vm3599, %v3460, 0
        %v3654 = vsel %vm3599, %v3462, 0
        %v3656 = vsel %vm3599, %v3464, 0
        %v3658 = vsel %vm3599, %v3466, 0
        %v3660 = vsel %vm3599, %v3468, 0
        %v3662 = vsel %vm3599, %v3470, 0
        %v3664 = vsel %vm3599, %v3472, 0
        %v3666 = vsel %vm3599, %v3474, 0
        %v3668 = vsel %vm3599, %v3476, 0
        %v3670 = vsel %vm3599, %v3478, 0
        %v3672 = vsel %vm3599, %v3480, 0
        %v3674 = vsel %vm3599, %v3482, 0
        %v3676 = vsel %vm3599, %v3484, 0
        %v3678 = vsel %vm3599, %v3486, 0
        %v3680 = vsel %vm3599, %v3488, 0
        %v3682 = vsel %vm3599, %v3490, 0
        %v3684 = vsel %vm3599, %v3492, 0
        %v3686 = vsel %vm3599, %v3494, 0
        %v3688 = vsel %vm3599, %v3496, 0
        %v3690 = vsel %vm3599, %v3498, 0
        %v3692 = vsel %vm3599, %v3500, 0
        %v3694 = vsel %vm3599, %v3502, 0
        %v3696 = vsel %vm3599, %v3504, 0
        %v3698 = vsel %vm3599, %v3506, 0
        %v3700 = vsel %vm3599, %v3508, 0
        %v3702 = vsel %vm3599, %v3510, 0
        %v3704 = vsel %vm3599, %v3512, 0
        %v3706 = vsel %vm3599, %v3514, 0
        %v3708 = vsel %vm3599, %v3516, 0
        %v3710 = vsel %vm3599, %v3518, 0
        %v3712 = vsel %vm3599, %v3520, 0
        %v3714 = vsel %vm3599, %v3522, 0
        %v3716 = vsel %vm3599, %v3524, 0
        %v3718 = vsel %vm3599, %v3526, 0
        %v3720 = vsel %vm3599, %v3528, 0
        %v3722 = vsel %vm3599, %v3530, 0
        %v3724 = vsel %vm3599, %v3532, 0
        %v3726 = vsel %vm3599, %v3534, 0
        %v3728 = vsel %vm3599, %v3536, 0
        %v3730 = vsel %vm3599, %v3538, 0
        %v3732 = vsel %vm3599, %v3540, 0
        %v3734 = vsel %vm3599, %v3542, 0
        %v3736 = vsel %vm3599, %v3544, 0
        %v3738 = vsel %vm3599, %v3546, 0
        %v3740 = vsel %vm3599, %v3548, 0
        %v3742 = vsel %vm3599, %v3550, 0
        %v3744 = vsel %vm3599, %v3552, 0
        %v3746 = vsel %vm3599, %v3554, 0
        %v3748 = vsel %vm3599, %v3556, 0
        %v3750 = vsel %vm3599, %v3558, 0
        %v3752 = vsel %vm3599, %v3560, 0
        %v3754 = vsel %vm3599, %v3562, 0
        %v3756 = vsel %vm3599, %v3564, 0
        %v3758 = vsel %vm3599, %v3566, 0
        %v3760 = vsel %vm3599, %v3568, 0
        %v3762 = vsel %vm3599, %v3570, 0
        %v3764 = vsel %vm3599, %v3572, 0
        %v3766 = vsel %vm3599, %v3574, 0
        %v3768 = vsel %vm3599, %v3576, 0
        %v3770 = vsel %vm3599, %v3578, 0
        %v3772 = vsel %vm3599, %v3580, 0
        %v3774 = vsel %vm3599, %v3582, 0
        %v3776 = vsel %vm3599, %v3584, 0
        %v3778 = vsel %vm3599, %v3586, 0
        %v3780 = vsel %vm3599, %v3588, 0
        %v3782 = vsel %vm3599, %v3590, 0
        %v3784 = vsel %vm3599, %v3592, 0
        %v3786 = vsel %vm3599, %v3594, 0
        %v3788 = vsel %vm3599, %v3596, 0
        %v3790 = vsel %vm3599, %v3598, 0
        %3792 = vmatprep.subr.mxu0 0.0
        %3793 = vmatpush1.msra.mxu0 %v3310
        %3794 = vmatprep.subr.mxu0 0.0
        %3795 = vmatpush1.msra.mxu0 0.0
        %3796 = vmatprep.subr.mxu0 0.0
        %3797 = vmatpush1.msra.mxu0 0.0
        %3798 = vmatprep.subr.mxu0 0.0
        %3799 = vmatpush1.msra.mxu0 0.0
        %3800 = vmatprep.subr.mxu0 0.0
        %3801 = vmatpush1.msra.mxu0 0.0
        %3802 = vmatprep.subr.mxu0 0.0
        %3803 = vmatpush1.msra.mxu0 0.0
        %3804 = vmatprep.subr.mxu0 0.0
        %3805 = vmatpush1.msra.mxu0 0.0
        %3806 = vmatprep.subr.mxu0 0.0
        %3807 = vmatpush1.msra.mxu0 0.0
        %3808 = vmatprep.subr.mxu0 0.0
        %3809 = vmatpush1.msra.mxu0 0.0
        %3810 = vmatprep.subr.mxu0 0.0
        %3811 = vmatpush1.msra.mxu0 0.0
        %3812 = vmatprep.subr.mxu0 0.0
        %3813 = vmatpush1.msra.mxu0 0.0
        %3814 = vmatprep.subr.mxu0 0.0
        %3815 = vmatpush1.msra.mxu0 0.0
        %3816 = vmatprep.subr.mxu0 0.0
        %3817 = vmatpush1.msra.mxu0 0.0
        %3818 = vmatprep.subr.mxu0 0.0
        %3819 = vmatpush1.msra.mxu0 0.0
        %3820 = vmatprep.subr.mxu0 0.0
        %3821 = vmatpush1.msra.mxu0 0.0
        %3822 = vmatprep.subr.mxu0 0.0
        %3823 = vmatpush1.msra.mxu0 0.0
        %3824 = vmatprep.subr.mxu0 0.0
        %3825 = vmatpush1.msra.mxu0 0.0
        %3826 = vmatprep.subr.mxu0 0.0
        %3827 = vmatpush1.msra.mxu0 0.0
        %3828 = vmatprep.subr.mxu0 0.0
        %3829 = vmatpush1.msra.mxu0 0.0
        %3830 = vmatprep.subr.mxu0 0.0
        %3831 = vmatpush1.msra.mxu0 0.0
        %3832 = vmatprep.subr.mxu0 0.0
        %3833 = vmatpush1.msra.mxu0 0.0
        %3834 = vmatprep.subr.mxu0 0.0
        %3835 = vmatpush1.msra.mxu0 0.0
        %3836 = vmatprep.subr.mxu0 0.0
        %3837 = vmatpush1.msra.mxu0 0.0
        %3838 = vmatprep.subr.mxu0 0.0
        %3839 = vmatpush1.msra.mxu0 0.0
        %3840 = vmatprep.subr.mxu0 0.0
        %3841 = vmatpush1.msra.mxu0 0.0
        %3842 = vmatprep.subr.mxu0 0.0
        %3843 = vmatpush1.msra.mxu0 0.0
        %3844 = vmatprep.subr.mxu0 0.0
        %3845 = vmatpush1.msra.mxu0 0.0
        %3846 = vmatprep.subr.mxu0 0.0
        %3847 = vmatpush1.msra.mxu0 0.0
        %3848 = vmatprep.subr.mxu0 0.0
        %3849 = vmatpush1.msra.mxu0 0.0
        %3850 = vmatprep.subr.mxu0 0.0
        %3851 = vmatpush1.msra.mxu0 0.0
        %3852 = vmatprep.subr.mxu0 0.0
        %3853 = vmatpush1.msra.mxu0 0.0
        %3854 = vmatprep.subr.mxu0 0.0
        %3855 = vmatpush1.msra.mxu0 0.0
        %3856 = vmatprep.mubr.f32.mxu0 0.0
        %3857 = vmatmul.mubr.f32.gmra.mrb[0].mxu0 %v3600
        %v3858 = vpop.f32.mrb[0].mxu0
        %v3859 = vadd.f32 0.0, %v3858
        %v3860 = vpop.f32.mrb[0].mxu0
        %3861 = vmatprep.mubr.f32.mxu0 0.0
        %3862 = vmatmul.mubr.f32.gmra.mrb[0].mxu0 %v3602
        %v3863 = vpop.f32.mrb[0].mxu0
        %v3864 = vadd.f32 0.0, %v3863
        %v3865 = vpop.f32.mrb[0].mxu0
        %3866 = vmatprep.mubr.f32.mxu0 0.0
        %3867 = vmatmul.mubr.f32.gmra.mrb[0].mxu0 %v3604
        %v3868 = vpop.f32.mrb[0].mxu0
        %v3869 = vadd.f32 0.0, %v3868
        %v3870 = vpop.f32.mrb[0].mxu0
        %3871 = vmatprep.mubr.f32.mxu0 0.0
        %3872 = vmatmul.mubr.f32.gmra.mrb[0].mxu0 %v3606
        %v3873 = vpop.f32.mrb[0].mxu0
        %v3874 = vadd.f32 0.0, %v3873
        %v3875 = vpop.f32.mrb[0].mxu0
        %3876 = vmatprep.mubr.f32.mxu0 0.0
        %3877 = vmatmul.mubr.f32.gmra.mrb[0].mxu0 %v3608
        %v3878 = vpop.f32.mrb[0].mxu0
        %v3879 = vadd.f32 0.0, %v3878
        %v3880 = vpop.f32.mrb[0].mxu0
        %3881 = vmatprep.mubr.f32.mxu0 0.0
        %3882 = vmatmul.mubr.f32.gmra.mrb[0].mxu0 %v3610
        %v3883 = vpop.f32.mrb[0].mxu0
        %v3884 = vadd.f32 0.0, %v3883
        %v3885 = vpop.f32.mrb[0].mxu0
        %3886 = vmatprep.mubr.f32.mxu0 0.0
        %3887 = vmatmul.mubr.f32.gmra.mrb[0].mxu0 %v3612
        %v3888 = vpop.f32.mrb[0].mxu0
        %v3889 = vadd.f32 0.0, %v3888
        %v3890 = vpop.f32.mrb[0].mxu0
        %3891 = vmatprep.mubr.f32.mxu0 0.0
        %3892 = vmatmul.mubr.f32.gmra.mrb[0].mxu0 %v3614
        %v3893 = vpop.f32.mrb[0].mxu0
        %v3894 = vadd.f32 0.0, %v3893
        %v3895 = vpop.f32.mrb[0].mxu0
        %3896 = vmatprep.mubr.f32.mxu0 0.0
        %3897 = vmatmul.mubr.f32.gmra.mrb[0].mxu0 %v3616
        %v3898 = vpop.f32.mrb[0].mxu0
        %v3899 = vadd.f32 0.0, %v3898
        %v3900 = vpop.f32.mrb[0].mxu0
        %3901 = vmatprep.mubr.f32.mxu0 0.0
        %3902 = vmatmul.mubr.f32.gmra.mrb[0].mxu0 %v3618
        %v3903 = vpop.f32.mrb[0].mxu0
        %v3904 = vadd.f32 0.0, %v3903
        %v3905 = vpop.f32.mrb[0].mxu0
        %3906 = vmatprep.mubr.f32.mxu0 0.0
        %3907 = vmatmul.mubr.f32.gmra.mrb[0].mxu0 %v3620
        %v3908 = vpop.f32.mrb[0].mxu0
        %v3909 = vadd.f32 0.0, %v3908
        %v3910 = vpop.f32.mrb[0].mxu0
        %3911 = vmatprep.mubr.f32.mxu0 0.0
        %3912 = vmatmul.mubr.f32.gmra.mrb[0].mxu0 %v3622
        %v3913 = vpop.f32.mrb[0].mxu0
        %v3914 = vadd.f32 0.0, %v3913
        %v3915 = vpop.f32.mrb[0].mxu0
        %3916 = vmatprep.mubr.f32.mxu0 0.0
        %3917 = vmatmul.mubr.f32.gmra.mrb[0].mxu0 %v3624
        %v3918 = vpop.f32.mrb[0].mxu0
        %v3919 = vadd.f32 0.0, %v3918
        %v3920 = vpop.f32.mrb[0].mxu0
        %3921 = vmatprep.mubr.f32.mxu0 0.0
        %3922 = vmatmul.mubr.f32.gmra.mrb[0].mxu0 %v3626
        %v3923 = vpop.f32.mrb[0].mxu0
        %v3924 = vadd.f32 0.0, %v3923
        %v3925 = vpop.f32.mrb[0].mxu0
        %3926 = vmatprep.mubr.f32.mxu0 0.0
        %3927 = vmatmul.mubr.f32.gmra.mrb[0].mxu0 %v3628
        %v3928 = vpop.f32.mrb[0].mxu0
        %v3929 = vadd.f32 0.0, %v3928
        %v3930 = vpop.f32.mrb[0].mxu0
        %3931 = vmatprep.mubr.f32.mxu0 0.0
        %3932 = vmatmul.mubr.f32.gmra.mrb[0].mxu0 %v3630
        %v3933 = vpop.f32.mrb[0].mxu0
        %v3934 = vadd.f32 0.0, %v3933
        %v3935 = vpop.f32.mrb[0].mxu0
        %3936 = vmatprep.mubr.f32.mxu0 0.0
        %3937 = vmatmul.mubr.f32.gmra.mrb[0].mxu0 %v3632
        %v3938 = vpop.f32.mrb[0].mxu0
        %v3939 = vadd.f32 0.0, %v3938
        %v3940 = vpop.f32.mrb[0].mxu0
        %3941 = vmatprep.mubr.f32.mxu0 0.0
        %3942 = vmatmul.mubr.f32.gmra.mrb[0].mxu0 %v3634
        %v3943 = vpop.f32.mrb[0].mxu0
        %v3944 = vadd.f32 0.0, %v3943
        %v3945 = vpop.f32.mrb[0].mxu0
        %3946 = vmatprep.mubr.f32.mxu0 0.0
        %3947 = vmatmul.mubr.f32.gmra.mrb[0].mxu0 %v3636
        %v3948 = vpop.f32.mrb[0].mxu0
        %v3949 = vadd.f32 0.0, %v3948
        %v3950 = vpop.f32.mrb[0].mxu0
        %3951 = vmatprep.mubr.f32.mxu0 0.0
        %3952 = vmatmul.mubr.f32.gmra.mrb[0].mxu0 %v3638
        %v3953 = vpop.f32.mrb[0].mxu0
        %v3954 = vadd.f32 0.0, %v3953
        %v3955 = vpop.f32.mrb[0].mxu0
        %3956 = vmatprep.mubr.f32.mxu0 0.0
        %3957 = vmatmul.mubr.f32.gmra.mrb[0].mxu0 %v3640
        %v3958 = vpop.f32.mrb[0].mxu0
        %v3959 = vadd.f32 0.0, %v3958
        %v3960 = vpop.f32.mrb[0].mxu0
        %3961 = vmatprep.mubr.f32.mxu0 0.0
        %3962 = vmatmul.mubr.f32.gmra.mrb[0].mxu0 %v3642
        %v3963 = vpop.f32.mrb[0].mxu0
        %v3964 = vadd.f32 0.0, %v3963
        %v3965 = vpop.f32.mrb[0].mxu0
        %3966 = vmatprep.mubr.f32.mxu0 0.0
        %3967 = vmatmul.mubr.f32.gmra.mrb[0].mxu0 %v3644
        %v3968 = vpop.f32.mrb[0].mxu0
        %v3969 = vadd.f32 0.0, %v3968
        %v3970 = vpop.f32.mrb[0].mxu0
        %3971 = vmatprep.mubr.f32.mxu0 0.0
        %3972 = vmatmul.mubr.f32.gmra.mrb[0].mxu0 %v3646
        %v3973 = vpop.f32.mrb[0].mxu0
        %v3974 = vadd.f32 0.0, %v3973
        %v3975 = vpop.f32.mrb[0].mxu0
        %3976 = vmatprep.mubr.f32.mxu0 0.0
        %3977 = vmatmul.mubr.f32.gmra.mrb[0].mxu0 %v3648
        %v3978 = vpop.f32.mrb[0].mxu0
        %v3979 = vadd.f32 0.0, %v3978
        %v3980 = vpop.f32.mrb[0].mxu0
        %3981 = vmatprep.mubr.f32.mxu0 0.0
        %3982 = vmatmul.mubr.f32.gmra.mrb[0].mxu0 %v3650
        %v3983 = vpop.f32.mrb[0].mxu0
        %v3984 = vadd.f32 0.0, %v3983
        %v3985 = vpop.f32.mrb[0].mxu0
        %3986 = vmatprep.mubr.f32.mxu0 0.0
        %3987 = vmatmul.mubr.f32.gmra.mrb[0].mxu0 %v3652
        %v3988 = vpop.f32.mrb[0].mxu0
        %v3989 = vadd.f32 0.0, %v3988
        %v3990 = vpop.f32.mrb[0].mxu0
        %3991 = vmatprep.mubr.f32.mxu0 0.0
        %3992 = vmatmul.mubr.f32.gmra.mrb[0].mxu0 %v3654
        %v3993 = vpop.f32.mrb[0].mxu0
        %v3994 = vadd.f32 0.0, %v3993
        %v3995 = vpop.f32.mrb[0].mxu0
        %3996 = vmatprep.mubr.f32.mxu0 0.0
        %3997 = vmatmul.mubr.f32.gmra.mrb[0].mxu0 %v3656
        %v3998 = vpop.f32.mrb[0].mxu0
        %v3999 = vadd.f32 0.0, %v3998
        %v4000 = vpop.f32.mrb[0].mxu0
        %4001 = vmatprep.mubr.f32.mxu0 0.0
        %4002 = vmatmul.mubr.f32.gmra.mrb[0].mxu0 %v3658
        %v4003 = vpop.f32.mrb[0].mxu0
        %v4004 = vadd.f32 0.0, %v4003
        %v4005 = vpop.f32.mrb[0].mxu0
        %4006 = vmatprep.mubr.f32.mxu0 0.0
        %4007 = vmatmul.mubr.f32.gmra.mrb[0].mxu0 %v3660
        %v4008 = vpop.f32.mrb[0].mxu0
        %v4009 = vadd.f32 0.0, %v4008
        %v4010 = vpop.f32.mrb[0].mxu0
        %4011 = vmatprep.mubr.f32.mxu0 0.0
        %4012 = vmatmul.mubr.f32.gmra.mrb[0].mxu0 %v3662
        %v4013 = vpop.f32.mrb[0].mxu0
        %v4014 = vadd.f32 0.0, %v4013
        %v4015 = vpop.f32.mrb[0].mxu0
        %4016 = vmatprep.mubr.f32.mxu0 0.0
        %4017 = vmatmul.mubr.f32.gmra.mrb[0].mxu0 %v3664
        %v4018 = vpop.f32.mrb[0].mxu0
        %v4019 = vadd.f32 0.0, %v4018
        %v4020 = vpop.f32.mrb[0].mxu0
        %4021 = vmatprep.mubr.f32.mxu0 0.0
        %4022 = vmatmul.mubr.f32.gmra.mrb[0].mxu0 %v3666
        %v4023 = vpop.f32.mrb[0].mxu0
        %v4024 = vadd.f32 0.0, %v4023
        %v4025 = vpop.f32.mrb[0].mxu0
        %4026 = vmatprep.mubr.f32.mxu0 0.0
        %4027 = vmatmul.mubr.f32.gmra.mrb[0].mxu0 %v3668
        %v4028 = vpop.f32.mrb[0].mxu0
        %v4029 = vadd.f32 0.0, %v4028
        %v4030 = vpop.f32.mrb[0].mxu0
        %4031 = vmatprep.mubr.f32.mxu0 0.0
        %4032 = vmatmul.mubr.f32.gmra.mrb[0].mxu0 %v3670
        %v4033 = vpop.f32.mrb[0].mxu0
        %v4034 = vadd.f32 0.0, %v4033
        %v4035 = vpop.f32.mrb[0].mxu0
        %4036 = vmatprep.mubr.f32.mxu0 0.0
        %4037 = vmatmul.mubr.f32.gmra.mrb[0].mxu0 %v3672
        %v4038 = vpop.f32.mrb[0].mxu0
        %v4039 = vadd.f32 0.0, %v4038
        %v4040 = vpop.f32.mrb[0].mxu0
        %4041 = vmatprep.mubr.f32.mxu0 0.0
        %4042 = vmatmul.mubr.f32.gmra.mrb[0].mxu0 %v3674
        %v4043 = vpop.f32.mrb[0].mxu0
        %v4044 = vadd.f32 0.0, %v4043
        %v4045 = vpop.f32.mrb[0].mxu0
        %4046 = vmatprep.mubr.f32.mxu0 0.0
        %4047 = vmatmul.mubr.f32.gmra.mrb[0].mxu0 %v3676
        %v4048 = vpop.f32.mrb[0].mxu0
        %v4049 = vadd.f32 0.0, %v4048
        %v4050 = vpop.f32.mrb[0].mxu0
        %4051 = vmatprep.mubr.f32.mxu0 0.0
        %4052 = vmatmul.mubr.f32.gmra.mrb[0].mxu0 %v3678
        %v4053 = vpop.f32.mrb[0].mxu0
        %v4054 = vadd.f32 0.0, %v4053
        %v4055 = vpop.f32.mrb[0].mxu0
        %4056 = vmatprep.mubr.f32.mxu0 0.0
        %4057 = vmatmul.mubr.f32.gmra.mrb[0].mxu0 %v3680
        %v4058 = vpop.f32.mrb[0].mxu0
        %v4059 = vadd.f32 0.0, %v4058
        %v4060 = vpop.f32.mrb[0].mxu0
        %4061 = vmatprep.mubr.f32.mxu0 0.0
        %4062 = vmatmul.mubr.f32.gmra.mrb[0].mxu0 %v3682
        %v4063 = vpop.f32.mrb[0].mxu0
        %v4064 = vadd.f32 0.0, %v4063
        %v4065 = vpop.f32.mrb[0].mxu0
        %4066 = vmatprep.mubr.f32.mxu0 0.0
        %4067 = vmatmul.mubr.f32.gmra.mrb[0].mxu0 %v3684
        %v4068 = vpop.f32.mrb[0].mxu0
        %v4069 = vadd.f32 0.0, %v4068
        %v4070 = vpop.f32.mrb[0].mxu0
        %4071 = vmatprep.mubr.f32.mxu0 0.0
        %4072 = vmatmul.mubr.f32.gmra.mrb[0].mxu0 %v3686
        %v4073 = vpop.f32.mrb[0].mxu0
        %v4074 = vadd.f32 0.0, %v4073
        %v4075 = vpop.f32.mrb[0].mxu0
        %4076 = vmatprep.mubr.f32.mxu0 0.0
        %4077 = vmatmul.mubr.f32.gmra.mrb[0].mxu0 %v3688
        %v4078 = vpop.f32.mrb[0].mxu0
        %v4079 = vadd.f32 0.0, %v4078
        %v4080 = vpop.f32.mrb[0].mxu0
        %4081 = vmatprep.mubr.f32.mxu0 0.0
        %4082 = vmatmul.mubr.f32.gmra.mrb[0].mxu0 %v3690
        %v4083 = vpop.f32.mrb[0].mxu0
        %v4084 = vadd.f32 0.0, %v4083
        %v4085 = vpop.f32.mrb[0].mxu0
        %4086 = vmatprep.mubr.f32.mxu0 0.0
        %4087 = vmatmul.mubr.f32.gmra.mrb[0].mxu0 %v3692
        %v4088 = vpop.f32.mrb[0].mxu0
        %v4089 = vadd.f32 0.0, %v4088
        %v4090 = vpop.f32.mrb[0].mxu0
        %4091 = vmatprep.mubr.f32.mxu0 0.0
        %4092 = vmatmul.mubr.f32.gmra.mrb[0].mxu0 %v3694
        %v4093 = vpop.f32.mrb[0].mxu0
        %v4094 = vadd.f32 0.0, %v4093
        %v4095 = vpop.f32.mrb[0].mxu0
        %4096 = vmatprep.mubr.f32.mxu0 0.0
        %4097 = vmatmul.mubr.f32.gmra.mrb[0].mxu0 %v3696
        %v4098 = vpop.f32.mrb[0].mxu0
        %v4099 = vadd.f32 0.0, %v4098
        %v4100 = vpop.f32.mrb[0].mxu0
        %4101 = vmatprep.mubr.f32.mxu0 0.0
        %4102 = vmatmul.mubr.f32.gmra.mrb[0].mxu0 %v3698
        %v4103 = vpop.f32.mrb[0].mxu0
        %v4104 = vadd.f32 0.0, %v4103
        %v4105 = vpop.f32.mrb[0].mxu0
        %4106 = vmatprep.mubr.f32.mxu0 0.0
        %4107 = vmatmul.mubr.f32.gmra.mrb[0].mxu0 %v3700
        %v4108 = vpop.f32.mrb[0].mxu0
        %v4109 = vadd.f32 0.0, %v4108
        %v4110 = vpop.f32.mrb[0].mxu0
        %4111 = vmatprep.mubr.f32.mxu0 0.0
        %4112 = vmatmul.mubr.f32.gmra.mrb[0].mxu0 %v3702
        %v4113 = vpop.f32.mrb[0].mxu0
        %v4114 = vadd.f32 0.0, %v4113
        %v4115 = vpop.f32.mrb[0].mxu0
        %4116 = vmatprep.mubr.f32.mxu0 0.0
        %4117 = vmatmul.mubr.f32.gmra.mrb[0].mxu0 %v3704
        %v4118 = vpop.f32.mrb[0].mxu0
        %v4119 = vadd.f32 0.0, %v4118
        %v4120 = vpop.f32.mrb[0].mxu0
        %4121 = vmatprep.mubr.f32.mxu0 0.0
        %4122 = vmatmul.mubr.f32.gmra.mrb[0].mxu0 %v3706
        %v4123 = vpop.f32.mrb[0].mxu0
        %v4124 = vadd.f32 0.0, %v4123
        %v4125 = vpop.f32.mrb[0].mxu0
        %4126 = vmatprep.mubr.f32.mxu0 0.0
        %4127 = vmatmul.mubr.f32.gmra.mrb[0].mxu0 %v3708
        %v4128 = vpop.f32.mrb[0].mxu0
        %v4129 = vadd.f32 0.0, %v4128
        %v4130 = vpop.f32.mrb[0].mxu0
        %4131 = vmatprep.mubr.f32.mxu0 0.0
        %4132 = vmatmul.mubr.f32.gmra.mrb[0].mxu0 %v3710
        %v4133 = vpop.f32.mrb[0].mxu0
        %v4134 = vadd.f32 0.0, %v4133
        %v4135 = vpop.f32.mrb[0].mxu0
        %4136 = vmatprep.mubr.f32.mxu0 0.0
        %4137 = vmatmul.mubr.f32.gmra.mrb[0].mxu0 %v3712
        %v4138 = vpop.f32.mrb[0].mxu0
        %v4139 = vadd.f32 0.0, %v4138
        %v4140 = vpop.f32.mrb[0].mxu0
        %4141 = vmatprep.mubr.f32.mxu0 0.0
        %4142 = vmatmul.mubr.f32.gmra.mrb[0].mxu0 %v3714
        %v4143 = vpop.f32.mrb[0].mxu0
        %v4144 = vadd.f32 0.0, %v4143
        %v4145 = vpop.f32.mrb[0].mxu0
        %4146 = vmatprep.mubr.f32.mxu0 0.0
        %4147 = vmatmul.mubr.f32.gmra.mrb[0].mxu0 %v3716
        %v4148 = vpop.f32.mrb[0].mxu0
        %v4149 = vadd.f32 0.0, %v4148
        %v4150 = vpop.f32.mrb[0].mxu0
        %4151 = vmatprep.mubr.f32.mxu0 0.0
        %4152 = vmatmul.mubr.f32.gmra.mrb[0].mxu0 %v3718
        %v4153 = vpop.f32.mrb[0].mxu0
        %v4154 = vadd.f32 0.0, %v4153
        %v4155 = vpop.f32.mrb[0].mxu0
        %4156 = vmatprep.mubr.f32.mxu0 0.0
        %4157 = vmatmul.mubr.f32.gmra.mrb[0].mxu0 %v3720
        %v4158 = vpop.f32.mrb[0].mxu0
        %v4159 = vadd.f32 0.0, %v4158
        %v4160 = vpop.f32.mrb[0].mxu0
        %4161 = vmatprep.mubr.f32.mxu0 0.0
        %4162 = vmatmul.mubr.f32.gmra.mrb[0].mxu0 %v3722
        %v4163 = vpop.f32.mrb[0].mxu0
        %v4164 = vadd.f32 0.0, %v4163
        %v4165 = vpop.f32.mrb[0].mxu0
        %4166 = vmatprep.mubr.f32.mxu0 0.0
        %4167 = vmatmul.mubr.f32.gmra.mrb[0].mxu0 %v3724
        %v4168 = vpop.f32.mrb[0].mxu0
        %v4169 = vadd.f32 0.0, %v4168
        %v4170 = vpop.f32.mrb[0].mxu0
        %4171 = vmatprep.mubr.f32.mxu0 0.0
        %4172 = vmatmul.mubr.f32.gmra.mrb[0].mxu0 %v3726
        %v4173 = vpop.f32.mrb[0].mxu0
        %v4174 = vadd.f32 0.0, %v4173
        %v4175 = vpop.f32.mrb[0].mxu0
        %4176 = vmatprep.mubr.f32.mxu0 0.0
        %4177 = vmatmul.mubr.f32.gmra.mrb[0].mxu0 %v3728
        %v4178 = vpop.f32.mrb[0].mxu0
        %v4179 = vadd.f32 0.0, %v4178
        %v4180 = vpop.f32.mrb[0].mxu0
        %4181 = vmatprep.mubr.f32.mxu0 0.0
        %4182 = vmatmul.mubr.f32.gmra.mrb[0].mxu0 %v3730
        %v4183 = vpop.f32.mrb[0].mxu0
        %v4184 = vadd.f32 0.0, %v4183
        %v4185 = vpop.f32.mrb[0].mxu0
        %4186 = vmatprep.mubr.f32.mxu0 0.0
        %4187 = vmatmul.mubr.f32.gmra.mrb[0].mxu0 %v3732
        %v4188 = vpop.f32.mrb[0].mxu0
        %v4189 = vadd.f32 0.0, %v4188
        %v4190 = vpop.f32.mrb[0].mxu0
        %4191 = vmatprep.mubr.f32.mxu0 0.0
        %4192 = vmatmul.mubr.f32.gmra.mrb[0].mxu0 %v3734
        %v4193 = vpop.f32.mrb[0].mxu0
        %v4194 = vadd.f32 0.0, %v4193
        %v4195 = vpop.f32.mrb[0].mxu0
        %4196 = vmatprep.mubr.f32.mxu0 0.0
        %4197 = vmatmul.mubr.f32.gmra.mrb[0].mxu0 %v3736
        %v4198 = vpop.f32.mrb[0].mxu0
        %v4199 = vadd.f32 0.0, %v4198
        %v4200 = vpop.f32.mrb[0].mxu0
        %4201 = vmatprep.mubr.f32.mxu0 0.0
        %4202 = vmatmul.mubr.f32.gmra.mrb[0].mxu0 %v3738
        %v4203 = vpop.f32.mrb[0].mxu0
        %v4204 = vadd.f32 0.0, %v4203
        %v4205 = vpop.f32.mrb[0].mxu0
        %4206 = vmatprep.mubr.f32.mxu0 0.0
        %4207 = vmatmul.mubr.f32.gmra.mrb[0].mxu0 %v3740
        %v4208 = vpop.f32.mrb[0].mxu0
        %v4209 = vadd.f32 0.0, %v4208
        %v4210 = vpop.f32.mrb[0].mxu0
        %4211 = vmatprep.mubr.f32.mxu0 0.0
        %4212 = vmatmul.mubr.f32.gmra.mrb[0].mxu0 %v3742
        %v4213 = vpop.f32.mrb[0].mxu0
        %v4214 = vadd.f32 0.0, %v4213
        %v4215 = vpop.f32.mrb[0].mxu0
        %4216 = vmatprep.mubr.f32.mxu0 0.0
        %4217 = vmatmul.mubr.f32.gmra.mrb[0].mxu0 %v3744
        %v4218 = vpop.f32.mrb[0].mxu0
        %v4219 = vadd.f32 0.0, %v4218
        %v4220 = vpop.f32.mrb[0].mxu0
        %4221 = vmatprep.mubr.f32.mxu0 0.0
        %4222 = vmatmul.mubr.f32.gmra.mrb[0].mxu0 %v3746
        %v4223 = vpop.f32.mrb[0].mxu0
        %v4224 = vadd.f32 0.0, %v4223
        %v4225 = vpop.f32.mrb[0].mxu0
        %4226 = vmatprep.mubr.f32.mxu0 0.0
        %4227 = vmatmul.mubr.f32.gmra.mrb[0].mxu0 %v3748
        %v4228 = vpop.f32.mrb[0].mxu0
        %v4229 = vadd.f32 0.0, %v4228
        %v4230 = vpop.f32.mrb[0].mxu0
        %4231 = vmatprep.mubr.f32.mxu0 0.0
        %4232 = vmatmul.mubr.f32.gmra.mrb[0].mxu0 %v3750
        %v4233 = vpop.f32.mrb[0].mxu0
        %v4234 = vadd.f32 0.0, %v4233
        %v4235 = vpop.f32.mrb[0].mxu0
        %4236 = vmatprep.mubr.f32.mxu0 0.0
        %4237 = vmatmul.mubr.f32.gmra.mrb[0].mxu0 %v3752
        %v4238 = vpop.f32.mrb[0].mxu0
        %v4239 = vadd.f32 0.0, %v4238
        %v4240 = vpop.f32.mrb[0].mxu0
        %4241 = vmatprep.mubr.f32.mxu0 0.0
        %4242 = vmatmul.mubr.f32.gmra.mrb[0].mxu0 %v3754
        %v4243 = vpop.f32.mrb[0].mxu0
        %v4244 = vadd.f32 0.0, %v4243
        %v4245 = vpop.f32.mrb[0].mxu0
        %4246 = vmatprep.mubr.f32.mxu0 0.0
        %4247 = vmatmul.mubr.f32.gmra.mrb[0].mxu0 %v3756
        %v4248 = vpop.f32.mrb[0].mxu0
        %v4249 = vadd.f32 0.0, %v4248
        %v4250 = vpop.f32.mrb[0].mxu0
        %4251 = vmatprep.mubr.f32.mxu0 0.0
        %4252 = vmatmul.mubr.f32.gmra.mrb[0].mxu0 %v3758
        %v4253 = vpop.f32.mrb[0].mxu0
        %v4254 = vadd.f32 0.0, %v4253
        %v4255 = vpop.f32.mrb[0].mxu0
        %4256 = vmatprep.mubr.f32.mxu0 0.0
        %4257 = vmatmul.mubr.f32.gmra.mrb[0].mxu0 %v3760
        %v4258 = vpop.f32.mrb[0].mxu0
        %v4259 = vadd.f32 0.0, %v4258
        %v4260 = vpop.f32.mrb[0].mxu0
        %4261 = vmatprep.mubr.f32.mxu0 0.0
        %4262 = vmatmul.mubr.f32.gmra.mrb[0].mxu0 %v3762
        %v4263 = vpop.f32.mrb[0].mxu0
        %v4264 = vadd.f32 0.0, %v4263
        %v4265 = vpop.f32.mrb[0].mxu0
        %4266 = vmatprep.mubr.f32.mxu0 0.0
        %4267 = vmatmul.mubr.f32.gmra.mrb[0].mxu0 %v3764
        %v4268 = vpop.f32.mrb[0].mxu0
        %v4269 = vadd.f32 0.0, %v4268
        %v4270 = vpop.f32.mrb[0].mxu0
        %4271 = vmatprep.mubr.f32.mxu0 0.0
        %4272 = vmatmul.mubr.f32.gmra.mrb[0].mxu0 %v3766
        %v4273 = vpop.f32.mrb[0].mxu0
        %v4274 = vadd.f32 0.0, %v4273
        %v4275 = vpop.f32.mrb[0].mxu0
        %4276 = vmatprep.mubr.f32.mxu0 0.0
        %4277 = vmatmul.mubr.f32.gmra.mrb[0].mxu0 %v3768
        %v4278 = vpop.f32.mrb[0].mxu0
        %v4279 = vadd.f32 0.0, %v4278
        %v4280 = vpop.f32.mrb[0].mxu0
        %4281 = vmatprep.mubr.f32.mxu0 0.0
        %4282 = vmatmul.mubr.f32.gmra.mrb[0].mxu0 %v3770
        %v4283 = vpop.f32.mrb[0].mxu0
        %v4284 = vadd.f32 0.0, %v4283
        %v4285 = vpop.f32.mrb[0].mxu0
        %4286 = vmatprep.mubr.f32.mxu0 0.0
        %4287 = vmatmul.mubr.f32.gmra.mrb[0].mxu0 %v3772
        %v4288 = vpop.f32.mrb[0].mxu0
        %v4289 = vadd.f32 0.0, %v4288
        %v4290 = vpop.f32.mrb[0].mxu0
        %4291 = vmatprep.mubr.f32.mxu0 0.0
        %4292 = vmatmul.mubr.f32.gmra.mrb[0].mxu0 %v3774
        %v4293 = vpop.f32.mrb[0].mxu0
        %v4294 = vadd.f32 0.0, %v4293
        %v4295 = vpop.f32.mrb[0].mxu0
        %4296 = vmatprep.mubr.f32.mxu0 0.0
        %4297 = vmatmul.mubr.f32.gmra.mrb[0].mxu0 %v3776
        %v4298 = vpop.f32.mrb[0].mxu0
        %v4299 = vadd.f32 0.0, %v4298
        %v4300 = vpop.f32.mrb[0].mxu0
        %4301 = vmatprep.mubr.f32.mxu0 0.0
        %4302 = vmatmul.mubr.f32.gmra.mrb[0].mxu0 %v3778
        %v4303 = vpop.f32.mrb[0].mxu0
        %v4304 = vadd.f32 0.0, %v4303
        %v4305 = vpop.f32.mrb[0].mxu0
        %4306 = vmatprep.mubr.f32.mxu0 0.0
        %4307 = vmatmul.mubr.f32.gmra.mrb[0].mxu0 %v3780
        %v4308 = vpop.f32.mrb[0].mxu0
        %v4309 = vadd.f32 0.0, %v4308
        %v4310 = vpop.f32.mrb[0].mxu0
        %4311 = vmatprep.mubr.f32.mxu0 0.0
        %4312 = vmatmul.mubr.f32.gmra.mrb[0].mxu0 %v3782
        %v4313 = vpop.f32.mrb[0].mxu0
        %v4314 = vadd.f32 0.0, %v4313
        %v4315 = vpop.f32.mrb[0].mxu0
        %4316 = vmatprep.mubr.f32.mxu0 0.0
        %4317 = vmatmul.mubr.f32.gmra.mrb[0].mxu0 %v3784
        %v4318 = vpop.f32.mrb[0].mxu0
        %v4319 = vadd.f32 0.0, %v4318
        %v4320 = vpop.f32.mrb[0].mxu0
        %4321 = vmatprep.mubr.f32.mxu0 0.0
        %4322 = vmatmul.mubr.f32.gmra.mrb[0].mxu0 %v3786
        %v4323 = vpop.f32.mrb[0].mxu0
        %v4324 = vadd.f32 0.0, %v4323
        %v4325 = vpop.f32.mrb[0].mxu0
        %4326 = vmatprep.mubr.f32.mxu0 0.0
        %4327 = vmatmul.mubr.f32.gmra.mrb[0].mxu0 %v3788
        %v4328 = vpop.f32.mrb[0].mxu0
        %v4329 = vadd.f32 0.0, %v4328
        %v4330 = vpop.f32.mrb[0].mxu0
        %4331 = vmatprep.mubr.f32.mxu0 0.0
        %4332 = vmatmul.mubr.f32.gmra.mrb[0].mxu0 %v3790
        %v4333 = vpop.f32.mrb[0].mxu0
        %v4334 = vadd.f32 0.0, %v4333
        %v4335 = vpop.f32.mrb[0].mxu0
        %4336 = vdwg.mxu0
        %v4337 = vld [vmem:[%s4] sm:$0xff]
        %v4338 = vld [vmem:[%s4 + $0x8] sm:$0xff]
        %v4339 = vld [vmem:[%s4 + $0x10] sm:$0xff]
        %v4340 = vld [vmem:[%s4 + $0x18] sm:$0xff]
        %v4341 = vld [vmem:[%s6] sm:$0xff]
        %4374 = vrot.lane.b32.xlu0 %v2798, 112
        %v4375 = vpop.permute.xlu0 %4374
        %4376 = vrot.lane.b32.xlu0 %v2799, 112
        %v4377 = vpop.permute.xlu0 %4376
        %4378 = vrot.lane.b32.xlu0 %v2800, 112
        %v4379 = vpop.permute.xlu0 %4378
        %4380 = vrot.lane.b32.xlu0 %v2801, 112
        %v4381 = vpop.permute.xlu0 %4380
        %4382 = vrot.lane.b32.xlu0 %v2802, 112
        %v4383 = vpop.permute.xlu0 %4382
        %4384 = vrot.lane.b32.xlu0 %v2803, 112
        %v4385 = vpop.permute.xlu0 %4384
        %4386 = vrot.lane.b32.xlu0 %v2804, 112
        %v4387 = vpop.permute.xlu0 %4386
        %4388 = vrot.lane.b32.xlu0 %v2805, 112
        %v4389 = vpop.permute.xlu0 %4388
        %4390 = vrot.lane.b32.xlu0 %v2806, 112
        %v4391 = vpop.permute.xlu0 %4390
        %4392 = vrot.lane.b32.xlu0 %v2807, 112
        %v4393 = vpop.permute.xlu0 %4392
        %4394 = vrot.lane.b32.xlu0 %v2808, 112
        %v4395 = vpop.permute.xlu0 %4394
        %4396 = vrot.lane.b32.xlu0 %v2809, 112
        %v4397 = vpop.permute.xlu0 %4396
        %4398 = vrot.lane.b32.xlu0 %v2810, 112
        %v4399 = vpop.permute.xlu0 %4398
        %4400 = vrot.lane.b32.xlu0 %v2811, 112
        %v4401 = vpop.permute.xlu0 %4400
        %4402 = vrot.lane.b32.xlu0 %v2812, 112
        %v4403 = vpop.permute.xlu0 %4402
        %4404 = vrot.lane.b32.xlu0 %v2813, 112
        %v4405 = vpop.permute.xlu0 %4404
        %4406 = vrot.lane.b32.xlu0 %v2814, 112
        %v4407 = vpop.permute.xlu0 %4406
        %4408 = vrot.lane.b32.xlu0 %v2815, 112
        %v4409 = vpop.permute.xlu0 %4408
        %4410 = vrot.lane.b32.xlu0 %v2816, 112
        %v4411 = vpop.permute.xlu0 %4410
        %4412 = vrot.lane.b32.xlu0 %v2817, 112
        %v4413 = vpop.permute.xlu0 %4412
        %4414 = vrot.lane.b32.xlu0 %v2818, 112
        %v4415 = vpop.permute.xlu0 %4414
        %4416 = vrot.lane.b32.xlu0 %v2819, 112
        %v4417 = vpop.permute.xlu0 %4416
        %4418 = vrot.lane.b32.xlu0 %v2820, 112
        %v4419 = vpop.permute.xlu0 %4418
        %4420 = vrot.lane.b32.xlu0 %v2821, 112
        %v4421 = vpop.permute.xlu0 %4420
        %4422 = vrot.lane.b32.xlu0 %v2822, 112
        %v4423 = vpop.permute.xlu0 %4422
        %4424 = vrot.lane.b32.xlu0 %v2823, 112
        %v4425 = vpop.permute.xlu0 %4424
        %4426 = vrot.lane.b32.xlu0 %v2824, 112
        %v4427 = vpop.permute.xlu0 %4426
        %4428 = vrot.lane.b32.xlu0 %v2825, 112
        %v4429 = vpop.permute.xlu0 %4428
        %4430 = vrot.lane.b32.xlu0 %v2826, 112
        %v4431 = vpop.permute.xlu0 %4430
        %4432 = vrot.lane.b32.xlu0 %v2827, 112
        %v4433 = vpop.permute.xlu0 %4432
        %4434 = vrot.lane.b32.xlu0 %v2828, 112
        %v4435 = vpop.permute.xlu0 %4434
        %4436 = vrot.lane.b32.xlu0 %v2829, 112
        %v4437 = vpop.permute.xlu0 %4436
        %v4438 = vsel %vm3599, %v4375, 0
        %v4440 = vsel %vm3599, %v4377, 0
        %v4442 = vsel %vm3599, %v4379, 0
        %v4444 = vsel %vm3599, %v4381, 0
        %v4446 = vsel %vm3599, %v4383, 0
        %v4448 = vsel %vm3599, %v4385, 0
        %v4450 = vsel %vm3599, %v4387, 0
        %v4452 = vsel %vm3599, %v4389, 0
        %v4454 = vsel %vm3599, %v4391, 0
        %v4456 = vsel %vm3599, %v4393, 0
        %v4458 = vsel %vm3599, %v4395, 0
        %v4460 = vsel %vm3599, %v4397, 0
        %v4462 = vsel %vm3599, %v4399, 0
        %v4464 = vsel %vm3599, %v4401, 0
        %v4466 = vsel %vm3599, %v4403, 0
        %v4468 = vsel %vm3599, %v4405, 0
        %v4470 = vsel %vm3599, %v4407, 0
        %v4472 = vsel %vm3599, %v4409, 0
        %v4474 = vsel %vm3599, %v4411, 0
        %v4476 = vsel %vm3599, %v4413, 0
        %v4478 = vsel %vm3599, %v4415, 0
        %v4480 = vsel %vm3599, %v4417, 0
        %v4482 = vsel %vm3599, %v4419, 0
        %v4484 = vsel %vm3599, %v4421, 0
        %v4486 = vsel %vm3599, %v4423, 0
        %v4488 = vsel %vm3599, %v4425, 0
        %v4490 = vsel %vm3599, %v4427, 0
        %v4492 = vsel %vm3599, %v4429, 0
        %v4494 = vsel %vm3599, %v4431, 0
        %v4496 = vsel %vm3599, %v4433, 0
        %v4498 = vsel %vm3599, %v4435, 0
        %v4500 = vsel %vm3599, %v4437, 0
        %4502 = vmatprep.subr.mxu0 0.0
        %4503 = vmatpush1.msra.mxu0 %v4341
        %4504 = vmatprep.subr.mxu0 0.0
        %4505 = vmatpush1.msra.mxu0 0.0
        %4506 = vmatprep.subr.mxu0 0.0
        %4507 = vmatpush1.msra.mxu0 0.0
        %4508 = vmatprep.subr.mxu0 0.0
        %4509 = vmatpush1.msra.mxu0 0.0
        %4510 = vmatprep.subr.mxu0 0.0
        %4511 = vmatpush1.msra.mxu0 0.0
        %4512 = vmatprep.subr.mxu0 0.0
        %4513 = vmatpush1.msra.mxu0 0.0
        %4514 = vmatprep.subr.mxu0 0.0
        %4515 = vmatpush1.msra.mxu0 0.0
        %4516 = vmatprep.subr.mxu0 0.0
        %4517 = vmatpush1.msra.mxu0 0.0
        %4518 = vmatprep.subr.mxu0 0.0
        %4519 = vmatpush1.msra.mxu0 0.0
        %4520 = vmatprep.subr.mxu0 0.0
        %4521 = vmatpush1.msra.mxu0 0.0
        %4522 = vmatprep.subr.mxu0 0.0
        %4523 = vmatpush1.msra.mxu0 0.0
        %4524 = vmatprep.subr.mxu0 0.0
        %4525 = vmatpush1.msra.mxu0 0.0
        %4526 = vmatprep.subr.mxu0 0.0
        %4527 = vmatpush1.msra.mxu0 0.0
        %4528 = vmatprep.subr.mxu0 0.0
        %4529 = vmatpush1.msra.mxu0 0.0
        %4530 = vmatprep.subr.mxu0 0.0
        %4531 = vmatpush1.msra.mxu0 0.0
        %4532 = vmatprep.subr.mxu0 0.0
        %4533 = vmatpush1.msra.mxu0 0.0
        %4534 = vmatprep.subr.mxu0 0.0
        %4535 = vmatpush1.msra.mxu0 0.0
        %4536 = vmatprep.subr.mxu0 0.0
        %4537 = vmatpush1.msra.mxu0 0.0
        %4538 = vmatprep.subr.mxu0 0.0
        %4539 = vmatpush1.msra.mxu0 0.0
        %4540 = vmatprep.subr.mxu0 0.0
        %4541 = vmatpush1.msra.mxu0 0.0
        %4542 = vmatprep.subr.mxu0 0.0
        %4543 = vmatpush1.msra.mxu0 0.0
        %4544 = vmatprep.subr.mxu0 0.0
        %4545 = vmatpush1.msra.mxu0 0.0
        %4546 = vmatprep.subr.mxu0 0.0
        %4547 = vmatpush1.msra.mxu0 0.0
        %4548 = vmatprep.subr.mxu0 0.0
        %4549 = vmatpush1.msra.mxu0 0.0
        %4550 = vmatprep.subr.mxu0 0.0
        %4551 = vmatpush1.msra.mxu0 0.0
        %4552 = vmatprep.subr.mxu0 0.0
        %4553 = vmatpush1.msra.mxu0 0.0
        %4554 = vmatprep.subr.mxu0 0.0
        %4555 = vmatpush1.msra.mxu0 0.0
        %4556 = vmatprep.subr.mxu0 0.0
        %4557 = vmatpush1.msra.mxu0 0.0
        %4558 = vmatprep.subr.mxu0 0.0
        %4559 = vmatpush1.msra.mxu0 0.0
        %4560 = vmatprep.subr.mxu0 0.0
        %4561 = vmatpush1.msra.mxu0 0.0
        %4562 = vmatprep.subr.mxu0 0.0
        %4563 = vmatpush1.msra.mxu0 0.0
        %4564 = vmatprep.subr.mxu0 0.0
        %4565 = vmatpush1.msra.mxu0 0.0
        %4566 = vmatprep.mubr.f32.mxu0 0.0
        %4567 = vmatmul.mubr.f32.gmra.mrb[0].mxu0 %v4438
        %v4568 = vpop.f32.mrb[0].mxu0
        %v4569 = vadd.f32 0.0, %v4568
        %v4570 = vpop.f32.mrb[0].mxu0
        %4571 = vmatprep.mubr.f32.mxu0 0.0
        %4572 = vmatmul.mubr.f32.gmra.mrb[0].mxu0 %v4440
        %v4573 = vpop.f32.mrb[0].mxu0
        %v4574 = vadd.f32 0.0, %v4573
        %v4575 = vpop.f32.mrb[0].mxu0
        %4576 = vmatprep.mubr.f32.mxu0 0.0
        %4577 = vmatmul.mubr.f32.gmra.mrb[0].mxu0 %v4442
        %v4578 = vpop.f32.mrb[0].mxu0
        %v4579 = vadd.f32 0.0, %v4578
        %v4580 = vpop.f32.mrb[0].mxu0
        %4581 = vmatprep.mubr.f32.mxu0 0.0
        %4582 = vmatmul.mubr.f32.gmra.mrb[0].mxu0 %v4444
        %v4583 = vpop.f32.mrb[0].mxu0
        %v4584 = vadd.f32 0.0, %v4583
        %v4585 = vpop.f32.mrb[0].mxu0
        %4586 = vmatprep.mubr.f32.mxu0 0.0
        %4587 = vmatmul.mubr.f32.gmra.mrb[0].mxu0 %v4446
        %v4588 = vpop.f32.mrb[0].mxu0
        %v4589 = vadd.f32 0.0, %v4588
        %v4590 = vpop.f32.mrb[0].mxu0
        %4591 = vmatprep.mubr.f32.mxu0 0.0
        %4592 = vmatmul.mubr.f32.gmra.mrb[0].mxu0 %v4448
        %v4593 = vpop.f32.mrb[0].mxu0
        %v4594 = vadd.f32 0.0, %v4593
        %v4595 = vpop.f32.mrb[0].mxu0
        %4596 = vmatprep.mubr.f32.mxu0 0.0
        %4597 = vmatmul.mubr.f32.gmra.mrb[0].mxu0 %v4450
        %v4598 = vpop.f32.mrb[0].mxu0
        %v4599 = vadd.f32 0.0, %v4598
        %v4600 = vpop.f32.mrb[0].mxu0
        %4601 = vmatprep.mubr.f32.mxu0 0.0
        %4602 = vmatmul.mubr.f32.gmra.mrb[0].mxu0 %v4452
        %v4603 = vpop.f32.mrb[0].mxu0
        %v4604 = vadd.f32 0.0, %v4603
        %v4605 = vpop.f32.mrb[0].mxu0
        %4606 = vmatprep.mubr.f32.mxu0 0.0
        %4607 = vmatmul.mubr.f32.gmra.mrb[0].mxu0 %v4454
        %v4608 = vpop.f32.mrb[0].mxu0
        %v4609 = vadd.f32 0.0, %v4608
        %v4610 = vpop.f32.mrb[0].mxu0
        %4611 = vmatprep.mubr.f32.mxu0 0.0
        %4612 = vmatmul.mubr.f32.gmra.mrb[0].mxu0 %v4456
        %v4613 = vpop.f32.mrb[0].mxu0
        %v4614 = vadd.f32 0.0, %v4613
        %v4615 = vpop.f32.mrb[0].mxu0
        %4616 = vmatprep.mubr.f32.mxu0 0.0
        %4617 = vmatmul.mubr.f32.gmra.mrb[0].mxu0 %v4458
        %v4618 = vpop.f32.mrb[0].mxu0
        %v4619 = vadd.f32 0.0, %v4618
        %v4620 = vpop.f32.mrb[0].mxu0
        %4621 = vmatprep.mubr.f32.mxu0 0.0
        %4622 = vmatmul.mubr.f32.gmra.mrb[0].mxu0 %v4460
        %v4623 = vpop.f32.mrb[0].mxu0
        %v4624 = vadd.f32 0.0, %v4623
        %v4625 = vpop.f32.mrb[0].mxu0
        %4626 = vmatprep.mubr.f32.mxu0 0.0
        %4627 = vmatmul.mubr.f32.gmra.mrb[0].mxu0 %v4462
        %v4628 = vpop.f32.mrb[0].mxu0
        %v4629 = vadd.f32 0.0, %v4628
        %v4630 = vpop.f32.mrb[0].mxu0
        %4631 = vmatprep.mubr.f32.mxu0 0.0
        %4632 = vmatmul.mubr.f32.gmra.mrb[0].mxu0 %v4464
        %v4633 = vpop.f32.mrb[0].mxu0
        %v4634 = vadd.f32 0.0, %v4633
        %v4635 = vpop.f32.mrb[0].mxu0
        %4636 = vmatprep.mubr.f32.mxu0 0.0
        %4637 = vmatmul.mubr.f32.gmra.mrb[0].mxu0 %v4466
        %v4638 = vpop.f32.mrb[0].mxu0
        %v4639 = vadd.f32 0.0, %v4638
        %v4640 = vpop.f32.mrb[0].mxu0
        %4641 = vmatprep.mubr.f32.mxu0 0.0
        %4642 = vmatmul.mubr.f32.gmra.mrb[0].mxu0 %v4468
        %v4643 = vpop.f32.mrb[0].mxu0
        %v4644 = vadd.f32 0.0, %v4643
        %v4645 = vpop.f32.mrb[0].mxu0
        %4646 = vmatprep.mubr.f32.mxu0 0.0
        %4647 = vmatmul.mubr.f32.gmra.mrb[0].mxu0 %v4470
        %v4648 = vpop.f32.mrb[0].mxu0
        %v4649 = vadd.f32 0.0, %v4648
        %v4650 = vpop.f32.mrb[0].mxu0
        %4651 = vmatprep.mubr.f32.mxu0 0.0
        %4652 = vmatmul.mubr.f32.gmra.mrb[0].mxu0 %v4472
        %v4653 = vpop.f32.mrb[0].mxu0
        %v4654 = vadd.f32 0.0, %v4653
        %v4655 = vpop.f32.mrb[0].mxu0
        %4656 = vmatprep.mubr.f32.mxu0 0.0
        %4657 = vmatmul.mubr.f32.gmra.mrb[0].mxu0 %v4474
        %v4658 = vpop.f32.mrb[0].mxu0
        %v4659 = vadd.f32 0.0, %v4658
        %v4660 = vpop.f32.mrb[0].mxu0
        %4661 = vmatprep.mubr.f32.mxu0 0.0
        %4662 = vmatmul.mubr.f32.gmra.mrb[0].mxu0 %v4476
        %v4663 = vpop.f32.mrb[0].mxu0
        %v4664 = vadd.f32 0.0, %v4663
        %v4665 = vpop.f32.mrb[0].mxu0
        %4666 = vmatprep.mubr.f32.mxu0 0.0
        %4667 = vmatmul.mubr.f32.gmra.mrb[0].mxu0 %v4478
        %v4668 = vpop.f32.mrb[0].mxu0
        %v4669 = vadd.f32 0.0, %v4668
        %v4670 = vpop.f32.mrb[0].mxu0
        %4671 = vmatprep.mubr.f32.mxu0 0.0
        %4672 = vmatmul.mubr.f32.gmra.mrb[0].mxu0 %v4480
        %v4673 = vpop.f32.mrb[0].mxu0
        %v4674 = vadd.f32 0.0, %v4673
        %v4675 = vpop.f32.mrb[0].mxu0
        %4676 = vmatprep.mubr.f32.mxu0 0.0
        %4677 = vmatmul.mubr.f32.gmra.mrb[0].mxu0 %v4482
        %v4678 = vpop.f32.mrb[0].mxu0
        %v4679 = vadd.f32 0.0, %v4678
        %v4680 = vpop.f32.mrb[0].mxu0
        %4681 = vmatprep.mubr.f32.mxu0 0.0
        %4682 = vmatmul.mubr.f32.gmra.mrb[0].mxu0 %v4484
        %v4683 = vpop.f32.mrb[0].mxu0
        %v4684 = vadd.f32 0.0, %v4683
        %v4685 = vpop.f32.mrb[0].mxu0
        %4686 = vmatprep.mubr.f32.mxu0 0.0
        %4687 = vmatmul.mubr.f32.gmra.mrb[0].mxu0 %v4486
        %v4688 = vpop.f32.mrb[0].mxu0
        %v4689 = vadd.f32 0.0, %v4688
        %v4690 = vpop.f32.mrb[0].mxu0
        %4691 = vmatprep.mubr.f32.mxu0 0.0
        %4692 = vmatmul.mubr.f32.gmra.mrb[0].mxu0 %v4488
        %v4693 = vpop.f32.mrb[0].mxu0
        %v4694 = vadd.f32 0.0, %v4693
        %v4695 = vpop.f32.mrb[0].mxu0
        %4696 = vmatprep.mubr.f32.mxu0 0.0
        %4697 = vmatmul.mubr.f32.gmra.mrb[0].mxu0 %v4490
        %v4698 = vpop.f32.mrb[0].mxu0
        %v4699 = vadd.f32 0.0, %v4698
        %v4700 = vpop.f32.mrb[0].mxu0
        %4701 = vmatprep.mubr.f32.mxu0 0.0
        %4702 = vmatmul.mubr.f32.gmra.mrb[0].mxu0 %v4492
        %v4703 = vpop.f32.mrb[0].mxu0
        %v4704 = vadd.f32 0.0, %v4703
        %v4705 = vpop.f32.mrb[0].mxu0
        %4706 = vmatprep.mubr.f32.mxu0 0.0
        %4707 = vmatmul.mubr.f32.gmra.mrb[0].mxu0 %v4494
        %v4708 = vpop.f32.mrb[0].mxu0
        %v4709 = vadd.f32 0.0, %v4708
        %v4710 = vpop.f32.mrb[0].mxu0
        %4711 = vmatprep.mubr.f32.mxu0 0.0
        %4712 = vmatmul.mubr.f32.gmra.mrb[0].mxu0 %v4496
        %v4713 = vpop.f32.mrb[0].mxu0
        %v4714 = vadd.f32 0.0, %v4713
        %v4715 = vpop.f32.mrb[0].mxu0
        %4716 = vmatprep.mubr.f32.mxu0 0.0
        %4717 = vmatmul.mubr.f32.gmra.mrb[0].mxu0 %v4498
        %v4718 = vpop.f32.mrb[0].mxu0
        %v4719 = vadd.f32 0.0, %v4718
        %v4720 = vpop.f32.mrb[0].mxu0
        %4721 = vmatprep.mubr.f32.mxu0 0.0
        %4722 = vmatmul.mubr.f32.gmra.mrb[0].mxu0 %v4500
        %v4723 = vpop.f32.mrb[0].mxu0
        %v4724 = vadd.f32 0.0, %v4723
        %v4725 = vpop.f32.mrb[0].mxu0
        %4726 = vdwg.mxu0
        %v4728 = vsel %vm1053, %v1802, 0
        %v4731 = vsel %vm1053, %v1803, 0
        %v4734 = vsel %vm1053, %v1804, 0
        %v4737 = vsel %vm1053, %v1805, 0
        %v4740 = vsel %vm1053, %v1806, 0
        %v4743 = vsel %vm1053, %v1807, 0
        %v4746 = vsel %vm1053, %v1808, 0
        %v4749 = vsel %vm1053, %v1809, 0
        %v4752 = vsel %vm1053, %v1810, 0
        %v4755 = vsel %vm1053, %v1811, 0
        %v4758 = vsel %vm1053, %v1812, 0
        %v4761 = vsel %vm1053, %v1813, 0
        %v4764 = vsel %vm1053, %v1814, 0
        %v4767 = vsel %vm1053, %v1815, 0
        %v4770 = vsel %vm1053, %v1816, 0
        %v4773 = vsel %vm1053, %v1817, 0
        %v4776 = vsel %vm1053, %v1818, 0
        %v4779 = vsel %vm1053, %v1819, 0
        %v4782 = vsel %vm1053, %v1820, 0
        %v4785 = vsel %vm1053, %v1821, 0
        %v4788 = vsel %vm1053, %v1822, 0
        %v4791 = vsel %vm1053, %v1823, 0
        %v4794 = vsel %vm1053, %v1824, 0
        %v4797 = vsel %vm1053, %v1825, 0
        %v4800 = vsel %vm1053, %v1826, 0
        %v4803 = vsel %vm1053, %v1827, 0
        %v4806 = vsel %vm1053, %v1828, 0
        %v4809 = vsel %vm1053, %v1829, 0
        %v4812 = vsel %vm1053, %v1830, 0
        %v4815 = vsel %vm1053, %v1831, 0
        %v4818 = vsel %vm1053, %v1832, 0
        %v4821 = vsel %vm1053, %v1833, 0
        %4823 = vmatprep.subr.mxu0 0.0
        %4824 = vmatpush1.msra.mxu0 %v4337
        %4825 = vmatprep.subr.mxu0 0.0
        %4826 = vmatpush1.msra.mxu0 %v4338
        %4827 = vmatprep.subr.mxu0 0.0
        %4828 = vmatpush1.msra.mxu0 %v4339
        %4829 = vmatprep.subr.mxu0 0.0
        %4830 = vmatpush1.msra.mxu0 %v4340
        %4831 = vmatprep.subr.mxu0 0.0
        %4832 = vmatpush1.msra.mxu0 0.0
        %4833 = vmatprep.subr.mxu0 0.0
        %4834 = vmatpush1.msra.mxu0 0.0
        %4835 = vmatprep.subr.mxu0 0.0
        %4836 = vmatpush1.msra.mxu0 0.0
        %4837 = vmatprep.subr.mxu0 0.0
        %4838 = vmatpush1.msra.mxu0 0.0
        %4839 = vmatprep.subr.mxu0 0.0
        %4840 = vmatpush1.msra.mxu0 0.0
        %4841 = vmatprep.subr.mxu0 0.0
        %4842 = vmatpush1.msra.mxu0 0.0
        %4843 = vmatprep.subr.mxu0 0.0
        %4844 = vmatpush1.msra.mxu0 0.0
        %4845 = vmatprep.subr.mxu0 0.0
        %4846 = vmatpush1.msra.mxu0 0.0
        %4847 = vmatprep.subr.mxu0 0.0
        %4848 = vmatpush1.msra.mxu0 0.0
        %4849 = vmatprep.subr.mxu0 0.0
        %4850 = vmatpush1.msra.mxu0 0.0
        %4851 = vmatprep.subr.mxu0 0.0
        %4852 = vmatpush1.msra.mxu0 0.0
        %4853 = vmatprep.subr.mxu0 0.0
        %4854 = vmatpush1.msra.mxu0 0.0
        %4855 = vmatprep.subr.mxu0 0.0
        %4856 = vmatpush1.msra.mxu0 0.0
        %4857 = vmatprep.subr.mxu0 0.0
        %4858 = vmatpush1.msra.mxu0 0.0
        %4859 = vmatprep.subr.mxu0 0.0
        %4860 = vmatpush1.msra.mxu0 0.0
        %4861 = vmatprep.subr.mxu0 0.0
        %4862 = vmatpush1.msra.mxu0 0.0
        %4863 = vmatprep.subr.mxu0 0.0
        %4864 = vmatpush1.msra.mxu0 0.0
        %4865 = vmatprep.subr.mxu0 0.0
        %4866 = vmatpush1.msra.mxu0 0.0
        %4867 = vmatprep.subr.mxu0 0.0
        %4868 = vmatpush1.msra.mxu0 0.0
        %4869 = vmatprep.subr.mxu0 0.0
        %4870 = vmatpush1.msra.mxu0 0.0
        %4871 = vmatprep.subr.mxu0 0.0
        %4872 = vmatpush1.msra.mxu0 0.0
        %4873 = vmatprep.subr.mxu0 0.0
        %4874 = vmatpush1.msra.mxu0 0.0
        %4875 = vmatprep.subr.mxu0 0.0
        %4876 = vmatpush1.msra.mxu0 0.0
        %4877 = vmatprep.subr.mxu0 0.0
        %4878 = vmatpush1.msra.mxu0 0.0
        %4879 = vmatprep.subr.mxu0 0.0
        %4880 = vmatpush1.msra.mxu0 0.0
        %4881 = vmatprep.subr.mxu0 0.0
        %4882 = vmatpush1.msra.mxu0 0.0
        %4883 = vmatprep.subr.mxu0 0.0
        %4884 = vmatpush1.msra.mxu0 0.0
        %4885 = vmatprep.subr.mxu0 0.0
        %4886 = vmatpush1.msra.mxu0 0.0
        %4887 = vmatprep.mubr.f32.mxu0 0.0
        %4888 = vmatmul.mubr.f32.gmra.mrb[0].mxu0 %v4728
        %v4889 = vpop.f32.mrb[0].mxu0
        %v4890 = vadd.f32 %v4569, %v4889
        %v4891 = vpop.f32.mrb[0].mxu0
        %4892 = vmatprep.mubr.f32.mxu0 0.0
        %4893 = vmatmul.mubr.f32.gmra.mrb[0].mxu0 %v4731
        %v4894 = vpop.f32.mrb[0].mxu0
        %v4895 = vadd.f32 %v4574, %v4894
        %v4896 = vpop.f32.mrb[0].mxu0
        %4897 = vmatprep.mubr.f32.mxu0 0.0
        %4898 = vmatmul.mubr.f32.gmra.mrb[0].mxu0 %v4734
        %v4899 = vpop.f32.mrb[0].mxu0
        %v4900 = vadd.f32 %v4579, %v4899
        %v4901 = vpop.f32.mrb[0].mxu0
        %4902 = vmatprep.mubr.f32.mxu0 0.0
        %4903 = vmatmul.mubr.f32.gmra.mrb[0].mxu0 %v4737
        %v4904 = vpop.f32.mrb[0].mxu0
        %v4905 = vadd.f32 %v4584, %v4904
        %v4906 = vpop.f32.mrb[0].mxu0
        %4907 = vmatprep.mubr.f32.mxu0 0.0
        %4908 = vmatmul.mubr.f32.gmra.mrb[0].mxu0 %v4740
        %v4909 = vpop.f32.mrb[0].mxu0
        %v4910 = vadd.f32 %v4589, %v4909
        %v4911 = vpop.f32.mrb[0].mxu0
        %4912 = vmatprep.mubr.f32.mxu0 0.0
        %4913 = vmatmul.mubr.f32.gmra.mrb[0].mxu0 %v4743
        %v4914 = vpop.f32.mrb[0].mxu0
        %v4915 = vadd.f32 %v4594, %v4914
        %v4916 = vpop.f32.mrb[0].mxu0
        %4917 = vmatprep.mubr.f32.mxu0 0.0
        %4918 = vmatmul.mubr.f32.gmra.mrb[0].mxu0 %v4746
        %v4919 = vpop.f32.mrb[0].mxu0
        %v4920 = vadd.f32 %v4599, %v4919
        %v4921 = vpop.f32.mrb[0].mxu0
        %4922 = vmatprep.mubr.f32.mxu0 0.0
        %4923 = vmatmul.mubr.f32.gmra.mrb[0].mxu0 %v4749
        %v4924 = vpop.f32.mrb[0].mxu0
        %v4925 = vadd.f32 %v4604, %v4924
        %v4926 = vpop.f32.mrb[0].mxu0
        %4927 = vmatprep.mubr.f32.mxu0 0.0
        %4928 = vmatmul.mubr.f32.gmra.mrb[0].mxu0 %v4752
        %v4929 = vpop.f32.mrb[0].mxu0
        %v4930 = vadd.f32 %v4609, %v4929
        %v4931 = vpop.f32.mrb[0].mxu0
        %4932 = vmatprep.mubr.f32.mxu0 0.0
        %4933 = vmatmul.mubr.f32.gmra.mrb[0].mxu0 %v4755
        %v4934 = vpop.f32.mrb[0].mxu0
        %v4935 = vadd.f32 %v4614, %v4934
        %v4936 = vpop.f32.mrb[0].mxu0
        %4937 = vmatprep.mubr.f32.mxu0 0.0
        %4938 = vmatmul.mubr.f32.gmra.mrb[0].mxu0 %v4758
        %v4939 = vpop.f32.mrb[0].mxu0
        %v4940 = vadd.f32 %v4619, %v4939
        %v4941 = vpop.f32.mrb[0].mxu0
        %4942 = vmatprep.mubr.f32.mxu0 0.0
        %4943 = vmatmul.mubr.f32.gmra.mrb[0].mxu0 %v4761
        %v4944 = vpop.f32.mrb[0].mxu0
        %v4945 = vadd.f32 %v4624, %v4944
        %v4946 = vpop.f32.mrb[0].mxu0
        %4947 = vmatprep.mubr.f32.mxu0 0.0
        %4948 = vmatmul.mubr.f32.gmra.mrb[0].mxu0 %v4764
        %v4949 = vpop.f32.mrb[0].mxu0
        %v4950 = vadd.f32 %v4629, %v4949
        %v4951 = vpop.f32.mrb[0].mxu0
        %4952 = vmatprep.mubr.f32.mxu0 0.0
        %4953 = vmatmul.mubr.f32.gmra.mrb[0].mxu0 %v4767
        %v4954 = vpop.f32.mrb[0].mxu0
        %v4955 = vadd.f32 %v4634, %v4954
        %v4956 = vpop.f32.mrb[0].mxu0
        %4957 = vmatprep.mubr.f32.mxu0 0.0
        %4958 = vmatmul.mubr.f32.gmra.mrb[0].mxu0 %v4770
        %v4959 = vpop.f32.mrb[0].mxu0
        %v4960 = vadd.f32 %v4639, %v4959
        %v4961 = vpop.f32.mrb[0].mxu0
        %4962 = vmatprep.mubr.f32.mxu0 0.0
        %4963 = vmatmul.mubr.f32.gmra.mrb[0].mxu0 %v4773
        %v4964 = vpop.f32.mrb[0].mxu0
        %v4965 = vadd.f32 %v4644, %v4964
        %v4966 = vpop.f32.mrb[0].mxu0
        %4967 = vmatprep.mubr.f32.mxu0 0.0
        %4968 = vmatmul.mubr.f32.gmra.mrb[0].mxu0 %v4776
        %v4969 = vpop.f32.mrb[0].mxu0
        %v4970 = vadd.f32 %v4649, %v4969
        %v4971 = vpop.f32.mrb[0].mxu0
        %4972 = vmatprep.mubr.f32.mxu0 0.0
        %4973 = vmatmul.mubr.f32.gmra.mrb[0].mxu0 %v4779
        %v4974 = vpop.f32.mrb[0].mxu0
        %v4975 = vadd.f32 %v4654, %v4974
        %v4976 = vpop.f32.mrb[0].mxu0
        %4977 = vmatprep.mubr.f32.mxu0 0.0
        %4978 = vmatmul.mubr.f32.gmra.mrb[0].mxu0 %v4782
        %v4979 = vpop.f32.mrb[0].mxu0
        %v4980 = vadd.f32 %v4659, %v4979
        %v4981 = vpop.f32.mrb[0].mxu0
        %4982 = vmatprep.mubr.f32.mxu0 0.0
        %4983 = vmatmul.mubr.f32.gmra.mrb[0].mxu0 %v4785
        %v4984 = vpop.f32.mrb[0].mxu0
        %v4985 = vadd.f32 %v4664, %v4984
        %v4986 = vpop.f32.mrb[0].mxu0
        %4987 = vmatprep.mubr.f32.mxu0 0.0
        %4988 = vmatmul.mubr.f32.gmra.mrb[0].mxu0 %v4788
        %v4989 = vpop.f32.mrb[0].mxu0
        %v4990 = vadd.f32 %v4669, %v4989
        %v4991 = vpop.f32.mrb[0].mxu0
        %4992 = vmatprep.mubr.f32.mxu0 0.0
        %4993 = vmatmul.mubr.f32.gmra.mrb[0].mxu0 %v4791
        %v4994 = vpop.f32.mrb[0].mxu0
        %v4995 = vadd.f32 %v4674, %v4994
        %v4996 = vpop.f32.mrb[0].mxu0
        %4997 = vmatprep.mubr.f32.mxu0 0.0
        %4998 = vmatmul.mubr.f32.gmra.mrb[0].mxu0 %v4794
        %v4999 = vpop.f32.mrb[0].mxu0
        %v5000 = vadd.f32 %v4679, %v4999
        %v5001 = vpop.f32.mrb[0].mxu0
        %5002 = vmatprep.mubr.f32.mxu0 0.0
        %5003 = vmatmul.mubr.f32.gmra.mrb[0].mxu0 %v4797
        %v5004 = vpop.f32.mrb[0].mxu0
        %v5005 = vadd.f32 %v4684, %v5004
        %v5006 = vpop.f32.mrb[0].mxu0
        %5007 = vmatprep.mubr.f32.mxu0 0.0
        %5008 = vmatmul.mubr.f32.gmra.mrb[0].mxu0 %v4800
        %v5009 = vpop.f32.mrb[0].mxu0
        %v5010 = vadd.f32 %v4689, %v5009
        %v5011 = vpop.f32.mrb[0].mxu0
        %5012 = vmatprep.mubr.f32.mxu0 0.0
        %5013 = vmatmul.mubr.f32.gmra.mrb[0].mxu0 %v4803
        %v5014 = vpop.f32.mrb[0].mxu0
        %v5015 = vadd.f32 %v4694, %v5014
        %v5016 = vpop.f32.mrb[0].mxu0
        %5017 = vmatprep.mubr.f32.mxu0 0.0
        %5018 = vmatmul.mubr.f32.gmra.mrb[0].mxu0 %v4806
        %v5019 = vpop.f32.mrb[0].mxu0
        %v5020 = vadd.f32 %v4699, %v5019
        %v5021 = vpop.f32.mrb[0].mxu0
        %5022 = vmatprep.mubr.f32.mxu0 0.0
        %5023 = vmatmul.mubr.f32.gmra.mrb[0].mxu0 %v4809
        %v5024 = vpop.f32.mrb[0].mxu0
        %v5025 = vadd.f32 %v4704, %v5024
        %v5026 = vpop.f32.mrb[0].mxu0
        %5027 = vmatprep.mubr.f32.mxu0 0.0
        %5028 = vmatmul.mubr.f32.gmra.mrb[0].mxu0 %v4812
        %v5029 = vpop.f32.mrb[0].mxu0
        %v5030 = vadd.f32 %v4709, %v5029
        %v5031 = vpop.f32.mrb[0].mxu0
        %5032 = vmatprep.mubr.f32.mxu0 0.0
        %5033 = vmatmul.mubr.f32.gmra.mrb[0].mxu0 %v4815
        %v5034 = vpop.f32.mrb[0].mxu0
        %v5035 = vadd.f32 %v4714, %v5034
        %v5036 = vpop.f32.mrb[0].mxu0
        %5037 = vmatprep.mubr.f32.mxu0 0.0
        %5038 = vmatmul.mubr.f32.gmra.mrb[0].mxu0 %v4818
        %v5039 = vpop.f32.mrb[0].mxu0
        %v5040 = vadd.f32 %v4719, %v5039
        %v5041 = vpop.f32.mrb[0].mxu0
        %5042 = vmatprep.mubr.f32.mxu0 0.0
        %5043 = vmatmul.mubr.f32.gmra.mrb[0].mxu0 %v4821
        %v5044 = vpop.f32.mrb[0].mxu0
        %v5045 = vadd.f32 %v4724, %v5044
        %v5046 = vpop.f32.mrb[0].mxu0
        %5047 = vdwg.mxu0
        %v5048 = vlaneseq
        %v5049 = vshrl.u32 %v5048, 7
        %v5050 = vsub.s32 0, %v5049
        %v5051 = vrot.slane %v1043, %v5050
        %v5052 = vadd.f32 %v4890, %v5051
        %v5053 = vadd.f32 %v4895, %v5051
        %v5054 = vadd.f32 %v4900, %v5051
        %v5055 = vadd.f32 %v4905, %v5051
        %v5056 = vadd.f32 %v4910, %v5051
        %v5057 = vadd.f32 %v4915, %v5051
        %v5058 = vadd.f32 %v4920, %v5051
        %v5059 = vadd.f32 %v4925, %v5051
        %v5060 = vadd.f32 %v4930, %v5051
        %v5061 = vadd.f32 %v4935, %v5051
        %v5062 = vadd.f32 %v4940, %v5051
        %v5063 = vadd.f32 %v4945, %v5051
        %v5064 = vadd.f32 %v4950, %v5051
        %v5065 = vadd.f32 %v4955, %v5051
        %v5066 = vadd.f32 %v4960, %v5051
        %v5067 = vadd.f32 %v4965, %v5051
        %v5068 = vadd.f32 %v4970, %v5051
        %v5069 = vadd.f32 %v4975, %v5051
        %v5070 = vadd.f32 %v4980, %v5051
        %v5071 = vadd.f32 %v4985, %v5051
        %v5072 = vadd.f32 %v4990, %v5051
        %v5073 = vadd.f32 %v4995, %v5051
        %v5074 = vadd.f32 %v5000, %v5051
        %v5075 = vadd.f32 %v5005, %v5051
        %v5076 = vadd.f32 %v5010, %v5051
        %v5077 = vadd.f32 %v5015, %v5051
        %v5078 = vadd.f32 %v5020, %v5051
        %v5079 = vadd.f32 %v5025, %v5051
        %v5080 = vadd.f32 %v5030, %v5051
        %v5081 = vadd.f32 %v5035, %v5051
        %v5082 = vadd.f32 %v5040, %v5051
        %v5083 = vadd.f32 %v5045, %v5051
        %v5084 = vmul.f32 %v5052, %v5052
        %v5085 = vmul.f32 %v5053, %v5053
        %v5086 = vmul.f32 %v5054, %v5054
        %v5087 = vmul.f32 %v5055, %v5055
        %v5088 = vmul.f32 %v5056, %v5056
        %v5089 = vmul.f32 %v5057, %v5057
        %v5090 = vmul.f32 %v5058, %v5058
        %v5091 = vmul.f32 %v5059, %v5059
        %v5092 = vmul.f32 %v5060, %v5060
        %v5093 = vmul.f32 %v5061, %v5061
        %v5094 = vmul.f32 %v5062, %v5062
        %v5095 = vmul.f32 %v5063, %v5063
        %v5096 = vmul.f32 %v5064, %v5064
        %v5097 = vmul.f32 %v5065, %v5065
        %v5098 = vmul.f32 %v5066, %v5066
        %v5099 = vmul.f32 %v5067, %v5067
        %v5100 = vmul.f32 %v5068, %v5068
        %v5101 = vmul.f32 %v5069, %v5069
        %v5102 = vmul.f32 %v5070, %v5070
        %v5103 = vmul.f32 %v5071, %v5071
        %v5104 = vmul.f32 %v5072, %v5072
        %v5105 = vmul.f32 %v5073, %v5073
        %v5106 = vmul.f32 %v5074, %v5074
        %v5107 = vmul.f32 %v5075, %v5075
        %v5108 = vmul.f32 %v5076, %v5076
        %v5109 = vmul.f32 %v5077, %v5077
        %v5110 = vmul.f32 %v5078, %v5078
        %v5111 = vmul.f32 %v5079, %v5079
        %v5112 = vmul.f32 %v5080, %v5080
        %v5113 = vmul.f32 %v5081, %v5081
        %v5114 = vmul.f32 %v5082, %v5082
        %v5115 = vmul.f32 %v5083, %v5083
        %v5116 = vld [vmem:[%s8] sm:$0xff]
        %v5117 = vld [vmem:[%s8 + $0x8] sm:$0xff]
        %v5118 = vld [vmem:[%s8 + $0x10] sm:$0xff]
        %v5119 = vld [vmem:[%s8 + $0x18] sm:$0xff]
        %v5121 = vsel %vm1053, %v5052, 0
        %v5124 = vsel %vm1053, %v5053, 0
        %v5127 = vsel %vm1053, %v5054, 0
        %v5130 = vsel %vm1053, %v5055, 0
        %v5133 = vsel %vm1053, %v5056, 0
        %v5136 = vsel %vm1053, %v5057, 0
        %v5139 = vsel %vm1053, %v5058, 0
        %v5142 = vsel %vm1053, %v5059, 0
        %v5145 = vsel %vm1053, %v5060, 0
        %v5148 = vsel %vm1053, %v5061, 0
        %v5151 = vsel %vm1053, %v5062, 0
        %v5154 = vsel %vm1053, %v5063, 0
        %v5157 = vsel %vm1053, %v5064, 0
        %v5160 = vsel %vm1053, %v5065, 0
        %v5163 = vsel %vm1053, %v5066, 0
        %v5166 = vsel %vm1053, %v5067, 0
        %v5169 = vsel %vm1053, %v5068, 0
        %v5172 = vsel %vm1053, %v5069, 0
        %v5175 = vsel %vm1053, %v5070, 0
        %v5178 = vsel %vm1053, %v5071, 0
        %v5181 = vsel %vm1053, %v5072, 0
        %v5184 = vsel %vm1053, %v5073, 0
        %v5187 = vsel %vm1053, %v5074, 0
        %v5190 = vsel %vm1053, %v5075, 0
        %v5193 = vsel %vm1053, %v5076, 0
        %v5196 = vsel %vm1053, %v5077, 0
        %v5199 = vsel %vm1053, %v5078, 0
        %v5202 = vsel %vm1053, %v5079, 0
        %v5205 = vsel %vm1053, %v5080, 0
        %v5208 = vsel %vm1053, %v5081, 0
        %v5211 = vsel %vm1053, %v5082, 0
        %v5214 = vsel %vm1053, %v5083, 0
        %v5217 = vsel %vm1053, %v5084, 0
        %v5220 = vsel %vm1053, %v5085, 0
        %v5223 = vsel %vm1053, %v5086, 0
        %v5226 = vsel %vm1053, %v5087, 0
        %v5229 = vsel %vm1053, %v5088, 0
        %v5232 = vsel %vm1053, %v5089, 0
        %v5235 = vsel %vm1053, %v5090, 0
        %v5238 = vsel %vm1053, %v5091, 0
        %v5241 = vsel %vm1053, %v5092, 0
        %v5244 = vsel %vm1053, %v5093, 0
        %v5247 = vsel %vm1053, %v5094, 0
        %v5250 = vsel %vm1053, %v5095, 0
        %v5253 = vsel %vm1053, %v5096, 0
        %v5256 = vsel %vm1053, %v5097, 0
        %v5259 = vsel %vm1053, %v5098, 0
        %v5262 = vsel %vm1053, %v5099, 0
        %v5265 = vsel %vm1053, %v5100, 0
        %v5268 = vsel %vm1053, %v5101, 0
        %v5271 = vsel %vm1053, %v5102, 0
        %v5274 = vsel %vm1053, %v5103, 0
        %v5277 = vsel %vm1053, %v5104, 0
        %v5280 = vsel %vm1053, %v5105, 0
        %v5283 = vsel %vm1053, %v5106, 0
        %v5286 = vsel %vm1053, %v5107, 0
        %v5289 = vsel %vm1053, %v5108, 0
        %v5292 = vsel %vm1053, %v5109, 0
        %v5295 = vsel %vm1053, %v5110, 0
        %v5298 = vsel %vm1053, %v5111, 0
        %v5301 = vsel %vm1053, %v5112, 0
        %v5304 = vsel %vm1053, %v5113, 0
        %v5307 = vsel %vm1053, %v5114, 0
        %v5310 = vsel %vm1053, %v5115, 0
        %5312 = vmatprep.subr.mxu0 0.0
        %5313 = vmatpush1.msra.mxu0 %v5116
        %5314 = vmatprep.subr.mxu0 0.0
        %5315 = vmatpush1.msra.mxu0 %v5117
        %5316 = vmatprep.subr.mxu0 0.0
        %5317 = vmatpush1.msra.mxu0 %v5118
        %5318 = vmatprep.subr.mxu0 0.0
        %5319 = vmatpush1.msra.mxu0 %v5119
        %5320 = vmatprep.subr.mxu0 0.0
        %5321 = vmatpush1.msra.mxu0 0.0
        %5322 = vmatprep.subr.mxu0 0.0
        %5323 = vmatpush1.msra.mxu0 0.0
        %5324 = vmatprep.subr.mxu0 0.0
        %5325 = vmatpush1.msra.mxu0 0.0
        %5326 = vmatprep.subr.mxu0 0.0
        %5327 = vmatpush1.msra.mxu0 0.0
        %5328 = vmatprep.subr.mxu0 0.0
        %5329 = vmatpush1.msra.mxu0 0.0
        %5330 = vmatprep.subr.mxu0 0.0
        %5331 = vmatpush1.msra.mxu0 0.0
        %5332 = vmatprep.subr.mxu0 0.0
        %5333 = vmatpush1.msra.mxu0 0.0
        %5334 = vmatprep.subr.mxu0 0.0
        %5335 = vmatpush1.msra.mxu0 0.0
        %5336 = vmatprep.subr.mxu0 0.0
        %5337 = vmatpush1.msra.mxu0 0.0
        %5338 = vmatprep.subr.mxu0 0.0
        %5339 = vmatpush1.msra.mxu0 0.0
        %5340 = vmatprep.subr.mxu0 0.0
        %5341 = vmatpush1.msra.mxu0 0.0
        %5342 = vmatprep.subr.mxu0 0.0
        %5343 = vmatpush1.msra.mxu0 0.0
        %5344 = vmatprep.subr.mxu0 0.0
        %5345 = vmatpush1.msra.mxu0 0.0
        %5346 = vmatprep.subr.mxu0 0.0
        %5347 = vmatpush1.msra.mxu0 0.0
        %5348 = vmatprep.subr.mxu0 0.0
        %5349 = vmatpush1.msra.mxu0 0.0
        %5350 = vmatprep.subr.mxu0 0.0
        %5351 = vmatpush1.msra.mxu0 0.0
        %5352 = vmatprep.subr.mxu0 0.0
        %5353 = vmatpush1.msra.mxu0 0.0
        %5354 = vmatprep.subr.mxu0 0.0
        %5355 = vmatpush1.msra.mxu0 0.0
        %5356 = vmatprep.subr.mxu0 0.0
        %5357 = vmatpush1.msra.mxu0 0.0
        %5358 = vmatprep.subr.mxu0 0.0
        %5359 = vmatpush1.msra.mxu0 0.0
        %5360 = vmatprep.subr.mxu0 0.0
        %5361 = vmatpush1.msra.mxu0 0.0
        %5362 = vmatprep.subr.mxu0 0.0
        %5363 = vmatpush1.msra.mxu0 0.0
        %5364 = vmatprep.subr.mxu0 0.0
        %5365 = vmatpush1.msra.mxu0 0.0
        %5366 = vmatprep.subr.mxu0 0.0
        %5367 = vmatpush1.msra.mxu0 0.0
        %5368 = vmatprep.subr.mxu0 0.0
        %5369 = vmatpush1.msra.mxu0 0.0
        %5370 = vmatprep.subr.mxu0 0.0
        %5371 = vmatpush1.msra.mxu0 0.0
        %5372 = vmatprep.subr.mxu0 0.0
        %5373 = vmatpush1.msra.mxu0 0.0
        %5374 = vmatprep.subr.mxu0 0.0
        %5375 = vmatpush1.msra.mxu0 0.0
        %5376 = vmatprep.mubr.f32.mxu0 0.0
        %5377 = vmatmul.mubr.f32.gmra.mrb[0].mxu0 %v5121
        %v5378 = vpop.f32.mrb[0].mxu0
        %v5379 = vadd.f32 0.0, %v5378
        %v5380 = vpop.f32.mrb[0].mxu0
        %5381 = vmatprep.mubr.f32.mxu0 0.0
        %5382 = vmatmul.mubr.f32.gmra.mrb[0].mxu0 %v5124
        %v5383 = vpop.f32.mrb[0].mxu0
        %v5384 = vadd.f32 0.0, %v5383
        %v5385 = vpop.f32.mrb[0].mxu0
        %5386 = vmatprep.mubr.f32.mxu0 0.0
        %5387 = vmatmul.mubr.f32.gmra.mrb[0].mxu0 %v5127
        %v5388 = vpop.f32.mrb[0].mxu0
        %v5389 = vadd.f32 0.0, %v5388
        %v5390 = vpop.f32.mrb[0].mxu0
        %5391 = vmatprep.mubr.f32.mxu0 0.0
        %5392 = vmatmul.mubr.f32.gmra.mrb[0].mxu0 %v5130
        %v5393 = vpop.f32.mrb[0].mxu0
        %v5394 = vadd.f32 0.0, %v5393
        %v5395 = vpop.f32.mrb[0].mxu0
        %5396 = vmatprep.mubr.f32.mxu0 0.0
        %5397 = vmatmul.mubr.f32.gmra.mrb[0].mxu0 %v5133
        %v5398 = vpop.f32.mrb[0].mxu0
        %v5399 = vadd.f32 0.0, %v5398
        %v5400 = vpop.f32.mrb[0].mxu0
        %5401 = vmatprep.mubr.f32.mxu0 0.0
        %5402 = vmatmul.mubr.f32.gmra.mrb[0].mxu0 %v5136
        %v5403 = vpop.f32.mrb[0].mxu0
        %v5404 = vadd.f32 0.0, %v5403
        %v5405 = vpop.f32.mrb[0].mxu0
        %5406 = vmatprep.mubr.f32.mxu0 0.0
        %5407 = vmatmul.mubr.f32.gmra.mrb[0].mxu0 %v5139
        %v5408 = vpop.f32.mrb[0].mxu0
        %v5409 = vadd.f32 0.0, %v5408
        %v5410 = vpop.f32.mrb[0].mxu0
        %5411 = vmatprep.mubr.f32.mxu0 0.0
        %5412 = vmatmul.mubr.f32.gmra.mrb[0].mxu0 %v5142
        %v5413 = vpop.f32.mrb[0].mxu0
        %v5414 = vadd.f32 0.0, %v5413
        %v5415 = vpop.f32.mrb[0].mxu0
        %5416 = vmatprep.mubr.f32.mxu0 0.0
        %5417 = vmatmul.mubr.f32.gmra.mrb[0].mxu0 %v5145
        %v5418 = vpop.f32.mrb[0].mxu0
        %v5419 = vadd.f32 0.0, %v5418
        %v5420 = vpop.f32.mrb[0].mxu0
        %5421 = vmatprep.mubr.f32.mxu0 0.0
        %5422 = vmatmul.mubr.f32.gmra.mrb[0].mxu0 %v5148
        %v5423 = vpop.f32.mrb[0].mxu0
        %v5424 = vadd.f32 0.0, %v5423
        %v5425 = vpop.f32.mrb[0].mxu0
        %5426 = vmatprep.mubr.f32.mxu0 0.0
        %5427 = vmatmul.mubr.f32.gmra.mrb[0].mxu0 %v5151
        %v5428 = vpop.f32.mrb[0].mxu0
        %v5429 = vadd.f32 0.0, %v5428
        %v5430 = vpop.f32.mrb[0].mxu0
        %5431 = vmatprep.mubr.f32.mxu0 0.0
        %5432 = vmatmul.mubr.f32.gmra.mrb[0].mxu0 %v5154
        %v5433 = vpop.f32.mrb[0].mxu0
        %v5434 = vadd.f32 0.0, %v5433
        %v5435 = vpop.f32.mrb[0].mxu0
        %5436 = vmatprep.mubr.f32.mxu0 0.0
        %5437 = vmatmul.mubr.f32.gmra.mrb[0].mxu0 %v5157
        %v5438 = vpop.f32.mrb[0].mxu0
        %v5439 = vadd.f32 0.0, %v5438
        %v5440 = vpop.f32.mrb[0].mxu0
        %5441 = vmatprep.mubr.f32.mxu0 0.0
        %5442 = vmatmul.mubr.f32.gmra.mrb[0].mxu0 %v5160
        %v5443 = vpop.f32.mrb[0].mxu0
        %v5444 = vadd.f32 0.0, %v5443
        %v5445 = vpop.f32.mrb[0].mxu0
        %5446 = vmatprep.mubr.f32.mxu0 0.0
        %5447 = vmatmul.mubr.f32.gmra.mrb[0].mxu0 %v5163
        %v5448 = vpop.f32.mrb[0].mxu0
        %v5449 = vadd.f32 0.0, %v5448
        %v5450 = vpop.f32.mrb[0].mxu0
        %5451 = vmatprep.mubr.f32.mxu0 0.0
        %5452 = vmatmul.mubr.f32.gmra.mrb[0].mxu0 %v5166
        %v5453 = vpop.f32.mrb[0].mxu0
        %v5454 = vadd.f32 0.0, %v5453
        %v5455 = vpop.f32.mrb[0].mxu0
        %5456 = vmatprep.mubr.f32.mxu0 0.0
        %5457 = vmatmul.mubr.f32.gmra.mrb[0].mxu0 %v5169
        %v5458 = vpop.f32.mrb[0].mxu0
        %v5459 = vadd.f32 0.0, %v5458
        %v5460 = vpop.f32.mrb[0].mxu0
        %5461 = vmatprep.mubr.f32.mxu0 0.0
        %5462 = vmatmul.mubr.f32.gmra.mrb[0].mxu0 %v5172
        %v5463 = vpop.f32.mrb[0].mxu0
        %v5464 = vadd.f32 0.0, %v5463
        %v5465 = vpop.f32.mrb[0].mxu0
        %5466 = vmatprep.mubr.f32.mxu0 0.0
        %5467 = vmatmul.mubr.f32.gmra.mrb[0].mxu0 %v5175
        %v5468 = vpop.f32.mrb[0].mxu0
        %v5469 = vadd.f32 0.0, %v5468
        %v5470 = vpop.f32.mrb[0].mxu0
        %5471 = vmatprep.mubr.f32.mxu0 0.0
        %5472 = vmatmul.mubr.f32.gmra.mrb[0].mxu0 %v5178
        %v5473 = vpop.f32.mrb[0].mxu0
        %v5474 = vadd.f32 0.0, %v5473
        %v5475 = vpop.f32.mrb[0].mxu0
        %5476 = vmatprep.mubr.f32.mxu0 0.0
        %5477 = vmatmul.mubr.f32.gmra.mrb[0].mxu0 %v5181
        %v5478 = vpop.f32.mrb[0].mxu0
        %v5479 = vadd.f32 0.0, %v5478
        %v5480 = vpop.f32.mrb[0].mxu0
        %5481 = vmatprep.mubr.f32.mxu0 0.0
        %5482 = vmatmul.mubr.f32.gmra.mrb[0].mxu0 %v5184
        %v5483 = vpop.f32.mrb[0].mxu0
        %v5484 = vadd.f32 0.0, %v5483
        %v5485 = vpop.f32.mrb[0].mxu0
        %5486 = vmatprep.mubr.f32.mxu0 0.0
        %5487 = vmatmul.mubr.f32.gmra.mrb[0].mxu0 %v5187
        %v5488 = vpop.f32.mrb[0].mxu0
        %v5489 = vadd.f32 0.0, %v5488
        %v5490 = vpop.f32.mrb[0].mxu0
        %5491 = vmatprep.mubr.f32.mxu0 0.0
        %5492 = vmatmul.mubr.f32.gmra.mrb[0].mxu0 %v5190
        %v5493 = vpop.f32.mrb[0].mxu0
        %v5494 = vadd.f32 0.0, %v5493
        %v5495 = vpop.f32.mrb[0].mxu0
        %5496 = vmatprep.mubr.f32.mxu0 0.0
        %5497 = vmatmul.mubr.f32.gmra.mrb[0].mxu0 %v5193
        %v5498 = vpop.f32.mrb[0].mxu0
        %v5499 = vadd.f32 0.0, %v5498
        %v5500 = vpop.f32.mrb[0].mxu0
        %5501 = vmatprep.mubr.f32.mxu0 0.0
        %5502 = vmatmul.mubr.f32.gmra.mrb[0].mxu0 %v5196
        %v5503 = vpop.f32.mrb[0].mxu0
        %v5504 = vadd.f32 0.0, %v5503
        %v5505 = vpop.f32.mrb[0].mxu0
        %5506 = vmatprep.mubr.f32.mxu0 0.0
        %5507 = vmatmul.mubr.f32.gmra.mrb[0].mxu0 %v5199
        %v5508 = vpop.f32.mrb[0].mxu0
        %v5509 = vadd.f32 0.0, %v5508
        %v5510 = vpop.f32.mrb[0].mxu0
        %5511 = vmatprep.mubr.f32.mxu0 0.0
        %5512 = vmatmul.mubr.f32.gmra.mrb[0].mxu0 %v5202
        %v5513 = vpop.f32.mrb[0].mxu0
        %v5514 = vadd.f32 0.0, %v5513
        %v5515 = vpop.f32.mrb[0].mxu0
        %5516 = vmatprep.mubr.f32.mxu0 0.0
        %5517 = vmatmul.mubr.f32.gmra.mrb[0].mxu0 %v5205
        %v5518 = vpop.f32.mrb[0].mxu0
        %v5519 = vadd.f32 0.0, %v5518
        %v5520 = vpop.f32.mrb[0].mxu0
        %5521 = vmatprep.mubr.f32.mxu0 0.0
        %5522 = vmatmul.mubr.f32.gmra.mrb[0].mxu0 %v5208
        %v5523 = vpop.f32.mrb[0].mxu0
        %v5524 = vadd.f32 0.0, %v5523
        %v5525 = vpop.f32.mrb[0].mxu0
        %5526 = vmatprep.mubr.f32.mxu0 0.0
        %5527 = vmatmul.mubr.f32.gmra.mrb[0].mxu0 %v5211
        %v5528 = vpop.f32.mrb[0].mxu0
        %v5529 = vadd.f32 0.0, %v5528
        %v5530 = vpop.f32.mrb[0].mxu0
        %5531 = vmatprep.mubr.f32.mxu0 0.0
        %5532 = vmatmul.mubr.f32.gmra.mrb[0].mxu0 %v5214
        %v5533 = vpop.f32.mrb[0].mxu0
        %v5534 = vadd.f32 0.0, %v5533
        %v5535 = vpop.f32.mrb[0].mxu0
        %5536 = vmatprep.mubr.f32.mxu0 0.0
        %5537 = vmatmul.mubr.f32.gmra.mrb[0].mxu0 %v5217
        %v5538 = vpop.f32.mrb[0].mxu0
        %v5539 = vadd.f32 0.0, %v5538
        %v5540 = vpop.f32.mrb[0].mxu0
        %5541 = vmatprep.mubr.f32.mxu0 0.0
        %5542 = vmatmul.mubr.f32.gmra.mrb[0].mxu0 %v5220
        %v5543 = vpop.f32.mrb[0].mxu0
        %v5544 = vadd.f32 0.0, %v5543
        %v5545 = vpop.f32.mrb[0].mxu0
        %5546 = vmatprep.mubr.f32.mxu0 0.0
        %5547 = vmatmul.mubr.f32.gmra.mrb[0].mxu0 %v5223
        %v5548 = vpop.f32.mrb[0].mxu0
        %v5549 = vadd.f32 0.0, %v5548
        %v5550 = vpop.f32.mrb[0].mxu0
        %5551 = vmatprep.mubr.f32.mxu0 0.0
        %5552 = vmatmul.mubr.f32.gmra.mrb[0].mxu0 %v5226
        %v5553 = vpop.f32.mrb[0].mxu0
        %v5554 = vadd.f32 0.0, %v5553
        %v5555 = vpop.f32.mrb[0].mxu0
        %5556 = vmatprep.mubr.f32.mxu0 0.0
        %5557 = vmatmul.mubr.f32.gmra.mrb[0].mxu0 %v5229
        %v5558 = vpop.f32.mrb[0].mxu0
        %v5559 = vadd.f32 0.0, %v5558
        %v5560 = vpop.f32.mrb[0].mxu0
        %5561 = vmatprep.mubr.f32.mxu0 0.0
        %5562 = vmatmul.mubr.f32.gmra.mrb[0].mxu0 %v5232
        %v5563 = vpop.f32.mrb[0].mxu0
        %v5564 = vadd.f32 0.0, %v5563
        %v5565 = vpop.f32.mrb[0].mxu0
        %5566 = vmatprep.mubr.f32.mxu0 0.0
        %5567 = vmatmul.mubr.f32.gmra.mrb[0].mxu0 %v5235
        %v5568 = vpop.f32.mrb[0].mxu0
        %v5569 = vadd.f32 0.0, %v5568
        %v5570 = vpop.f32.mrb[0].mxu0
        %5571 = vmatprep.mubr.f32.mxu0 0.0
        %5572 = vmatmul.mubr.f32.gmra.mrb[0].mxu0 %v5238
        %v5573 = vpop.f32.mrb[0].mxu0
        %v5574 = vadd.f32 0.0, %v5573
        %v5575 = vpop.f32.mrb[0].mxu0
        %5576 = vmatprep.mubr.f32.mxu0 0.0
        %5577 = vmatmul.mubr.f32.gmra.mrb[0].mxu0 %v5241
        %v5578 = vpop.f32.mrb[0].mxu0
        %v5579 = vadd.f32 0.0, %v5578
        %v5580 = vpop.f32.mrb[0].mxu0
        %5581 = vmatprep.mubr.f32.mxu0 0.0
        %5582 = vmatmul.mubr.f32.gmra.mrb[0].mxu0 %v5244
        %v5583 = vpop.f32.mrb[0].mxu0
        %v5584 = vadd.f32 0.0, %v5583
        %v5585 = vpop.f32.mrb[0].mxu0
        %5586 = vmatprep.mubr.f32.mxu0 0.0
        %5587 = vmatmul.mubr.f32.gmra.mrb[0].mxu0 %v5247
        %v5588 = vpop.f32.mrb[0].mxu0
        %v5589 = vadd.f32 0.0, %v5588
        %v5590 = vpop.f32.mrb[0].mxu0
        %5591 = vmatprep.mubr.f32.mxu0 0.0
        %5592 = vmatmul.mubr.f32.gmra.mrb[0].mxu0 %v5250
        %v5593 = vpop.f32.mrb[0].mxu0
        %v5594 = vadd.f32 0.0, %v5593
        %v5595 = vpop.f32.mrb[0].mxu0
        %5596 = vmatprep.mubr.f32.mxu0 0.0
        %5597 = vmatmul.mubr.f32.gmra.mrb[0].mxu0 %v5253
        %v5598 = vpop.f32.mrb[0].mxu0
        %v5599 = vadd.f32 0.0, %v5598
        %v5600 = vpop.f32.mrb[0].mxu0
        %5601 = vmatprep.mubr.f32.mxu0 0.0
        %5602 = vmatmul.mubr.f32.gmra.mrb[0].mxu0 %v5256
        %v5603 = vpop.f32.mrb[0].mxu0
        %v5604 = vadd.f32 0.0, %v5603
        %v5605 = vpop.f32.mrb[0].mxu0
        %5606 = vmatprep.mubr.f32.mxu0 0.0
        %5607 = vmatmul.mubr.f32.gmra.mrb[0].mxu0 %v5259
        %v5608 = vpop.f32.mrb[0].mxu0
        %v5609 = vadd.f32 0.0, %v5608
        %v5610 = vpop.f32.mrb[0].mxu0
        %5611 = vmatprep.mubr.f32.mxu0 0.0
        %5612 = vmatmul.mubr.f32.gmra.mrb[0].mxu0 %v5262
        %v5613 = vpop.f32.mrb[0].mxu0
        %v5614 = vadd.f32 0.0, %v5613
        %v5615 = vpop.f32.mrb[0].mxu0
        %5616 = vmatprep.mubr.f32.mxu0 0.0
        %5617 = vmatmul.mubr.f32.gmra.mrb[0].mxu0 %v5265
        %v5618 = vpop.f32.mrb[0].mxu0
        %v5619 = vadd.f32 0.0, %v5618
        %v5620 = vpop.f32.mrb[0].mxu0
        %5621 = vmatprep.mubr.f32.mxu0 0.0
        %5622 = vmatmul.mubr.f32.gmra.mrb[0].mxu0 %v5268
        %v5623 = vpop.f32.mrb[0].mxu0
        %v5624 = vadd.f32 0.0, %v5623
        %v5625 = vpop.f32.mrb[0].mxu0
        %5626 = vmatprep.mubr.f32.mxu0 0.0
        %5627 = vmatmul.mubr.f32.gmra.mrb[0].mxu0 %v5271
        %v5628 = vpop.f32.mrb[0].mxu0
        %v5629 = vadd.f32 0.0, %v5628
        %v5630 = vpop.f32.mrb[0].mxu0
        %5631 = vmatprep.mubr.f32.mxu0 0.0
        %5632 = vmatmul.mubr.f32.gmra.mrb[0].mxu0 %v5274
        %v5633 = vpop.f32.mrb[0].mxu0
        %v5634 = vadd.f32 0.0, %v5633
        %v5635 = vpop.f32.mrb[0].mxu0
        %5636 = vmatprep.mubr.f32.mxu0 0.0
        %5637 = vmatmul.mubr.f32.gmra.mrb[0].mxu0 %v5277
        %v5638 = vpop.f32.mrb[0].mxu0
        %v5639 = vadd.f32 0.0, %v5638
        %v5640 = vpop.f32.mrb[0].mxu0
        %5641 = vmatprep.mubr.f32.mxu0 0.0
        %5642 = vmatmul.mubr.f32.gmra.mrb[0].mxu0 %v5280
        %v5643 = vpop.f32.mrb[0].mxu0
        %v5644 = vadd.f32 0.0, %v5643
        %v5645 = vpop.f32.mrb[0].mxu0
        %5646 = vmatprep.mubr.f32.mxu0 0.0
        %5647 = vmatmul.mubr.f32.gmra.mrb[0].mxu0 %v5283
        %v5648 = vpop.f32.mrb[0].mxu0
        %v5649 = vadd.f32 0.0, %v5648
        %v5650 = vpop.f32.mrb[0].mxu0
        %5651 = vmatprep.mubr.f32.mxu0 0.0
        %5652 = vmatmul.mubr.f32.gmra.mrb[0].mxu0 %v5286
        %v5653 = vpop.f32.mrb[0].mxu0
        %v5654 = vadd.f32 0.0, %v5653
        %v5655 = vpop.f32.mrb[0].mxu0
        %5656 = vmatprep.mubr.f32.mxu0 0.0
        %5657 = vmatmul.mubr.f32.gmra.mrb[0].mxu0 %v5289
        %v5658 = vpop.f32.mrb[0].mxu0
        %v5659 = vadd.f32 0.0, %v5658
        %v5660 = vpop.f32.mrb[0].mxu0
        %5661 = vmatprep.mubr.f32.mxu0 0.0
        %5662 = vmatmul.mubr.f32.gmra.mrb[0].mxu0 %v5292
        %v5663 = vpop.f32.mrb[0].mxu0
        %v5664 = vadd.f32 0.0, %v5663
        %v5665 = vpop.f32.mrb[0].mxu0
        %5666 = vmatprep.mubr.f32.mxu0 0.0
        %5667 = vmatmul.mubr.f32.gmra.mrb[0].mxu0 %v5295
        %v5668 = vpop.f32.mrb[0].mxu0
        %v5669 = vadd.f32 0.0, %v5668
        %v5670 = vpop.f32.mrb[0].mxu0
        %5671 = vmatprep.mubr.f32.mxu0 0.0
        %5672 = vmatmul.mubr.f32.gmra.mrb[0].mxu0 %v5298
        %v5673 = vpop.f32.mrb[0].mxu0
        %v5674 = vadd.f32 0.0, %v5673
        %v5675 = vpop.f32.mrb[0].mxu0
        %5676 = vmatprep.mubr.f32.mxu0 0.0
        %5677 = vmatmul.mubr.f32.gmra.mrb[0].mxu0 %v5301
        %v5678 = vpop.f32.mrb[0].mxu0
        %v5679 = vadd.f32 0.0, %v5678
        %v5680 = vpop.f32.mrb[0].mxu0
        %5681 = vmatprep.mubr.f32.mxu0 0.0
        %5682 = vmatmul.mubr.f32.gmra.mrb[0].mxu0 %v5304
        %v5683 = vpop.f32.mrb[0].mxu0
        %v5684 = vadd.f32 0.0, %v5683
        %v5685 = vpop.f32.mrb[0].mxu0
        %5686 = vmatprep.mubr.f32.mxu0 0.0
        %5687 = vmatmul.mubr.f32.gmra.mrb[0].mxu0 %v5307
        %v5688 = vpop.f32.mrb[0].mxu0
        %v5689 = vadd.f32 0.0, %v5688
        %v5690 = vpop.f32.mrb[0].mxu0
        %5691 = vmatprep.mubr.f32.mxu0 0.0
        %5692 = vmatmul.mubr.f32.gmra.mrb[0].mxu0 %v5310
        %v5693 = vpop.f32.mrb[0].mxu0
        %v5694 = vadd.f32 0.0, %v5693
        %v5695 = vpop.f32.mrb[0].mxu0
        %5696 = vdwg.mxu0
        %v5697 = vmul.f32 %v5379, %v5379
        %v5698 = vmul.f32 %v5384, %v5384
        %v5699 = vmul.f32 %v5389, %v5389
        %v5700 = vmul.f32 %v5394, %v5394
        %v5701 = vmul.f32 %v5399, %v5399
        %v5702 = vmul.f32 %v5404, %v5404
        %v5703 = vmul.f32 %v5409, %v5409
        %v5704 = vmul.f32 %v5414, %v5414
        %v5705 = vmul.f32 %v5419, %v5419
        %v5706 = vmul.f32 %v5424, %v5424
        %v5707 = vmul.f32 %v5429, %v5429
        %v5708 = vmul.f32 %v5434, %v5434
        %v5709 = vmul.f32 %v5439, %v5439
        %v5710 = vmul.f32 %v5444, %v5444
        %v5711 = vmul.f32 %v5449, %v5449
        %v5712 = vmul.f32 %v5454, %v5454
        %v5713 = vmul.f32 %v5459, %v5459
        %v5714 = vmul.f32 %v5464, %v5464
        %v5715 = vmul.f32 %v5469, %v5469
        %v5716 = vmul.f32 %v5474, %v5474
        %v5717 = vmul.f32 %v5479, %v5479
        %v5718 = vmul.f32 %v5484, %v5484
        %v5719 = vmul.f32 %v5489, %v5489
        %v5720 = vmul.f32 %v5494, %v5494
        %v5721 = vmul.f32 %v5499, %v5499
        %v5722 = vmul.f32 %v5504, %v5504
        %v5723 = vmul.f32 %v5509, %v5509
        %v5724 = vmul.f32 %v5514, %v5514
        %v5725 = vmul.f32 %v5519, %v5519
        %v5726 = vmul.f32 %v5524, %v5524
        %v5727 = vmul.f32 %v5529, %v5529
        %v5728 = vmul.f32 %v5534, %v5534
        %v5729 = vsub.f32 %v5539, %v5697
        %v5730 = vsub.f32 %v5544, %v5698
        %v5731 = vsub.f32 %v5549, %v5699
        %v5732 = vsub.f32 %v5554, %v5700
        %v5733 = vsub.f32 %v5559, %v5701
        %v5734 = vsub.f32 %v5564, %v5702
        %v5735 = vsub.f32 %v5569, %v5703
        %v5736 = vsub.f32 %v5574, %v5704
        %v5737 = vsub.f32 %v5579, %v5705
        %v5738 = vsub.f32 %v5584, %v5706
        %v5739 = vsub.f32 %v5589, %v5707
        %v5740 = vsub.f32 %v5594, %v5708
        %v5741 = vsub.f32 %v5599, %v5709
        %v5742 = vsub.f32 %v5604, %v5710
        %v5743 = vsub.f32 %v5609, %v5711
        %v5744 = vsub.f32 %v5614, %v5712
        %v5745 = vsub.f32 %v5619, %v5713
        %v5746 = vsub.f32 %v5624, %v5714
        %v5747 = vsub.f32 %v5629, %v5715
        %v5748 = vsub.f32 %v5634, %v5716
        %v5749 = vsub.f32 %v5639, %v5717
        %v5750 = vsub.f32 %v5644, %v5718
        %v5751 = vsub.f32 %v5649, %v5719
        %v5752 = vsub.f32 %v5654, %v5720
        %v5753 = vsub.f32 %v5659, %v5721
        %v5754 = vsub.f32 %v5664, %v5722
        %v5755 = vsub.f32 %v5669, %v5723
        %v5756 = vsub.f32 %v5674, %v5724
        %v5757 = vsub.f32 %v5679, %v5725
        %v5758 = vsub.f32 %v5684, %v5726
        %v5759 = vsub.f32 %v5689, %v5727
        %v5760 = vsub.f32 %v5694, %v5728
        %v5761 = vmax.f32 %v5729, 0.0
        %v5762 = vmax.f32 %v5730, 0.0
        %v5763 = vmax.f32 %v5731, 0.0
        %v5764 = vmax.f32 %v5732, 0.0
        %v5765 = vmax.f32 %v5733, 0.0
        %v5766 = vmax.f32 %v5734, 0.0
        %v5767 = vmax.f32 %v5735, 0.0
        %v5768 = vmax.f32 %v5736, 0.0
        %v5769 = vmax.f32 %v5737, 0.0
        %v5770 = vmax.f32 %v5738, 0.0
        %v5771 = vmax.f32 %v5739, 0.0
        %v5772 = vmax.f32 %v5740, 0.0
        %v5773 = vmax.f32 %v5741, 0.0
        %v5774 = vmax.f32 %v5742, 0.0
        %v5775 = vmax.f32 %v5743, 0.0
        %v5776 = vmax.f32 %v5744, 0.0
        %v5777 = vmax.f32 %v5745, 0.0
        %v5778 = vmax.f32 %v5746, 0.0
        %v5779 = vmax.f32 %v5747, 0.0
        %v5780 = vmax.f32 %v5748, 0.0
        %v5781 = vmax.f32 %v5749, 0.0
        %v5782 = vmax.f32 %v5750, 0.0
        %v5783 = vmax.f32 %v5751, 0.0
        %v5784 = vmax.f32 %v5752, 0.0
        %v5785 = vmax.f32 %v5753, 0.0
        %v5786 = vmax.f32 %v5754, 0.0
        %v5787 = vmax.f32 %v5755, 0.0
        %v5788 = vmax.f32 %v5756, 0.0
        %v5789 = vmax.f32 %v5757, 0.0
        %v5790 = vmax.f32 %v5758, 0.0
        %v5791 = vmax.f32 %v5759, 0.0
        %v5792 = vmax.f32 %v5760, 0.0
        %v5793 = vadd.f32 %v5761, 1e-05
        %v5794 = vadd.f32 %v5762, 1e-05
        %v5795 = vadd.f32 %v5763, 1e-05
        %v5796 = vadd.f32 %v5764, 1e-05
        %v5797 = vadd.f32 %v5765, 1e-05
        %v5798 = vadd.f32 %v5766, 1e-05
        %v5799 = vadd.f32 %v5767, 1e-05
        %v5800 = vadd.f32 %v5768, 1e-05
        %v5801 = vadd.f32 %v5769, 1e-05
        %v5802 = vadd.f32 %v5770, 1e-05
        %v5803 = vadd.f32 %v5771, 1e-05
        %v5804 = vadd.f32 %v5772, 1e-05
        %v5805 = vadd.f32 %v5773, 1e-05
        %v5806 = vadd.f32 %v5774, 1e-05
        %v5807 = vadd.f32 %v5775, 1e-05
        %v5808 = vadd.f32 %v5776, 1e-05
        %v5809 = vadd.f32 %v5777, 1e-05
        %v5810 = vadd.f32 %v5778, 1e-05
        %v5811 = vadd.f32 %v5779, 1e-05
        %v5812 = vadd.f32 %v5780, 1e-05
        %v5813 = vadd.f32 %v5781, 1e-05
        %v5814 = vadd.f32 %v5782, 1e-05
        %v5815 = vadd.f32 %v5783, 1e-05
        %v5816 = vadd.f32 %v5784, 1e-05
        %v5817 = vadd.f32 %v5785, 1e-05
        %v5818 = vadd.f32 %v5786, 1e-05
        %v5819 = vadd.f32 %v5787, 1e-05
        %v5820 = vadd.f32 %v5788, 1e-05
        %v5821 = vadd.f32 %v5789, 1e-05
        %v5822 = vadd.f32 %v5790, 1e-05
        %v5823 = vadd.f32 %v5791, 1e-05
        %v5824 = vadd.f32 %v5792, 1e-05
        %v5825 = vrsqrt.pop %v5793
        %v5826 = vrsqrt.pop %v5794
        %v5827 = vrsqrt.pop %v5795
        %v5828 = vrsqrt.pop %v5796
        %v5829 = vrsqrt.pop %v5797
        %v5830 = vrsqrt.pop %v5798
        %v5831 = vrsqrt.pop %v5799
        %v5832 = vrsqrt.pop %v5800
        %v5833 = vrsqrt.pop %v5801
        %v5834 = vrsqrt.pop %v5802
        %v5835 = vrsqrt.pop %v5803
        %v5836 = vrsqrt.pop %v5804
        %v5837 = vrsqrt.pop %v5805
        %v5838 = vrsqrt.pop %v5806
        %v5839 = vrsqrt.pop %v5807
        %v5840 = vrsqrt.pop %v5808
        %v5841 = vrsqrt.pop %v5809
        %v5842 = vrsqrt.pop %v5810
        %v5843 = vrsqrt.pop %v5811
        %v5844 = vrsqrt.pop %v5812
        %v5845 = vrsqrt.pop %v5813
        %v5846 = vrsqrt.pop %v5814
        %v5847 = vrsqrt.pop %v5815
        %v5848 = vrsqrt.pop %v5816
        %v5849 = vrsqrt.pop %v5817
        %v5850 = vrsqrt.pop %v5818
        %v5851 = vrsqrt.pop %v5819
        %v5852 = vrsqrt.pop %v5820
        %v5853 = vrsqrt.pop %v5821
        %v5854 = vrsqrt.pop %v5822
        %v5855 = vrsqrt.pop %v5823
        %v5856 = vrsqrt.pop %v5824
        %v5857 = vld [vmem:[%s9] sm:$0xf]
        %vm5858 = vcmask 31744
        %v5860 = vsel %vm5858, %v5825, 0
        %v5863 = vsel %vm5858, %v5826, 0
        %v5866 = vsel %vm5858, %v5827, 0
        %v5869 = vsel %vm5858, %v5828, 0
        %v5872 = vsel %vm5858, %v5829, 0
        %v5875 = vsel %vm5858, %v5830, 0
        %v5878 = vsel %vm5858, %v5831, 0
        %v5881 = vsel %vm5858, %v5832, 0
        %v5884 = vsel %vm5858, %v5833, 0
        %v5887 = vsel %vm5858, %v5834, 0
        %v5890 = vsel %vm5858, %v5835, 0
        %v5893 = vsel %vm5858, %v5836, 0
        %v5896 = vsel %vm5858, %v5837, 0
        %v5899 = vsel %vm5858, %v5838, 0
        %v5902 = vsel %vm5858, %v5839, 0
        %v5905 = vsel %vm5858, %v5840, 0
        %v5908 = vsel %vm5858, %v5841, 0
        %v5911 = vsel %vm5858, %v5842, 0
        %v5914 = vsel %vm5858, %v5843, 0
        %v5917 = vsel %vm5858, %v5844, 0
        %v5920 = vsel %vm5858, %v5845, 0
        %v5923 = vsel %vm5858, %v5846, 0
        %v5926 = vsel %vm5858, %v5847, 0
        %v5929 = vsel %vm5858, %v5848, 0
        %v5932 = vsel %vm5858, %v5849, 0
        %v5935 = vsel %vm5858, %v5850, 0
        %v5938 = vsel %vm5858, %v5851, 0
        %v5941 = vsel %vm5858, %v5852, 0
        %v5944 = vsel %vm5858, %v5853, 0
        %v5947 = vsel %vm5858, %v5854, 0
        %v5950 = vsel %vm5858, %v5855, 0
        %v5953 = vsel %vm5858, %v5856, 0
        %vm5955 = vcmask 1043456
        %v5957 = vsel %vm5955, %v5857, 0
        %5959 = vmatprep.subr.mxu0 0.0
        %5960 = vmatpush1.msra.mxu0 %v5957
        %5961 = vmatprep.subr.mxu0 0.0
        %5962 = vmatpush1.msra.mxu0 0.0
        %5963 = vmatprep.subr.mxu0 0.0
        %5964 = vmatpush1.msra.mxu0 0.0
        %5965 = vmatprep.subr.mxu0 0.0
        %5966 = vmatpush1.msra.mxu0 0.0
        %5967 = vmatprep.subr.mxu0 0.0
        %5968 = vmatpush1.msra.mxu0 0.0
        %5969 = vmatprep.subr.mxu0 0.0
        %5970 = vmatpush1.msra.mxu0 0.0
        %5971 = vmatprep.subr.mxu0 0.0
        %5972 = vmatpush1.msra.mxu0 0.0
        %5973 = vmatprep.subr.mxu0 0.0
        %5974 = vmatpush1.msra.mxu0 0.0
        %5975 = vmatprep.subr.mxu0 0.0
        %5976 = vmatpush1.msra.mxu0 0.0
        %5977 = vmatprep.subr.mxu0 0.0
        %5978 = vmatpush1.msra.mxu0 0.0
        %5979 = vmatprep.subr.mxu0 0.0
        %5980 = vmatpush1.msra.mxu0 0.0
        %5981 = vmatprep.subr.mxu0 0.0
        %5982 = vmatpush1.msra.mxu0 0.0
        %5983 = vmatprep.subr.mxu0 0.0
        %5984 = vmatpush1.msra.mxu0 0.0
        %5985 = vmatprep.subr.mxu0 0.0
        %5986 = vmatpush1.msra.mxu0 0.0
        %5987 = vmatprep.subr.mxu0 0.0
        %5988 = vmatpush1.msra.mxu0 0.0
        %5989 = vmatprep.subr.mxu0 0.0
        %5990 = vmatpush1.msra.mxu0 0.0
        %5991 = vmatprep.subr.mxu0 0.0
        %5992 = vmatpush1.msra.mxu0 0.0
        %5993 = vmatprep.subr.mxu0 0.0
        %5994 = vmatpush1.msra.mxu0 0.0
        %5995 = vmatprep.subr.mxu0 0.0
        %5996 = vmatpush1.msra.mxu0 0.0
        %5997 = vmatprep.subr.mxu0 0.0
        %5998 = vmatpush1.msra.mxu0 0.0
        %5999 = vmatprep.subr.mxu0 0.0
        %6000 = vmatpush1.msra.mxu0 0.0
        %6001 = vmatprep.subr.mxu0 0.0
        %6002 = vmatpush1.msra.mxu0 0.0
        %6003 = vmatprep.subr.mxu0 0.0
        %6004 = vmatpush1.msra.mxu0 0.0
        %6005 = vmatprep.subr.mxu0 0.0
        %6006 = vmatpush1.msra.mxu0 0.0
        %6007 = vmatprep.subr.mxu0 0.0
        %6008 = vmatpush1.msra.mxu0 0.0
        %6009 = vmatprep.subr.mxu0 0.0
        %6010 = vmatpush1.msra.mxu0 0.0
        %6011 = vmatprep.subr.mxu0 0.0
        %6012 = vmatpush1.msra.mxu0 0.0
        %6013 = vmatprep.subr.mxu0 0.0
        %6014 = vmatpush1.msra.mxu0 0.0
        %6015 = vmatprep.subr.mxu0 0.0
        %6016 = vmatpush1.msra.mxu0 0.0
        %6017 = vmatprep.subr.mxu0 0.0
        %6018 = vmatpush1.msra.mxu0 0.0
        %6019 = vmatprep.subr.mxu0 0.0
        %6020 = vmatpush1.msra.mxu0 0.0
        %6021 = vmatprep.subr.mxu0 0.0
        %6022 = vmatpush1.msra.mxu0 0.0
        %6023 = vmatprep.mubr.f32.mxu0 0.0
        %6024 = vmatmul.mubr.f32.gmra.mrb[0].mxu0 %v5860
        %v6025 = vpop.f32.mrb[0].mxu0
        %v6026 = vadd.f32 0.0, %v6025
        %v6027 = vpop.f32.mrb[0].mxu0
        %6028 = vmatprep.mubr.f32.mxu0 0.0
        %6029 = vmatmul.mubr.f32.gmra.mrb[0].mxu0 %v5863
        %v6030 = vpop.f32.mrb[0].mxu0
        %v6031 = vadd.f32 0.0, %v6030
        %v6032 = vpop.f32.mrb[0].mxu0
        %6033 = vmatprep.mubr.f32.mxu0 0.0
        %6034 = vmatmul.mubr.f32.gmra.mrb[0].mxu0 %v5866
        %v6035 = vpop.f32.mrb[0].mxu0
        %v6036 = vadd.f32 0.0, %v6035
        %v6037 = vpop.f32.mrb[0].mxu0
        %6038 = vmatprep.mubr.f32.mxu0 0.0
        %6039 = vmatmul.mubr.f32.gmra.mrb[0].mxu0 %v5869
        %v6040 = vpop.f32.mrb[0].mxu0
        %v6041 = vadd.f32 0.0, %v6040
        %v6042 = vpop.f32.mrb[0].mxu0
        %6043 = vmatprep.mubr.f32.mxu0 0.0
        %6044 = vmatmul.mubr.f32.gmra.mrb[0].mxu0 %v5872
        %v6045 = vpop.f32.mrb[0].mxu0
        %v6046 = vadd.f32 0.0, %v6045
        %v6047 = vpop.f32.mrb[0].mxu0
        %6048 = vmatprep.mubr.f32.mxu0 0.0
        %6049 = vmatmul.mubr.f32.gmra.mrb[0].mxu0 %v5875
        %v6050 = vpop.f32.mrb[0].mxu0
        %v6051 = vadd.f32 0.0, %v6050
        %v6052 = vpop.f32.mrb[0].mxu0
        %6053 = vmatprep.mubr.f32.mxu0 0.0
        %6054 = vmatmul.mubr.f32.gmra.mrb[0].mxu0 %v5878
        %v6055 = vpop.f32.mrb[0].mxu0
        %v6056 = vadd.f32 0.0, %v6055
        %v6057 = vpop.f32.mrb[0].mxu0
        %6058 = vmatprep.mubr.f32.mxu0 0.0
        %6059 = vmatmul.mubr.f32.gmra.mrb[0].mxu0 %v5881
        %v6060 = vpop.f32.mrb[0].mxu0
        %v6061 = vadd.f32 0.0, %v6060
        %v6062 = vpop.f32.mrb[0].mxu0
        %6063 = vmatprep.mubr.f32.mxu0 0.0
        %6064 = vmatmul.mubr.f32.gmra.mrb[0].mxu0 %v5884
        %v6065 = vpop.f32.mrb[0].mxu0
        %v6066 = vadd.f32 0.0, %v6065
        %v6067 = vpop.f32.mrb[0].mxu0
        %6068 = vmatprep.mubr.f32.mxu0 0.0
        %6069 = vmatmul.mubr.f32.gmra.mrb[0].mxu0 %v5887
        %v6070 = vpop.f32.mrb[0].mxu0
        %v6071 = vadd.f32 0.0, %v6070
        %v6072 = vpop.f32.mrb[0].mxu0
        %6073 = vmatprep.mubr.f32.mxu0 0.0
        %6074 = vmatmul.mubr.f32.gmra.mrb[0].mxu0 %v5890
        %v6075 = vpop.f32.mrb[0].mxu0
        %v6076 = vadd.f32 0.0, %v6075
        %v6077 = vpop.f32.mrb[0].mxu0
        %6078 = vmatprep.mubr.f32.mxu0 0.0
        %6079 = vmatmul.mubr.f32.gmra.mrb[0].mxu0 %v5893
        %v6080 = vpop.f32.mrb[0].mxu0
        %v6081 = vadd.f32 0.0, %v6080
        %v6082 = vpop.f32.mrb[0].mxu0
        %6083 = vmatprep.mubr.f32.mxu0 0.0
        %6084 = vmatmul.mubr.f32.gmra.mrb[0].mxu0 %v5896
        %v6085 = vpop.f32.mrb[0].mxu0
        %v6086 = vadd.f32 0.0, %v6085
        %v6087 = vpop.f32.mrb[0].mxu0
        %6088 = vmatprep.mubr.f32.mxu0 0.0
        %6089 = vmatmul.mubr.f32.gmra.mrb[0].mxu0 %v5899
        %v6090 = vpop.f32.mrb[0].mxu0
        %v6091 = vadd.f32 0.0, %v6090
        %v6092 = vpop.f32.mrb[0].mxu0
        %6093 = vmatprep.mubr.f32.mxu0 0.0
        %6094 = vmatmul.mubr.f32.gmra.mrb[0].mxu0 %v5902
        %v6095 = vpop.f32.mrb[0].mxu0
        %v6096 = vadd.f32 0.0, %v6095
        %v6097 = vpop.f32.mrb[0].mxu0
        %6098 = vmatprep.mubr.f32.mxu0 0.0
        %6099 = vmatmul.mubr.f32.gmra.mrb[0].mxu0 %v5905
        %v6100 = vpop.f32.mrb[0].mxu0
        %v6101 = vadd.f32 0.0, %v6100
        %v6102 = vpop.f32.mrb[0].mxu0
        %6103 = vmatprep.mubr.f32.mxu0 0.0
        %6104 = vmatmul.mubr.f32.gmra.mrb[0].mxu0 %v5908
        %v6105 = vpop.f32.mrb[0].mxu0
        %v6106 = vadd.f32 0.0, %v6105
        %v6107 = vpop.f32.mrb[0].mxu0
        %6108 = vmatprep.mubr.f32.mxu0 0.0
        %6109 = vmatmul.mubr.f32.gmra.mrb[0].mxu0 %v5911
        %v6110 = vpop.f32.mrb[0].mxu0
        %v6111 = vadd.f32 0.0, %v6110
        %v6112 = vpop.f32.mrb[0].mxu0
        %6113 = vmatprep.mubr.f32.mxu0 0.0
        %6114 = vmatmul.mubr.f32.gmra.mrb[0].mxu0 %v5914
        %v6115 = vpop.f32.mrb[0].mxu0
        %v6116 = vadd.f32 0.0, %v6115
        %v6117 = vpop.f32.mrb[0].mxu0
        %6118 = vmatprep.mubr.f32.mxu0 0.0
        %6119 = vmatmul.mubr.f32.gmra.mrb[0].mxu0 %v5917
        %v6120 = vpop.f32.mrb[0].mxu0
        %v6121 = vadd.f32 0.0, %v6120
        %v6122 = vpop.f32.mrb[0].mxu0
        %6123 = vmatprep.mubr.f32.mxu0 0.0
        %6124 = vmatmul.mubr.f32.gmra.mrb[0].mxu0 %v5920
        %v6125 = vpop.f32.mrb[0].mxu0
        %v6126 = vadd.f32 0.0, %v6125
        %v6127 = vpop.f32.mrb[0].mxu0
        %6128 = vmatprep.mubr.f32.mxu0 0.0
        %6129 = vmatmul.mubr.f32.gmra.mrb[0].mxu0 %v5923
        %v6130 = vpop.f32.mrb[0].mxu0
        %v6131 = vadd.f32 0.0, %v6130
        %v6132 = vpop.f32.mrb[0].mxu0
        %6133 = vmatprep.mubr.f32.mxu0 0.0
        %6134 = vmatmul.mubr.f32.gmra.mrb[0].mxu0 %v5926
        %v6135 = vpop.f32.mrb[0].mxu0
        %v6136 = vadd.f32 0.0, %v6135
        %v6137 = vpop.f32.mrb[0].mxu0
        %6138 = vmatprep.mubr.f32.mxu0 0.0
        %6139 = vmatmul.mubr.f32.gmra.mrb[0].mxu0 %v5929
        %v6140 = vpop.f32.mrb[0].mxu0
        %v6141 = vadd.f32 0.0, %v6140
        %v6142 = vpop.f32.mrb[0].mxu0
        %6143 = vmatprep.mubr.f32.mxu0 0.0
        %6144 = vmatmul.mubr.f32.gmra.mrb[0].mxu0 %v5932
        %v6145 = vpop.f32.mrb[0].mxu0
        %v6146 = vadd.f32 0.0, %v6145
        %v6147 = vpop.f32.mrb[0].mxu0
        %6148 = vmatprep.mubr.f32.mxu0 0.0
        %6149 = vmatmul.mubr.f32.gmra.mrb[0].mxu0 %v5935
        %v6150 = vpop.f32.mrb[0].mxu0
        %v6151 = vadd.f32 0.0, %v6150
        %v6152 = vpop.f32.mrb[0].mxu0
        %6153 = vmatprep.mubr.f32.mxu0 0.0
        %6154 = vmatmul.mubr.f32.gmra.mrb[0].mxu0 %v5938
        %v6155 = vpop.f32.mrb[0].mxu0
        %v6156 = vadd.f32 0.0, %v6155
        %v6157 = vpop.f32.mrb[0].mxu0
        %6158 = vmatprep.mubr.f32.mxu0 0.0
        %6159 = vmatmul.mubr.f32.gmra.mrb[0].mxu0 %v5941
        %v6160 = vpop.f32.mrb[0].mxu0
        %v6161 = vadd.f32 0.0, %v6160
        %v6162 = vpop.f32.mrb[0].mxu0
        %6163 = vmatprep.mubr.f32.mxu0 0.0
        %6164 = vmatmul.mubr.f32.gmra.mrb[0].mxu0 %v5944
        %v6165 = vpop.f32.mrb[0].mxu0
        %v6166 = vadd.f32 0.0, %v6165
        %v6167 = vpop.f32.mrb[0].mxu0
        %6168 = vmatprep.mubr.f32.mxu0 0.0
        %6169 = vmatmul.mubr.f32.gmra.mrb[0].mxu0 %v5947
        %v6170 = vpop.f32.mrb[0].mxu0
        %v6171 = vadd.f32 0.0, %v6170
        %v6172 = vpop.f32.mrb[0].mxu0
        %6173 = vmatprep.mubr.f32.mxu0 0.0
        %6174 = vmatmul.mubr.f32.gmra.mrb[0].mxu0 %v5950
        %v6175 = vpop.f32.mrb[0].mxu0
        %v6176 = vadd.f32 0.0, %v6175
        %v6177 = vpop.f32.mrb[0].mxu0
        %6178 = vmatprep.mubr.f32.mxu0 0.0
        %6179 = vmatmul.mubr.f32.gmra.mrb[0].mxu0 %v5953
        %v6180 = vpop.f32.mrb[0].mxu0
        %v6181 = vadd.f32 0.0, %v6180
        %v6182 = vpop.f32.mrb[0].mxu0
        %6183 = vdwg.mxu0
        %v6184 = vmul.f32 %v5379, %v5825
        %v6185 = vmul.f32 %v5384, %v5826
        %v6186 = vmul.f32 %v5389, %v5827
        %v6187 = vmul.f32 %v5394, %v5828
        %v6188 = vmul.f32 %v5399, %v5829
        %v6189 = vmul.f32 %v5404, %v5830
        %v6190 = vmul.f32 %v5409, %v5831
        %v6191 = vmul.f32 %v5414, %v5832
        %v6192 = vmul.f32 %v5419, %v5833
        %v6193 = vmul.f32 %v5424, %v5834
        %v6194 = vmul.f32 %v5429, %v5835
        %v6195 = vmul.f32 %v5434, %v5836
        %v6196 = vmul.f32 %v5439, %v5837
        %v6197 = vmul.f32 %v5444, %v5838
        %v6198 = vmul.f32 %v5449, %v5839
        %v6199 = vmul.f32 %v5454, %v5840
        %v6200 = vmul.f32 %v5459, %v5841
        %v6201 = vmul.f32 %v5464, %v5842
        %v6202 = vmul.f32 %v5469, %v5843
        %v6203 = vmul.f32 %v5474, %v5844
        %v6204 = vmul.f32 %v5479, %v5845
        %v6205 = vmul.f32 %v5484, %v5846
        %v6206 = vmul.f32 %v5489, %v5847
        %v6207 = vmul.f32 %v5494, %v5848
        %v6208 = vmul.f32 %v5499, %v5849
        %v6209 = vmul.f32 %v5504, %v5850
        %v6210 = vmul.f32 %v5509, %v5851
        %v6211 = vmul.f32 %v5514, %v5852
        %v6212 = vmul.f32 %v5519, %v5853
        %v6213 = vmul.f32 %v5524, %v5854
        %v6214 = vmul.f32 %v5529, %v5855
        %v6215 = vmul.f32 %v5534, %v5856
        %v6217 = vsel %vm5858, %v6184, 0
        %v6220 = vsel %vm5858, %v6185, 0
        %v6223 = vsel %vm5858, %v6186, 0
        %v6226 = vsel %vm5858, %v6187, 0
        %v6229 = vsel %vm5858, %v6188, 0
        %v6232 = vsel %vm5858, %v6189, 0
        %v6235 = vsel %vm5858, %v6190, 0
        %v6238 = vsel %vm5858, %v6191, 0
        %v6241 = vsel %vm5858, %v6192, 0
        %v6244 = vsel %vm5858, %v6193, 0
        %v6247 = vsel %vm5858, %v6194, 0
        %v6250 = vsel %vm5858, %v6195, 0
        %v6253 = vsel %vm5858, %v6196, 0
        %v6256 = vsel %vm5858, %v6197, 0
        %v6259 = vsel %vm5858, %v6198, 0
        %v6262 = vsel %vm5858, %v6199, 0
        %v6265 = vsel %vm5858, %v6200, 0
        %v6268 = vsel %vm5858, %v6201, 0
        %v6271 = vsel %vm5858, %v6202, 0
        %v6274 = vsel %vm5858, %v6203, 0
        %v6277 = vsel %vm5858, %v6204, 0
        %v6280 = vsel %vm5858, %v6205, 0
        %v6283 = vsel %vm5858, %v6206, 0
        %v6286 = vsel %vm5858, %v6207, 0
        %v6289 = vsel %vm5858, %v6208, 0
        %v6292 = vsel %vm5858, %v6209, 0
        %v6295 = vsel %vm5858, %v6210, 0
        %v6298 = vsel %vm5858, %v6211, 0
        %v6301 = vsel %vm5858, %v6212, 0
        %v6304 = vsel %vm5858, %v6213, 0
        %v6307 = vsel %vm5858, %v6214, 0
        %v6310 = vsel %vm5858, %v6215, 0
        %6312 = vmatprep.subr.mxu0 0.0
        %6313 = vmatpush1.msra.mxu0 %v5957
        %6314 = vmatprep.subr.mxu0 0.0
        %6315 = vmatpush1.msra.mxu0 0.0
        %6316 = vmatprep.subr.mxu0 0.0
        %6317 = vmatpush1.msra.mxu0 0.0
        %6318 = vmatprep.subr.mxu0 0.0
        %6319 = vmatpush1.msra.mxu0 0.0
        %6320 = vmatprep.subr.mxu0 0.0
        %6321 = vmatpush1.msra.mxu0 0.0
        %6322 = vmatprep.subr.mxu0 0.0
        %6323 = vmatpush1.msra.mxu0 0.0
        %6324 = vmatprep.subr.mxu0 0.0
        %6325 = vmatpush1.msra.mxu0 0.0
        %6326 = vmatprep.subr.mxu0 0.0
        %6327 = vmatpush1.msra.mxu0 0.0
        %6328 = vmatprep.subr.mxu0 0.0
        %6329 = vmatpush1.msra.mxu0 0.0
        %6330 = vmatprep.subr.mxu0 0.0
        %6331 = vmatpush1.msra.mxu0 0.0
        %6332 = vmatprep.subr.mxu0 0.0
        %6333 = vmatpush1.msra.mxu0 0.0
        %6334 = vmatprep.subr.mxu0 0.0
        %6335 = vmatpush1.msra.mxu0 0.0
        %6336 = vmatprep.subr.mxu0 0.0
        %6337 = vmatpush1.msra.mxu0 0.0
        %6338 = vmatprep.subr.mxu0 0.0
        %6339 = vmatpush1.msra.mxu0 0.0
        %6340 = vmatprep.subr.mxu0 0.0
        %6341 = vmatpush1.msra.mxu0 0.0
        %6342 = vmatprep.subr.mxu0 0.0
        %6343 = vmatpush1.msra.mxu0 0.0
        %6344 = vmatprep.subr.mxu0 0.0
        %6345 = vmatpush1.msra.mxu0 0.0
        %6346 = vmatprep.subr.mxu0 0.0
        %6347 = vmatpush1.msra.mxu0 0.0
        %6348 = vmatprep.subr.mxu0 0.0
        %6349 = vmatpush1.msra.mxu0 0.0
        %6350 = vmatprep.subr.mxu0 0.0
        %6351 = vmatpush1.msra.mxu0 0.0
        %6352 = vmatprep.subr.mxu0 0.0
        %6353 = vmatpush1.msra.mxu0 0.0
        %6354 = vmatprep.subr.mxu0 0.0
        %6355 = vmatpush1.msra.mxu0 0.0
        %6356 = vmatprep.subr.mxu0 0.0
        %6357 = vmatpush1.msra.mxu0 0.0
        %6358 = vmatprep.subr.mxu0 0.0
        %6359 = vmatpush1.msra.mxu0 0.0
        %6360 = vmatprep.subr.mxu0 0.0
        %6361 = vmatpush1.msra.mxu0 0.0
        %6362 = vmatprep.subr.mxu0 0.0
        %6363 = vmatpush1.msra.mxu0 0.0
        %6364 = vmatprep.subr.mxu0 0.0
        %6365 = vmatpush1.msra.mxu0 0.0
        %6366 = vmatprep.subr.mxu0 0.0
        %6367 = vmatpush1.msra.mxu0 0.0
        %6368 = vmatprep.subr.mxu0 0.0
        %6369 = vmatpush1.msra.mxu0 0.0
        %6370 = vmatprep.subr.mxu0 0.0
        %6371 = vmatpush1.msra.mxu0 0.0
        %6372 = vmatprep.subr.mxu0 0.0
        %6373 = vmatpush1.msra.mxu0 0.0
        %6374 = vmatprep.subr.mxu0 0.0
        %6375 = vmatpush1.msra.mxu0 0.0
        %6376 = vmatprep.mubr.f32.mxu0 0.0
        %6377 = vmatmul.mubr.f32.gmra.mrb[0].mxu0 %v6217
        %v6378 = vpop.f32.mrb[0].mxu0
        %v6379 = vadd.f32 0.0, %v6378
        %v6380 = vpop.f32.mrb[0].mxu0
        %6381 = vmatprep.mubr.f32.mxu0 0.0
        %6382 = vmatmul.mubr.f32.gmra.mrb[0].mxu0 %v6220
        %v6383 = vpop.f32.mrb[0].mxu0
        %v6384 = vadd.f32 0.0, %v6383
        %v6385 = vpop.f32.mrb[0].mxu0
        %6386 = vmatprep.mubr.f32.mxu0 0.0
        %6387 = vmatmul.mubr.f32.gmra.mrb[0].mxu0 %v6223
        %v6388 = vpop.f32.mrb[0].mxu0
        %v6389 = vadd.f32 0.0, %v6388
        %v6390 = vpop.f32.mrb[0].mxu0
        %6391 = vmatprep.mubr.f32.mxu0 0.0
        %6392 = vmatmul.mubr.f32.gmra.mrb[0].mxu0 %v6226
        %v6393 = vpop.f32.mrb[0].mxu0
        %v6394 = vadd.f32 0.0, %v6393
        %v6395 = vpop.f32.mrb[0].mxu0
        %6396 = vmatprep.mubr.f32.mxu0 0.0
        %6397 = vmatmul.mubr.f32.gmra.mrb[0].mxu0 %v6229
        %v6398 = vpop.f32.mrb[0].mxu0
        %v6399 = vadd.f32 0.0, %v6398
        %v6400 = vpop.f32.mrb[0].mxu0
        %6401 = vmatprep.mubr.f32.mxu0 0.0
        %6402 = vmatmul.mubr.f32.gmra.mrb[0].mxu0 %v6232
        %v6403 = vpop.f32.mrb[0].mxu0
        %v6404 = vadd.f32 0.0, %v6403
        %v6405 = vpop.f32.mrb[0].mxu0
        %6406 = vmatprep.mubr.f32.mxu0 0.0
        %6407 = vmatmul.mubr.f32.gmra.mrb[0].mxu0 %v6235
        %v6408 = vpop.f32.mrb[0].mxu0
        %v6409 = vadd.f32 0.0, %v6408
        %v6410 = vpop.f32.mrb[0].mxu0
        %6411 = vmatprep.mubr.f32.mxu0 0.0
        %6412 = vmatmul.mubr.f32.gmra.mrb[0].mxu0 %v6238
        %v6413 = vpop.f32.mrb[0].mxu0
        %v6414 = vadd.f32 0.0, %v6413
        %v6415 = vpop.f32.mrb[0].mxu0
        %6416 = vmatprep.mubr.f32.mxu0 0.0
        %6417 = vmatmul.mubr.f32.gmra.mrb[0].mxu0 %v6241
        %v6418 = vpop.f32.mrb[0].mxu0
        %v6419 = vadd.f32 0.0, %v6418
        %v6420 = vpop.f32.mrb[0].mxu0
        %6421 = vmatprep.mubr.f32.mxu0 0.0
        %6422 = vmatmul.mubr.f32.gmra.mrb[0].mxu0 %v6244
        %v6423 = vpop.f32.mrb[0].mxu0
        %v6424 = vadd.f32 0.0, %v6423
        %v6425 = vpop.f32.mrb[0].mxu0
        %6426 = vmatprep.mubr.f32.mxu0 0.0
        %6427 = vmatmul.mubr.f32.gmra.mrb[0].mxu0 %v6247
        %v6428 = vpop.f32.mrb[0].mxu0
        %v6429 = vadd.f32 0.0, %v6428
        %v6430 = vpop.f32.mrb[0].mxu0
        %6431 = vmatprep.mubr.f32.mxu0 0.0
        %6432 = vmatmul.mubr.f32.gmra.mrb[0].mxu0 %v6250
        %v6433 = vpop.f32.mrb[0].mxu0
        %v6434 = vadd.f32 0.0, %v6433
        %v6435 = vpop.f32.mrb[0].mxu0
        %6436 = vmatprep.mubr.f32.mxu0 0.0
        %6437 = vmatmul.mubr.f32.gmra.mrb[0].mxu0 %v6253
        %v6438 = vpop.f32.mrb[0].mxu0
        %v6439 = vadd.f32 0.0, %v6438
        %v6440 = vpop.f32.mrb[0].mxu0
        %6441 = vmatprep.mubr.f32.mxu0 0.0
        %6442 = vmatmul.mubr.f32.gmra.mrb[0].mxu0 %v6256
        %v6443 = vpop.f32.mrb[0].mxu0
        %v6444 = vadd.f32 0.0, %v6443
        %v6445 = vpop.f32.mrb[0].mxu0
        %6446 = vmatprep.mubr.f32.mxu0 0.0
        %6447 = vmatmul.mubr.f32.gmra.mrb[0].mxu0 %v6259
        %v6448 = vpop.f32.mrb[0].mxu0
        %v6449 = vadd.f32 0.0, %v6448
        %v6450 = vpop.f32.mrb[0].mxu0
        %6451 = vmatprep.mubr.f32.mxu0 0.0
        %6452 = vmatmul.mubr.f32.gmra.mrb[0].mxu0 %v6262
        %v6453 = vpop.f32.mrb[0].mxu0
        %v6454 = vadd.f32 0.0, %v6453
        %v6455 = vpop.f32.mrb[0].mxu0
        %6456 = vmatprep.mubr.f32.mxu0 0.0
        %6457 = vmatmul.mubr.f32.gmra.mrb[0].mxu0 %v6265
        %v6458 = vpop.f32.mrb[0].mxu0
        %v6459 = vadd.f32 0.0, %v6458
        %v6460 = vpop.f32.mrb[0].mxu0
        %6461 = vmatprep.mubr.f32.mxu0 0.0
        %6462 = vmatmul.mubr.f32.gmra.mrb[0].mxu0 %v6268
        %v6463 = vpop.f32.mrb[0].mxu0
        %v6464 = vadd.f32 0.0, %v6463
        %v6465 = vpop.f32.mrb[0].mxu0
        %6466 = vmatprep.mubr.f32.mxu0 0.0
        %6467 = vmatmul.mubr.f32.gmra.mrb[0].mxu0 %v6271
        %v6468 = vpop.f32.mrb[0].mxu0
        %v6469 = vadd.f32 0.0, %v6468
        %v6470 = vpop.f32.mrb[0].mxu0
        %6471 = vmatprep.mubr.f32.mxu0 0.0
        %6472 = vmatmul.mubr.f32.gmra.mrb[0].mxu0 %v6274
        %v6473 = vpop.f32.mrb[0].mxu0
        %v6474 = vadd.f32 0.0, %v6473
        %v6475 = vpop.f32.mrb[0].mxu0
        %6476 = vmatprep.mubr.f32.mxu0 0.0
        %6477 = vmatmul.mubr.f32.gmra.mrb[0].mxu0 %v6277
        %v6478 = vpop.f32.mrb[0].mxu0
        %v6479 = vadd.f32 0.0, %v6478
        %v6480 = vpop.f32.mrb[0].mxu0
        %6481 = vmatprep.mubr.f32.mxu0 0.0
        %6482 = vmatmul.mubr.f32.gmra.mrb[0].mxu0 %v6280
        %v6483 = vpop.f32.mrb[0].mxu0
        %v6484 = vadd.f32 0.0, %v6483
        %v6485 = vpop.f32.mrb[0].mxu0
        %6486 = vmatprep.mubr.f32.mxu0 0.0
        %6487 = vmatmul.mubr.f32.gmra.mrb[0].mxu0 %v6283
        %v6488 = vpop.f32.mrb[0].mxu0
        %v6489 = vadd.f32 0.0, %v6488
        %v6490 = vpop.f32.mrb[0].mxu0
        %6491 = vmatprep.mubr.f32.mxu0 0.0
        %6492 = vmatmul.mubr.f32.gmra.mrb[0].mxu0 %v6286
        %v6493 = vpop.f32.mrb[0].mxu0
        %v6494 = vadd.f32 0.0, %v6493
        %v6495 = vpop.f32.mrb[0].mxu0
        %6496 = vmatprep.mubr.f32.mxu0 0.0
        %6497 = vmatmul.mubr.f32.gmra.mrb[0].mxu0 %v6289
        %v6498 = vpop.f32.mrb[0].mxu0
        %v6499 = vadd.f32 0.0, %v6498
        %v6500 = vpop.f32.mrb[0].mxu0
        %6501 = vmatprep.mubr.f32.mxu0 0.0
        %6502 = vmatmul.mubr.f32.gmra.mrb[0].mxu0 %v6292
        %v6503 = vpop.f32.mrb[0].mxu0
        %v6504 = vadd.f32 0.0, %v6503
        %v6505 = vpop.f32.mrb[0].mxu0
        %6506 = vmatprep.mubr.f32.mxu0 0.0
        %6507 = vmatmul.mubr.f32.gmra.mrb[0].mxu0 %v6295
        %v6508 = vpop.f32.mrb[0].mxu0
        %v6509 = vadd.f32 0.0, %v6508
        %v6510 = vpop.f32.mrb[0].mxu0
        %6511 = vmatprep.mubr.f32.mxu0 0.0
        %6512 = vmatmul.mubr.f32.gmra.mrb[0].mxu0 %v6298
        %v6513 = vpop.f32.mrb[0].mxu0
        %v6514 = vadd.f32 0.0, %v6513
        %v6515 = vpop.f32.mrb[0].mxu0
        %6516 = vmatprep.mubr.f32.mxu0 0.0
        %6517 = vmatmul.mubr.f32.gmra.mrb[0].mxu0 %v6301
        %v6518 = vpop.f32.mrb[0].mxu0
        %v6519 = vadd.f32 0.0, %v6518
        %v6520 = vpop.f32.mrb[0].mxu0
        %6521 = vmatprep.mubr.f32.mxu0 0.0
        %6522 = vmatmul.mubr.f32.gmra.mrb[0].mxu0 %v6304
        %v6523 = vpop.f32.mrb[0].mxu0
        %v6524 = vadd.f32 0.0, %v6523
        %v6525 = vpop.f32.mrb[0].mxu0
        %6526 = vmatprep.mubr.f32.mxu0 0.0
        %6527 = vmatmul.mubr.f32.gmra.mrb[0].mxu0 %v6307
        %v6528 = vpop.f32.mrb[0].mxu0
        %v6529 = vadd.f32 0.0, %v6528
        %v6530 = vpop.f32.mrb[0].mxu0
        %6531 = vmatprep.mubr.f32.mxu0 0.0
        %6532 = vmatmul.mubr.f32.gmra.mrb[0].mxu0 %v6310
        %v6533 = vpop.f32.mrb[0].mxu0
        %v6534 = vadd.f32 0.0, %v6533
        %v6535 = vpop.f32.mrb[0].mxu0
        %6536 = vdwg.mxu0
        %v6537 = vlaneseq
        %v6538 = vshrl.u32 %v6537, 7
        %v6539 = vsub.s32 0, %v6538
        %v6540 = vrot.slane %v1044, %v6539
        %v6541 = vsub.f32 %v6540, %v6379
        %v6542 = vsub.f32 %v6540, %v6384
        %v6543 = vsub.f32 %v6540, %v6389
        %v6544 = vsub.f32 %v6540, %v6394
        %v6545 = vsub.f32 %v6540, %v6399
        %v6546 = vsub.f32 %v6540, %v6404
        %v6547 = vsub.f32 %v6540, %v6409
        %v6548 = vsub.f32 %v6540, %v6414
        %v6549 = vsub.f32 %v6540, %v6419
        %v6550 = vsub.f32 %v6540, %v6424
        %v6551 = vsub.f32 %v6540, %v6429
        %v6552 = vsub.f32 %v6540, %v6434
        %v6553 = vsub.f32 %v6540, %v6439
        %v6554 = vsub.f32 %v6540, %v6444
        %v6555 = vsub.f32 %v6540, %v6449
        %v6556 = vsub.f32 %v6540, %v6454
        %v6557 = vsub.f32 %v6540, %v6459
        %v6558 = vsub.f32 %v6540, %v6464
        %v6559 = vsub.f32 %v6540, %v6469
        %v6560 = vsub.f32 %v6540, %v6474
        %v6561 = vsub.f32 %v6540, %v6479
        %v6562 = vsub.f32 %v6540, %v6484
        %v6563 = vsub.f32 %v6540, %v6489
        %v6564 = vsub.f32 %v6540, %v6494
        %v6565 = vsub.f32 %v6540, %v6499
        %v6566 = vsub.f32 %v6540, %v6504
        %v6567 = vsub.f32 %v6540, %v6509
        %v6568 = vsub.f32 %v6540, %v6514
        %v6569 = vsub.f32 %v6540, %v6519
        %v6570 = vsub.f32 %v6540, %v6524
        %v6571 = vsub.f32 %v6540, %v6529
        %v6572 = vsub.f32 %v6540, %v6534
        %v6573 = vmul.f32 %v5052, %v6026
        %v6574 = vmul.f32 %v5053, %v6031
        %v6575 = vmul.f32 %v5054, %v6036
        %v6576 = vmul.f32 %v5055, %v6041
        %v6577 = vmul.f32 %v5056, %v6046
        %v6578 = vmul.f32 %v5057, %v6051
        %v6579 = vmul.f32 %v5058, %v6056
        %v6580 = vmul.f32 %v5059, %v6061
        %v6581 = vmul.f32 %v5060, %v6066
        %v6582 = vmul.f32 %v5061, %v6071
        %v6583 = vmul.f32 %v5062, %v6076
        %v6584 = vmul.f32 %v5063, %v6081
        %v6585 = vmul.f32 %v5064, %v6086
        %v6586 = vmul.f32 %v5065, %v6091
        %v6587 = vmul.f32 %v5066, %v6096
        %v6588 = vmul.f32 %v5067, %v6101
        %v6589 = vmul.f32 %v5068, %v6106
        %v6590 = vmul.f32 %v5069, %v6111
        %v6591 = vmul.f32 %v5070, %v6116
        %v6592 = vmul.f32 %v5071, %v6121
        %v6593 = vmul.f32 %v5072, %v6126
        %v6594 = vmul.f32 %v5073, %v6131
        %v6595 = vmul.f32 %v5074, %v6136
        %v6596 = vmul.f32 %v5075, %v6141
        %v6597 = vmul.f32 %v5076, %v6146
        %v6598 = vmul.f32 %v5077, %v6151
        %v6599 = vmul.f32 %v5078, %v6156
        %v6600 = vmul.f32 %v5079, %v6161
        %v6601 = vmul.f32 %v5080, %v6166
        %v6602 = vmul.f32 %v5081, %v6171
        %v6603 = vmul.f32 %v5082, %v6176
        %v6604 = vmul.f32 %v5083, %v6181
        %v6605 = vadd.f32 %v913, %v6573
        %v6606 = vadd.f32 %v914, %v6574
        %v6607 = vadd.f32 %v915, %v6575
        %v6608 = vadd.f32 %v916, %v6576
        %v6609 = vadd.f32 %v917, %v6577
        %v6610 = vadd.f32 %v918, %v6578
        %v6611 = vadd.f32 %v919, %v6579
        %v6612 = vadd.f32 %v920, %v6580
        %v6613 = vadd.f32 %v921, %v6581
        %v6614 = vadd.f32 %v922, %v6582
        %v6615 = vadd.f32 %v923, %v6583
        %v6616 = vadd.f32 %v924, %v6584
        %v6617 = vadd.f32 %v925, %v6585
        %v6618 = vadd.f32 %v926, %v6586
        %v6619 = vadd.f32 %v927, %v6587
        %v6620 = vadd.f32 %v928, %v6588
        %v6621 = vadd.f32 %v929, %v6589
        %v6622 = vadd.f32 %v930, %v6590
        %v6623 = vadd.f32 %v931, %v6591
        %v6624 = vadd.f32 %v932, %v6592
        %v6625 = vadd.f32 %v933, %v6593
        %v6626 = vadd.f32 %v934, %v6594
        %v6627 = vadd.f32 %v935, %v6595
        %v6628 = vadd.f32 %v936, %v6596
        %v6629 = vadd.f32 %v937, %v6597
        %v6630 = vadd.f32 %v938, %v6598
        %v6631 = vadd.f32 %v939, %v6599
        %v6632 = vadd.f32 %v940, %v6600
        %v6633 = vadd.f32 %v941, %v6601
        %v6634 = vadd.f32 %v942, %v6602
        %v6635 = vadd.f32 %v943, %v6603
        %v6636 = vadd.f32 %v944, %v6604
        %v6637 = vadd.f32 %v6605, %v6541
        %v6638 = vadd.f32 %v6606, %v6542
        %v6639 = vadd.f32 %v6607, %v6543
        %v6640 = vadd.f32 %v6608, %v6544
        %v6641 = vadd.f32 %v6609, %v6545
        %v6642 = vadd.f32 %v6610, %v6546
        %v6643 = vadd.f32 %v6611, %v6547
        %v6644 = vadd.f32 %v6612, %v6548
        %v6645 = vadd.f32 %v6613, %v6549
        %v6646 = vadd.f32 %v6614, %v6550
        %v6647 = vadd.f32 %v6615, %v6551
        %v6648 = vadd.f32 %v6616, %v6552
        %v6649 = vadd.f32 %v6617, %v6553
        %v6650 = vadd.f32 %v6618, %v6554
        %v6651 = vadd.f32 %v6619, %v6555
        %v6652 = vadd.f32 %v6620, %v6556
        %v6653 = vadd.f32 %v6621, %v6557
        %v6654 = vadd.f32 %v6622, %v6558
        %v6655 = vadd.f32 %v6623, %v6559
        %v6656 = vadd.f32 %v6624, %v6560
        %v6657 = vadd.f32 %v6625, %v6561
        %v6658 = vadd.f32 %v6626, %v6562
        %v6659 = vadd.f32 %v6627, %v6563
        %v6660 = vadd.f32 %v6628, %v6564
        %v6661 = vadd.f32 %v6629, %v6565
        %v6662 = vadd.f32 %v6630, %v6566
        %v6663 = vadd.f32 %v6631, %v6567
        %v6664 = vadd.f32 %v6632, %v6568
        %v6665 = vadd.f32 %v6633, %v6569
        %v6666 = vadd.f32 %v6634, %v6570
        %v6667 = vadd.f32 %v6635, %v6571
        %v6668 = vadd.f32 %v6636, %v6572
        %v6669 = vadd.f32 %v2192, %v3859
        %v6670 = vadd.f32 %v2197, %v3864
        %v6671 = vadd.f32 %v2202, %v3869
        %v6672 = vadd.f32 %v2207, %v3874
        %v6673 = vadd.f32 %v2212, %v3879
        %v6674 = vadd.f32 %v2217, %v3884
        %v6675 = vadd.f32 %v2222, %v3889
        %v6676 = vadd.f32 %v2227, %v3894
        %v6677 = vadd.f32 %v2232, %v3899
        %v6678 = vadd.f32 %v2237, %v3904
        %v6679 = vadd.f32 %v2242, %v3909
        %v6680 = vadd.f32 %v2247, %v3914
        %v6681 = vadd.f32 %v2252, %v3919
        %v6682 = vadd.f32 %v2257, %v3924
        %v6683 = vadd.f32 %v2262, %v3929
        %v6684 = vadd.f32 %v2267, %v3934
        %v6685 = vadd.f32 %v2272, %v3939
        %v6686 = vadd.f32 %v2277, %v3944
        %v6687 = vadd.f32 %v2282, %v3949
        %v6688 = vadd.f32 %v2287, %v3954
        %v6689 = vadd.f32 %v2292, %v3959
        %v6690 = vadd.f32 %v2297, %v3964
        %v6691 = vadd.f32 %v2302, %v3969
        %v6692 = vadd.f32 %v2307, %v3974
        %v6693 = vadd.f32 %v2312, %v3979
        %v6694 = vadd.f32 %v2317, %v3984
        %v6695 = vadd.f32 %v2322, %v3989
        %v6696 = vadd.f32 %v2327, %v3994
        %v6697 = vadd.f32 %v2332, %v3999
        %v6698 = vadd.f32 %v2337, %v4004
        %v6699 = vadd.f32 %v2342, %v4009
        %v6700 = vadd.f32 %v2347, %v4014
        %v6701 = vadd.f32 %v2352, %v4019
        %v6702 = vadd.f32 %v2357, %v4024
        %v6703 = vadd.f32 %v2362, %v4029
        %v6704 = vadd.f32 %v2367, %v4034
        %v6705 = vadd.f32 %v2372, %v4039
        %v6706 = vadd.f32 %v2377, %v4044
        %v6707 = vadd.f32 %v2382, %v4049
        %v6708 = vadd.f32 %v2387, %v4054
        %v6709 = vadd.f32 %v2392, %v4059
        %v6710 = vadd.f32 %v2397, %v4064
        %v6711 = vadd.f32 %v2402, %v4069
        %v6712 = vadd.f32 %v2407, %v4074
        %v6713 = vadd.f32 %v2412, %v4079
        %v6714 = vadd.f32 %v2417, %v4084
        %v6715 = vadd.f32 %v2422, %v4089
        %v6716 = vadd.f32 %v2427, %v4094
        %v6717 = vadd.f32 %v2432, %v4099
        %v6718 = vadd.f32 %v2437, %v4104
        %v6719 = vadd.f32 %v2442, %v4109
        %v6720 = vadd.f32 %v2447, %v4114
        %v6721 = vadd.f32 %v2452, %v4119
        %v6722 = vadd.f32 %v2457, %v4124
        %v6723 = vadd.f32 %v2462, %v4129
        %v6724 = vadd.f32 %v2467, %v4134
        %v6725 = vadd.f32 %v2472, %v4139
        %v6726 = vadd.f32 %v2477, %v4144
        %v6727 = vadd.f32 %v2482, %v4149
        %v6728 = vadd.f32 %v2487, %v4154
        %v6729 = vadd.f32 %v2492, %v4159
        %v6730 = vadd.f32 %v2497, %v4164
        %v6731 = vadd.f32 %v2502, %v4169
        %v6732 = vadd.f32 %v2507, %v4174
        %v6733 = vadd.f32 %v2512, %v4179
        %v6734 = vadd.f32 %v2517, %v4184
        %v6735 = vadd.f32 %v2522, %v4189
        %v6736 = vadd.f32 %v2527, %v4194
        %v6737 = vadd.f32 %v2532, %v4199
        %v6738 = vadd.f32 %v2537, %v4204
        %v6739 = vadd.f32 %v2542, %v4209
        %v6740 = vadd.f32 %v2547, %v4214
        %v6741 = vadd.f32 %v2552, %v4219
        %v6742 = vadd.f32 %v2557, %v4224
        %v6743 = vadd.f32 %v2562, %v4229
        %v6744 = vadd.f32 %v2567, %v4234
        %v6745 = vadd.f32 %v2572, %v4239
        %v6746 = vadd.f32 %v2577, %v4244
        %v6747 = vadd.f32 %v2582, %v4249
        %v6748 = vadd.f32 %v2587, %v4254
        %v6749 = vadd.f32 %v2592, %v4259
        %v6750 = vadd.f32 %v2597, %v4264
        %v6751 = vadd.f32 %v2602, %v4269
        %v6752 = vadd.f32 %v2607, %v4274
        %v6753 = vadd.f32 %v2612, %v4279
        %v6754 = vadd.f32 %v2617, %v4284
        %v6755 = vadd.f32 %v2622, %v4289
        %v6756 = vadd.f32 %v2627, %v4294
        %v6757 = vadd.f32 %v2632, %v4299
        %v6758 = vadd.f32 %v2637, %v4304
        %v6759 = vadd.f32 %v2642, %v4309
        %v6760 = vadd.f32 %v2647, %v4314
        %v6761 = vadd.f32 %v2652, %v4319
        %v6762 = vadd.f32 %v2657, %v4324
        %v6763 = vadd.f32 %v2662, %v4329
        %v6764 = vadd.f32 %v2667, %v4334
        %v6765 = vmul.f32 %v6669, %v6669
        %v6766 = vmul.f32 %v6670, %v6670
        %v6767 = vmul.f32 %v6671, %v6671
        %v6768 = vmul.f32 %v6672, %v6672
        %v6769 = vmul.f32 %v6673, %v6673
        %v6770 = vmul.f32 %v6674, %v6674
        %v6771 = vmul.f32 %v6675, %v6675
        %v6772 = vmul.f32 %v6676, %v6676
        %v6773 = vmul.f32 %v6677, %v6677
        %v6774 = vmul.f32 %v6678, %v6678
        %v6775 = vmul.f32 %v6679, %v6679
        %v6776 = vmul.f32 %v6680, %v6680
        %v6777 = vmul.f32 %v6681, %v6681
        %v6778 = vmul.f32 %v6682, %v6682
        %v6779 = vmul.f32 %v6683, %v6683
        %v6780 = vmul.f32 %v6684, %v6684
        %v6781 = vmul.f32 %v6685, %v6685
        %v6782 = vmul.f32 %v6686, %v6686
        %v6783 = vmul.f32 %v6687, %v6687
        %v6784 = vmul.f32 %v6688, %v6688
        %v6785 = vmul.f32 %v6689, %v6689
        %v6786 = vmul.f32 %v6690, %v6690
        %v6787 = vmul.f32 %v6691, %v6691
        %v6788 = vmul.f32 %v6692, %v6692
        %v6789 = vmul.f32 %v6693, %v6693
        %v6790 = vmul.f32 %v6694, %v6694
        %v6791 = vmul.f32 %v6695, %v6695
        %v6792 = vmul.f32 %v6696, %v6696
        %v6793 = vmul.f32 %v6697, %v6697
        %v6794 = vmul.f32 %v6698, %v6698
        %v6795 = vmul.f32 %v6699, %v6699
        %v6796 = vmul.f32 %v6700, %v6700
        %v6797 = vmul.f32 %v6701, %v6701
        %v6798 = vmul.f32 %v6702, %v6702
        %v6799 = vmul.f32 %v6703, %v6703
        %v6800 = vmul.f32 %v6704, %v6704
        %v6801 = vmul.f32 %v6705, %v6705
        %v6802 = vmul.f32 %v6706, %v6706
        %v6803 = vmul.f32 %v6707, %v6707
        %v6804 = vmul.f32 %v6708, %v6708
        %v6805 = vmul.f32 %v6709, %v6709
        %v6806 = vmul.f32 %v6710, %v6710
        %v6807 = vmul.f32 %v6711, %v6711
        %v6808 = vmul.f32 %v6712, %v6712
        %v6809 = vmul.f32 %v6713, %v6713
        %v6810 = vmul.f32 %v6714, %v6714
        %v6811 = vmul.f32 %v6715, %v6715
        %v6812 = vmul.f32 %v6716, %v6716
        %v6813 = vmul.f32 %v6717, %v6717
        %v6814 = vmul.f32 %v6718, %v6718
        %v6815 = vmul.f32 %v6719, %v6719
        %v6816 = vmul.f32 %v6720, %v6720
        %v6817 = vmul.f32 %v6721, %v6721
        %v6818 = vmul.f32 %v6722, %v6722
        %v6819 = vmul.f32 %v6723, %v6723
        %v6820 = vmul.f32 %v6724, %v6724
        %v6821 = vmul.f32 %v6725, %v6725
        %v6822 = vmul.f32 %v6726, %v6726
        %v6823 = vmul.f32 %v6727, %v6727
        %v6824 = vmul.f32 %v6728, %v6728
        %v6825 = vmul.f32 %v6729, %v6729
        %v6826 = vmul.f32 %v6730, %v6730
        %v6827 = vmul.f32 %v6731, %v6731
        %v6828 = vmul.f32 %v6732, %v6732
        %v6829 = vadd.f32 %v6765, %v6797
        %v6830 = vadd.f32 %v6766, %v6798
        %v6831 = vadd.f32 %v6767, %v6799
        %v6832 = vadd.f32 %v6768, %v6800
        %v6833 = vadd.f32 %v6769, %v6801
        %v6834 = vadd.f32 %v6770, %v6802
        %v6835 = vadd.f32 %v6771, %v6803
        %v6836 = vadd.f32 %v6772, %v6804
        %v6837 = vadd.f32 %v6773, %v6805
        %v6838 = vadd.f32 %v6774, %v6806
        %v6839 = vadd.f32 %v6775, %v6807
        %v6840 = vadd.f32 %v6776, %v6808
        %v6841 = vadd.f32 %v6777, %v6809
        %v6842 = vadd.f32 %v6778, %v6810
        %v6843 = vadd.f32 %v6779, %v6811
        %v6844 = vadd.f32 %v6780, %v6812
        %v6845 = vadd.f32 %v6781, %v6813
        %v6846 = vadd.f32 %v6782, %v6814
        %v6847 = vadd.f32 %v6783, %v6815
        %v6848 = vadd.f32 %v6784, %v6816
        %v6849 = vadd.f32 %v6785, %v6817
        %v6850 = vadd.f32 %v6786, %v6818
        %v6851 = vadd.f32 %v6787, %v6819
        %v6852 = vadd.f32 %v6788, %v6820
        %v6853 = vadd.f32 %v6789, %v6821
        %v6854 = vadd.f32 %v6790, %v6822
        %v6855 = vadd.f32 %v6791, %v6823
        %v6856 = vadd.f32 %v6792, %v6824
        %v6857 = vadd.f32 %v6793, %v6825
        %v6858 = vadd.f32 %v6794, %v6826
        %v6859 = vadd.f32 %v6795, %v6827
        %v6860 = vadd.f32 %v6796, %v6828
        %v6861 = vmul.f32 %v6733, %v6733
        %v6862 = vmul.f32 %v6734, %v6734
        %v6863 = vmul.f32 %v6735, %v6735
        %v6864 = vmul.f32 %v6736, %v6736
        %v6865 = vmul.f32 %v6737, %v6737
        %v6866 = vmul.f32 %v6738, %v6738
        %v6867 = vmul.f32 %v6739, %v6739
        %v6868 = vmul.f32 %v6740, %v6740
        %v6869 = vmul.f32 %v6741, %v6741
        %v6870 = vmul.f32 %v6742, %v6742
        %v6871 = vmul.f32 %v6743, %v6743
        %v6872 = vmul.f32 %v6744, %v6744
        %v6873 = vmul.f32 %v6745, %v6745
        %v6874 = vmul.f32 %v6746, %v6746
        %v6875 = vmul.f32 %v6747, %v6747
        %v6876 = vmul.f32 %v6748, %v6748
        %v6877 = vmul.f32 %v6749, %v6749
        %v6878 = vmul.f32 %v6750, %v6750
        %v6879 = vmul.f32 %v6751, %v6751
        %v6880 = vmul.f32 %v6752, %v6752
        %v6881 = vmul.f32 %v6753, %v6753
        %v6882 = vmul.f32 %v6754, %v6754
        %v6883 = vmul.f32 %v6755, %v6755
        %v6884 = vmul.f32 %v6756, %v6756
        %v6885 = vmul.f32 %v6757, %v6757
        %v6886 = vmul.f32 %v6758, %v6758
        %v6887 = vmul.f32 %v6759, %v6759
        %v6888 = vmul.f32 %v6760, %v6760
        %v6889 = vmul.f32 %v6761, %v6761
        %v6890 = vmul.f32 %v6762, %v6762
        %v6891 = vmul.f32 %v6763, %v6763
        %v6892 = vmul.f32 %v6764, %v6764
        %v6893 = vadd.f32 %v6829, %v6861
        %v6894 = vadd.f32 %v6830, %v6862
        %v6895 = vadd.f32 %v6831, %v6863
        %v6896 = vadd.f32 %v6832, %v6864
        %v6897 = vadd.f32 %v6833, %v6865
        %v6898 = vadd.f32 %v6834, %v6866
        %v6899 = vadd.f32 %v6835, %v6867
        %v6900 = vadd.f32 %v6836, %v6868
        %v6901 = vadd.f32 %v6837, %v6869
        %v6902 = vadd.f32 %v6838, %v6870
        %v6903 = vadd.f32 %v6839, %v6871
        %v6904 = vadd.f32 %v6840, %v6872
        %v6905 = vadd.f32 %v6841, %v6873
        %v6906 = vadd.f32 %v6842, %v6874
        %v6907 = vadd.f32 %v6843, %v6875
        %v6908 = vadd.f32 %v6844, %v6876
        %v6909 = vadd.f32 %v6845, %v6877
        %v6910 = vadd.f32 %v6846, %v6878
        %v6911 = vadd.f32 %v6847, %v6879
        %v6912 = vadd.f32 %v6848, %v6880
        %v6913 = vadd.f32 %v6849, %v6881
        %v6914 = vadd.f32 %v6850, %v6882
        %v6915 = vadd.f32 %v6851, %v6883
        %v6916 = vadd.f32 %v6852, %v6884
        %v6917 = vadd.f32 %v6853, %v6885
        %v6918 = vadd.f32 %v6854, %v6886
        %v6919 = vadd.f32 %v6855, %v6887
        %v6920 = vadd.f32 %v6856, %v6888
        %v6921 = vadd.f32 %v6857, %v6889
        %v6922 = vadd.f32 %v6858, %v6890
        %v6923 = vadd.f32 %v6859, %v6891
        %v6924 = vadd.f32 %v6860, %v6892
        %v6925 = vld [vmem:[%s10] sm:$0xff]
        %v6926 = vld [vmem:[%s10 + $0x8] sm:$0xff]
        %v6928 = vsel %vm1836, %v6893, 0
        %v6931 = vsel %vm1836, %v6894, 0
        %v6934 = vsel %vm1836, %v6895, 0
        %v6937 = vsel %vm1836, %v6896, 0
        %v6940 = vsel %vm1836, %v6897, 0
        %v6943 = vsel %vm1836, %v6898, 0
        %v6946 = vsel %vm1836, %v6899, 0
        %v6949 = vsel %vm1836, %v6900, 0
        %v6952 = vsel %vm1836, %v6901, 0
        %v6955 = vsel %vm1836, %v6902, 0
        %v6958 = vsel %vm1836, %v6903, 0
        %v6961 = vsel %vm1836, %v6904, 0
        %v6964 = vsel %vm1836, %v6905, 0
        %v6967 = vsel %vm1836, %v6906, 0
        %v6970 = vsel %vm1836, %v6907, 0
        %v6973 = vsel %vm1836, %v6908, 0
        %v6976 = vsel %vm1836, %v6909, 0
        %v6979 = vsel %vm1836, %v6910, 0
        %v6982 = vsel %vm1836, %v6911, 0
        %v6985 = vsel %vm1836, %v6912, 0
        %v6988 = vsel %vm1836, %v6913, 0
        %v6991 = vsel %vm1836, %v6914, 0
        %v6994 = vsel %vm1836, %v6915, 0
        %v6997 = vsel %vm1836, %v6916, 0
        %v7000 = vsel %vm1836, %v6917, 0
        %v7003 = vsel %vm1836, %v6918, 0
        %v7006 = vsel %vm1836, %v6919, 0
        %v7009 = vsel %vm1836, %v6920, 0
        %v7012 = vsel %vm1836, %v6921, 0
        %v7015 = vsel %vm1836, %v6922, 0
        %v7018 = vsel %vm1836, %v6923, 0
        %v7021 = vsel %vm1836, %v6924, 0
        %7023 = vmatprep.subr.mxu0 0.0
        %7024 = vmatpush1.msra.mxu0 %v6925
        %7025 = vmatprep.subr.mxu0 0.0
        %7026 = vmatpush1.msra.mxu0 %v6926
        %7027 = vmatprep.subr.mxu0 0.0
        %7028 = vmatpush1.msra.mxu0 0.0
        %7029 = vmatprep.subr.mxu0 0.0
        %7030 = vmatpush1.msra.mxu0 0.0
        %7031 = vmatprep.subr.mxu0 0.0
        %7032 = vmatpush1.msra.mxu0 0.0
        %7033 = vmatprep.subr.mxu0 0.0
        %7034 = vmatpush1.msra.mxu0 0.0
        %7035 = vmatprep.subr.mxu0 0.0
        %7036 = vmatpush1.msra.mxu0 0.0
        %7037 = vmatprep.subr.mxu0 0.0
        %7038 = vmatpush1.msra.mxu0 0.0
        %7039 = vmatprep.subr.mxu0 0.0
        %7040 = vmatpush1.msra.mxu0 0.0
        %7041 = vmatprep.subr.mxu0 0.0
        %7042 = vmatpush1.msra.mxu0 0.0
        %7043 = vmatprep.subr.mxu0 0.0
        %7044 = vmatpush1.msra.mxu0 0.0
        %7045 = vmatprep.subr.mxu0 0.0
        %7046 = vmatpush1.msra.mxu0 0.0
        %7047 = vmatprep.subr.mxu0 0.0
        %7048 = vmatpush1.msra.mxu0 0.0
        %7049 = vmatprep.subr.mxu0 0.0
        %7050 = vmatpush1.msra.mxu0 0.0
        %7051 = vmatprep.subr.mxu0 0.0
        %7052 = vmatpush1.msra.mxu0 0.0
        %7053 = vmatprep.subr.mxu0 0.0
        %7054 = vmatpush1.msra.mxu0 0.0
        %7055 = vmatprep.subr.mxu0 0.0
        %7056 = vmatpush1.msra.mxu0 0.0
        %7057 = vmatprep.subr.mxu0 0.0
        %7058 = vmatpush1.msra.mxu0 0.0
        %7059 = vmatprep.subr.mxu0 0.0
        %7060 = vmatpush1.msra.mxu0 0.0
        %7061 = vmatprep.subr.mxu0 0.0
        %7062 = vmatpush1.msra.mxu0 0.0
        %7063 = vmatprep.subr.mxu0 0.0
        %7064 = vmatpush1.msra.mxu0 0.0
        %7065 = vmatprep.subr.mxu0 0.0
        %7066 = vmatpush1.msra.mxu0 0.0
        %7067 = vmatprep.subr.mxu0 0.0
        %7068 = vmatpush1.msra.mxu0 0.0
        %7069 = vmatprep.subr.mxu0 0.0
        %7070 = vmatpush1.msra.mxu0 0.0
        %7071 = vmatprep.subr.mxu0 0.0
        %7072 = vmatpush1.msra.mxu0 0.0
        %7073 = vmatprep.subr.mxu0 0.0
        %7074 = vmatpush1.msra.mxu0 0.0
        %7075 = vmatprep.subr.mxu0 0.0
        %7076 = vmatpush1.msra.mxu0 0.0
        %7077 = vmatprep.subr.mxu0 0.0
        %7078 = vmatpush1.msra.mxu0 0.0
        %7079 = vmatprep.subr.mxu0 0.0
        %7080 = vmatpush1.msra.mxu0 0.0
        %7081 = vmatprep.subr.mxu0 0.0
        %7082 = vmatpush1.msra.mxu0 0.0
        %7083 = vmatprep.subr.mxu0 0.0
        %7084 = vmatpush1.msra.mxu0 0.0
        %7085 = vmatprep.subr.mxu0 0.0
        %7086 = vmatpush1.msra.mxu0 0.0
        %7087 = vmatprep.mubr.f32.mxu0 0.0
        %7088 = vmatmul.mubr.f32.gmra.mrb[0].mxu0 %v6928
        %v7089 = vpop.f32.mrb[0].mxu0
        %v7090 = vadd.f32 1e-05, %v7089
        %v7091 = vpop.f32.mrb[0].mxu0
        %7092 = vmatprep.mubr.f32.mxu0 0.0
        %7093 = vmatmul.mubr.f32.gmra.mrb[0].mxu0 %v6931
        %v7094 = vpop.f32.mrb[0].mxu0
        %v7095 = vadd.f32 1e-05, %v7094
        %v7096 = vpop.f32.mrb[0].mxu0
        %7097 = vmatprep.mubr.f32.mxu0 0.0
        %7098 = vmatmul.mubr.f32.gmra.mrb[0].mxu0 %v6934
        %v7099 = vpop.f32.mrb[0].mxu0
        %v7100 = vadd.f32 1e-05, %v7099
        %v7101 = vpop.f32.mrb[0].mxu0
        %7102 = vmatprep.mubr.f32.mxu0 0.0
        %7103 = vmatmul.mubr.f32.gmra.mrb[0].mxu0 %v6937
        %v7104 = vpop.f32.mrb[0].mxu0
        %v7105 = vadd.f32 1e-05, %v7104
        %v7106 = vpop.f32.mrb[0].mxu0
        %7107 = vmatprep.mubr.f32.mxu0 0.0
        %7108 = vmatmul.mubr.f32.gmra.mrb[0].mxu0 %v6940
        %v7109 = vpop.f32.mrb[0].mxu0
        %v7110 = vadd.f32 1e-05, %v7109
        %v7111 = vpop.f32.mrb[0].mxu0
        %7112 = vmatprep.mubr.f32.mxu0 0.0
        %7113 = vmatmul.mubr.f32.gmra.mrb[0].mxu0 %v6943
        %v7114 = vpop.f32.mrb[0].mxu0
        %v7115 = vadd.f32 1e-05, %v7114
        %v7116 = vpop.f32.mrb[0].mxu0
        %7117 = vmatprep.mubr.f32.mxu0 0.0
        %7118 = vmatmul.mubr.f32.gmra.mrb[0].mxu0 %v6946
        %v7119 = vpop.f32.mrb[0].mxu0
        %v7120 = vadd.f32 1e-05, %v7119
        %v7121 = vpop.f32.mrb[0].mxu0
        %7122 = vmatprep.mubr.f32.mxu0 0.0
        %7123 = vmatmul.mubr.f32.gmra.mrb[0].mxu0 %v6949
        %v7124 = vpop.f32.mrb[0].mxu0
        %v7125 = vadd.f32 1e-05, %v7124
        %v7126 = vpop.f32.mrb[0].mxu0
        %7127 = vmatprep.mubr.f32.mxu0 0.0
        %7128 = vmatmul.mubr.f32.gmra.mrb[0].mxu0 %v6952
        %v7129 = vpop.f32.mrb[0].mxu0
        %v7130 = vadd.f32 1e-05, %v7129
        %v7131 = vpop.f32.mrb[0].mxu0
        %7132 = vmatprep.mubr.f32.mxu0 0.0
        %7133 = vmatmul.mubr.f32.gmra.mrb[0].mxu0 %v6955
        %v7134 = vpop.f32.mrb[0].mxu0
        %v7135 = vadd.f32 1e-05, %v7134
        %v7136 = vpop.f32.mrb[0].mxu0
        %7137 = vmatprep.mubr.f32.mxu0 0.0
        %7138 = vmatmul.mubr.f32.gmra.mrb[0].mxu0 %v6958
        %v7139 = vpop.f32.mrb[0].mxu0
        %v7140 = vadd.f32 1e-05, %v7139
        %v7141 = vpop.f32.mrb[0].mxu0
        %7142 = vmatprep.mubr.f32.mxu0 0.0
        %7143 = vmatmul.mubr.f32.gmra.mrb[0].mxu0 %v6961
        %v7144 = vpop.f32.mrb[0].mxu0
        %v7145 = vadd.f32 1e-05, %v7144
        %v7146 = vpop.f32.mrb[0].mxu0
        %7147 = vmatprep.mubr.f32.mxu0 0.0
        %7148 = vmatmul.mubr.f32.gmra.mrb[0].mxu0 %v6964
        %v7149 = vpop.f32.mrb[0].mxu0
        %v7150 = vadd.f32 1e-05, %v7149
        %v7151 = vpop.f32.mrb[0].mxu0
        %7152 = vmatprep.mubr.f32.mxu0 0.0
        %7153 = vmatmul.mubr.f32.gmra.mrb[0].mxu0 %v6967
        %v7154 = vpop.f32.mrb[0].mxu0
        %v7155 = vadd.f32 1e-05, %v7154
        %v7156 = vpop.f32.mrb[0].mxu0
        %7157 = vmatprep.mubr.f32.mxu0 0.0
        %7158 = vmatmul.mubr.f32.gmra.mrb[0].mxu0 %v6970
        %v7159 = vpop.f32.mrb[0].mxu0
        %v7160 = vadd.f32 1e-05, %v7159
        %v7161 = vpop.f32.mrb[0].mxu0
        %7162 = vmatprep.mubr.f32.mxu0 0.0
        %7163 = vmatmul.mubr.f32.gmra.mrb[0].mxu0 %v6973
        %v7164 = vpop.f32.mrb[0].mxu0
        %v7165 = vadd.f32 1e-05, %v7164
        %v7166 = vpop.f32.mrb[0].mxu0
        %7167 = vmatprep.mubr.f32.mxu0 0.0
        %7168 = vmatmul.mubr.f32.gmra.mrb[0].mxu0 %v6976
        %v7169 = vpop.f32.mrb[0].mxu0
        %v7170 = vadd.f32 1e-05, %v7169
        %v7171 = vpop.f32.mrb[0].mxu0
        %7172 = vmatprep.mubr.f32.mxu0 0.0
        %7173 = vmatmul.mubr.f32.gmra.mrb[0].mxu0 %v6979
        %v7174 = vpop.f32.mrb[0].mxu0
        %v7175 = vadd.f32 1e-05, %v7174
        %v7176 = vpop.f32.mrb[0].mxu0
        %7177 = vmatprep.mubr.f32.mxu0 0.0
        %7178 = vmatmul.mubr.f32.gmra.mrb[0].mxu0 %v6982
        %v7179 = vpop.f32.mrb[0].mxu0
        %v7180 = vadd.f32 1e-05, %v7179
        %v7181 = vpop.f32.mrb[0].mxu0
        %7182 = vmatprep.mubr.f32.mxu0 0.0
        %7183 = vmatmul.mubr.f32.gmra.mrb[0].mxu0 %v6985
        %v7184 = vpop.f32.mrb[0].mxu0
        %v7185 = vadd.f32 1e-05, %v7184
        %v7186 = vpop.f32.mrb[0].mxu0
        %7187 = vmatprep.mubr.f32.mxu0 0.0
        %7188 = vmatmul.mubr.f32.gmra.mrb[0].mxu0 %v6988
        %v7189 = vpop.f32.mrb[0].mxu0
        %v7190 = vadd.f32 1e-05, %v7189
        %v7191 = vpop.f32.mrb[0].mxu0
        %7192 = vmatprep.mubr.f32.mxu0 0.0
        %7193 = vmatmul.mubr.f32.gmra.mrb[0].mxu0 %v6991
        %v7194 = vpop.f32.mrb[0].mxu0
        %v7195 = vadd.f32 1e-05, %v7194
        %v7196 = vpop.f32.mrb[0].mxu0
        %7197 = vmatprep.mubr.f32.mxu0 0.0
        %7198 = vmatmul.mubr.f32.gmra.mrb[0].mxu0 %v6994
        %v7199 = vpop.f32.mrb[0].mxu0
        %v7200 = vadd.f32 1e-05, %v7199
        %v7201 = vpop.f32.mrb[0].mxu0
        %7202 = vmatprep.mubr.f32.mxu0 0.0
        %7203 = vmatmul.mubr.f32.gmra.mrb[0].mxu0 %v6997
        %v7204 = vpop.f32.mrb[0].mxu0
        %v7205 = vadd.f32 1e-05, %v7204
        %v7206 = vpop.f32.mrb[0].mxu0
        %7207 = vmatprep.mubr.f32.mxu0 0.0
        %7208 = vmatmul.mubr.f32.gmra.mrb[0].mxu0 %v7000
        %v7209 = vpop.f32.mrb[0].mxu0
        %v7210 = vadd.f32 1e-05, %v7209
        %v7211 = vpop.f32.mrb[0].mxu0
        %7212 = vmatprep.mubr.f32.mxu0 0.0
        %7213 = vmatmul.mubr.f32.gmra.mrb[0].mxu0 %v7003
        %v7214 = vpop.f32.mrb[0].mxu0
        %v7215 = vadd.f32 1e-05, %v7214
        %v7216 = vpop.f32.mrb[0].mxu0
        %7217 = vmatprep.mubr.f32.mxu0 0.0
        %7218 = vmatmul.mubr.f32.gmra.mrb[0].mxu0 %v7006
        %v7219 = vpop.f32.mrb[0].mxu0
        %v7220 = vadd.f32 1e-05, %v7219
        %v7221 = vpop.f32.mrb[0].mxu0
        %7222 = vmatprep.mubr.f32.mxu0 0.0
        %7223 = vmatmul.mubr.f32.gmra.mrb[0].mxu0 %v7009
        %v7224 = vpop.f32.mrb[0].mxu0
        %v7225 = vadd.f32 1e-05, %v7224
        %v7226 = vpop.f32.mrb[0].mxu0
        %7227 = vmatprep.mubr.f32.mxu0 0.0
        %7228 = vmatmul.mubr.f32.gmra.mrb[0].mxu0 %v7012
        %v7229 = vpop.f32.mrb[0].mxu0
        %v7230 = vadd.f32 1e-05, %v7229
        %v7231 = vpop.f32.mrb[0].mxu0
        %7232 = vmatprep.mubr.f32.mxu0 0.0
        %7233 = vmatmul.mubr.f32.gmra.mrb[0].mxu0 %v7015
        %v7234 = vpop.f32.mrb[0].mxu0
        %v7235 = vadd.f32 1e-05, %v7234
        %v7236 = vpop.f32.mrb[0].mxu0
        %7237 = vmatprep.mubr.f32.mxu0 0.0
        %7238 = vmatmul.mubr.f32.gmra.mrb[0].mxu0 %v7018
        %v7239 = vpop.f32.mrb[0].mxu0
        %v7240 = vadd.f32 1e-05, %v7239
        %v7241 = vpop.f32.mrb[0].mxu0
        %7242 = vmatprep.mubr.f32.mxu0 0.0
        %7243 = vmatmul.mubr.f32.gmra.mrb[0].mxu0 %v7021
        %v7244 = vpop.f32.mrb[0].mxu0
        %v7245 = vadd.f32 1e-05, %v7244
        %v7246 = vpop.f32.mrb[0].mxu0
        %7247 = vdwg.mxu0
        %v7248 = vrsqrt.pop %v7090
        %v7249 = vrsqrt.pop %v7095
        %v7250 = vrsqrt.pop %v7100
        %v7251 = vrsqrt.pop %v7105
        %v7252 = vrsqrt.pop %v7110
        %v7253 = vrsqrt.pop %v7115
        %v7254 = vrsqrt.pop %v7120
        %v7255 = vrsqrt.pop %v7125
        %v7256 = vrsqrt.pop %v7130
        %v7257 = vrsqrt.pop %v7135
        %v7258 = vrsqrt.pop %v7140
        %v7259 = vrsqrt.pop %v7145
        %v7260 = vrsqrt.pop %v7150
        %v7261 = vrsqrt.pop %v7155
        %v7262 = vrsqrt.pop %v7160
        %v7263 = vrsqrt.pop %v7165
        %v7264 = vrsqrt.pop %v7170
        %v7265 = vrsqrt.pop %v7175
        %v7266 = vrsqrt.pop %v7180
        %v7267 = vrsqrt.pop %v7185
        %v7268 = vrsqrt.pop %v7190
        %v7269 = vrsqrt.pop %v7195
        %v7270 = vrsqrt.pop %v7200
        %v7271 = vrsqrt.pop %v7205
        %v7272 = vrsqrt.pop %v7210
        %v7273 = vrsqrt.pop %v7215
        %v7274 = vrsqrt.pop %v7220
        %v7275 = vrsqrt.pop %v7225
        %v7276 = vrsqrt.pop %v7230
        %v7277 = vrsqrt.pop %v7235
        %v7278 = vrsqrt.pop %v7240
        %v7279 = vrsqrt.pop %v7245
        %v7280 = vld [vmem:[%s11] sm:$0xf]
        %v7282 = vsel %vm5858, %v7248, 0
        %v7285 = vsel %vm5858, %v7249, 0
        %v7288 = vsel %vm5858, %v7250, 0
        %v7291 = vsel %vm5858, %v7251, 0
        %v7294 = vsel %vm5858, %v7252, 0
        %v7297 = vsel %vm5858, %v7253, 0
        %v7300 = vsel %vm5858, %v7254, 0
        %v7303 = vsel %vm5858, %v7255, 0
        %v7306 = vsel %vm5858, %v7256, 0
        %v7309 = vsel %vm5858, %v7257, 0
        %v7312 = vsel %vm5858, %v7258, 0
        %v7315 = vsel %vm5858, %v7259, 0
        %v7318 = vsel %vm5858, %v7260, 0
        %v7321 = vsel %vm5858, %v7261, 0
        %v7324 = vsel %vm5858, %v7262, 0
        %v7327 = vsel %vm5858, %v7263, 0
        %v7330 = vsel %vm5858, %v7264, 0
        %v7333 = vsel %vm5858, %v7265, 0
        %v7336 = vsel %vm5858, %v7266, 0
        %v7339 = vsel %vm5858, %v7267, 0
        %v7342 = vsel %vm5858, %v7268, 0
        %v7345 = vsel %vm5858, %v7269, 0
        %v7348 = vsel %vm5858, %v7270, 0
        %v7351 = vsel %vm5858, %v7271, 0
        %v7354 = vsel %vm5858, %v7272, 0
        %v7357 = vsel %vm5858, %v7273, 0
        %v7360 = vsel %vm5858, %v7274, 0
        %v7363 = vsel %vm5858, %v7275, 0
        %v7366 = vsel %vm5858, %v7276, 0
        %v7369 = vsel %vm5858, %v7277, 0
        %v7372 = vsel %vm5858, %v7278, 0
        %v7375 = vsel %vm5858, %v7279, 0
        %v7378 = vsel %vm5955, %v7280, 0
        %7380 = vmatprep.subr.mxu0 0.0
        %7381 = vmatpush1.msra.mxu0 %v7378
        %7382 = vmatprep.subr.mxu0 0.0
        %7383 = vmatpush1.msra.mxu0 0.0
        %7384 = vmatprep.subr.mxu0 0.0
        %7385 = vmatpush1.msra.mxu0 0.0
        %7386 = vmatprep.subr.mxu0 0.0
        %7387 = vmatpush1.msra.mxu0 0.0
        %7388 = vmatprep.subr.mxu0 0.0
        %7389 = vmatpush1.msra.mxu0 0.0
        %7390 = vmatprep.subr.mxu0 0.0
        %7391 = vmatpush1.msra.mxu0 0.0
        %7392 = vmatprep.subr.mxu0 0.0
        %7393 = vmatpush1.msra.mxu0 0.0
        %7394 = vmatprep.subr.mxu0 0.0
        %7395 = vmatpush1.msra.mxu0 0.0
        %7396 = vmatprep.subr.mxu0 0.0
        %7397 = vmatpush1.msra.mxu0 0.0
        %7398 = vmatprep.subr.mxu0 0.0
        %7399 = vmatpush1.msra.mxu0 0.0
        %7400 = vmatprep.subr.mxu0 0.0
        %7401 = vmatpush1.msra.mxu0 0.0
        %7402 = vmatprep.subr.mxu0 0.0
        %7403 = vmatpush1.msra.mxu0 0.0
        %7404 = vmatprep.subr.mxu0 0.0
        %7405 = vmatpush1.msra.mxu0 0.0
        %7406 = vmatprep.subr.mxu0 0.0
        %7407 = vmatpush1.msra.mxu0 0.0
        %7408 = vmatprep.subr.mxu0 0.0
        %7409 = vmatpush1.msra.mxu0 0.0
        %7410 = vmatprep.subr.mxu0 0.0
        %7411 = vmatpush1.msra.mxu0 0.0
        %7412 = vmatprep.subr.mxu0 0.0
        %7413 = vmatpush1.msra.mxu0 0.0
        %7414 = vmatprep.subr.mxu0 0.0
        %7415 = vmatpush1.msra.mxu0 0.0
        %7416 = vmatprep.subr.mxu0 0.0
        %7417 = vmatpush1.msra.mxu0 0.0
        %7418 = vmatprep.subr.mxu0 0.0
        %7419 = vmatpush1.msra.mxu0 0.0
        %7420 = vmatprep.subr.mxu0 0.0
        %7421 = vmatpush1.msra.mxu0 0.0
        %7422 = vmatprep.subr.mxu0 0.0
        %7423 = vmatpush1.msra.mxu0 0.0
        %7424 = vmatprep.subr.mxu0 0.0
        %7425 = vmatpush1.msra.mxu0 0.0
        %7426 = vmatprep.subr.mxu0 0.0
        %7427 = vmatpush1.msra.mxu0 0.0
        %7428 = vmatprep.subr.mxu0 0.0
        %7429 = vmatpush1.msra.mxu0 0.0
        %7430 = vmatprep.subr.mxu0 0.0
        %7431 = vmatpush1.msra.mxu0 0.0
        %7432 = vmatprep.subr.mxu0 0.0
        %7433 = vmatpush1.msra.mxu0 0.0
        %7434 = vmatprep.subr.mxu0 0.0
        %7435 = vmatpush1.msra.mxu0 0.0
        %7436 = vmatprep.subr.mxu0 0.0
        %7437 = vmatpush1.msra.mxu0 0.0
        %7438 = vmatprep.subr.mxu0 0.0
        %7439 = vmatpush1.msra.mxu0 0.0
        %7440 = vmatprep.subr.mxu0 0.0
        %7441 = vmatpush1.msra.mxu0 0.0
        %7442 = vmatprep.subr.mxu0 0.0
        %7443 = vmatpush1.msra.mxu0 0.0
        %7444 = vmatprep.mubr.f32.mxu0 0.0
        %7445 = vmatmul.mubr.f32.gmra.mrb[0].mxu0 %v7282
        %v7446 = vpop.f32.mrb[0].mxu0
        %v7447 = vadd.f32 0.0, %v7446
        %v7448 = vpop.f32.mrb[0].mxu0
        %7449 = vmatprep.mubr.f32.mxu0 0.0
        %7450 = vmatmul.mubr.f32.gmra.mrb[0].mxu0 %v7285
        %v7451 = vpop.f32.mrb[0].mxu0
        %v7452 = vadd.f32 0.0, %v7451
        %v7453 = vpop.f32.mrb[0].mxu0
        %7454 = vmatprep.mubr.f32.mxu0 0.0
        %7455 = vmatmul.mubr.f32.gmra.mrb[0].mxu0 %v7288
        %v7456 = vpop.f32.mrb[0].mxu0
        %v7457 = vadd.f32 0.0, %v7456
        %v7458 = vpop.f32.mrb[0].mxu0
        %7459 = vmatprep.mubr.f32.mxu0 0.0
        %7460 = vmatmul.mubr.f32.gmra.mrb[0].mxu0 %v7291
        %v7461 = vpop.f32.mrb[0].mxu0
        %v7462 = vadd.f32 0.0, %v7461
        %v7463 = vpop.f32.mrb[0].mxu0
        %7464 = vmatprep.mubr.f32.mxu0 0.0
        %7465 = vmatmul.mubr.f32.gmra.mrb[0].mxu0 %v7294
        %v7466 = vpop.f32.mrb[0].mxu0
        %v7467 = vadd.f32 0.0, %v7466
        %v7468 = vpop.f32.mrb[0].mxu0
        %7469 = vmatprep.mubr.f32.mxu0 0.0
        %7470 = vmatmul.mubr.f32.gmra.mrb[0].mxu0 %v7297
        %v7471 = vpop.f32.mrb[0].mxu0
        %v7472 = vadd.f32 0.0, %v7471
        %v7473 = vpop.f32.mrb[0].mxu0
        %7474 = vmatprep.mubr.f32.mxu0 0.0
        %7475 = vmatmul.mubr.f32.gmra.mrb[0].mxu0 %v7300
        %v7476 = vpop.f32.mrb[0].mxu0
        %v7477 = vadd.f32 0.0, %v7476
        %v7478 = vpop.f32.mrb[0].mxu0
        %7479 = vmatprep.mubr.f32.mxu0 0.0
        %7480 = vmatmul.mubr.f32.gmra.mrb[0].mxu0 %v7303
        %v7481 = vpop.f32.mrb[0].mxu0
        %v7482 = vadd.f32 0.0, %v7481
        %v7483 = vpop.f32.mrb[0].mxu0
        %7484 = vmatprep.mubr.f32.mxu0 0.0
        %7485 = vmatmul.mubr.f32.gmra.mrb[0].mxu0 %v7306
        %v7486 = vpop.f32.mrb[0].mxu0
        %v7487 = vadd.f32 0.0, %v7486
        %v7488 = vpop.f32.mrb[0].mxu0
        %7489 = vmatprep.mubr.f32.mxu0 0.0
        %7490 = vmatmul.mubr.f32.gmra.mrb[0].mxu0 %v7309
        %v7491 = vpop.f32.mrb[0].mxu0
        %v7492 = vadd.f32 0.0, %v7491
        %v7493 = vpop.f32.mrb[0].mxu0
        %7494 = vmatprep.mubr.f32.mxu0 0.0
        %7495 = vmatmul.mubr.f32.gmra.mrb[0].mxu0 %v7312
        %v7496 = vpop.f32.mrb[0].mxu0
        %v7497 = vadd.f32 0.0, %v7496
        %v7498 = vpop.f32.mrb[0].mxu0
        %7499 = vmatprep.mubr.f32.mxu0 0.0
        %7500 = vmatmul.mubr.f32.gmra.mrb[0].mxu0 %v7315
        %v7501 = vpop.f32.mrb[0].mxu0
        %v7502 = vadd.f32 0.0, %v7501
        %v7503 = vpop.f32.mrb[0].mxu0
        %7504 = vmatprep.mubr.f32.mxu0 0.0
        %7505 = vmatmul.mubr.f32.gmra.mrb[0].mxu0 %v7318
        %v7506 = vpop.f32.mrb[0].mxu0
        %v7507 = vadd.f32 0.0, %v7506
        %v7508 = vpop.f32.mrb[0].mxu0
        %7509 = vmatprep.mubr.f32.mxu0 0.0
        %7510 = vmatmul.mubr.f32.gmra.mrb[0].mxu0 %v7321
        %v7511 = vpop.f32.mrb[0].mxu0
        %v7512 = vadd.f32 0.0, %v7511
        %v7513 = vpop.f32.mrb[0].mxu0
        %7514 = vmatprep.mubr.f32.mxu0 0.0
        %7515 = vmatmul.mubr.f32.gmra.mrb[0].mxu0 %v7324
        %v7516 = vpop.f32.mrb[0].mxu0
        %v7517 = vadd.f32 0.0, %v7516
        %v7518 = vpop.f32.mrb[0].mxu0
        %7519 = vmatprep.mubr.f32.mxu0 0.0
        %7520 = vmatmul.mubr.f32.gmra.mrb[0].mxu0 %v7327
        %v7521 = vpop.f32.mrb[0].mxu0
        %v7522 = vadd.f32 0.0, %v7521
        %v7523 = vpop.f32.mrb[0].mxu0
        %7524 = vmatprep.mubr.f32.mxu0 0.0
        %7525 = vmatmul.mubr.f32.gmra.mrb[0].mxu0 %v7330
        %v7526 = vpop.f32.mrb[0].mxu0
        %v7527 = vadd.f32 0.0, %v7526
        %v7528 = vpop.f32.mrb[0].mxu0
        %7529 = vmatprep.mubr.f32.mxu0 0.0
        %7530 = vmatmul.mubr.f32.gmra.mrb[0].mxu0 %v7333
        %v7531 = vpop.f32.mrb[0].mxu0
        %v7532 = vadd.f32 0.0, %v7531
        %v7533 = vpop.f32.mrb[0].mxu0
        %7534 = vmatprep.mubr.f32.mxu0 0.0
        %7535 = vmatmul.mubr.f32.gmra.mrb[0].mxu0 %v7336
        %v7536 = vpop.f32.mrb[0].mxu0
        %v7537 = vadd.f32 0.0, %v7536
        %v7538 = vpop.f32.mrb[0].mxu0
        %7539 = vmatprep.mubr.f32.mxu0 0.0
        %7540 = vmatmul.mubr.f32.gmra.mrb[0].mxu0 %v7339
        %v7541 = vpop.f32.mrb[0].mxu0
        %v7542 = vadd.f32 0.0, %v7541
        %v7543 = vpop.f32.mrb[0].mxu0
        %7544 = vmatprep.mubr.f32.mxu0 0.0
        %7545 = vmatmul.mubr.f32.gmra.mrb[0].mxu0 %v7342
        %v7546 = vpop.f32.mrb[0].mxu0
        %v7547 = vadd.f32 0.0, %v7546
        %v7548 = vpop.f32.mrb[0].mxu0
        %7549 = vmatprep.mubr.f32.mxu0 0.0
        %7550 = vmatmul.mubr.f32.gmra.mrb[0].mxu0 %v7345
        %v7551 = vpop.f32.mrb[0].mxu0
        %v7552 = vadd.f32 0.0, %v7551
        %v7553 = vpop.f32.mrb[0].mxu0
        %7554 = vmatprep.mubr.f32.mxu0 0.0
        %7555 = vmatmul.mubr.f32.gmra.mrb[0].mxu0 %v7348
        %v7556 = vpop.f32.mrb[0].mxu0
        %v7557 = vadd.f32 0.0, %v7556
        %v7558 = vpop.f32.mrb[0].mxu0
        %7559 = vmatprep.mubr.f32.mxu0 0.0
        %7560 = vmatmul.mubr.f32.gmra.mrb[0].mxu0 %v7351
        %v7561 = vpop.f32.mrb[0].mxu0
        %v7562 = vadd.f32 0.0, %v7561
        %v7563 = vpop.f32.mrb[0].mxu0
        %7564 = vmatprep.mubr.f32.mxu0 0.0
        %7565 = vmatmul.mubr.f32.gmra.mrb[0].mxu0 %v7354
        %v7566 = vpop.f32.mrb[0].mxu0
        %v7567 = vadd.f32 0.0, %v7566
        %v7568 = vpop.f32.mrb[0].mxu0
        %7569 = vmatprep.mubr.f32.mxu0 0.0
        %7570 = vmatmul.mubr.f32.gmra.mrb[0].mxu0 %v7357
        %v7571 = vpop.f32.mrb[0].mxu0
        %v7572 = vadd.f32 0.0, %v7571
        %v7573 = vpop.f32.mrb[0].mxu0
        %7574 = vmatprep.mubr.f32.mxu0 0.0
        %7575 = vmatmul.mubr.f32.gmra.mrb[0].mxu0 %v7360
        %v7576 = vpop.f32.mrb[0].mxu0
        %v7577 = vadd.f32 0.0, %v7576
        %v7578 = vpop.f32.mrb[0].mxu0
        %7579 = vmatprep.mubr.f32.mxu0 0.0
        %7580 = vmatmul.mubr.f32.gmra.mrb[0].mxu0 %v7363
        %v7581 = vpop.f32.mrb[0].mxu0
        %v7582 = vadd.f32 0.0, %v7581
        %v7583 = vpop.f32.mrb[0].mxu0
        %7584 = vmatprep.mubr.f32.mxu0 0.0
        %7585 = vmatmul.mubr.f32.gmra.mrb[0].mxu0 %v7366
        %v7586 = vpop.f32.mrb[0].mxu0
        %v7587 = vadd.f32 0.0, %v7586
        %v7588 = vpop.f32.mrb[0].mxu0
        %7589 = vmatprep.mubr.f32.mxu0 0.0
        %7590 = vmatmul.mubr.f32.gmra.mrb[0].mxu0 %v7369
        %v7591 = vpop.f32.mrb[0].mxu0
        %v7592 = vadd.f32 0.0, %v7591
        %v7593 = vpop.f32.mrb[0].mxu0
        %7594 = vmatprep.mubr.f32.mxu0 0.0
        %7595 = vmatmul.mubr.f32.gmra.mrb[0].mxu0 %v7372
        %v7596 = vpop.f32.mrb[0].mxu0
        %v7597 = vadd.f32 0.0, %v7596
        %v7598 = vpop.f32.mrb[0].mxu0
        %7599 = vmatprep.mubr.f32.mxu0 0.0
        %7600 = vmatmul.mubr.f32.gmra.mrb[0].mxu0 %v7375
        %v7601 = vpop.f32.mrb[0].mxu0
        %v7602 = vadd.f32 0.0, %v7601
        %v7603 = vpop.f32.mrb[0].mxu0
        %7604 = vdwg.mxu0
        %v7605 = vsel %vm1053, %v6637, 0.0
        %v7606 = vsel %vm1053, %v6638, 0.0
        %v7607 = vsel %vm1053, %v6639, 0.0
        %v7608 = vsel %vm1053, %v6640, 0.0
        %v7609 = vsel %vm1053, %v6641, 0.0
        %v7610 = vsel %vm1053, %v6642, 0.0
        %v7611 = vsel %vm1053, %v6643, 0.0
        %v7612 = vsel %vm1053, %v6644, 0.0
        %v7613 = vsel %vm1053, %v6645, 0.0
        %v7614 = vsel %vm1053, %v6646, 0.0
        %v7615 = vsel %vm1053, %v6647, 0.0
        %v7616 = vsel %vm1053, %v6648, 0.0
        %v7617 = vsel %vm1053, %v6649, 0.0
        %v7618 = vsel %vm1053, %v6650, 0.0
        %v7619 = vsel %vm1053, %v6651, 0.0
        %v7620 = vsel %vm1053, %v6652, 0.0
        %v7621 = vsel %vm1053, %v6653, 0.0
        %v7622 = vsel %vm1053, %v6654, 0.0
        %v7623 = vsel %vm1053, %v6655, 0.0
        %v7624 = vsel %vm1053, %v6656, 0.0
        %v7625 = vsel %vm1053, %v6657, 0.0
        %v7626 = vsel %vm1053, %v6658, 0.0
        %v7627 = vsel %vm1053, %v6659, 0.0
        %v7628 = vsel %vm1053, %v6660, 0.0
        %v7629 = vsel %vm1053, %v6661, 0.0
        %v7630 = vsel %vm1053, %v6662, 0.0
        %v7631 = vsel %vm1053, %v6663, 0.0
        %v7632 = vsel %vm1053, %v6664, 0.0
        %v7633 = vsel %vm1053, %v6665, 0.0
        %v7634 = vsel %vm1053, %v6666, 0.0
        %v7635 = vsel %vm1053, %v6667, 0.0
        %v7636 = vsel %vm1053, %v6668, 0.0
        %7637 = vst [vmem:[%s897] sm:$0xff] %v7605
        %7638 = vst [vmem:[%s897 + $0x8] sm:$0xff] %v7606
        %7639 = vst [vmem:[%s897 + $0x10] sm:$0xff] %v7607
        %7640 = vst [vmem:[%s897 + $0x18] sm:$0xff] %v7608
        %7641 = vst [vmem:[%s897 + $0x20] sm:$0xff] %v7609
        %7642 = vst [vmem:[%s897 + $0x28] sm:$0xff] %v7610
        %7643 = vst [vmem:[%s897 + $0x30] sm:$0xff] %v7611
        %7644 = vst [vmem:[%s897 + $0x38] sm:$0xff] %v7612
        %7645 = vst [vmem:[%s897 + $0x40] sm:$0xff] %v7613
        %7646 = vst [vmem:[%s897 + $0x48] sm:$0xff] %v7614
        %7647 = vst [vmem:[%s897 + $0x50] sm:$0xff] %v7615
        %7648 = vst [vmem:[%s897 + $0x58] sm:$0xff] %v7616
        %7649 = vst [vmem:[%s897 + $0x60] sm:$0xff] %v7617
        %7650 = vst [vmem:[%s897 + $0x68] sm:$0xff] %v7618
        %7651 = vst [vmem:[%s897 + $0x70] sm:$0xff] %v7619
        %7652 = vst [vmem:[%s897 + $0x78] sm:$0xff] %v7620
        %7653 = vst [vmem:[%s897 + $0x80] sm:$0xff] %v7621
        %7654 = vst [vmem:[%s897 + $0x88] sm:$0xff] %v7622
        %7655 = vst [vmem:[%s897 + $0x90] sm:$0xff] %v7623
        %7656 = vst [vmem:[%s897 + $0x98] sm:$0xff] %v7624
        %7657 = vst [vmem:[%s897 + $0xa0] sm:$0xff] %v7625
        %7658 = vst [vmem:[%s897 + $0xa8] sm:$0xff] %v7626
        %7659 = vst [vmem:[%s897 + $0xb0] sm:$0xff] %v7627
        %7660 = vst [vmem:[%s897 + $0xb8] sm:$0xff] %v7628
        %7661 = vst [vmem:[%s897 + $0xc0] sm:$0xff] %v7629
        %7662 = vst [vmem:[%s897 + $0xc8] sm:$0xff] %v7630
        %7663 = vst [vmem:[%s897 + $0xd0] sm:$0xff] %v7631
        %7664 = vst [vmem:[%s897 + $0xd8] sm:$0xff] %v7632
        %7665 = vst [vmem:[%s897 + $0xe0] sm:$0xff] %v7633
        %7666 = vst [vmem:[%s897 + $0xe8] sm:$0xff] %v7634
        %7667 = vst [vmem:[%s897 + $0xf0] sm:$0xff] %v7635
        %7668 = vst [vmem:[%s897 + $0xf8] sm:$0xff] %v7636
        %v7669 = vmul.f32 %v6669, %v7447
        %v7670 = vmul.f32 %v6670, %v7452
        %v7671 = vmul.f32 %v6671, %v7457
        %v7672 = vmul.f32 %v6672, %v7462
        %v7673 = vmul.f32 %v6673, %v7467
        %v7674 = vmul.f32 %v6674, %v7472
        %v7675 = vmul.f32 %v6675, %v7477
        %v7676 = vmul.f32 %v6676, %v7482
        %v7677 = vmul.f32 %v6677, %v7487
        %v7678 = vmul.f32 %v6678, %v7492
        %v7679 = vmul.f32 %v6679, %v7497
        %v7680 = vmul.f32 %v6680, %v7502
        %v7681 = vmul.f32 %v6681, %v7507
        %v7682 = vmul.f32 %v6682, %v7512
        %v7683 = vmul.f32 %v6683, %v7517
        %v7684 = vmul.f32 %v6684, %v7522
        %v7685 = vmul.f32 %v6685, %v7527
        %v7686 = vmul.f32 %v6686, %v7532
        %v7687 = vmul.f32 %v6687, %v7537
        %v7688 = vmul.f32 %v6688, %v7542
        %v7689 = vmul.f32 %v6689, %v7547
        %v7690 = vmul.f32 %v6690, %v7552
        %v7691 = vmul.f32 %v6691, %v7557
        %v7692 = vmul.f32 %v6692, %v7562
        %v7693 = vmul.f32 %v6693, %v7567
        %v7694 = vmul.f32 %v6694, %v7572
        %v7695 = vmul.f32 %v6695, %v7577
        %v7696 = vmul.f32 %v6696, %v7582
        %v7697 = vmul.f32 %v6697, %v7587
        %v7698 = vmul.f32 %v6698, %v7592
        %v7699 = vmul.f32 %v6699, %v7597
        %v7700 = vmul.f32 %v6700, %v7602
        %v7701 = vadd.f32 %v945, %v7669
        %v7702 = vadd.f32 %v946, %v7670
        %v7703 = vadd.f32 %v947, %v7671
        %v7704 = vadd.f32 %v948, %v7672
        %v7705 = vadd.f32 %v949, %v7673
        %v7706 = vadd.f32 %v950, %v7674
        %v7707 = vadd.f32 %v951, %v7675
        %v7708 = vadd.f32 %v952, %v7676
        %v7709 = vadd.f32 %v953, %v7677
        %v7710 = vadd.f32 %v954, %v7678
        %v7711 = vadd.f32 %v955, %v7679
        %v7712 = vadd.f32 %v956, %v7680
        %v7713 = vadd.f32 %v957, %v7681
        %v7714 = vadd.f32 %v958, %v7682
        %v7715 = vadd.f32 %v959, %v7683
        %v7716 = vadd.f32 %v960, %v7684
        %v7717 = vadd.f32 %v961, %v7685
        %v7718 = vadd.f32 %v962, %v7686
        %v7719 = vadd.f32 %v963, %v7687
        %v7720 = vadd.f32 %v964, %v7688
        %v7721 = vadd.f32 %v965, %v7689
        %v7722 = vadd.f32 %v966, %v7690
        %v7723 = vadd.f32 %v967, %v7691
        %v7724 = vadd.f32 %v968, %v7692
        %v7725 = vadd.f32 %v969, %v7693
        %v7726 = vadd.f32 %v970, %v7694
        %v7727 = vadd.f32 %v971, %v7695
        %v7728 = vadd.f32 %v972, %v7696
        %v7729 = vadd.f32 %v973, %v7697
        %v7730 = vadd.f32 %v974, %v7698
        %v7731 = vadd.f32 %v975, %v7699
        %v7732 = vadd.f32 %v976, %v7700
        %7733 = vst.msk [vmem:[%s903] sm:$0xff] %vm1836, %v7701
        %7734 = vst.msk [vmem:[%s903 + $0x8] sm:$0xff] %vm1836, %v7702
        %7735 = vst.msk [vmem:[%s903 + $0x10] sm:$0xff] %vm1836, %v7703
        %7736 = vst.msk [vmem:[%s903 + $0x18] sm:$0xff] %vm1836, %v7704
        %7737 = vst.msk [vmem:[%s903 + $0x20] sm:$0xff] %vm1836, %v7705
        %7738 = vst.msk [vmem:[%s903 + $0x28] sm:$0xff] %vm1836, %v7706
        %7739 = vst.msk [vmem:[%s903 + $0x30] sm:$0xff] %vm1836, %v7707
        %7740 = vst.msk [vmem:[%s903 + $0x38] sm:$0xff] %vm1836, %v7708
        %7741 = vst.msk [vmem:[%s903 + $0x40] sm:$0xff] %vm1836, %v7709
        %7742 = vst.msk [vmem:[%s903 + $0x48] sm:$0xff] %vm1836, %v7710
        %7743 = vst.msk [vmem:[%s903 + $0x50] sm:$0xff] %vm1836, %v7711
        %7744 = vst.msk [vmem:[%s903 + $0x58] sm:$0xff] %vm1836, %v7712
        %7745 = vst.msk [vmem:[%s903 + $0x60] sm:$0xff] %vm1836, %v7713
        %7746 = vst.msk [vmem:[%s903 + $0x68] sm:$0xff] %vm1836, %v7714
        %7747 = vst.msk [vmem:[%s903 + $0x70] sm:$0xff] %vm1836, %v7715
        %7748 = vst.msk [vmem:[%s903 + $0x78] sm:$0xff] %vm1836, %v7716
        %7749 = vst.msk [vmem:[%s903 + $0x80] sm:$0xff] %vm1836, %v7717
        %7750 = vst.msk [vmem:[%s903 + $0x88] sm:$0xff] %vm1836, %v7718
        %7751 = vst.msk [vmem:[%s903 + $0x90] sm:$0xff] %vm1836, %v7719
        %7752 = vst.msk [vmem:[%s903 + $0x98] sm:$0xff] %vm1836, %v7720
        %7753 = vst.msk [vmem:[%s903 + $0xa0] sm:$0xff] %vm1836, %v7721
        %7754 = vst.msk [vmem:[%s903 + $0xa8] sm:$0xff] %vm1836, %v7722
        %7755 = vst.msk [vmem:[%s903 + $0xb0] sm:$0xff] %vm1836, %v7723
        %7756 = vst.msk [vmem:[%s903 + $0xb8] sm:$0xff] %vm1836, %v7724
        %7757 = vst.msk [vmem:[%s903 + $0xc0] sm:$0xff] %vm1836, %v7725
        %7758 = vst.msk [vmem:[%s903 + $0xc8] sm:$0xff] %vm1836, %v7726
        %7759 = vst.msk [vmem:[%s903 + $0xd0] sm:$0xff] %vm1836, %v7727
        %7760 = vst.msk [vmem:[%s903 + $0xd8] sm:$0xff] %vm1836, %v7728
        %7761 = vst.msk [vmem:[%s903 + $0xe0] sm:$0xff] %vm1836, %v7729
        %7762 = vst.msk [vmem:[%s903 + $0xe8] sm:$0xff] %vm1836, %v7730
        %7763 = vst.msk [vmem:[%s903 + $0xf0] sm:$0xff] %vm1836, %v7731
        %7764 = vst.msk [vmem:[%s903 + $0xf8] sm:$0xff] %vm1836, %v7732
        %v7765 = vmul.f32 %v6701, %v7447
        %v7766 = vmul.f32 %v6702, %v7452
        %v7767 = vmul.f32 %v6703, %v7457
        %v7768 = vmul.f32 %v6704, %v7462
        %v7769 = vmul.f32 %v6705, %v7467
        %v7770 = vmul.f32 %v6706, %v7472
        %v7771 = vmul.f32 %v6707, %v7477
        %v7772 = vmul.f32 %v6708, %v7482
        %v7773 = vmul.f32 %v6709, %v7487
        %v7774 = vmul.f32 %v6710, %v7492
        %v7775 = vmul.f32 %v6711, %v7497
        %v7776 = vmul.f32 %v6712, %v7502
        %v7777 = vmul.f32 %v6713, %v7507
        %v7778 = vmul.f32 %v6714, %v7512
        %v7779 = vmul.f32 %v6715, %v7517
        %v7780 = vmul.f32 %v6716, %v7522
        %v7781 = vmul.f32 %v6717, %v7527
        %v7782 = vmul.f32 %v6718, %v7532
        %v7783 = vmul.f32 %v6719, %v7537
        %v7784 = vmul.f32 %v6720, %v7542
        %v7785 = vmul.f32 %v6721, %v7547
        %v7786 = vmul.f32 %v6722, %v7552
        %v7787 = vmul.f32 %v6723, %v7557
        %v7788 = vmul.f32 %v6724, %v7562
        %v7789 = vmul.f32 %v6725, %v7567
        %v7790 = vmul.f32 %v6726, %v7572
        %v7791 = vmul.f32 %v6727, %v7577
        %v7792 = vmul.f32 %v6728, %v7582
        %v7793 = vmul.f32 %v6729, %v7587
        %v7794 = vmul.f32 %v6730, %v7592
        %v7795 = vmul.f32 %v6731, %v7597
        %v7796 = vmul.f32 %v6732, %v7602
        %v7797 = vadd.f32 %v977, %v7765
        %v7798 = vadd.f32 %v978, %v7766
        %v7799 = vadd.f32 %v979, %v7767
        %v7800 = vadd.f32 %v980, %v7768
        %v7801 = vadd.f32 %v981, %v7769
        %v7802 = vadd.f32 %v982, %v7770
        %v7803 = vadd.f32 %v983, %v7771
        %v7804 = vadd.f32 %v984, %v7772
        %v7805 = vadd.f32 %v985, %v7773
        %v7806 = vadd.f32 %v986, %v7774
        %v7807 = vadd.f32 %v987, %v7775
        %v7808 = vadd.f32 %v988, %v7776
        %v7809 = vadd.f32 %v989, %v7777
        %v7810 = vadd.f32 %v990, %v7778
        %v7811 = vadd.f32 %v991, %v7779
        %v7812 = vadd.f32 %v992, %v7780
        %v7813 = vadd.f32 %v993, %v7781
        %v7814 = vadd.f32 %v994, %v7782
        %v7815 = vadd.f32 %v995, %v7783
        %v7816 = vadd.f32 %v996, %v7784
        %v7817 = vadd.f32 %v997, %v7785
        %v7818 = vadd.f32 %v998, %v7786
        %v7819 = vadd.f32 %v999, %v7787
        %v7820 = vadd.f32 %v1000, %v7788
        %v7821 = vadd.f32 %v1001, %v7789
        %v7822 = vadd.f32 %v1002, %v7790
        %v7823 = vadd.f32 %v1003, %v7791
        %v7824 = vadd.f32 %v1004, %v7792
        %v7825 = vadd.f32 %v1005, %v7793
        %v7826 = vadd.f32 %v1006, %v7794
        %v7827 = vadd.f32 %v1007, %v7795
        %v7828 = vadd.f32 %v1008, %v7796
        %s7829 = scalar_lea.vmem %s903, 256 [#allocation5]
        %7830 = vst.msk [vmem:[%s7829] sm:$0xff] %vm1836, %v7797
        %7831 = vst.msk [vmem:[%s7829 + $0x8] sm:$0xff] %vm1836, %v7798
        %7832 = vst.msk [vmem:[%s7829 + $0x10] sm:$0xff] %vm1836, %v7799
        %7833 = vst.msk [vmem:[%s7829 + $0x18] sm:$0xff] %vm1836, %v7800
        %7834 = vst.msk [vmem:[%s7829 + $0x20] sm:$0xff] %vm1836, %v7801
        %7835 = vst.msk [vmem:[%s7829 + $0x28] sm:$0xff] %vm1836, %v7802
        %7836 = vst.msk [vmem:[%s7829 + $0x30] sm:$0xff] %vm1836, %v7803
        %7837 = vst.msk [vmem:[%s7829 + $0x38] sm:$0xff] %vm1836, %v7804
        %7838 = vst.msk [vmem:[%s7829 + $0x40] sm:$0xff] %vm1836, %v7805
        %7839 = vst.msk [vmem:[%s7829 + $0x48] sm:$0xff] %vm1836, %v7806
        %7840 = vst.msk [vmem:[%s7829 + $0x50] sm:$0xff] %vm1836, %v7807
        %7841 = vst.msk [vmem:[%s7829 + $0x58] sm:$0xff] %vm1836, %v7808
        %7842 = vst.msk [vmem:[%s7829 + $0x60] sm:$0xff] %vm1836, %v7809
        %7843 = vst.msk [vmem:[%s7829 + $0x68] sm:$0xff] %vm1836, %v7810
        %7844 = vst.msk [vmem:[%s7829 + $0x70] sm:$0xff] %vm1836, %v7811
        %7845 = vst.msk [vmem:[%s7829 + $0x78] sm:$0xff] %vm1836, %v7812
        %7846 = vst.msk [vmem:[%s7829 + $0x80] sm:$0xff] %vm1836, %v7813
        %7847 = vst.msk [vmem:[%s7829 + $0x88] sm:$0xff] %vm1836, %v7814
        %7848 = vst.msk [vmem:[%s7829 + $0x90] sm:$0xff] %vm1836, %v7815
        %7849 = vst.msk [vmem:[%s7829 + $0x98] sm:$0xff] %vm1836, %v7816
        %7850 = vst.msk [vmem:[%s7829 + $0xa0] sm:$0xff] %vm1836, %v7817
        %7851 = vst.msk [vmem:[%s7829 + $0xa8] sm:$0xff] %vm1836, %v7818
        %7852 = vst.msk [vmem:[%s7829 + $0xb0] sm:$0xff] %vm1836, %v7819
        %7853 = vst.msk [vmem:[%s7829 + $0xb8] sm:$0xff] %vm1836, %v7820
        %7854 = vst.msk [vmem:[%s7829 + $0xc0] sm:$0xff] %vm1836, %v7821
        %7855 = vst.msk [vmem:[%s7829 + $0xc8] sm:$0xff] %vm1836, %v7822
        %7856 = vst.msk [vmem:[%s7829 + $0xd0] sm:$0xff] %vm1836, %v7823
        %7857 = vst.msk [vmem:[%s7829 + $0xd8] sm:$0xff] %vm1836, %v7824
        %7858 = vst.msk [vmem:[%s7829 + $0xe0] sm:$0xff] %vm1836, %v7825
        %7859 = vst.msk [vmem:[%s7829 + $0xe8] sm:$0xff] %vm1836, %v7826
        %7860 = vst.msk [vmem:[%s7829 + $0xf0] sm:$0xff] %vm1836, %v7827
        %7861 = vst.msk [vmem:[%s7829 + $0xf8] sm:$0xff] %vm1836, %v7828
        %v7862 = vmul.f32 %v6733, %v7447
        %v7863 = vmul.f32 %v6734, %v7452
        %v7864 = vmul.f32 %v6735, %v7457
        %v7865 = vmul.f32 %v6736, %v7462
        %v7866 = vmul.f32 %v6737, %v7467
        %v7867 = vmul.f32 %v6738, %v7472
        %v7868 = vmul.f32 %v6739, %v7477
        %v7869 = vmul.f32 %v6740, %v7482
        %v7870 = vmul.f32 %v6741, %v7487
        %v7871 = vmul.f32 %v6742, %v7492
        %v7872 = vmul.f32 %v6743, %v7497
        %v7873 = vmul.f32 %v6744, %v7502
        %v7874 = vmul.f32 %v6745, %v7507
        %v7875 = vmul.f32 %v6746, %v7512
        %v7876 = vmul.f32 %v6747, %v7517
        %v7877 = vmul.f32 %v6748, %v7522
        %v7878 = vmul.f32 %v6749, %v7527
        %v7879 = vmul.f32 %v6750, %v7532
        %v7880 = vmul.f32 %v6751, %v7537
        %v7881 = vmul.f32 %v6752, %v7542
        %v7882 = vmul.f32 %v6753, %v7547
        %v7883 = vmul.f32 %v6754, %v7552
        %v7884 = vmul.f32 %v6755, %v7557
        %v7885 = vmul.f32 %v6756, %v7562
        %v7886 = vmul.f32 %v6757, %v7567
        %v7887 = vmul.f32 %v6758, %v7572
        %v7888 = vmul.f32 %v6759, %v7577
        %v7889 = vmul.f32 %v6760, %v7582
        %v7890 = vmul.f32 %v6761, %v7587
        %v7891 = vmul.f32 %v6762, %v7592
        %v7892 = vmul.f32 %v6763, %v7597
        %v7893 = vmul.f32 %v6764, %v7602
        %v7894 = vadd.f32 %v1009, %v7862
        %v7895 = vadd.f32 %v1010, %v7863
        %v7896 = vadd.f32 %v1011, %v7864
        %v7897 = vadd.f32 %v1012, %v7865
        %v7898 = vadd.f32 %v1013, %v7866
        %v7899 = vadd.f32 %v1014, %v7867
        %v7900 = vadd.f32 %v1015, %v7868
        %v7901 = vadd.f32 %v1016, %v7869
        %v7902 = vadd.f32 %v1017, %v7870
        %v7903 = vadd.f32 %v1018, %v7871
        %v7904 = vadd.f32 %v1019, %v7872
        %v7905 = vadd.f32 %v1020, %v7873
        %v7906 = vadd.f32 %v1021, %v7874
        %v7907 = vadd.f32 %v1022, %v7875
        %v7908 = vadd.f32 %v1023, %v7876
        %v7909 = vadd.f32 %v1024, %v7877
        %v7910 = vadd.f32 %v1025, %v7878
        %v7911 = vadd.f32 %v1026, %v7879
        %v7912 = vadd.f32 %v1027, %v7880
        %v7913 = vadd.f32 %v1028, %v7881
        %v7914 = vadd.f32 %v1029, %v7882
        %v7915 = vadd.f32 %v1030, %v7883
        %v7916 = vadd.f32 %v1031, %v7884
        %v7917 = vadd.f32 %v1032, %v7885
        %v7918 = vadd.f32 %v1033, %v7886
        %v7919 = vadd.f32 %v1034, %v7887
        %v7920 = vadd.f32 %v1035, %v7888
        %v7921 = vadd.f32 %v1036, %v7889
        %v7922 = vadd.f32 %v1037, %v7890
        %v7923 = vadd.f32 %v1038, %v7891
        %v7924 = vadd.f32 %v1039, %v7892
        %v7925 = vadd.f32 %v1040, %v7893
        %s7926 = scalar_lea.vmem %s903, 512 [#allocation5]
        %7927 = vst.msk [vmem:[%s7926] sm:$0xff] %vm1836, %v7894
        %7928 = vst.msk [vmem:[%s7926 + $0x8] sm:$0xff] %vm1836, %v7895
        %7929 = vst.msk [vmem:[%s7926 + $0x10] sm:$0xff] %vm1836, %v7896
        %7930 = vst.msk [vmem:[%s7926 + $0x18] sm:$0xff] %vm1836, %v7897
        %7931 = vst.msk [vmem:[%s7926 + $0x20] sm:$0xff] %vm1836, %v7898
        %7932 = vst.msk [vmem:[%s7926 + $0x28] sm:$0xff] %vm1836, %v7899
        %7933 = vst.msk [vmem:[%s7926 + $0x30] sm:$0xff] %vm1836, %v7900
        %7934 = vst.msk [vmem:[%s7926 + $0x38] sm:$0xff] %vm1836, %v7901
        %7935 = vst.msk [vmem:[%s7926 + $0x40] sm:$0xff] %vm1836, %v7902
        %7936 = vst.msk [vmem:[%s7926 + $0x48] sm:$0xff] %vm1836, %v7903
        %7937 = vst.msk [vmem:[%s7926 + $0x50] sm:$0xff] %vm1836, %v7904
        %7938 = vst.msk [vmem:[%s7926 + $0x58] sm:$0xff] %vm1836, %v7905
        %7939 = vst.msk [vmem:[%s7926 + $0x60] sm:$0xff] %vm1836, %v7906
        %7940 = vst.msk [vmem:[%s7926 + $0x68] sm:$0xff] %vm1836, %v7907
        %7941 = vst.msk [vmem:[%s7926 + $0x70] sm:$0xff] %vm1836, %v7908
        %7942 = vst.msk [vmem:[%s7926 + $0x78] sm:$0xff] %vm1836, %v7909
        %7943 = vst.msk [vmem:[%s7926 + $0x80] sm:$0xff] %vm1836, %v7910
        %7944 = vst.msk [vmem:[%s7926 + $0x88] sm:$0xff] %vm1836, %v7911
        %7945 = vst.msk [vmem:[%s7926 + $0x90] sm:$0xff] %vm1836, %v7912
        %7946 = vst.msk [vmem:[%s7926 + $0x98] sm:$0xff] %vm1836, %v7913
        %7947 = vst.msk [vmem:[%s7926 + $0xa0] sm:$0xff] %vm1836, %v7914
        %7948 = vst.msk [vmem:[%s7926 + $0xa8] sm:$0xff] %vm1836, %v7915
        %7949 = vst.msk [vmem:[%s7926 + $0xb0] sm:$0xff] %vm1836, %v7916
        %7950 = vst.msk [vmem:[%s7926 + $0xb8] sm:$0xff] %vm1836, %v7917
        %7951 = vst.msk [vmem:[%s7926 + $0xc0] sm:$0xff] %vm1836, %v7918
        %7952 = vst.msk [vmem:[%s7926 + $0xc8] sm:$0xff] %vm1836, %v7919
        %7953 = vst.msk [vmem:[%s7926 + $0xd0] sm:$0xff] %vm1836, %v7920
        %7954 = vst.msk [vmem:[%s7926 + $0xd8] sm:$0xff] %vm1836, %v7921
        %7955 = vst.msk [vmem:[%s7926 + $0xe0] sm:$0xff] %vm1836, %v7922
        %7956 = vst.msk [vmem:[%s7926 + $0xe8] sm:$0xff] %vm1836, %v7923
        %7957 = vst.msk [vmem:[%s7926 + $0xf0] sm:$0xff] %vm1836, %v7924
        %7958 = vst.msk [vmem:[%s7926 + $0xf8] sm:$0xff] %vm1836, %v7925
        %s7959 = sand.u32 %s320, 1
        %s7960 = scalar_lea.sflag [#allocation4], %s7959
        %s7961 = sand.u32 %s320, 1
        %s7962 = smul.addr %s7961, 256
        %s7963 = scalar_lea.vmem [#allocation3], %s7962
        %s7964 = sand.u32 %s346, 1
        %s7965 = sand.u32 %s346, 1
        %s7966 = smul.addr %s7965, 768
        %s7967 = scalar_lea.vmem [#allocation5], %s7966
        // Predicated region
        $region111: #{tpu_custom_call.1} parent=105 // pred_check
          %p7968 = pneg %p330
        $region112: #{tpu_custom_call.1} parent=105 // pred_check_branch
          %7970 = sbr.rel (%p7968) target = $region114
        $region113: #{tpu_custom_call.1} parent=105 // pred_region
          %s7971 = smul.u32 32, %s29
          %s7973 = ssub.s32 4096, 4096
          %7974 = vsyncadd %s7960, %s7973
          %s7975 = smul.addr %s7971, 128
          %s7976 = scalar_lea.hbm %s13, %s7975
          %s7977 = sshll.u32 %s7963, 4
          %s7978 = int_to_ptr.vmem [resolvable:$true] %s7977
          %7983 = dma.vmem_to_hbm [thread:$0]  %s7978, 4096, %s7976, %s7960, 128, 128, 8
        $region114: #{tpu_custom_call.1} parent=105 // pred_fallthru
          _
        // Predicated region
        $region115: #{tpu_custom_call.1} parent=105 // pred_check
          %p7984 = pneg %p356
        $region116: #{tpu_custom_call.1} parent=105 // pred_check_branch
          %7986 = sbr.rel (%p7984) target = $region118
        $region117: #{tpu_custom_call.1} parent=105 // pred_region
          %s7987 = smul.u32 32, %s29
          %s7988 = smul.addr %s7987, 8
          %s7989 = scalar_lea.vmem %s14, %s7988
          // Predicated region
          $region119: #{tpu_custom_call.1} parent=117 // pred_check
            _
          $region120: #{tpu_custom_call.1} parent=117 // pred_check_branch
            %7991 = sbr.rel (0) target = $region122
          $region121: #{tpu_custom_call.1} parent=117 // pred_region
            // Predicated region
            $region123: #{tpu_custom_call.1} parent=121 // pred_check
              _
            $region124: #{tpu_custom_call.1} parent=121 // pred_check_branch
              %7993 = sbr.rel (0) target = $region126
            $region125: #{tpu_custom_call.1} parent=121 // pred_region
              // Predicated region
              $region138: #{tpu_custom_call.1} parent=125 // pred_check
                _
              $region139: #{tpu_custom_call.1} parent=125 // pred_check_branch
                %8198 = sbr.rel (0) target = $region141
              $region140: #{tpu_custom_call.1} parent=125 // pred_region
                loop: start=0, step=1, limit=1
                $region142: #{tpu_custom_call.1} parent=140 // loop_pre_header
                  _
                $region143: #{tpu_custom_call.1} parent=140 // loop_header
                  %s8200 = sphi 0, %s8204
                  %p8201 = scmp.ge.s32.totalorder %s8200, 1
                  %s8205 = sphi %s7967, %s7967
                  %s8206 = sphi %s7989, %s7989
                $region144: #{tpu_custom_call.1} parent=140 // loop_header_branch
                  %8203 = sbr.rel (%p8201) target = $region148
                $region145: #{tpu_custom_call.1} parent=140 // loop_body
                  %v8207 = vld [vmem:[%s8205] sm:$0xff]
                  %8208 = vst [vmem:[%s8206] sm:$0xff] %v8207
                  %v8209 = vld [vmem:[%s8205 + $0x8] sm:$0xff]
                  %8210 = vst [vmem:[%s8206 + $0x8] sm:$0xff] %v8209
                  %v8211 = vld [vmem:[%s8205 + $0x10] sm:$0xff]
                  %8212 = vst [vmem:[%s8206 + $0x10] sm:$0xff] %v8211
                  %v8213 = vld [vmem:[%s8205 + $0x18] sm:$0xff]
                  %8214 = vst [vmem:[%s8206 + $0x18] sm:$0xff] %v8213
                  %v8215 = vld [vmem:[%s8205 + $0x20] sm:$0xff]
                  %8216 = vst [vmem:[%s8206 + $0x20] sm:$0xff] %v8215
                  %v8217 = vld [vmem:[%s8205 + $0x28] sm:$0xff]
                  %8218 = vst [vmem:[%s8206 + $0x28] sm:$0xff] %v8217
                  %v8219 = vld [vmem:[%s8205 + $0x30] sm:$0xff]
                  %8220 = vst [vmem:[%s8206 + $0x30] sm:$0xff] %v8219
                  %v8221 = vld [vmem:[%s8205 + $0x38] sm:$0xff]
                  %8222 = vst [vmem:[%s8206 + $0x38] sm:$0xff] %v8221
                  %v8223 = vld [vmem:[%s8205 + $0x40] sm:$0xff]
                  %8224 = vst [vmem:[%s8206 + $0x40] sm:$0xff] %v8223
                  %v8225 = vld [vmem:[%s8205 + $0x48] sm:$0xff]
                  %8226 = vst [vmem:[%s8206 + $0x48] sm:$0xff] %v8225
                  %v8227 = vld [vmem:[%s8205 + $0x50] sm:$0xff]
                  %8228 = vst [vmem:[%s8206 + $0x50] sm:$0xff] %v8227
                  %v8229 = vld [vmem:[%s8205 + $0x58] sm:$0xff]
                  %8230 = vst [vmem:[%s8206 + $0x58] sm:$0xff] %v8229
                  %v8231 = vld [vmem:[%s8205 + $0x60] sm:$0xff]
                  %8232 = vst [vmem:[%s8206 + $0x60] sm:$0xff] %v8231
                  %v8233 = vld [vmem:[%s8205 + $0x68] sm:$0xff]
                  %8234 = vst [vmem:[%s8206 + $0x68] sm:$0xff] %v8233
                  %v8235 = vld [vmem:[%s8205 + $0x70] sm:$0xff]
                  %8236 = vst [vmem:[%s8206 + $0x70] sm:$0xff] %v8235
                  %v8237 = vld [vmem:[%s8205 + $0x78] sm:$0xff]
                  %8238 = vst [vmem:[%s8206 + $0x78] sm:$0xff] %v8237
                  %v8239 = vld [vmem:[%s8205 + $0x80] sm:$0xff]
                  %8240 = vst [vmem:[%s8206 + $0x80] sm:$0xff] %v8239
                  %v8241 = vld [vmem:[%s8205 + $0x88] sm:$0xff]
                  %8242 = vst [vmem:[%s8206 + $0x88] sm:$0xff] %v8241
                  %v8243 = vld [vmem:[%s8205 + $0x90] sm:$0xff]
                  %8244 = vst [vmem:[%s8206 + $0x90] sm:$0xff] %v8243
                  %v8245 = vld [vmem:[%s8205 + $0x98] sm:$0xff]
                  %8246 = vst [vmem:[%s8206 + $0x98] sm:$0xff] %v8245
                  %v8247 = vld [vmem:[%s8205 + $0xa0] sm:$0xff]
                  %8248 = vst [vmem:[%s8206 + $0xa0] sm:$0xff] %v8247
                  %v8249 = vld [vmem:[%s8205 + $0xa8] sm:$0xff]
                  %8250 = vst [vmem:[%s8206 + $0xa8] sm:$0xff] %v8249
                  %v8251 = vld [vmem:[%s8205 + $0xb0] sm:$0xff]
                  %8252 = vst [vmem:[%s8206 + $0xb0] sm:$0xff] %v8251
                  %v8253 = vld [vmem:[%s8205 + $0xb8] sm:$0xff]
                  %8254 = vst [vmem:[%s8206 + $0xb8] sm:$0xff] %v8253
                  %v8255 = vld [vmem:[%s8205 + $0xc0] sm:$0xff]
                  %8256 = vst [vmem:[%s8206 + $0xc0] sm:$0xff] %v8255
                  %v8257 = vld [vmem:[%s8205 + $0xc8] sm:$0xff]
                  %8258 = vst [vmem:[%s8206 + $0xc8] sm:$0xff] %v8257
                  %v8259 = vld [vmem:[%s8205 + $0xd0] sm:$0xff]
                  %8260 = vst [vmem:[%s8206 + $0xd0] sm:$0xff] %v8259
                  %v8261 = vld [vmem:[%s8205 + $0xd8] sm:$0xff]
                  %8262 = vst [vmem:[%s8206 + $0xd8] sm:$0xff] %v8261
                  %v8263 = vld [vmem:[%s8205 + $0xe0] sm:$0xff]
                  %8264 = vst [vmem:[%s8206 + $0xe0] sm:$0xff] %v8263
                  %v8265 = vld [vmem:[%s8205 + $0xe8] sm:$0xff]
                  %8266 = vst [vmem:[%s8206 + $0xe8] sm:$0xff] %v8265
                  %v8267 = vld [vmem:[%s8205 + $0xf0] sm:$0xff]
                  %8268 = vst [vmem:[%s8206 + $0xf0] sm:$0xff] %v8267
                  %v8269 = vld [vmem:[%s8205 + $0xf8] sm:$0xff]
                  %8270 = vst [vmem:[%s8206 + $0xf8] sm:$0xff] %v8269
                  %v8271 = vld [vmem:[%s8205 + $0x100] sm:$0xff]
                  %8272 = vst [vmem:[%s8206 + $0x200] sm:$0xff] %v8271
                  %v8273 = vld [vmem:[%s8205 + $0x108] sm:$0xff]
                  %8274 = vst [vmem:[%s8206 + $0x208] sm:$0xff] %v8273
                  %v8275 = vld [vmem:[%s8205 + $0x110] sm:$0xff]
                  %8276 = vst [vmem:[%s8206 + $0x210] sm:$0xff] %v8275
                  %v8277 = vld [vmem:[%s8205 + $0x118] sm:$0xff]
                  %8278 = vst [vmem:[%s8206 + $0x218] sm:$0xff] %v8277
                  %v8279 = vld [vmem:[%s8205 + $0x120] sm:$0xff]
                  %8280 = vst [vmem:[%s8206 + $0x220] sm:$0xff] %v8279
                  %v8281 = vld [vmem:[%s8205 + $0x128] sm:$0xff]
                  %8282 = vst [vmem:[%s8206 + $0x228] sm:$0xff] %v8281
                  %v8283 = vld [vmem:[%s8205 + $0x130] sm:$0xff]
                  %8284 = vst [vmem:[%s8206 + $0x230] sm:$0xff] %v8283
                  %v8285 = vld [vmem:[%s8205 + $0x138] sm:$0xff]
                  %8286 = vst [vmem:[%s8206 + $0x238] sm:$0xff] %v8285
                  %v8287 = vld [vmem:[%s8205 + $0x140] sm:$0xff]
                  %8288 = vst [vmem:[%s8206 + $0x240] sm:$0xff] %v8287
                  %v8289 = vld [vmem:[%s8205 + $0x148] sm:$0xff]
                  %8290 = vst [vmem:[%s8206 + $0x248] sm:$0xff] %v8289
                  %v8291 = vld [vmem:[%s8205 + $0x150] sm:$0xff]
                  %8292 = vst [vmem:[%s8206 + $0x250] sm:$0xff] %v8291
                  %v8293 = vld [vmem:[%s8205 + $0x158] sm:$0xff]
                  %8294 = vst [vmem:[%s8206 + $0x258] sm:$0xff] %v8293
                  %v8295 = vld [vmem:[%s8205 + $0x160] sm:$0xff]
                  %8296 = vst [vmem:[%s8206 + $0x260] sm:$0xff] %v8295
                  %v8297 = vld [vmem:[%s8205 + $0x168] sm:$0xff]
                  %8298 = vst [vmem:[%s8206 + $0x268] sm:$0xff] %v8297
                  %v8299 = vld [vmem:[%s8205 + $0x170] sm:$0xff]
                  %8300 = vst [vmem:[%s8206 + $0x270] sm:$0xff] %v8299
                  %v8301 = vld [vmem:[%s8205 + $0x178] sm:$0xff]
                  %8302 = vst [vmem:[%s8206 + $0x278] sm:$0xff] %v8301
                  %v8303 = vld [vmem:[%s8205 + $0x180] sm:$0xff]
                  %8304 = vst [vmem:[%s8206 + $0x280] sm:$0xff] %v8303
                  %v8305 = vld [vmem:[%s8205 + $0x188] sm:$0xff]
                  %8306 = vst [vmem:[%s8206 + $0x288] sm:$0xff] %v8305
                  %v8307 = vld [vmem:[%s8205 + $0x190] sm:$0xff]
                  %8308 = vst [vmem:[%s8206 + $0x290] sm:$0xff] %v8307
                  %v8309 = vld [vmem:[%s8205 + $0x198] sm:$0xff]
                  %8310 = vst [vmem:[%s8206 + $0x298] sm:$0xff] %v8309
                  %v8311 = vld [vmem:[%s8205 + $0x1a0] sm:$0xff]
                  %8312 = vst [vmem:[%s8206 + $0x2a0] sm:$0xff] %v8311
                  %v8313 = vld [vmem:[%s8205 + $0x1a8] sm:$0xff]
                  %8314 = vst [vmem:[%s8206 + $0x2a8] sm:$0xff] %v8313
                  %v8315 = vld [vmem:[%s8205 + $0x1b0] sm:$0xff]
                  %8316 = vst [vmem:[%s8206 + $0x2b0] sm:$0xff] %v8315
                  %v8317 = vld [vmem:[%s8205 + $0x1b8] sm:$0xff]
                  %8318 = vst [vmem:[%s8206 + $0x2b8] sm:$0xff] %v8317
                  %v8319 = vld [vmem:[%s8205 + $0x1c0] sm:$0xff]
                  %8320 = vst [vmem:[%s8206 + $0x2c0] sm:$0xff] %v8319
                  %v8321 = vld [vmem:[%s8205 + $0x1c8] sm:$0xff]
                  %8322 = vst [vmem:[%s8206 + $0x2c8] sm:$0xff] %v8321
                  %v8323 = vld [vmem:[%s8205 + $0x1d0] sm:$0xff]
                  %8324 = vst [vmem:[%s8206 + $0x2d0] sm:$0xff] %v8323
                  %v8325 = vld [vmem:[%s8205 + $0x1d8] sm:$0xff]
                  %8326 = vst [vmem:[%s8206 + $0x2d8] sm:$0xff] %v8325
                  %v8327 = vld [vmem:[%s8205 + $0x1e0] sm:$0xff]
                  %8328 = vst [vmem:[%s8206 + $0x2e0] sm:$0xff] %v8327
                  %v8329 = vld [vmem:[%s8205 + $0x1e8] sm:$0xff]
                  %8330 = vst [vmem:[%s8206 + $0x2e8] sm:$0xff] %v8329
                  %v8331 = vld [vmem:[%s8205 + $0x1f0] sm:$0xff]
                  %8332 = vst [vmem:[%s8206 + $0x2f0] sm:$0xff] %v8331
                  %v8333 = vld [vmem:[%s8205 + $0x1f8] sm:$0xff]
                  %8334 = vst [vmem:[%s8206 + $0x2f8] sm:$0xff] %v8333
                  %v8335 = vld [vmem:[%s8205 + $0x200] sm:$0xff]
                  %8336 = vst [vmem:[%s8206 + $0x400] sm:$0xff] %v8335
                  %v8337 = vld [vmem:[%s8205 + $0x208] sm:$0xff]
                  %8338 = vst [vmem:[%s8206 + $0x408] sm:$0xff] %v8337
                  %v8339 = vld [vmem:[%s8205 + $0x210] sm:$0xff]
                  %8340 = vst [vmem:[%s8206 + $0x410] sm:$0xff] %v8339
                  %v8341 = vld [vmem:[%s8205 + $0x218] sm:$0xff]
                  %8342 = vst [vmem:[%s8206 + $0x418] sm:$0xff] %v8341
                  %v8343 = vld [vmem:[%s8205 + $0x220] sm:$0xff]
                  %8344 = vst [vmem:[%s8206 + $0x420] sm:$0xff] %v8343
                  %v8345 = vld [vmem:[%s8205 + $0x228] sm:$0xff]
                  %8346 = vst [vmem:[%s8206 + $0x428] sm:$0xff] %v8345
                  %v8347 = vld [vmem:[%s8205 + $0x230] sm:$0xff]
                  %8348 = vst [vmem:[%s8206 + $0x430] sm:$0xff] %v8347
                  %v8349 = vld [vmem:[%s8205 + $0x238] sm:$0xff]
                  %8350 = vst [vmem:[%s8206 + $0x438] sm:$0xff] %v8349
                  %v8351 = vld [vmem:[%s8205 + $0x240] sm:$0xff]
                  %8352 = vst [vmem:[%s8206 + $0x440] sm:$0xff] %v8351
                  %v8353 = vld [vmem:[%s8205 + $0x248] sm:$0xff]
                  %8354 = vst [vmem:[%s8206 + $0x448] sm:$0xff] %v8353
                  %v8355 = vld [vmem:[%s8205 + $0x250] sm:$0xff]
                  %8356 = vst [vmem:[%s8206 + $0x450] sm:$0xff] %v8355
                  %v8357 = vld [vmem:[%s8205 + $0x258] sm:$0xff]
                  %8358 = vst [vmem:[%s8206 + $0x458] sm:$0xff] %v8357
                  %v8359 = vld [vmem:[%s8205 + $0x260] sm:$0xff]
                  %8360 = vst [vmem:[%s8206 + $0x460] sm:$0xff] %v8359
                  %v8361 = vld [vmem:[%s8205 + $0x268] sm:$0xff]
                  %8362 = vst [vmem:[%s8206 + $0x468] sm:$0xff] %v8361
                  %v8363 = vld [vmem:[%s8205 + $0x270] sm:$0xff]
                  %8364 = vst [vmem:[%s8206 + $0x470] sm:$0xff] %v8363
                  %v8365 = vld [vmem:[%s8205 + $0x278] sm:$0xff]
                  %8366 = vst [vmem:[%s8206 + $0x478] sm:$0xff] %v8365
                  %v8367 = vld [vmem:[%s8205 + $0x280] sm:$0xff]
                  %8368 = vst [vmem:[%s8206 + $0x480] sm:$0xff] %v8367
                  %v8369 = vld [vmem:[%s8205 + $0x288] sm:$0xff]
                  %8370 = vst [vmem:[%s8206 + $0x488] sm:$0xff] %v8369
                  %v8371 = vld [vmem:[%s8205 + $0x290] sm:$0xff]
                  %8372 = vst [vmem:[%s8206 + $0x490] sm:$0xff] %v8371
                  %v8373 = vld [vmem:[%s8205 + $0x298] sm:$0xff]
                  %8374 = vst [vmem:[%s8206 + $0x498] sm:$0xff] %v8373
                  %v8375 = vld [vmem:[%s8205 + $0x2a0] sm:$0xff]
                  %8376 = vst [vmem:[%s8206 + $0x4a0] sm:$0xff] %v8375
                  %v8377 = vld [vmem:[%s8205 + $0x2a8] sm:$0xff]
                  %8378 = vst [vmem:[%s8206 + $0x4a8] sm:$0xff] %v8377
                  %v8379 = vld [vmem:[%s8205 + $0x2b0] sm:$0xff]
                  %8380 = vst [vmem:[%s8206 + $0x4b0] sm:$0xff] %v8379
                  %v8381 = vld [vmem:[%s8205 + $0x2b8] sm:$0xff]
                  %8382 = vst [vmem:[%s8206 + $0x4b8] sm:$0xff] %v8381
                  %v8383 = vld [vmem:[%s8205 + $0x2c0] sm:$0xff]
                  %8384 = vst [vmem:[%s8206 + $0x4c0] sm:$0xff] %v8383
                  %v8385 = vld [vmem:[%s8205 + $0x2c8] sm:$0xff]
                  %8386 = vst [vmem:[%s8206 + $0x4c8] sm:$0xff] %v8385
                  %v8387 = vld [vmem:[%s8205 + $0x2d0] sm:$0xff]
                  %8388 = vst [vmem:[%s8206 + $0x4d0] sm:$0xff] %v8387
                  %v8389 = vld [vmem:[%s8205 + $0x2d8] sm:$0xff]
                  %8390 = vst [vmem:[%s8206 + $0x4d8] sm:$0xff] %v8389
                  %v8391 = vld [vmem:[%s8205 + $0x2e0] sm:$0xff]
                  %8392 = vst [vmem:[%s8206 + $0x4e0] sm:$0xff] %v8391
                  %v8393 = vld [vmem:[%s8205 + $0x2e8] sm:$0xff]
                  %8394 = vst [vmem:[%s8206 + $0x4e8] sm:$0xff] %v8393
                  %v8395 = vld [vmem:[%s8205 + $0x2f0] sm:$0xff]
                  %8396 = vst [vmem:[%s8206 + $0x4f0] sm:$0xff] %v8395
                  %v8397 = vld [vmem:[%s8205 + $0x2f8] sm:$0xff]
                  %8398 = vst [vmem:[%s8206 + $0x4f8] sm:$0xff] %v8397
                $region146: #{tpu_custom_call.1} parent=140 // loop_footer
                  %s8204 = sadd.s32 1, %s8200
                $region147: #{tpu_custom_call.1} parent=140 // loop_footer_branch
                  %8199 = sbr.rel target = $region143
                $region148: #{tpu_custom_call.1} parent=140 // loop_exit
                  _
              $region141: #{tpu_custom_call.1} parent=125 // pred_fallthru
                _
              // Predicated region
              $region149: #{tpu_custom_call.1} parent=125 // pred_check
                _
              $region150: #{tpu_custom_call.1} parent=125 // pred_check_branch
                %8400 = sbr.rel target = $region152
              $region151: #{tpu_custom_call.1} parent=125 // pred_region
                _
              $region152: #{tpu_custom_call.1} parent=125 // pred_fallthru
                _
            $region126: #{tpu_custom_call.1} parent=121 // pred_fallthru
              _
            // Predicated region
            $region127: #{tpu_custom_call.1} parent=121 // pred_check
              _
            $region128: #{tpu_custom_call.1} parent=121 // pred_check_branch
              %7995 = sbr.rel target = $region130
            $region129: #{tpu_custom_call.1} parent=121 // pred_region
              loop: start=0, step=1, limit=1
              $region131: #{tpu_custom_call.1} parent=129 // loop_pre_header
                _
              $region132: #{tpu_custom_call.1} parent=129 // loop_header
                %s7998 = sphi 0, %s8002
                %p7999 = scmp.ge.s32.totalorder %s7998, 1
                %s8003 = sphi %s7967, %s7967
                %s8004 = sphi %s7989, %s7989
              $region133: #{tpu_custom_call.1} parent=129 // loop_header_branch
                %8001 = sbr.rel (%p7999) target = $region137
              $region134: #{tpu_custom_call.1} parent=129 // loop_body
                %v8005 = vld [vmem:[%s8003] sm:$0xff]
                %8006 = vst [vmem:[%s8004] sm:$0xff] %v8005
                %v8007 = vld [vmem:[%s8003 + $0x8] sm:$0xff]
                %8008 = vst [vmem:[%s8004 + $0x8] sm:$0xff] %v8007
                %v8009 = vld [vmem:[%s8003 + $0x10] sm:$0xff]
                %8010 = vst [vmem:[%s8004 + $0x10] sm:$0xff] %v8009
                %v8011 = vld [vmem:[%s8003 + $0x18] sm:$0xff]
                %8012 = vst [vmem:[%s8004 + $0x18] sm:$0xff] %v8011
                %v8013 = vld [vmem:[%s8003 + $0x20] sm:$0xff]
                %8014 = vst [vmem:[%s8004 + $0x20] sm:$0xff] %v8013
                %v8015 = vld [vmem:[%s8003 + $0x28] sm:$0xff]
                %8016 = vst [vmem:[%s8004 + $0x28] sm:$0xff] %v8015
                %v8017 = vld [vmem:[%s8003 + $0x30] sm:$0xff]
                %8018 = vst [vmem:[%s8004 + $0x30] sm:$0xff] %v8017
                %v8019 = vld [vmem:[%s8003 + $0x38] sm:$0xff]
                %8020 = vst [vmem:[%s8004 + $0x38] sm:$0xff] %v8019
                %v8021 = vld [vmem:[%s8003 + $0x40] sm:$0xff]
                %8022 = vst [vmem:[%s8004 + $0x40] sm:$0xff] %v8021
                %v8023 = vld [vmem:[%s8003 + $0x48] sm:$0xff]
                %8024 = vst [vmem:[%s8004 + $0x48] sm:$0xff] %v8023
                %v8025 = vld [vmem:[%s8003 + $0x50] sm:$0xff]
                %8026 = vst [vmem:[%s8004 + $0x50] sm:$0xff] %v8025
                %v8027 = vld [vmem:[%s8003 + $0x58] sm:$0xff]
                %8028 = vst [vmem:[%s8004 + $0x58] sm:$0xff] %v8027
                %v8029 = vld [vmem:[%s8003 + $0x60] sm:$0xff]
                %8030 = vst [vmem:[%s8004 + $0x60] sm:$0xff] %v8029
                %v8031 = vld [vmem:[%s8003 + $0x68] sm:$0xff]
                %8032 = vst [vmem:[%s8004 + $0x68] sm:$0xff] %v8031
                %v8033 = vld [vmem:[%s8003 + $0x70] sm:$0xff]
                %8034 = vst [vmem:[%s8004 + $0x70] sm:$0xff] %v8033
                %v8035 = vld [vmem:[%s8003 + $0x78] sm:$0xff]
                %8036 = vst [vmem:[%s8004 + $0x78] sm:$0xff] %v8035
                %v8037 = vld [vmem:[%s8003 + $0x80] sm:$0xff]
                %8038 = vst [vmem:[%s8004 + $0x80] sm:$0xff] %v8037
                %v8039 = vld [vmem:[%s8003 + $0x88] sm:$0xff]
                %8040 = vst [vmem:[%s8004 + $0x88] sm:$0xff] %v8039
                %v8041 = vld [vmem:[%s8003 + $0x90] sm:$0xff]
                %8042 = vst [vmem:[%s8004 + $0x90] sm:$0xff] %v8041
                %v8043 = vld [vmem:[%s8003 + $0x98] sm:$0xff]
                %8044 = vst [vmem:[%s8004 + $0x98] sm:$0xff] %v8043
                %v8045 = vld [vmem:[%s8003 + $0xa0] sm:$0xff]
                %8046 = vst [vmem:[%s8004 + $0xa0] sm:$0xff] %v8045
                %v8047 = vld [vmem:[%s8003 + $0xa8] sm:$0xff]
                %8048 = vst [vmem:[%s8004 + $0xa8] sm:$0xff] %v8047
                %v8049 = vld [vmem:[%s8003 + $0xb0] sm:$0xff]
                %8050 = vst [vmem:[%s8004 + $0xb0] sm:$0xff] %v8049
                %v8051 = vld [vmem:[%s8003 + $0xb8] sm:$0xff]
                %8052 = vst [vmem:[%s8004 + $0xb8] sm:$0xff] %v8051
                %v8053 = vld [vmem:[%s8003 + $0xc0] sm:$0xff]
                %8054 = vst [vmem:[%s8004 + $0xc0] sm:$0xff] %v8053
                %v8055 = vld [vmem:[%s8003 + $0xc8] sm:$0xff]
                %8056 = vst [vmem:[%s8004 + $0xc8] sm:$0xff] %v8055
                %v8057 = vld [vmem:[%s8003 + $0xd0] sm:$0xff]
                %8058 = vst [vmem:[%s8004 + $0xd0] sm:$0xff] %v8057
                %v8059 = vld [vmem:[%s8003 + $0xd8] sm:$0xff]
                %8060 = vst [vmem:[%s8004 + $0xd8] sm:$0xff] %v8059
                %v8061 = vld [vmem:[%s8003 + $0xe0] sm:$0xff]
                %8062 = vst [vmem:[%s8004 + $0xe0] sm:$0xff] %v8061
                %v8063 = vld [vmem:[%s8003 + $0xe8] sm:$0xff]
                %8064 = vst [vmem:[%s8004 + $0xe8] sm:$0xff] %v8063
                %v8065 = vld [vmem:[%s8003 + $0xf0] sm:$0xff]
                %8066 = vst [vmem:[%s8004 + $0xf0] sm:$0xff] %v8065
                %v8067 = vld [vmem:[%s8003 + $0xf8] sm:$0xff]
                %8068 = vst [vmem:[%s8004 + $0xf8] sm:$0xff] %v8067
                %v8069 = vld [vmem:[%s8003 + $0x100] sm:$0xff]
                %8070 = vst [vmem:[%s8004 + $0x200] sm:$0xff] %v8069
                %v8071 = vld [vmem:[%s8003 + $0x108] sm:$0xff]
                %8072 = vst [vmem:[%s8004 + $0x208] sm:$0xff] %v8071
                %v8073 = vld [vmem:[%s8003 + $0x110] sm:$0xff]
                %8074 = vst [vmem:[%s8004 + $0x210] sm:$0xff] %v8073
                %v8075 = vld [vmem:[%s8003 + $0x118] sm:$0xff]
                %8076 = vst [vmem:[%s8004 + $0x218] sm:$0xff] %v8075
                %v8077 = vld [vmem:[%s8003 + $0x120] sm:$0xff]
                %8078 = vst [vmem:[%s8004 + $0x220] sm:$0xff] %v8077
                %v8079 = vld [vmem:[%s8003 + $0x128] sm:$0xff]
                %8080 = vst [vmem:[%s8004 + $0x228] sm:$0xff] %v8079
                %v8081 = vld [vmem:[%s8003 + $0x130] sm:$0xff]
                %8082 = vst [vmem:[%s8004 + $0x230] sm:$0xff] %v8081
                %v8083 = vld [vmem:[%s8003 + $0x138] sm:$0xff]
                %8084 = vst [vmem:[%s8004 + $0x238] sm:$0xff] %v8083
                %v8085 = vld [vmem:[%s8003 + $0x140] sm:$0xff]
                %8086 = vst [vmem:[%s8004 + $0x240] sm:$0xff] %v8085
                %v8087 = vld [vmem:[%s8003 + $0x148] sm:$0xff]
                %8088 = vst [vmem:[%s8004 + $0x248] sm:$0xff] %v8087
                %v8089 = vld [vmem:[%s8003 + $0x150] sm:$0xff]
                %8090 = vst [vmem:[%s8004 + $0x250] sm:$0xff] %v8089
                %v8091 = vld [vmem:[%s8003 + $0x158] sm:$0xff]
                %8092 = vst [vmem:[%s8004 + $0x258] sm:$0xff] %v8091
                %v8093 = vld [vmem:[%s8003 + $0x160] sm:$0xff]
                %8094 = vst [vmem:[%s8004 + $0x260] sm:$0xff] %v8093
                %v8095 = vld [vmem:[%s8003 + $0x168] sm:$0xff]
                %8096 = vst [vmem:[%s8004 + $0x268] sm:$0xff] %v8095
                %v8097 = vld [vmem:[%s8003 + $0x170] sm:$0xff]
                %8098 = vst [vmem:[%s8004 + $0x270] sm:$0xff] %v8097
                %v8099 = vld [vmem:[%s8003 + $0x178] sm:$0xff]
                %8100 = vst [vmem:[%s8004 + $0x278] sm:$0xff] %v8099
                %v8101 = vld [vmem:[%s8003 + $0x180] sm:$0xff]
                %8102 = vst [vmem:[%s8004 + $0x280] sm:$0xff] %v8101
                %v8103 = vld [vmem:[%s8003 + $0x188] sm:$0xff]
                %8104 = vst [vmem:[%s8004 + $0x288] sm:$0xff] %v8103
                %v8105 = vld [vmem:[%s8003 + $0x190] sm:$0xff]
                %8106 = vst [vmem:[%s8004 + $0x290] sm:$0xff] %v8105
                %v8107 = vld [vmem:[%s8003 + $0x198] sm:$0xff]
                %8108 = vst [vmem:[%s8004 + $0x298] sm:$0xff] %v8107
                %v8109 = vld [vmem:[%s8003 + $0x1a0] sm:$0xff]
                %8110 = vst [vmem:[%s8004 + $0x2a0] sm:$0xff] %v8109
                %v8111 = vld [vmem:[%s8003 + $0x1a8] sm:$0xff]
                %8112 = vst [vmem:[%s8004 + $0x2a8] sm:$0xff] %v8111
                %v8113 = vld [vmem:[%s8003 + $0x1b0] sm:$0xff]
                %8114 = vst [vmem:[%s8004 + $0x2b0] sm:$0xff] %v8113
                %v8115 = vld [vmem:[%s8003 + $0x1b8] sm:$0xff]
                %8116 = vst [vmem:[%s8004 + $0x2b8] sm:$0xff] %v8115
                %v8117 = vld [vmem:[%s8003 + $0x1c0] sm:$0xff]
                %8118 = vst [vmem:[%s8004 + $0x2c0] sm:$0xff] %v8117
                %v8119 = vld [vmem:[%s8003 + $0x1c8] sm:$0xff]
                %8120 = vst [vmem:[%s8004 + $0x2c8] sm:$0xff] %v8119
                %v8121 = vld [vmem:[%s8003 + $0x1d0] sm:$0xff]
                %8122 = vst [vmem:[%s8004 + $0x2d0] sm:$0xff] %v8121
                %v8123 = vld [vmem:[%s8003 + $0x1d8] sm:$0xff]
                %8124 = vst [vmem:[%s8004 + $0x2d8] sm:$0xff] %v8123
                %v8125 = vld [vmem:[%s8003 + $0x1e0] sm:$0xff]
                %8126 = vst [vmem:[%s8004 + $0x2e0] sm:$0xff] %v8125
                %v8127 = vld [vmem:[%s8003 + $0x1e8] sm:$0xff]
                %8128 = vst [vmem:[%s8004 + $0x2e8] sm:$0xff] %v8127
                %v8129 = vld [vmem:[%s8003 + $0x1f0] sm:$0xff]
                %8130 = vst [vmem:[%s8004 + $0x2f0] sm:$0xff] %v8129
                %v8131 = vld [vmem:[%s8003 + $0x1f8] sm:$0xff]
                %8132 = vst [vmem:[%s8004 + $0x2f8] sm:$0xff] %v8131
                %v8133 = vld [vmem:[%s8003 + $0x200] sm:$0xff]
                %8134 = vst [vmem:[%s8004 + $0x400] sm:$0xff] %v8133
                %v8135 = vld [vmem:[%s8003 + $0x208] sm:$0xff]
                %8136 = vst [vmem:[%s8004 + $0x408] sm:$0xff] %v8135
                %v8137 = vld [vmem:[%s8003 + $0x210] sm:$0xff]
                %8138 = vst [vmem:[%s8004 + $0x410] sm:$0xff] %v8137
                %v8139 = vld [vmem:[%s8003 + $0x218] sm:$0xff]
                %8140 = vst [vmem:[%s8004 + $0x418] sm:$0xff] %v8139
                %v8141 = vld [vmem:[%s8003 + $0x220] sm:$0xff]
                %8142 = vst [vmem:[%s8004 + $0x420] sm:$0xff] %v8141
                %v8143 = vld [vmem:[%s8003 + $0x228] sm:$0xff]
                %8144 = vst [vmem:[%s8004 + $0x428] sm:$0xff] %v8143
                %v8145 = vld [vmem:[%s8003 + $0x230] sm:$0xff]
                %8146 = vst [vmem:[%s8004 + $0x430] sm:$0xff] %v8145
                %v8147 = vld [vmem:[%s8003 + $0x238] sm:$0xff]
                %8148 = vst [vmem:[%s8004 + $0x438] sm:$0xff] %v8147
                %v8149 = vld [vmem:[%s8003 + $0x240] sm:$0xff]
                %8150 = vst [vmem:[%s8004 + $0x440] sm:$0xff] %v8149
                %v8151 = vld [vmem:[%s8003 + $0x248] sm:$0xff]
                %8152 = vst [vmem:[%s8004 + $0x448] sm:$0xff] %v8151
                %v8153 = vld [vmem:[%s8003 + $0x250] sm:$0xff]
                %8154 = vst [vmem:[%s8004 + $0x450] sm:$0xff] %v8153
                %v8155 = vld [vmem:[%s8003 + $0x258] sm:$0xff]
                %8156 = vst [vmem:[%s8004 + $0x458] sm:$0xff] %v8155
                %v8157 = vld [vmem:[%s8003 + $0x260] sm:$0xff]
                %8158 = vst [vmem:[%s8004 + $0x460] sm:$0xff] %v8157
                %v8159 = vld [vmem:[%s8003 + $0x268] sm:$0xff]
                %8160 = vst [vmem:[%s8004 + $0x468] sm:$0xff] %v8159
                %v8161 = vld [vmem:[%s8003 + $0x270] sm:$0xff]
                %8162 = vst [vmem:[%s8004 + $0x470] sm:$0xff] %v8161
                %v8163 = vld [vmem:[%s8003 + $0x278] sm:$0xff]
                %8164 = vst [vmem:[%s8004 + $0x478] sm:$0xff] %v8163
                %v8165 = vld [vmem:[%s8003 + $0x280] sm:$0xff]
                %8166 = vst [vmem:[%s8004 + $0x480] sm:$0xff] %v8165
                %v8167 = vld [vmem:[%s8003 + $0x288] sm:$0xff]
                %8168 = vst [vmem:[%s8004 + $0x488] sm:$0xff] %v8167
                %v8169 = vld [vmem:[%s8003 + $0x290] sm:$0xff]
                %8170 = vst [vmem:[%s8004 + $0x490] sm:$0xff] %v8169
                %v8171 = vld [vmem:[%s8003 + $0x298] sm:$0xff]
                %8172 = vst [vmem:[%s8004 + $0x498] sm:$0xff] %v8171
                %v8173 = vld [vmem:[%s8003 + $0x2a0] sm:$0xff]
                %8174 = vst [vmem:[%s8004 + $0x4a0] sm:$0xff] %v8173
                %v8175 = vld [vmem:[%s8003 + $0x2a8] sm:$0xff]
                %8176 = vst [vmem:[%s8004 + $0x4a8] sm:$0xff] %v8175
                %v8177 = vld [vmem:[%s8003 + $0x2b0] sm:$0xff]
                %8178 = vst [vmem:[%s8004 + $0x4b0] sm:$0xff] %v8177
                %v8179 = vld [vmem:[%s8003 + $0x2b8] sm:$0xff]
                %8180 = vst [vmem:[%s8004 + $0x4b8] sm:$0xff] %v8179
                %v8181 = vld [vmem:[%s8003 + $0x2c0] sm:$0xff]
                %8182 = vst [vmem:[%s8004 + $0x4c0] sm:$0xff] %v8181
                %v8183 = vld [vmem:[%s8003 + $0x2c8] sm:$0xff]
                %8184 = vst [vmem:[%s8004 + $0x4c8] sm:$0xff] %v8183
                %v8185 = vld [vmem:[%s8003 + $0x2d0] sm:$0xff]
                %8186 = vst [vmem:[%s8004 + $0x4d0] sm:$0xff] %v8185
                %v8187 = vld [vmem:[%s8003 + $0x2d8] sm:$0xff]
                %8188 = vst [vmem:[%s8004 + $0x4d8] sm:$0xff] %v8187
                %v8189 = vld [vmem:[%s8003 + $0x2e0] sm:$0xff]
                %8190 = vst [vmem:[%s8004 + $0x4e0] sm:$0xff] %v8189
                %v8191 = vld [vmem:[%s8003 + $0x2e8] sm:$0xff]
                %8192 = vst [vmem:[%s8004 + $0x4e8] sm:$0xff] %v8191
                %v8193 = vld [vmem:[%s8003 + $0x2f0] sm:$0xff]
                %8194 = vst [vmem:[%s8004 + $0x4f0] sm:$0xff] %v8193
                %v8195 = vld [vmem:[%s8003 + $0x2f8] sm:$0xff]
                %8196 = vst [vmem:[%s8004 + $0x4f8] sm:$0xff] %v8195
              $region135: #{tpu_custom_call.1} parent=129 // loop_footer
                %s8002 = sadd.s32 1, %s7998
              $region136: #{tpu_custom_call.1} parent=129 // loop_footer_branch
                %7997 = sbr.rel target = $region132
              $region137: #{tpu_custom_call.1} parent=129 // loop_exit
                _
            $region130: #{tpu_custom_call.1} parent=121 // pred_fallthru
              _
          $region122: #{tpu_custom_call.1} parent=117 // pred_fallthru
            _
          %8401 = vnop
        $region118: #{tpu_custom_call.1} parent=105 // pred_fallthru
          _
      $region106: #{tpu_custom_call.1} parent=5 // pred_fallthru
        _
      %p8402 = scmp.le.s32.totalorder 2, %s24
      // Predicated region
      $region153: #{tpu_custom_call.1} parent=5 // pred_check
        %p8403 = pneg %p8402
      $region154: #{tpu_custom_call.1} parent=5 // pred_check_branch
        %8405 = sbr.rel (%p8403) target = $region156
      $region155: #{tpu_custom_call.1} parent=5 // pred_region
        %s8406 = ssub.s32 %s24, 2
        // Predicated region
        $region157: #{tpu_custom_call.1} parent=155 // pred_check
          %p8407 = pneg %p336
        $region158: #{tpu_custom_call.1} parent=155 // pred_check_branch
          %8409 = sbr.rel (%p8407) target = $region160
        $region159: #{tpu_custom_call.1} parent=155 // pred_region
          %s8410 = sand.u32 %s321, 1
          %s8411 = scalar_lea.sflag [#allocation4], %s8410
          %s8412 = sand.u32 %s321, 1
          %s8413 = smul.addr %s8412, 256
          %s8414 = scalar_lea.vmem [#allocation3], %s8413
          %8415 = dma.done %s8411, 4096
        $region160: #{tpu_custom_call.1} parent=155 // pred_fallthru
          _
        // Predicated region
        $region161: #{tpu_custom_call.1} parent=155 // pred_check
          %p8416 = pneg %p362
        $region162: #{tpu_custom_call.1} parent=155 // pred_check_branch
          %8418 = sbr.rel (%p8416) target = $region164
        $region163: #{tpu_custom_call.1} parent=155 // pred_region
          %s8419 = sand.u32 %s347, 1
          %s8420 = sand.u32 %s347, 1
          %s8421 = smul.addr %s8420, 768
          %s8422 = scalar_lea.vmem [#allocation5], %s8421
        $region164: #{tpu_custom_call.1} parent=155 // pred_fallthru
          _
      $region156: #{tpu_custom_call.1} parent=5 // pred_fallthru
        _
    $region6: #{tpu_custom_call.1} parent=1 // loop_footer
      %s28 = sadd.s32 1, %s24
    $region7: #{tpu_custom_call.1} parent=1 // loop_footer_branch
      %23 = sbr.rel target = $region3
    $region8: #{tpu_custom_call.1} parent=1 // loop_exit
      _
    %8423 = vsyncpa [#allocation4], 1
    %s8424 = scalar_lea.sflag [#allocation4], 1
    %8425 = vsyncpa %s8424, 1

</llo_original>
